<compile_context>
chip_gen: v5e
topology: v5e:2x2
jax: 0.10.0
libtpu: 0.0.40
codegen_flags: <defaults>
</compile_context>

<pallas_src>
import functools

import jax
import jax.numpy as jnp
from jax import lax
from jax.experimental import pallas as pl
from jax.experimental.pallas import tpu as pltpu

BN_EPS = 1e-5
N_TILES = 6          # N in the PyTorch forward (number of image tiles)
N_OUT = 6            # n in Model.__init__
ENC_C = 32           # encoder output channels (stand-in for nc=2048)
HEAD_HIDDEN = 512


# ----------------------------- tiling helpers ------------------------------

def _pick_tm(M, K, itemsize=2, max_bytes=4 << 20):
    """Largest multiple-of-8 row tile that divides M, keeps the A block under
    `max_bytes` (so double-buffering stays well inside v7x's 64 MiB VMEM), and
    -- when M is big enough to split -- leaves >= 2 grid steps so both v7x
    TensorCores get work via the 'parallel' dimension semantics."""
    if M % 8 != 0:
        return M                       # tiny / ragged M: single full block
    best = None
    for tm in range(M, 7, -8):
        if M % tm:
            continue
        if tm * K * itemsize > max_bytes:
            continue
        if best is None:
            best = tm                  # biggest tile that fits (grid may be 1)
        if M // tm >= 2:
            return tm                  # biggest tile that also gives >=2 steps
    return best if best is not None else M


def _pad_k(a, w, mult=16):
    """Zero-pad the contraction dim to a multiple of `mult` (bf16-friendly)."""
    K = a.shape[1]
    Kp = ((K + mult - 1) // mult) * mult
    if Kp != K:
        a = jnp.pad(a, ((0, 0), (0, Kp - K)))
        w = jnp.pad(w, ((0, Kp - K), (0, 0)))
    return a, w


# ----------------------------- Pallas kernels ------------------------------

def _gemm_bias_act_kernel(a_ref, w_ref, b_ref, o_ref, *, act):
    # bf16 operands -> f32 MXU accumulation -> f32 epilogue.
    acc = jnp.dot(a_ref[...], w_ref[...], preferred_element_type=jnp.float32)
    acc = acc + b_ref[...]                       # folded BN shift / bias
    if act == "relu":
        acc = jnp.maximum(acc, 0.0)
    o_ref[...] = acc.astype(o_ref.dtype)


def fused_gemm(a, w, bias, act="none", out_dtype=jnp.bfloat16):
    """out = act(a @ w + bias); bias broadcasts over rows.  BN scales must be
    pre-folded into `w`."""
    a, w = _pad_k(a.astype(jnp.bfloat16), w.astype(jnp.bfloat16))
    M, K = a.shape
    N = w.shape[1]
    TM = _pick_tm(M, K)
    kern = functools.partial(_gemm_bias_act_kernel, act=act)
    # TODO(synk): for N<=32 a lane-dense (transposed) output layout would avoid
    # masked partial stores; kept row-major to match the NHWC reshape glue.
    return pl.pallas_call(
        kern,
        out_shape=jax.ShapeDtypeStruct((M, N), out_dtype),
        grid=(M // TM,),
        in_specs=[
            pl.BlockSpec((TM, K), lambda i: (i, 0)),
            pl.BlockSpec((K, N), lambda i: (0, 0)),
            pl.BlockSpec((1, N), lambda i: (0, 0)),
        ],
        out_specs=pl.BlockSpec((TM, N), lambda i: (i, 0)),
        compiler_params=pltpu.CompilerParams(dimension_semantics=("parallel",)),
    )(a, w, bias.reshape(1, N).astype(jnp.float32))


def _dual_gemm_relu_kernel(a_ref, c_ref, wa_ref, wc_ref, b_ref, o_ref):
    acc = jnp.dot(a_ref[...], wa_ref[...], preferred_element_type=jnp.float32)
    acc = acc + jnp.dot(c_ref[...], wc_ref[...], preferred_element_type=jnp.float32)
    o_ref[...] = jnp.maximum(acc + b_ref[...], 0.0).astype(o_ref.dtype)


def fused_residual_gemm_relu(a, c, wa, wc, bias, out_dtype=jnp.bfloat16):
    """out = relu(a @ wa + c @ wc + bias): bottleneck tail 1x1 conv, projection
    shortcut, residual add and ReLU in a single kernel launch."""
    a, wa = _pad_k(a.astype(jnp.bfloat16), wa.astype(jnp.bfloat16))
    c, wc = _pad_k(c.astype(jnp.bfloat16), wc.astype(jnp.bfloat16))
    M, Ka = a.shape
    Kc = c.shape[1]
    N = wa.shape[1]
    TM = _pick_tm(M, Ka + Kc)
    return pl.pallas_call(
        _dual_gemm_relu_kernel,
        out_shape=jax.ShapeDtypeStruct((M, N), out_dtype),
        grid=(M // TM,),
        in_specs=[
            pl.BlockSpec((TM, Ka), lambda i: (i, 0)),
            pl.BlockSpec((TM, Kc), lambda i: (i, 0)),
            pl.BlockSpec((Ka, N), lambda i: (0, 0)),
            pl.BlockSpec((Kc, N), lambda i: (0, 0)),
            pl.BlockSpec((1, N), lambda i: (0, 0)),
        ],
        out_specs=pl.BlockSpec((TM, N), lambda i: (i, 0)),
        compiler_params=pltpu.CompilerParams(dimension_semantics=("parallel",)),
    )(a, c, wa, wc, bias.reshape(1, N).astype(jnp.float32))


def _head_kernel(feat_ref, w1a_ref, w1b_ref, b1_ref, s_ref, t_ref,
                 w2_ref, b2_ref, o_ref):
    x = feat_ref[...].astype(jnp.float32)          # (bs, S, C)
    mx = jnp.max(x, axis=1)                        # AdaptiveMaxPool2d -> (bs, C)
    av = jnp.mean(x, axis=1)                       # AdaptiveAvgPool2d -> (bs, C)
    # Linear(2C, 512): weight split in halves so concat([max|avg]) never
    # materializes (fastai AdaptiveConcatPool2d order = [max, avg]).
    h = jnp.dot(mx, w1a_ref[...], preferred_element_type=jnp.float32)
    h = h + jnp.dot(av, w1b_ref[...], preferred_element_type=jnp.float32)
    h = h + b1_ref[...]
    h = h * jnp.tanh(jax.nn.softplus(h))           # Mish
    h = h * s_ref[...] + t_ref[...]                # BatchNorm1d (eval affine)
    # Dropout(0.5): identity in eval mode.
    o_ref[...] = (jnp.dot(h, w2_ref[...], preferred_element_type=jnp.float32)
                  + b2_ref[...]).astype(o_ref.dtype)


def fused_head(feat, w1, b1, bn_s, bn_t, w2, b2):
    """feat: [bs, S, C] -> [bs, N_OUT].  AdaptiveConcatPool2d + Flatten +
    Linear + Mish + BatchNorm1d + Dropout(eval) + Linear in ONE pallas_call."""
    bs, S, C = feat.shape
    H = w1.shape[1]
    return pl.pallas_call(
        _head_kernel,
        out_shape=jax.ShapeDtypeStruct((bs, N_OUT), jnp.float32),
    )(feat,
      w1[:C].astype(jnp.float32), w1[C:].astype(jnp.float32),
      b1.reshape(1, H).astype(jnp.float32),
      bn_s.reshape(1, H).astype(jnp.float32),
      bn_t.reshape(1, H).astype(jnp.float32),
      w2.astype(jnp.float32), b2.reshape(1, N_OUT).astype(jnp.float32))


# --------------------------------- glue ------------------------------------

def im2col(x, kh, kw, stride, pad):
    """x: [B,H,W,C] NHWC -> ([B*Ho*Wo, kh*kw*C], (B,Ho,Wo)); column order (kh,kw,C).
    TODO(synk): fold this gather into the GEMM grid (kh*kw reduction axis) to
    avoid materializing the expanded copy in HBM."""
    B, H, W, C = x.shape
    xp = jnp.pad(x, ((0, 0), (pad, pad), (pad, pad), (0, 0)))
    Ho = (H + 2 * pad - kh) // stride + 1
    Wo = (W + 2 * pad - kw) // stride + 1
    cols = []
    for i in range(kh):
        for j in range(kw):
            cols.append(xp[:, i:i + stride * Ho:stride, j:j + stride * Wo:stride, :])
    cols = jnp.stack(cols, axis=-2)                      # [B,Ho,Wo,kh*kw,C]
    return cols.reshape(B * Ho * Wo, kh * kw * C), (B, Ho, Wo)


def init_params(key):
    ks = jax.random.split(key, 20)

    def w(k, shape, scale=0.1):
        return jax.random.normal(k, shape, jnp.float32) * scale

    def bn(k, c):
        k1, k2, k3, k4 = jax.random.split(k, 4)
        gamma = jax.random.uniform(k1, (c,), jnp.float32, 0.5, 1.5)
        beta = jax.random.normal(k2, (c,), jnp.float32) * 0.1
        mean = jax.random.normal(k3, (c,), jnp.float32) * 0.1
        var = jax.random.uniform(k4, (c,), jnp.float32, 0.5, 1.5)
        scale = gamma / jnp.sqrt(var + BN_EPS)
        shift = beta - mean * scale
        return scale, shift                              # folded eval-mode BN affine

    p = {}
    p["w_stem"] = w(ks[0], (7 * 7 * 3, 16))              # 7x7 conv, 3->16
    p["bn_stem"] = bn(ks[1], 16)
    p["w1"] = w(ks[2], (16, ENC_C))                      # 1x1 conv 16->32
    p["bn1"] = bn(ks[3], ENC_C)
    p["w2"] = [w(ks[4 + g], (3 * 3 * 8, 8)) for g in range(4)]   # grouped 3x3, groups=4
    p["bn2"] = bn(ks[8], ENC_C)
    p["w3"] = w(ks[9], (ENC_C, ENC_C))                   # 1x1 conv 32->32
    p["bn3"] = bn(ks[10], ENC_C)
    p["w_sc"] = w(ks[11], (16, ENC_C))                   # projection shortcut
    p["bn_sc"] = bn(ks[12], ENC_C)
    p["head_w1"] = w(ks[13], (2 * ENC_C, HEAD_HIDDEN), 0.05)
    p["head_b1"] = w(ks[14], (HEAD_HIDDEN,), 0.05)
    p["head_bn"] = bn(ks[15], HEAD_HIDDEN)
    p["head_w2"] = w(ks[16], (HEAD_HIDDEN, N_OUT), 0.05)
    p["head_b2"] = w(ks[17], (N_OUT,), 0.05)
    return p


def fold_params(p):
    """Fold eval-mode BN scales into the conv weights so every conv GEMM is a
    single `act(A @ W + b)`; build the block-diagonal weight for the grouped
    3x3 conv; stack the bottleneck-tail + shortcut epilogue."""
    f = {}
    s, t = p["bn_stem"]
    f["w_stem"], f["b_stem"] = p["w_stem"] * s, t
    s, t = p["bn1"]
    f["w1"], f["b1"] = p["w1"] * s, t
    # grouped 3x3 conv (cardinality 4) -> one block-diagonal (9*C, C) weight.
    s2, t2 = p["bn2"]
    wbd = jnp.zeros((9, ENC_C, ENC_C), jnp.float32)
    for g in range(4):
        wg = p["w2"][g].reshape(9, 8, 8)                 # (kh*kw, cin_g, cout_g)
        wbd = wbd.at[:, 8 * g:8 * (g + 1), 8 * g:8 * (g + 1)].set(wg)
    f["w2"], f["b2"] = wbd.reshape(9 * ENC_C, ENC_C) * s2, t2
    s3, t3 = p["bn3"]
    ssc, tsc = p["bn_sc"]
    f["w3"], f["w_sc"], f["b3sc"] = p["w3"] * s3, p["w_sc"] * ssc, t3 + tsc
    f["head_w1"], f["head_b1"] = p["head_w1"], p["head_b1"]
    f["head_bn_s"], f["head_bn_t"] = p["head_bn"]
    f["head_w2"], f["head_b2"] = p["head_w2"], p["head_b2"]
    return f


def encoder(x, f):
    """x: [B, H, W, 3] NHWC -> [B, H/4, W/4, ENC_C]."""
    # stem: 7x7/2 conv + folded BN + ReLU  (im2col + one fused Pallas GEMM)
    cols, (B, Ho, Wo) = im2col(x.astype(jnp.bfloat16), 7, 7, 2, 3)
    y = fused_gemm(cols, f["w_stem"], f["b_stem"], act="relu").reshape(B, Ho, Wo, 16)
    # 3x3/2 maxpool.  TODO(synk): strided max-pool kept as lax.reduce_window glue.
    y = lax.reduce_window(y, jnp.asarray(-jnp.inf, y.dtype), lax.max,
                          (1, 3, 3, 1), (1, 2, 2, 1),
                          padding=((0, 0), (1, 1), (1, 1), (0, 0)))
    B, H, W, C = y.shape
    flat = y.reshape(B * H * W, C)
    # ResNeXt bottleneck (cardinality 4): 1x1 -> grouped 3x3 (single GEMM with
    # block-diagonal weight) -> fused [1x1 + projection shortcut + add + ReLU].
    h1 = fused_gemm(flat, f["w1"], f["b1"], act="relu").reshape(B, H, W, ENC_C)
    cg, _ = im2col(h1, 3, 3, 1, 1)
    h2 = fused_gemm(cg, f["w2"], f["b2"], act="relu")            # [B*H*W, ENC_C]
    out = fused_residual_gemm_relu(h2, flat, f["w3"], f["w_sc"], f["b3sc"])
    return out.reshape(B, H, W, ENC_C)


def model_forward(x, p):
    """x: [bs, N, 3, h, w] (same axis convention as the PyTorch module) -> [bs, N_OUT]."""
    f = fold_params(p)
    bs, n, c, h, w = x.shape
    x = x.reshape(bs * n, c, h, w).transpose(0, 2, 3, 1)        # NCHW -> NHWC
    feat = encoder(x, f)                                        # [bs*n, h', w', C]
    _, hp, wp, C = feat.shape
    # Torch ref: encoder per tile, then view(bs,n,c,h,w).permute(0,2,1,3,4)
    # .view(-1,c,h*n,w) stacks tiles along H *after* the encoder; the head's
    # global max/avg pool is order-invariant, so pool over all n*h'*w' positions.
    feat = feat.reshape(bs, n * hp * wp, C)
    return fused_head(feat, f["head_w1"], f["head_b1"],
                      f["head_bn_s"], f["head_bn_t"],
                      f["head_w2"], f["head_b2"])               # [bs, N_OUT]


if __name__ == "__main__":
    key = jax.random.PRNGKey(0)
    kx, kp = jax.random.split(key)
    x = jax.random.normal(kx, (2, N_TILES, 3, 32, 32), jnp.float32)   # [bs, N, 3, h, w]
    params = init_params(kp)
    out = jax.jit(model_forward)(x, params)
    out = jax.block_until_ready(out)
    assert out.shape == (2, N_OUT) and out.dtype == jnp.float32
    print("KERNEL_OK")
</pallas_src>

<mosaic_0001>
module attributes {stable_mosaic.version = 11 : i64} {
  func.func @_gemm_bias_act_kernel(%arg0: i32, %arg1: memref<1536x160xbf16, #tpu.memory_space<vmem>>, %arg2: memref<160x16xbf16, #tpu.memory_space<vmem>>, %arg3: memref<1x16xf32, #tpu.memory_space<vmem>>, %arg4: memref<1536x16xbf16, #tpu.memory_space<vmem>>) attributes {dimension_semantics = [#tpu.dimension_semantics<parallel>], iteration_bounds = array<i64: 2>, scalar_prefetch = 0 : i64, scratch_operands = 0 : i64, tpu.core_type = #tpu.core_type<tc>, window_params = [{transform_indices = @transform_0, window_bounds = array<i64: 1536, 160>}, {pipeline_mode = #tpu.pipeline_mode<synchronous>, transform_indices = @transform_1, window_bounds = array<i64: 160, 16>}, {pipeline_mode = #tpu.pipeline_mode<synchronous>, transform_indices = @transform_2, window_bounds = array<i64: 1, 16>}, {transform_indices = @transform_3, window_bounds = array<i64: 1536, 16>}]} {
    %c0 = arith.constant 0 : index
    %c0_0 = arith.constant 0 : index
    %0 = vector.load %arg1[%c0, %c0_0] : memref<1536x160xbf16, #tpu.memory_space<vmem>>, vector<1536x160xbf16>
    %c0_1 = arith.constant 0 : index
    %c0_2 = arith.constant 0 : index
    %1 = vector.load %arg2[%c0_1, %c0_2] : memref<160x16xbf16, #tpu.memory_space<vmem>>, vector<160x16xbf16>
    %cst = arith.constant dense<0.000000e+00> : vector<1536x16xf32>
    %2 = tpu.matmul %0, %1, %cst {dimension_numbers = #tpu.dot_dimension_numbers<[1], [0], [0], [1], [0, 0, 1, 1], [], []>} : vector<1536x160xbf16>, vector<160x16xbf16>, vector<1536x16xf32> -> vector<1536x16xf32>
    %c0_3 = arith.constant 0 : index
    %c0_4 = arith.constant 0 : index
    %3 = vector.load %arg3[%c0_3, %c0_4] : memref<1x16xf32, #tpu.memory_space<vmem>>, vector<1x16xf32>
    %4 = vector.broadcast %3 : vector<1x16xf32> to vector<1536x16xf32>
    %5 = arith.addf %2, %4 : vector<1536x16xf32>
    %cst_5 = arith.constant 0.000000e+00 : f32
    %6 = vector.broadcast %cst_5 : f32 to vector<1536x16xf32>
    %7 = arith.maximumf %5, %6 : vector<1536x16xf32>
    %8 = arith.truncf %7 : vector<1536x16xf32> to vector<1536x16xbf16>
    %c0_6 = arith.constant 0 : index
    %c0_7 = arith.constant 0 : index
    %9 = vector.load %arg4[%c0_6, %c0_7] : memref<1536x16xbf16, #tpu.memory_space<vmem>>, vector<1536x16xbf16>
    tpu.vector_store %arg4[%c0_6, %c0_7], %8 {strides = array<i32>} : memref<1536x16xbf16, #tpu.memory_space<vmem>>, vector<1536x16xbf16>,
    return
  }
  func.func @transform_0(%arg0: i32) -> (i32, i32) {
    %c0_i32 = arith.constant 0 : i32
    %c0_i32_0 = arith.constant 0 : i32
    return %arg0, %c0_i32 : i32, i32
  }
  func.func @transform_1(%arg0: i32) -> (i32, i32) {
    %c0_i32 = arith.constant 0 : i32
    %c0_i32_0 = arith.constant 0 : i32
    %c0_i32_1 = arith.constant 0 : i32
    return %c0_i32, %c0_i32_0 : i32, i32
  }
  func.func @transform_2(%arg0: i32) -> (i32, i32) {
    %c0_i32 = arith.constant 0 : i32
    %c0_i32_0 = arith.constant 0 : i32
    %c0_i32_1 = arith.constant 0 : i32
    return %c0_i32, %c0_i32_0 : i32, i32
  }
  func.func @transform_3(%arg0: i32) -> (i32, i32) {
    %c0_i32 = arith.constant 0 : i32
    %c0_i32_0 = arith.constant 0 : i32
    return %arg0, %c0_i32 : i32, i32
  }
}

module attributes {stable_mosaic.version = 11 : i64} {
  func.func @_gemm_bias_act_kernel(%arg0: i32, %arg1: memref<384x16xbf16, #tpu.memory_space<vmem>>, %arg2: memref<16x32xbf16, #tpu.memory_space<vmem>>, %arg3: memref<1x32xf32, #tpu.memory_space<vmem>>, %arg4: memref<384x32xbf16, #tpu.memory_space<vmem>>) attributes {dimension_semantics = [#tpu.dimension_semantics<parallel>], iteration_bounds = array<i64: 2>, scalar_prefetch = 0 : i64, scratch_operands = 0 : i64, tpu.core_type = #tpu.core_type<tc>, window_params = [{transform_indices = @transform_0, window_bounds = array<i64: 384, 16>}, {pipeline_mode = #tpu.pipeline_mode<synchronous>, transform_indices = @transform_1, window_bounds = array<i64: 16, 32>}, {pipeline_mode = #tpu.pipeline_mode<synchronous>, transform_indices = @transform_2, window_bounds = array<i64: 1, 32>}, {transform_indices = @transform_3, window_bounds = array<i64: 384, 32>}]} {
    %c0 = arith.constant 0 : index
    %c0_0 = arith.constant 0 : index
    %0 = vector.load %arg1[%c0, %c0_0] : memref<384x16xbf16, #tpu.memory_space<vmem>>, vector<384x16xbf16>
    %c0_1 = arith.constant 0 : index
    %c0_2 = arith.constant 0 : index
    %1 = vector.load %arg2[%c0_1, %c0_2] : memref<16x32xbf16, #tpu.memory_space<vmem>>, vector<16x32xbf16>
    %cst = arith.constant dense<0.000000e+00> : vector<384x32xf32>
    %2 = tpu.matmul %0, %1, %cst {dimension_numbers = #tpu.dot_dimension_numbers<[1], [0], [0], [1], [0, 0, 1, 1], [], []>} : vector<384x16xbf16>, vector<16x32xbf16>, vector<384x32xf32> -> vector<384x32xf32>
    %c0_3 = arith.constant 0 : index
    %c0_4 = arith.constant 0 : index
    %3 = vector.load %arg3[%c0_3, %c0_4] : memref<1x32xf32, #tpu.memory_space<vmem>>, vector<1x32xf32>
    %4 = vector.broadcast %3 : vector<1x32xf32> to vector<384x32xf32>
    %5 = arith.addf %2, %4 : vector<384x32xf32>
    %cst_5 = arith.constant 0.000000e+00 : f32
    %6 = vector.broadcast %cst_5 : f32 to vector<384x32xf32>
    %7 = arith.maximumf %5, %6 : vector<384x32xf32>
    %8 = arith.truncf %7 : vector<384x32xf32> to vector<384x32xbf16>
    %c0_6 = arith.constant 0 : index
    %c0_7 = arith.constant 0 : index
    %9 = vector.load %arg4[%c0_6, %c0_7] : memref<384x32xbf16, #tpu.memory_space<vmem>>, vector<384x32xbf16>
    tpu.vector_store %arg4[%c0_6, %c0_7], %8 {strides = array<i32>} : memref<384x32xbf16, #tpu.memory_space<vmem>>, vector<384x32xbf16>,
    return
  }
  func.func @transform_0(%arg0: i32) -> (i32, i32) {
    %c0_i32 = arith.constant 0 : i32
    %c0_i32_0 = arith.constant 0 : i32
    return %arg0, %c0_i32 : i32, i32
  }
  func.func @transform_1(%arg0: i32) -> (i32, i32) {
    %c0_i32 = arith.constant 0 : i32
    %c0_i32_0 = arith.constant 0 : i32
    %c0_i32_1 = arith.constant 0 : i32
    return %c0_i32, %c0_i32_0 : i32, i32
  }
  func.func @transform_2(%arg0: i32) -> (i32, i32) {
    %c0_i32 = arith.constant 0 : i32
    %c0_i32_0 = arith.constant 0 : i32
    %c0_i32_1 = arith.constant 0 : i32
    return %c0_i32, %c0_i32_0 : i32, i32
  }
  func.func @transform_3(%arg0: i32) -> (i32, i32) {
    %c0_i32 = arith.constant 0 : i32
    %c0_i32_0 = arith.constant 0 : i32
    return %arg0, %c0_i32 : i32, i32
  }
}

module attributes {stable_mosaic.version = 11 : i64} {
  func.func @_gemm_bias_act_kernel(%arg0: i32, %arg1: memref<384x288xbf16, #tpu.memory_space<vmem>>, %arg2: memref<288x32xbf16, #tpu.memory_space<vmem>>, %arg3: memref<1x32xf32, #tpu.memory_space<vmem>>, %arg4: memref<384x32xbf16, #tpu.memory_space<vmem>>) attributes {dimension_semantics = [#tpu.dimension_semantics<parallel>], iteration_bounds = array<i64: 2>, scalar_prefetch = 0 : i64, scratch_operands = 0 : i64, tpu.core_type = #tpu.core_type<tc>, window_params = [{transform_indices = @transform_0, window_bounds = array<i64: 384, 288>}, {pipeline_mode = #tpu.pipeline_mode<synchronous>, transform_indices = @transform_1, window_bounds = array<i64: 288, 32>}, {pipeline_mode = #tpu.pipeline_mode<synchronous>, transform_indices = @transform_2, window_bounds = array<i64: 1, 32>}, {transform_indices = @transform_3, window_bounds = array<i64: 384, 32>}]} {
    %c0 = arith.constant 0 : index
    %c0_0 = arith.constant 0 : index
    %0 = vector.load %arg1[%c0, %c0_0] : memref<384x288xbf16, #tpu.memory_space<vmem>>, vector<384x288xbf16>
    %c0_1 = arith.constant 0 : index
    %c0_2 = arith.constant 0 : index
    %1 = vector.load %arg2[%c0_1, %c0_2] : memref<288x32xbf16, #tpu.memory_space<vmem>>, vector<288x32xbf16>
    %cst = arith.constant dense<0.000000e+00> : vector<384x32xf32>
    %2 = tpu.matmul %0, %1, %cst {dimension_numbers = #tpu.dot_dimension_numbers<[1], [0], [0], [1], [0, 0, 1, 1], [], []>} : vector<384x288xbf16>, vector<288x32xbf16>, vector<384x32xf32> -> vector<384x32xf32>
    %c0_3 = arith.constant 0 : index
    %c0_4 = arith.constant 0 : index
    %3 = vector.load %arg3[%c0_3, %c0_4] : memref<1x32xf32, #tpu.memory_space<vmem>>, vector<1x32xf32>
    %4 = vector.broadcast %3 : vector<1x32xf32> to vector<384x32xf32>
    %5 = arith.addf %2, %4 : vector<384x32xf32>
    %cst_5 = arith.constant 0.000000e+00 : f32
    %6 = vector.broadcast %cst_5 : f32 to vector<384x32xf32>
    %7 = arith.maximumf %5, %6 : vector<384x32xf32>
    %8 = arith.truncf %7 : vector<384x32xf32> to vector<384x32xbf16>
    %c0_6 = arith.constant 0 : index
    %c0_7 = arith.constant 0 : index
    %9 = vector.load %arg4[%c0_6, %c0_7] : memref<384x32xbf16, #tpu.memory_space<vmem>>, vector<384x32xbf16>
    tpu.vector_store %arg4[%c0_6, %c0_7], %8 {strides = array<i32>} : memref<384x32xbf16, #tpu.memory_space<vmem>>, vector<384x32xbf16>,
    return
  }
  func.func @transform_0(%arg0: i32) -> (i32, i32) {
    %c0_i32 = arith.constant 0 : i32
    %c0_i32_0 = arith.constant 0 : i32
    return %arg0, %c0_i32 : i32, i32
  }
  func.func @transform_1(%arg0: i32) -> (i32, i32) {
    %c0_i32 = arith.constant 0 : i32
    %c0_i32_0 = arith.constant 0 : i32
    %c0_i32_1 = arith.constant 0 : i32
    return %c0_i32, %c0_i32_0 : i32, i32
  }
  func.func @transform_2(%arg0: i32) -> (i32, i32) {
    %c0_i32 = arith.constant 0 : i32
    %c0_i32_0 = arith.constant 0 : i32
    %c0_i32_1 = arith.constant 0 : i32
    return %c0_i32, %c0_i32_0 : i32, i32
  }
  func.func @transform_3(%arg0: i32) -> (i32, i32) {
    %c0_i32 = arith.constant 0 : i32
    %c0_i32_0 = arith.constant 0 : i32
    return %arg0, %c0_i32 : i32, i32
  }
}

module attributes {stable_mosaic.version = 11 : i64} {
  func.func @_dual_gemm_relu_kernel(%arg0: i32, %arg1: memref<384x32xbf16, #tpu.memory_space<vmem>>, %arg2: memref<384x16xbf16, #tpu.memory_space<vmem>>, %arg3: memref<32x32xbf16, #tpu.memory_space<vmem>>, %arg4: memref<16x32xbf16, #tpu.memory_space<vmem>>, %arg5: memref<1x32xf32, #tpu.memory_space<vmem>>, %arg6: memref<384x32xbf16, #tpu.memory_space<vmem>>) attributes {dimension_semantics = [#tpu.dimension_semantics<parallel>], iteration_bounds = array<i64: 2>, scalar_prefetch = 0 : i64, scratch_operands = 0 : i64, tpu.core_type = #tpu.core_type<tc>, window_params = [{transform_indices = @transform_0, window_bounds = array<i64: 384, 32>}, {transform_indices = @transform_1, window_bounds = array<i64: 384, 16>}, {pipeline_mode = #tpu.pipeline_mode<synchronous>, transform_indices = @transform_2, window_bounds = array<i64: 32, 32>}, {pipeline_mode = #tpu.pipeline_mode<synchronous>, transform_indices = @transform_3, window_bounds = array<i64: 16, 32>}, {pipeline_mode = #tpu.pipeline_mode<synchronous>, transform_indices = @transform_4, window_bounds = array<i64: 1, 32>}, {transform_indices = @transform_5, window_bounds = array<i64: 384, 32>}]} {
    %c0 = arith.constant 0 : index
    %c0_0 = arith.constant 0 : index
    %0 = vector.load %arg1[%c0, %c0_0] : memref<384x32xbf16, #tpu.memory_space<vmem>>, vector<384x32xbf16>
    %c0_1 = arith.constant 0 : index
    %c0_2 = arith.constant 0 : index
    %1 = vector.load %arg3[%c0_1, %c0_2] : memref<32x32xbf16, #tpu.memory_space<vmem>>, vector<32x32xbf16>
    %cst = arith.constant dense<0.000000e+00> : vector<384x32xf32>
    %2 = tpu.matmul %0, %1, %cst {dimension_numbers = #tpu.dot_dimension_numbers<[1], [0], [0], [1], [0, 0, 1, 1], [], []>} : vector<384x32xbf16>, vector<32x32xbf16>, vector<384x32xf32> -> vector<384x32xf32>
    %c0_3 = arith.constant 0 : index
    %c0_4 = arith.constant 0 : index
    %3 = vector.load %arg2[%c0_3, %c0_4] : memref<384x16xbf16, #tpu.memory_space<vmem>>, vector<384x16xbf16>
    %c0_5 = arith.constant 0 : index
    %c0_6 = arith.constant 0 : index
    %4 = vector.load %arg4[%c0_5, %c0_6] : memref<16x32xbf16, #tpu.memory_space<vmem>>, vector<16x32xbf16>
    %cst_7 = arith.constant dense<0.000000e+00> : vector<384x32xf32>
    %5 = tpu.matmul %3, %4, %cst_7 {dimension_numbers = #tpu.dot_dimension_numbers<[1], [0], [0], [1], [0, 0, 1, 1], [], []>} : vector<384x16xbf16>, vector<16x32xbf16>, vector<384x32xf32> -> vector<384x32xf32>
    %6 = arith.addf %2, %5 : vector<384x32xf32>
    %c0_8 = arith.constant 0 : index
    %c0_9 = arith.constant 0 : index
    %7 = vector.load %arg5[%c0_8, %c0_9] : memref<1x32xf32, #tpu.memory_space<vmem>>, vector<1x32xf32>
    %8 = vector.broadcast %7 : vector<1x32xf32> to vector<384x32xf32>
    %9 = arith.addf %6, %8 : vector<384x32xf32>
    %cst_10 = arith.constant 0.000000e+00 : f32
    %10 = vector.broadcast %cst_10 : f32 to vector<384x32xf32>
    %11 = arith.maximumf %9, %10 : vector<384x32xf32>
    %12 = arith.truncf %11 : vector<384x32xf32> to vector<384x32xbf16>
    %c0_11 = arith.constant 0 : index
    %c0_12 = arith.constant 0 : index
    %13 = vector.load %arg6[%c0_11, %c0_12] : memref<384x32xbf16, #tpu.memory_space<vmem>>, vector<384x32xbf16>
    tpu.vector_store %arg6[%c0_11, %c0_12], %12 {strides = array<i32>} : memref<384x32xbf16, #tpu.memory_space<vmem>>, vector<384x32xbf16>,
    return
  }
  func.func @transform_0(%arg0: i32) -> (i32, i32) {
    %c0_i32 = arith.constant 0 : i32
    %c0_i32_0 = arith.constant 0 : i32
    return %arg0, %c0_i32 : i32, i32
  }
  func.func @transform_1(%arg0: i32) -> (i32, i32) {
    %c0_i32 = arith.constant 0 : i32
    %c0_i32_0 = arith.constant 0 : i32
    return %arg0, %c0_i32 : i32, i32
  }
  func.func @transform_2(%arg0: i32) -> (i32, i32) {
    %c0_i32 = arith.constant 0 : i32
    %c0_i32_0 = arith.constant 0 : i32
    %c0_i32_1 = arith.constant 0 : i32
    return %c0_i32, %c0_i32_0 : i32, i32
  }
  func.func @transform_3(%arg0: i32) -> (i32, i32) {
    %c0_i32 = arith.constant 0 : i32
    %c0_i32_0 = arith.constant 0 : i32
    %c0_i32_1 = arith.constant 0 : i32
    return %c0_i32, %c0_i32_0 : i32, i32
  }
  func.func @transform_4(%arg0: i32) -> (i32, i32) {
    %c0_i32 = arith.constant 0 : i32
    %c0_i32_0 = arith.constant 0 : i32
    %c0_i32_1 = arith.constant 0 : i32
    return %c0_i32, %c0_i32_0 : i32, i32
  }
  func.func @transform_5(%arg0: i32) -> (i32, i32) {
    %c0_i32 = arith.constant 0 : i32
    %c0_i32_0 = arith.constant 0 : i32
    return %arg0, %c0_i32 : i32, i32
  }
}

module attributes {stable_mosaic.version = 11 : i64} {
  func.func @_head_kernel(%arg0: memref<2x384x32xbf16, #tpu.memory_space<vmem>>, %arg1: memref<32x512xf32, #tpu.memory_space<vmem>>, %arg2: memref<32x512xf32, #tpu.memory_space<vmem>>, %arg3: memref<1x512xf32, #tpu.memory_space<vmem>>, %arg4: memref<1x512xf32, #tpu.memory_space<vmem>>, %arg5: memref<1x512xf32, #tpu.memory_space<vmem>>, %arg6: memref<512x6xf32, #tpu.memory_space<vmem>>, %arg7: memref<1x6xf32, #tpu.memory_space<vmem>>, %arg8: memref<2x6xf32, #tpu.memory_space<vmem>>) attributes {dimension_semantics = [], scalar_prefetch = 0 : i64, scratch_operands = 0 : i64, tpu.core_type = #tpu.core_type<tc>} {
    %c0 = arith.constant 0 : index
    %c0_0 = arith.constant 0 : index
    %c0_1 = arith.constant 0 : index
    %0 = vector.load %arg0[%c0, %c0_0, %c0_1] : memref<2x384x32xbf16, #tpu.memory_space<vmem>>, vector<2x384x32xbf16>
    %1 = arith.extf %0 : vector<2x384x32xbf16> to vector<2x384x32xf32>
    %cst = arith.constant dense<0xFF800000> : vector<2x32xf32>
    %2 = vector.multi_reduction <maximumf>, %1, %cst [1] : vector<2x384x32xf32> to vector<2x32xf32>
    %cst_2 = arith.constant dense<0.000000e+00> : vector<2x32xf32>
    %3 = vector.multi_reduction <add>, %1, %cst_2 [1] : vector<2x384x32xf32> to vector<2x32xf32>
    %cst_3 = arith.constant 3.840000e+02 : f32
    %4 = vector.broadcast %cst_3 : f32 to vector<2x32xf32>
    %5 = arith.divf %3, %4 : vector<2x32xf32>
    %c0_4 = arith.constant 0 : index
    %c0_5 = arith.constant 0 : index
    %6 = vector.load %arg1[%c0_4, %c0_5] : memref<32x512xf32, #tpu.memory_space<vmem>>, vector<32x512xf32>
    %cst_6 = arith.constant dense<0.000000e+00> : vector<2x512xf32>
    %7 = tpu.matmul %2, %6, %cst_6 {dimension_numbers = #tpu.dot_dimension_numbers<[1], [0], [0], [1], [0, 0, 1, 1], [], []>} : vector<2x32xf32>, vector<32x512xf32>, vector<2x512xf32> -> vector<2x512xf32>
    %c0_7 = arith.constant 0 : index
    %c0_8 = arith.constant 0 : index
    %8 = vector.load %arg2[%c0_7, %c0_8] : memref<32x512xf32, #tpu.memory_space<vmem>>, vector<32x512xf32>
    %cst_9 = arith.constant dense<0.000000e+00> : vector<2x512xf32>
    %9 = tpu.matmul %5, %8, %cst_9 {dimension_numbers = #tpu.dot_dimension_numbers<[1], [0], [0], [1], [0, 0, 1, 1], [], []>} : vector<2x32xf32>, vector<32x512xf32>, vector<2x512xf32> -> vector<2x512xf32>
    %10 = arith.addf %7, %9 : vector<2x512xf32>
    %c0_10 = arith.constant 0 : index
    %c0_11 = arith.constant 0 : index
    %11 = vector.load %arg3[%c0_10, %c0_11] : memref<1x512xf32, #tpu.memory_space<vmem>>, vector<1x512xf32>
    %12 = vector.broadcast %11 : vector<1x512xf32> to vector<2x512xf32>
    %13 = arith.addf %10, %12 : vector<2x512xf32>
    %cst_12 = arith.constant 0.000000e+00 : f32
    %14 = vector.broadcast %cst_12 : f32 to vector<2x512xf32>
    %15 = arith.maximumf %13, %14 : vector<2x512xf32>
    %16 = vector.broadcast %cst_12 : f32 to vector<2x512xf32>
    %17 = arith.subf %13, %16 : vector<2x512xf32>
    %18 = arith.cmpf one, %17, %17 : vector<2x512xf32>
    %19 = vector.broadcast %cst_12 : f32 to vector<2x512xf32>
    %20 = arith.addf %13, %19 : vector<2x512xf32>
    %21 = math.absf %17 : vector<2x512xf32>
    %cst_13 = arith.constant 0.000000e+00 : f32
    %22 = vector.broadcast %cst_13 : f32 to vector<2x512xf32>
    %23 = arith.subf %22, %21 : vector<2x512xf32>
    %24 = math.exp %23 : vector<2x512xf32>
    %25 = math.log1p %24 : vector<2x512xf32>
    %26 = arith.addf %15, %25 : vector<2x512xf32>
    %27 = arith.select %18, %20, %26 : vector<2x512xi1>, vector<2x512xf32>
    %28 = math.tanh %27 : vector<2x512xf32>
    %29 = arith.mulf %13, %28 : vector<2x512xf32>
    %c0_14 = arith.constant 0 : index
    %c0_15 = arith.constant 0 : index
    %30 = vector.load %arg4[%c0_14, %c0_15] : memref<1x512xf32, #tpu.memory_space<vmem>>, vector<1x512xf32>
    %31 = vector.broadcast %30 : vector<1x512xf32> to vector<2x512xf32>
    %32 = arith.mulf %29, %31 : vector<2x512xf32>
    %c0_16 = arith.constant 0 : index
    %c0_17 = arith.constant 0 : index
    %33 = vector.load %arg5[%c0_16, %c0_17] : memref<1x512xf32, #tpu.memory_space<vmem>>, vector<1x512xf32>
    %34 = vector.broadcast %33 : vector<1x512xf32> to vector<2x512xf32>
    %35 = arith.addf %32, %34 : vector<2x512xf32>
    %c0_18 = arith.constant 0 : index
    %c0_19 = arith.constant 0 : index
    %36 = vector.load %arg6[%c0_18, %c0_19] : memref<512x6xf32, #tpu.memory_space<vmem>>, vector<512x6xf32>
    %cst_20 = arith.constant dense<0.000000e+00> : vector<2x6xf32>
    %37 = tpu.matmul %35, %36, %cst_20 {dimension_numbers = #tpu.dot_dimension_numbers<[1], [0], [0], [1], [0, 0, 1, 1], [], []>} : vector<2x512xf32>, vector<512x6xf32>, vector<2x6xf32> -> vector<2x6xf32>
    %c0_21 = arith.constant 0 : index
    %c0_22 = arith.constant 0 : index
    %38 = vector.load %arg7[%c0_21, %c0_22] : memref<1x6xf32, #tpu.memory_space<vmem>>, vector<1x6xf32>
    %39 = vector.broadcast %38 : vector<1x6xf32> to vector<2x6xf32>
    %40 = arith.addf %37, %39 : vector<2x6xf32>
    %c0_23 = arith.constant 0 : index
    %c0_24 = arith.constant 0 : index
    %41 = vector.load %arg8[%c0_23, %c0_24] : memref<2x6xf32, #tpu.memory_space<vmem>>, vector<2x6xf32>
    tpu.vector_store %arg8[%c0_23, %c0_24], %40 {strides = array<i32>} : memref<2x6xf32, #tpu.memory_space<vmem>>, vector<2x6xf32>,
    return
  }
}

</mosaic_0001>

<llo_original>
// kernel: model_forward.6
$region0: #{model_forward.6}
  #allocation0 [shape = 'u32[]', space=smem, size = 0x4, offset = 0x4, fixed_abs, tag = 'smem constant byte address 0x4 - core index']
  #allocation1 [shape = 'u32[72,128]{1,0:T(1,128)}', space=vmem, size = 0x9000, scoped, tag = 'internal scratch']
  %s0 = inlined_call_operand.vmem [shape: bf16[768,16], index: 0, kind: input, shape index: {}]
  %s1 = inlined_call_operand.vmem [shape: bf16[16,32], index: 1, kind: input, shape index: {}]
  %s2 = inlined_call_operand.vmem [shape: f32[1,32], index: 2, kind: input, shape index: {}]
  %s3 = inlined_call_operand.vmem [shape: bf16[768,32], index: 3, kind: output, shape index: {}]
  %s4 = sld [smem:[#allocation0]]
  $region45: #{model_forward.6} parent=0
    _
  %s6 = ssub.s32 1, %s4
  %s7 = scalar_select 0, %s6, %s4
  loop: start=0, step=1, limit=4
  $region2: #{model_forward.6} parent=0 // loop_pre_header
    _
  $region3: #{model_forward.6} parent=0 // loop_header
    %s9 = sphi 0, %s13
    %p10 = scmp.ge.s32.totalorder %s9, 4
    %s19 = sphi 0, %s21
    %s22 = sphi 0, %s19
    %s23 = sphi 0, %s22
    %s39 = sphi 0, %s23
    %s43 = sphi 0, %s43
    %s45 = sphi 0, %s43
    %s46 = sphi 0, %s45
    %s60 = sphi 0, %s46
    %s64 = sphi 0, %s64
    %s66 = sphi 0, %s64
    %s67 = sphi 0, %s66
    %s81 = sphi 0, %s67
    %s87 = sphi 0, %s89
    %s90 = sphi 0, %s87
    %s91 = sphi 0, %s90
    %s107 = sphi 0, %s91
  $region4: #{model_forward.6} parent=0 // loop_header_branch
    %12 = sbr.rel (%p10) target = $region8
  $region5: #{model_forward.6} parent=0 // loop_body
    %s14 = ssub.s32 %s9, 1
    %s15 = ssub.s32 %s9, 2
    %s16 = sadd.s32 %s9, 1
    %s17 = ssub.s32 %s9, %s16
    %p18 = scmp.eq.s32.totalorder %s17, 0
    %s20 = sadd.s32 %s19, 1
    %s21 = scalar_select %p18, %s19, %s20
    %p24 = pneg %p18
    %p25 = scmp.eq.s32.totalorder %s9, 1
    %p26 = por %p24, %p25
    %p27 = scmp.ne.s32.totalorder %s19, %s22
    %p28 = scmp.eq.s32.totalorder %s9, 0
    %p29 = por %p27, %p28
    %p30 = scmp.ne.s32.totalorder %s19, %s22
    %p31 = scmp.eq.s32.totalorder %s14, 1
    %p32 = por %p30, %p31
    %p33 = scmp.ne.s32.totalorder %s22, %s23
    %p34 = scmp.eq.s32.totalorder %s14, 0
    %p35 = por %p33, %p34
    %p36 = scmp.ne.s32.totalorder %s22, %s23
    %p37 = scmp.eq.s32.totalorder %s15, 1
    %p38 = por %p36, %p37
    %p40 = scmp.ne.s32.totalorder %s23, %s39
    %p41 = scmp.eq.s32.totalorder %s15, 0
    %p42 = por %p40, %p41
    %s44 = sadd.s32 %s43, 1
    %p47 = scmp.eq.s32.totalorder %s9, 1
    %p48 = scmp.ne.s32.totalorder %s43, %s45
    %p49 = scmp.eq.s32.totalorder %s9, 0
    %p50 = por %p48, %p49
    %p51 = scmp.ne.s32.totalorder %s43, %s45
    %p52 = scmp.eq.s32.totalorder %s14, 1
    %p53 = por %p51, %p52
    %p54 = scmp.ne.s32.totalorder %s45, %s46
    %p55 = scmp.eq.s32.totalorder %s14, 0
    %p56 = por %p54, %p55
    %p57 = scmp.ne.s32.totalorder %s45, %s46
    %p58 = scmp.eq.s32.totalorder %s15, 1
    %p59 = por %p57, %p58
    %p61 = scmp.ne.s32.totalorder %s46, %s60
    %p62 = scmp.eq.s32.totalorder %s15, 0
    %p63 = por %p61, %p62
    %s65 = sadd.s32 %s64, 1
    %p68 = scmp.eq.s32.totalorder %s9, 1
    %p69 = scmp.ne.s32.totalorder %s64, %s66
    %p70 = scmp.eq.s32.totalorder %s9, 0
    %p71 = por %p69, %p70
    %p72 = scmp.ne.s32.totalorder %s64, %s66
    %p73 = scmp.eq.s32.totalorder %s14, 1
    %p74 = por %p72, %p73
    %p75 = scmp.ne.s32.totalorder %s66, %s67
    %p76 = scmp.eq.s32.totalorder %s14, 0
    %p77 = por %p75, %p76
    %p78 = scmp.ne.s32.totalorder %s66, %s67
    %p79 = scmp.eq.s32.totalorder %s15, 1
    %p80 = por %p78, %p79
    %p82 = scmp.ne.s32.totalorder %s67, %s81
    %p83 = scmp.eq.s32.totalorder %s15, 0
    %p84 = por %p82, %p83
    %s85 = ssub.s32 %s9, %s16
    %p86 = scmp.eq.s32.totalorder %s85, 0
    %s88 = sadd.s32 %s87, 1
    %s89 = scalar_select %p86, %s87, %s88
    %p92 = pneg %p86
    %p93 = scmp.eq.s32.totalorder %s9, 1
    %p94 = por %p92, %p93
    %p95 = scmp.ne.s32.totalorder %s87, %s90
    %p96 = scmp.eq.s32.totalorder %s9, 0
    %p97 = por %p95, %p96
    %p98 = scmp.ne.s32.totalorder %s87, %s90
    %p99 = scmp.eq.s32.totalorder %s14, 1
    %p100 = por %p98, %p99
    %p101 = scmp.ne.s32.totalorder %s90, %s91
    %p102 = scmp.eq.s32.totalorder %s14, 0
    %p103 = por %p101, %p102
    %p104 = scmp.ne.s32.totalorder %s90, %s91
    %p105 = scmp.eq.s32.totalorder %s15, 1
    %p106 = por %p104, %p105
    %p108 = scmp.ne.s32.totalorder %s91, %s107
    %p109 = scmp.eq.s32.totalorder %s15, 0
    %p110 = por %p108, %p109
    %p111 = scmp.le.s32.totalorder 1, %s9
    %p112 = scmp.lt.s32.totalorder %s9, 3
    %p113 = pnand %p111, %p112
    %p114 = pneg %p113
    // Predicated region
    $region9: #{model_forward.6} parent=5 // pred_check
      _
    $region10: #{model_forward.6} parent=5 // pred_check_branch
      %116 = sbr.rel (%p113) target = $region12
    $region11: #{model_forward.6} parent=5 // pred_region
      %s117 = ssub.s32 %s9, 1
      // Predicated region
      $region13: #{model_forward.6} parent=11 // pred_check
        %p118 = pneg %p56
      $region14: #{model_forward.6} parent=11 // pred_check_branch
        %120 = sbr.rel (%p118) target = $region16
      $region15: #{model_forward.6} parent=11 // pred_region
        _
      $region16: #{model_forward.6} parent=11 // pred_fallthru
        _
      // Predicated region
      $region17: #{model_forward.6} parent=11 // pred_check
        %p121 = pneg %p77
      $region18: #{model_forward.6} parent=11 // pred_check_branch
        %123 = sbr.rel (%p121) target = $region20
      $region19: #{model_forward.6} parent=11 // pred_region
        _
      $region20: #{model_forward.6} parent=11 // pred_fallthru
        _
    $region12: #{model_forward.6} parent=5 // pred_fallthru
      _
    %p124 = scmp.lt.s32.totalorder %s9, 2
    // Predicated region
    $region21: #{model_forward.6} parent=5 // pred_check
      %p125 = pneg %p124
    $region22: #{model_forward.6} parent=5 // pred_check_branch
      %127 = sbr.rel (%p125) target = $region24
    $region23: #{model_forward.6} parent=5 // pred_region
      // Predicated region
      $region25: #{model_forward.6} parent=23 // pred_check
        %p128 = pneg %p29
      $region26: #{model_forward.6} parent=23 // pred_check_branch
        %130 = sbr.rel (%p128) target = $region28
      $region27: #{model_forward.6} parent=23 // pred_region
        %s131 = smul.u32 48, %s9
        %p132 = scmp.lt.s32.totalorder %s131, 95
        %s133 = scalar_select %p132, %s131, 95
        %s134 = smul.addr %s133, 4
        %s135 = scalar_lea.vmem %s0, %s134
        %s136 = smul.u32 48, %s9
      $region28: #{model_forward.6} parent=23 // pred_fallthru
        _
    $region24: #{model_forward.6} parent=5 // pred_fallthru
      _
    %p137 = scmp.le.s32.totalorder 1, %s9
    %p138 = scmp.lt.s32.totalorder %s9, 3
    %p139 = pnand %p137, %p138
    %p140 = pneg %p139
    // Predicated region
    $region29: #{model_forward.6} parent=5 // pred_check
      _
    $region30: #{model_forward.6} parent=5 // pred_check_branch
      %142 = sbr.rel (%p139) target = $region32
    $region31: #{model_forward.6} parent=5 // pred_region
      %s143 = ssub.s32 %s9, 1
      %s144 = smul.u32 48, %s14
      %p145 = scmp.lt.s32.totalorder %s144, 95
      %s146 = scalar_select %p145, %s144, 95
      %s147 = smul.addr %s146, 4
      %s148 = scalar_lea.vmem %s0, %s147
      %p149 = pneg %p35
      %p150 = pneg %p32
      %p151 = pneg %p56
      %p152 = pneg %p53
      %p153 = pneg %p77
      %p154 = pneg %p74
      %p155 = pneg %p103
      %p156 = pneg %p100
      %s157 = smul.u32 48, %s14
      %p158 = scmp.lt.s32.totalorder %s157, 95
      %s159 = scalar_select %p158, %s157, 95
      %s160 = smul.addr %s159, 4
      %s161 = scalar_lea.vmem %s3, %s160
      %s162 = smul.u32 48, %s14
      %p163 = scmp.lt.s32.totalorder %s162, 95
      %s164 = scalar_select %p163, %s162, 95
      %s165 = smul.addr %s164, 4
      %s166 = scalar_lea.vmem %s0, %s165
      %s167 = smul.u32 48, %s14
      %s168 = smul.u32 48, %s14
      %p169 = scmp.lt.s32.totalorder %s168, 95
      %s170 = scalar_select %p169, %s168, 95
      %s171 = smul.addr %s170, 4
      %s172 = scalar_lea.vmem %s3, %s171
      %s173 = smul.u32 48, %s14
      %v175 = vld [vmem:[%s166] sm:$0xf]
      %v176 = vld [vmem:[%s166 + $0x4] sm:$0xf]
      %v177 = vld [vmem:[%s166 + $0x8] sm:$0xf]
      %v178 = vld [vmem:[%s166 + $0xc] sm:$0xf]
      %v179 = vld [vmem:[%s166 + $0x10] sm:$0xf]
      %v180 = vld [vmem:[%s166 + $0x14] sm:$0xf]
      %v181 = vld [vmem:[%s166 + $0x18] sm:$0xf]
      %v182 = vld [vmem:[%s166 + $0x1c] sm:$0xf]
      %v183 = vld [vmem:[%s166 + $0x20] sm:$0xf]
      %v184 = vld [vmem:[%s166 + $0x24] sm:$0xf]
      %v185 = vld [vmem:[%s166 + $0x28] sm:$0xf]
      %v186 = vld [vmem:[%s166 + $0x2c] sm:$0xf]
      %v187 = vld [vmem:[%s166 + $0x30] sm:$0xf]
      %v188 = vld [vmem:[%s166 + $0x34] sm:$0xf]
      %v189 = vld [vmem:[%s166 + $0x38] sm:$0xf]
      %v190 = vld [vmem:[%s166 + $0x3c] sm:$0xf]
      %v191 = vld [vmem:[%s166 + $0x40] sm:$0xf]
      %v192 = vld [vmem:[%s166 + $0x44] sm:$0xf]
      %v193 = vld [vmem:[%s166 + $0x48] sm:$0xf]
      %v194 = vld [vmem:[%s166 + $0x4c] sm:$0xf]
      %v195 = vld [vmem:[%s166 + $0x50] sm:$0xf]
      %v196 = vld [vmem:[%s166 + $0x54] sm:$0xf]
      %v197 = vld [vmem:[%s166 + $0x58] sm:$0xf]
      %v198 = vld [vmem:[%s166 + $0x5c] sm:$0xf]
      %v199 = vld [vmem:[%s166 + $0x60] sm:$0xf]
      %v200 = vld [vmem:[%s166 + $0x64] sm:$0xf]
      %v201 = vld [vmem:[%s166 + $0x68] sm:$0xf]
      %v202 = vld [vmem:[%s166 + $0x6c] sm:$0xf]
      %v203 = vld [vmem:[%s166 + $0x70] sm:$0xf]
      %v204 = vld [vmem:[%s166 + $0x74] sm:$0xf]
      %v205 = vld [vmem:[%s166 + $0x78] sm:$0xf]
      %v206 = vld [vmem:[%s166 + $0x7c] sm:$0xf]
      %v207 = vld [vmem:[%s166 + $0x80] sm:$0xf]
      %v208 = vld [vmem:[%s166 + $0x84] sm:$0xf]
      %v209 = vld [vmem:[%s166 + $0x88] sm:$0xf]
      %v210 = vld [vmem:[%s166 + $0x8c] sm:$0xf]
      %v211 = vld [vmem:[%s166 + $0x90] sm:$0xf]
      %v212 = vld [vmem:[%s166 + $0x94] sm:$0xf]
      %v213 = vld [vmem:[%s166 + $0x98] sm:$0xf]
      %v214 = vld [vmem:[%s166 + $0x9c] sm:$0xf]
      %v215 = vld [vmem:[%s166 + $0xa0] sm:$0xf]
      %v216 = vld [vmem:[%s166 + $0xa4] sm:$0xf]
      %v217 = vld [vmem:[%s166 + $0xa8] sm:$0xf]
      %v218 = vld [vmem:[%s166 + $0xac] sm:$0xf]
      %v219 = vld [vmem:[%s166 + $0xb0] sm:$0xf]
      %v220 = vld [vmem:[%s166 + $0xb4] sm:$0xf]
      %v221 = vld [vmem:[%s166 + $0xb8] sm:$0xf]
      %v222 = vld [vmem:[%s166 + $0xbc] sm:$0xf]
      %v223 = vld [vmem:[%s1] sm:$0xf]
      %v224 = vld [vmem:[%s1 + $0x4] sm:$0xf]
      %v225 = vld [vmem:[%s2] sm:$0x1]
      %v227 = vperm.slane %v225, 0
      %v277 = vunpack.c.l.b16 %v175
      %v278 = vunpack.c.l.b16 %v176
      %v279 = vunpack.c.l.b16 %v177
      %v280 = vunpack.c.l.b16 %v178
      %v281 = vunpack.c.l.b16 %v179
      %v282 = vunpack.c.l.b16 %v180
      %v283 = vunpack.c.l.b16 %v181
      %v284 = vunpack.c.l.b16 %v182
      %v285 = vunpack.c.l.b16 %v183
      %v286 = vunpack.c.l.b16 %v184
      %v287 = vunpack.c.l.b16 %v185
      %v288 = vunpack.c.l.b16 %v186
      %v289 = vunpack.c.l.b16 %v187
      %v290 = vunpack.c.l.b16 %v188
      %v291 = vunpack.c.l.b16 %v189
      %v292 = vunpack.c.l.b16 %v190
      %v293 = vunpack.c.l.b16 %v191
      %v294 = vunpack.c.l.b16 %v192
      %v295 = vunpack.c.l.b16 %v193
      %v296 = vunpack.c.l.b16 %v194
      %v297 = vunpack.c.l.b16 %v195
      %v298 = vunpack.c.l.b16 %v196
      %v299 = vunpack.c.l.b16 %v197
      %v300 = vunpack.c.l.b16 %v198
      %v301 = vunpack.c.l.b16 %v199
      %v302 = vunpack.c.l.b16 %v200
      %v303 = vunpack.c.l.b16 %v201
      %v304 = vunpack.c.l.b16 %v202
      %v305 = vunpack.c.l.b16 %v203
      %v306 = vunpack.c.l.b16 %v204
      %v307 = vunpack.c.l.b16 %v205
      %v308 = vunpack.c.l.b16 %v206
      %v309 = vunpack.c.l.b16 %v207
      %v310 = vunpack.c.l.b16 %v208
      %v311 = vunpack.c.l.b16 %v209
      %v312 = vunpack.c.l.b16 %v210
      %v313 = vunpack.c.l.b16 %v211
      %v314 = vunpack.c.l.b16 %v212
      %v315 = vunpack.c.l.b16 %v213
      %v316 = vunpack.c.l.b16 %v214
      %v317 = vunpack.c.l.b16 %v215
      %v318 = vunpack.c.l.b16 %v216
      %v319 = vunpack.c.l.b16 %v217
      %v320 = vunpack.c.l.b16 %v218
      %v321 = vunpack.c.l.b16 %v219
      %v322 = vunpack.c.l.b16 %v220
      %v323 = vunpack.c.l.b16 %v221
      %v324 = vunpack.c.l.b16 %v222
      %v325 = vpack.c.b16 %v278, %v277
      %v326 = vpack.c.b16 %v280, %v279
      %v327 = vpack.c.b16 %v282, %v281
      %v328 = vpack.c.b16 %v284, %v283
      %v329 = vpack.c.b16 %v286, %v285
      %v330 = vpack.c.b16 %v288, %v287
      %v331 = vpack.c.b16 %v290, %v289
      %v332 = vpack.c.b16 %v292, %v291
      %v333 = vpack.c.b16 %v294, %v293
      %v334 = vpack.c.b16 %v296, %v295
      %v335 = vpack.c.b16 %v298, %v297
      %v336 = vpack.c.b16 %v300, %v299
      %v337 = vpack.c.b16 %v302, %v301
      %v338 = vpack.c.b16 %v304, %v303
      %v339 = vpack.c.b16 %v306, %v305
      %v340 = vpack.c.b16 %v308, %v307
      %v341 = vpack.c.b16 %v310, %v309
      %v342 = vpack.c.b16 %v312, %v311
      %v343 = vpack.c.b16 %v314, %v313
      %v344 = vpack.c.b16 %v316, %v315
      %v345 = vpack.c.b16 %v318, %v317
      %v346 = vpack.c.b16 %v320, %v319
      %v347 = vpack.c.b16 %v322, %v321
      %v348 = vpack.c.b16 %v324, %v323
      %v351 = vunpack.c.l.b16 %v223
      %v352 = vunpack.c.l.b16 %v224
      %v353 = vpack.c.b16 %v352, %v351
      %vm355 = vcmask 130048
      %v357 = vsel %vm355, %v325, 0
      %v360 = vsel %vm355, %v326, 0
      %v363 = vsel %vm355, %v327, 0
      %v366 = vsel %vm355, %v328, 0
      %v369 = vsel %vm355, %v329, 0
      %v372 = vsel %vm355, %v330, 0
      %v375 = vsel %vm355, %v331, 0
      %v378 = vsel %vm355, %v332, 0
      %v381 = vsel %vm355, %v333, 0
      %v384 = vsel %vm355, %v334, 0
      %v387 = vsel %vm355, %v335, 0
      %v390 = vsel %vm355, %v336, 0
      %v393 = vsel %vm355, %v337, 0
      %v396 = vsel %vm355, %v338, 0
      %v399 = vsel %vm355, %v339, 0
      %v402 = vsel %vm355, %v340, 0
      %v405 = vsel %vm355, %v341, 0
      %v408 = vsel %vm355, %v342, 0
      %v411 = vsel %vm355, %v343, 0
      %v414 = vsel %vm355, %v344, 0
      %v417 = vsel %vm355, %v345, 0
      %v420 = vsel %vm355, %v346, 0
      %v423 = vsel %vm355, %v347, 0
      %v426 = vsel %vm355, %v348, 0
      %428 = vmatpush.bf16.msra.mxu0 0
      %429 = vmatpush.bf16.msra.mxu0 0
      %430 = vmatpush.bf16.msra.mxu0 0
      %431 = vmatpush.bf16.msra.mxu0 0
      %432 = vmatpush.bf16.msra.mxu0 0
      %433 = vmatpush.bf16.msra.mxu0 0
      %434 = vmatpush.bf16.msra.mxu0 0
      %435 = vmatpush.bf16.msra.mxu0 %v353
      %436 = vmatmul.bf16.gmra.mxu0 %v357
      %v437 = vpop.f32.mrf.mxu0
      %v438 = vadd.f32 %v227, %v437
      %v439 = vpop.f32.mrf.mxu0
      %v440 = vadd.f32 %v227, %v439
      %441 = vmatmul.bf16.gmra.mxu0 %v360
      %v442 = vpop.f32.mrf.mxu0
      %v443 = vadd.f32 %v227, %v442
      %v444 = vpop.f32.mrf.mxu0
      %v445 = vadd.f32 %v227, %v444
      %446 = vmatmul.bf16.gmra.mxu0 %v363
      %v447 = vpop.f32.mrf.mxu0
      %v448 = vadd.f32 %v227, %v447
      %v449 = vpop.f32.mrf.mxu0
      %v450 = vadd.f32 %v227, %v449
      %451 = vmatmul.bf16.gmra.mxu0 %v366
      %v452 = vpop.f32.mrf.mxu0
      %v453 = vadd.f32 %v227, %v452
      %v454 = vpop.f32.mrf.mxu0
      %v455 = vadd.f32 %v227, %v454
      %456 = vmatmul.bf16.gmra.mxu0 %v369
      %v457 = vpop.f32.mrf.mxu0
      %v458 = vadd.f32 %v227, %v457
      %v459 = vpop.f32.mrf.mxu0
      %v460 = vadd.f32 %v227, %v459
      %461 = vmatmul.bf16.gmra.mxu0 %v372
      %v462 = vpop.f32.mrf.mxu0
      %v463 = vadd.f32 %v227, %v462
      %v464 = vpop.f32.mrf.mxu0
      %v465 = vadd.f32 %v227, %v464
      %466 = vmatmul.bf16.gmra.mxu0 %v375
      %v467 = vpop.f32.mrf.mxu0
      %v468 = vadd.f32 %v227, %v467
      %v469 = vpop.f32.mrf.mxu0
      %v470 = vadd.f32 %v227, %v469
      %471 = vmatmul.bf16.gmra.mxu0 %v378
      %v472 = vpop.f32.mrf.mxu0
      %v473 = vadd.f32 %v227, %v472
      %v474 = vpop.f32.mrf.mxu0
      %v475 = vadd.f32 %v227, %v474
      %476 = vmatmul.bf16.gmra.mxu0 %v381
      %v477 = vpop.f32.mrf.mxu0
      %v478 = vadd.f32 %v227, %v477
      %v479 = vpop.f32.mrf.mxu0
      %v480 = vadd.f32 %v227, %v479
      %481 = vmatmul.bf16.gmra.mxu0 %v384
      %v482 = vpop.f32.mrf.mxu0
      %v483 = vadd.f32 %v227, %v482
      %v484 = vpop.f32.mrf.mxu0
      %v485 = vadd.f32 %v227, %v484
      %486 = vmatmul.bf16.gmra.mxu0 %v387
      %v487 = vpop.f32.mrf.mxu0
      %v488 = vadd.f32 %v227, %v487
      %v489 = vpop.f32.mrf.mxu0
      %v490 = vadd.f32 %v227, %v489
      %491 = vmatmul.bf16.gmra.mxu0 %v390
      %v492 = vpop.f32.mrf.mxu0
      %v493 = vadd.f32 %v227, %v492
      %v494 = vpop.f32.mrf.mxu0
      %v495 = vadd.f32 %v227, %v494
      %496 = vmatmul.bf16.gmra.mxu0 %v393
      %v497 = vpop.f32.mrf.mxu0
      %v498 = vadd.f32 %v227, %v497
      %v499 = vpop.f32.mrf.mxu0
      %v500 = vadd.f32 %v227, %v499
      %501 = vmatmul.bf16.gmra.mxu0 %v396
      %v502 = vpop.f32.mrf.mxu0
      %v503 = vadd.f32 %v227, %v502
      %v504 = vpop.f32.mrf.mxu0
      %v505 = vadd.f32 %v227, %v504
      %506 = vmatmul.bf16.gmra.mxu0 %v399
      %v507 = vpop.f32.mrf.mxu0
      %v508 = vadd.f32 %v227, %v507
      %v509 = vpop.f32.mrf.mxu0
      %v510 = vadd.f32 %v227, %v509
      %511 = vmatmul.bf16.gmra.mxu0 %v402
      %v512 = vpop.f32.mrf.mxu0
      %v513 = vadd.f32 %v227, %v512
      %v514 = vpop.f32.mrf.mxu0
      %v515 = vadd.f32 %v227, %v514
      %516 = vmatmul.bf16.gmra.mxu0 %v405
      %v517 = vpop.f32.mrf.mxu0
      %v518 = vadd.f32 %v227, %v517
      %v519 = vpop.f32.mrf.mxu0
      %v520 = vadd.f32 %v227, %v519
      %521 = vmatmul.bf16.gmra.mxu0 %v408
      %v522 = vpop.f32.mrf.mxu0
      %v523 = vadd.f32 %v227, %v522
      %v524 = vpop.f32.mrf.mxu0
      %v525 = vadd.f32 %v227, %v524
      %526 = vmatmul.bf16.gmra.mxu0 %v411
      %v527 = vpop.f32.mrf.mxu0
      %v528 = vadd.f32 %v227, %v527
      %v529 = vpop.f32.mrf.mxu0
      %v530 = vadd.f32 %v227, %v529
      %531 = vmatmul.bf16.gmra.mxu0 %v414
      %v532 = vpop.f32.mrf.mxu0
      %v533 = vadd.f32 %v227, %v532
      %v534 = vpop.f32.mrf.mxu0
      %v535 = vadd.f32 %v227, %v534
      %536 = vmatmul.bf16.gmra.mxu0 %v417
      %v537 = vpop.f32.mrf.mxu0
      %v538 = vadd.f32 %v227, %v537
      %v539 = vpop.f32.mrf.mxu0
      %v540 = vadd.f32 %v227, %v539
      %541 = vmatmul.bf16.gmra.mxu0 %v420
      %v542 = vpop.f32.mrf.mxu0
      %v543 = vadd.f32 %v227, %v542
      %v544 = vpop.f32.mrf.mxu0
      %v545 = vadd.f32 %v227, %v544
      %546 = vmatmul.bf16.gmra.mxu0 %v423
      %v547 = vpop.f32.mrf.mxu0
      %v548 = vadd.f32 %v227, %v547
      %v549 = vpop.f32.mrf.mxu0
      %v550 = vadd.f32 %v227, %v549
      %551 = vmatmul.bf16.gmra.mxu0 %v426
      %v552 = vpop.f32.mrf.mxu0
      %v553 = vadd.f32 %v227, %v552
      %v554 = vpop.f32.mrf.mxu0
      %v555 = vadd.f32 %v227, %v554
      %556 = vdwg.mxu0
      %v557 = vmax.f32 %v438, 0.0
      %v558 = vmax.f32 %v440, 0.0
      %v559 = vmax.f32 %v443, 0.0
      %v560 = vmax.f32 %v445, 0.0
      %v561 = vmax.f32 %v448, 0.0
      %v562 = vmax.f32 %v450, 0.0
      %v563 = vmax.f32 %v453, 0.0
      %v564 = vmax.f32 %v455, 0.0
      %v565 = vmax.f32 %v458, 0.0
      %v566 = vmax.f32 %v460, 0.0
      %v567 = vmax.f32 %v463, 0.0
      %v568 = vmax.f32 %v465, 0.0
      %v569 = vmax.f32 %v468, 0.0
      %v570 = vmax.f32 %v470, 0.0
      %v571 = vmax.f32 %v473, 0.0
      %v572 = vmax.f32 %v475, 0.0
      %v573 = vmax.f32 %v478, 0.0
      %v574 = vmax.f32 %v480, 0.0
      %v575 = vmax.f32 %v483, 0.0
      %v576 = vmax.f32 %v485, 0.0
      %v577 = vmax.f32 %v488, 0.0
      %v578 = vmax.f32 %v490, 0.0
      %v579 = vmax.f32 %v493, 0.0
      %v580 = vmax.f32 %v495, 0.0
      %v581 = vmax.f32 %v498, 0.0
      %v582 = vmax.f32 %v500, 0.0
      %v583 = vmax.f32 %v503, 0.0
      %v584 = vmax.f32 %v505, 0.0
      %v585 = vmax.f32 %v508, 0.0
      %v586 = vmax.f32 %v510, 0.0
      %v587 = vmax.f32 %v513, 0.0
      %v588 = vmax.f32 %v515, 0.0
      %v589 = vmax.f32 %v518, 0.0
      %v590 = vmax.f32 %v520, 0.0
      %v591 = vmax.f32 %v523, 0.0
      %v592 = vmax.f32 %v525, 0.0
      %v593 = vmax.f32 %v528, 0.0
      %v594 = vmax.f32 %v530, 0.0
      %v595 = vmax.f32 %v533, 0.0
      %v596 = vmax.f32 %v535, 0.0
      %v597 = vmax.f32 %v538, 0.0
      %v598 = vmax.f32 %v540, 0.0
      %v599 = vmax.f32 %v543, 0.0
      %v600 = vmax.f32 %v545, 0.0
      %v601 = vmax.f32 %v548, 0.0
      %v602 = vmax.f32 %v550, 0.0
      %v603 = vmax.f32 %v553, 0.0
      %v604 = vmax.f32 %v555, 0.0
      %v605 = vpack.c.bf16 %v557, %v557
      %v606 = vpack.c.bf16 %v558, %v558
      %v607 = vpack.c.bf16 %v559, %v559
      %v608 = vpack.c.bf16 %v560, %v560
      %v609 = vpack.c.bf16 %v561, %v561
      %v610 = vpack.c.bf16 %v562, %v562
      %v611 = vpack.c.bf16 %v563, %v563
      %v612 = vpack.c.bf16 %v564, %v564
      %v613 = vpack.c.bf16 %v565, %v565
      %v614 = vpack.c.bf16 %v566, %v566
      %v615 = vpack.c.bf16 %v567, %v567
      %v616 = vpack.c.bf16 %v568, %v568
      %v617 = vpack.c.bf16 %v569, %v569
      %v618 = vpack.c.bf16 %v570, %v570
      %v619 = vpack.c.bf16 %v571, %v571
      %v620 = vpack.c.bf16 %v572, %v572
      %v621 = vpack.c.bf16 %v573, %v573
      %v622 = vpack.c.bf16 %v574, %v574
      %v623 = vpack.c.bf16 %v575, %v575
      %v624 = vpack.c.bf16 %v576, %v576
      %v625 = vpack.c.bf16 %v577, %v577
      %v626 = vpack.c.bf16 %v578, %v578
      %v627 = vpack.c.bf16 %v579, %v579
      %v628 = vpack.c.bf16 %v580, %v580
      %v629 = vpack.c.bf16 %v581, %v581
      %v630 = vpack.c.bf16 %v582, %v582
      %v631 = vpack.c.bf16 %v583, %v583
      %v632 = vpack.c.bf16 %v584, %v584
      %v633 = vpack.c.bf16 %v585, %v585
      %v634 = vpack.c.bf16 %v586, %v586
      %v635 = vpack.c.bf16 %v587, %v587
      %v636 = vpack.c.bf16 %v588, %v588
      %v637 = vpack.c.bf16 %v589, %v589
      %v638 = vpack.c.bf16 %v590, %v590
      %v639 = vpack.c.bf16 %v591, %v591
      %v640 = vpack.c.bf16 %v592, %v592
      %v641 = vpack.c.bf16 %v593, %v593
      %v642 = vpack.c.bf16 %v594, %v594
      %v643 = vpack.c.bf16 %v595, %v595
      %v644 = vpack.c.bf16 %v596, %v596
      %v645 = vpack.c.bf16 %v597, %v597
      %v646 = vpack.c.bf16 %v598, %v598
      %v647 = vpack.c.bf16 %v599, %v599
      %v648 = vpack.c.bf16 %v600, %v600
      %v649 = vpack.c.bf16 %v601, %v601
      %v650 = vpack.c.bf16 %v602, %v602
      %v651 = vpack.c.bf16 %v603, %v603
      %v652 = vpack.c.bf16 %v604, %v604
      %vm653 = vcmask 257024
      %654 = vst.msk [vmem:[%s172] sm:$0xf] %vm653, %v605
      %655 = vst.msk [vmem:[%s172 + $0x4] sm:$0xf] %vm653, %v606
      %656 = vst.msk [vmem:[%s172 + $0x8] sm:$0xf] %vm653, %v607
      %657 = vst.msk [vmem:[%s172 + $0xc] sm:$0xf] %vm653, %v608
      %658 = vst.msk [vmem:[%s172 + $0x10] sm:$0xf] %vm653, %v609
      %659 = vst.msk [vmem:[%s172 + $0x14] sm:$0xf] %vm653, %v610
      %660 = vst.msk [vmem:[%s172 + $0x18] sm:$0xf] %vm653, %v611
      %661 = vst.msk [vmem:[%s172 + $0x1c] sm:$0xf] %vm653, %v612
      %662 = vst.msk [vmem:[%s172 + $0x20] sm:$0xf] %vm653, %v613
      %663 = vst.msk [vmem:[%s172 + $0x24] sm:$0xf] %vm653, %v614
      %664 = vst.msk [vmem:[%s172 + $0x28] sm:$0xf] %vm653, %v615
      %665 = vst.msk [vmem:[%s172 + $0x2c] sm:$0xf] %vm653, %v616
      %666 = vst.msk [vmem:[%s172 + $0x30] sm:$0xf] %vm653, %v617
      %667 = vst.msk [vmem:[%s172 + $0x34] sm:$0xf] %vm653, %v618
      %668 = vst.msk [vmem:[%s172 + $0x38] sm:$0xf] %vm653, %v619
      %669 = vst.msk [vmem:[%s172 + $0x3c] sm:$0xf] %vm653, %v620
      %670 = vst.msk [vmem:[%s172 + $0x40] sm:$0xf] %vm653, %v621
      %671 = vst.msk [vmem:[%s172 + $0x44] sm:$0xf] %vm653, %v622
      %672 = vst.msk [vmem:[%s172 + $0x48] sm:$0xf] %vm653, %v623
      %673 = vst.msk [vmem:[%s172 + $0x4c] sm:$0xf] %vm653, %v624
      %674 = vst.msk [vmem:[%s172 + $0x50] sm:$0xf] %vm653, %v625
      %675 = vst.msk [vmem:[%s172 + $0x54] sm:$0xf] %vm653, %v626
      %676 = vst.msk [vmem:[%s172 + $0x58] sm:$0xf] %vm653, %v627
      %677 = vst.msk [vmem:[%s172 + $0x5c] sm:$0xf] %vm653, %v628
      %678 = vst.msk [vmem:[%s172 + $0x60] sm:$0xf] %vm653, %v629
      %679 = vst.msk [vmem:[%s172 + $0x64] sm:$0xf] %vm653, %v630
      %680 = vst.msk [vmem:[%s172 + $0x68] sm:$0xf] %vm653, %v631
      %681 = vst.msk [vmem:[%s172 + $0x6c] sm:$0xf] %vm653, %v632
      %682 = vst.msk [vmem:[%s172 + $0x70] sm:$0xf] %vm653, %v633
      %683 = vst.msk [vmem:[%s172 + $0x74] sm:$0xf] %vm653, %v634
      %684 = vst.msk [vmem:[%s172 + $0x78] sm:$0xf] %vm653, %v635
      %685 = vst.msk [vmem:[%s172 + $0x7c] sm:$0xf] %vm653, %v636
      %686 = vst.msk [vmem:[%s172 + $0x80] sm:$0xf] %vm653, %v637
      %687 = vst.msk [vmem:[%s172 + $0x84] sm:$0xf] %vm653, %v638
      %688 = vst.msk [vmem:[%s172 + $0x88] sm:$0xf] %vm653, %v639
      %689 = vst.msk [vmem:[%s172 + $0x8c] sm:$0xf] %vm653, %v640
      %690 = vst.msk [vmem:[%s172 + $0x90] sm:$0xf] %vm653, %v641
      %691 = vst.msk [vmem:[%s172 + $0x94] sm:$0xf] %vm653, %v642
      %692 = vst.msk [vmem:[%s172 + $0x98] sm:$0xf] %vm653, %v643
      %693 = vst.msk [vmem:[%s172 + $0x9c] sm:$0xf] %vm653, %v644
      %694 = vst.msk [vmem:[%s172 + $0xa0] sm:$0xf] %vm653, %v645
      %695 = vst.msk [vmem:[%s172 + $0xa4] sm:$0xf] %vm653, %v646
      %696 = vst.msk [vmem:[%s172 + $0xa8] sm:$0xf] %vm653, %v647
      %697 = vst.msk [vmem:[%s172 + $0xac] sm:$0xf] %vm653, %v648
      %698 = vst.msk [vmem:[%s172 + $0xb0] sm:$0xf] %vm653, %v649
      %699 = vst.msk [vmem:[%s172 + $0xb4] sm:$0xf] %vm653, %v650
      %700 = vst.msk [vmem:[%s172 + $0xb8] sm:$0xf] %vm653, %v651
      %701 = vst.msk [vmem:[%s172 + $0xbc] sm:$0xf] %vm653, %v652
      %s702 = smul.u32 48, %s14
      %p703 = scmp.lt.s32.totalorder %s702, 95
      %s704 = scalar_select %p703, %s702, 95
      %s705 = smul.addr %s704, 4
      %s706 = scalar_lea.vmem %s3, %s705
      // Predicated region
      $region33: #{model_forward.6} parent=31 // pred_check
        %p707 = pneg %p100
      $region34: #{model_forward.6} parent=31 // pred_check_branch
        %709 = sbr.rel (%p707) target = $region36
      $region35: #{model_forward.6} parent=31 // pred_region
        %s710 = smul.u32 48, %s14
      $region36: #{model_forward.6} parent=31 // pred_fallthru
        _
    $region32: #{model_forward.6} parent=5 // pred_fallthru
      _
    %p711 = scmp.le.s32.totalorder 2, %s9
    // Predicated region
    $region37: #{model_forward.6} parent=5 // pred_check
      %p712 = pneg %p711
    $region38: #{model_forward.6} parent=5 // pred_check_branch
      %714 = sbr.rel (%p712) target = $region40
    $region39: #{model_forward.6} parent=5 // pred_region
      %s715 = ssub.s32 %s9, 2
      // Predicated region
      $region41: #{model_forward.6} parent=39 // pred_check
        %p716 = pneg %p106
      $region42: #{model_forward.6} parent=39 // pred_check_branch
        %718 = sbr.rel (%p716) target = $region44
      $region43: #{model_forward.6} parent=39 // pred_region
        %s719 = smul.u32 48, %s15
        %p720 = scmp.lt.s32.totalorder %s719, 95
        %s721 = scalar_select %p720, %s719, 95
        %s722 = smul.addr %s721, 4
        %s723 = scalar_lea.vmem %s3, %s722
      $region44: #{model_forward.6} parent=39 // pred_fallthru
        _
    $region40: #{model_forward.6} parent=5 // pred_fallthru
      _
  $region6: #{model_forward.6} parent=0 // loop_footer
    %s13 = sadd.s32 1, %s9
  $region7: #{model_forward.6} parent=0 // loop_footer_branch
    %8 = sbr.rel target = $region3
  $region8: #{model_forward.6} parent=0 // loop_exit
    _

// kernel: model_forward.5
$region0: #{model_forward.5}
  #allocation0 [shape = 'u32[]', space=smem, size = 0x4, offset = 0x4, fixed_abs, tag = 'smem constant byte address 0x4 - core index']
  #allocation1 [shape = 'u32[72,128]{1,0:T(1,128)}', space=vmem, size = 0x9000, scoped, tag = 'internal scratch']
  %s0 = inlined_call_operand.vmem [shape: bf16[3072,160], index: 0, kind: input, shape index: {}]
  %s1 = inlined_call_operand.vmem [shape: bf16[160,16], index: 1, kind: input, shape index: {}]
  %s2 = inlined_call_operand.vmem [shape: f32[1,16], index: 2, kind: input, shape index: {}]
  %s3 = inlined_call_operand.vmem [shape: bf16[3072,16], index: 3, kind: output, shape index: {}]
  %s4 = sld [smem:[#allocation0]]
  $region45: #{model_forward.5} parent=0
    _
  %s6 = ssub.s32 1, %s4
  %s7 = scalar_select 0, %s6, %s4
  loop: start=0, step=1, limit=4
  $region2: #{model_forward.5} parent=0 // loop_pre_header
    _
  $region3: #{model_forward.5} parent=0 // loop_header
    %s9 = sphi 0, %s13
    %p10 = scmp.ge.s32.totalorder %s9, 4
    %s19 = sphi 0, %s21
    %s22 = sphi 0, %s19
    %s23 = sphi 0, %s22
    %s39 = sphi 0, %s23
    %s43 = sphi 0, %s43
    %s45 = sphi 0, %s43
    %s46 = sphi 0, %s45
    %s60 = sphi 0, %s46
    %s64 = sphi 0, %s64
    %s66 = sphi 0, %s64
    %s67 = sphi 0, %s66
    %s81 = sphi 0, %s67
    %s87 = sphi 0, %s89
    %s90 = sphi 0, %s87
    %s91 = sphi 0, %s90
    %s107 = sphi 0, %s91
  $region4: #{model_forward.5} parent=0 // loop_header_branch
    %12 = sbr.rel (%p10) target = $region8
  $region5: #{model_forward.5} parent=0 // loop_body
    %s14 = ssub.s32 %s9, 1
    %s15 = ssub.s32 %s9, 2
    %s16 = sadd.s32 %s9, 1
    %s17 = ssub.s32 %s9, %s16
    %p18 = scmp.eq.s32.totalorder %s17, 0
    %s20 = sadd.s32 %s19, 1
    %s21 = scalar_select %p18, %s19, %s20
    %p24 = pneg %p18
    %p25 = scmp.eq.s32.totalorder %s9, 1
    %p26 = por %p24, %p25
    %p27 = scmp.ne.s32.totalorder %s19, %s22
    %p28 = scmp.eq.s32.totalorder %s9, 0
    %p29 = por %p27, %p28
    %p30 = scmp.ne.s32.totalorder %s19, %s22
    %p31 = scmp.eq.s32.totalorder %s14, 1
    %p32 = por %p30, %p31
    %p33 = scmp.ne.s32.totalorder %s22, %s23
    %p34 = scmp.eq.s32.totalorder %s14, 0
    %p35 = por %p33, %p34
    %p36 = scmp.ne.s32.totalorder %s22, %s23
    %p37 = scmp.eq.s32.totalorder %s15, 1
    %p38 = por %p36, %p37
    %p40 = scmp.ne.s32.totalorder %s23, %s39
    %p41 = scmp.eq.s32.totalorder %s15, 0
    %p42 = por %p40, %p41
    %s44 = sadd.s32 %s43, 1
    %p47 = scmp.eq.s32.totalorder %s9, 1
    %p48 = scmp.ne.s32.totalorder %s43, %s45
    %p49 = scmp.eq.s32.totalorder %s9, 0
    %p50 = por %p48, %p49
    %p51 = scmp.ne.s32.totalorder %s43, %s45
    %p52 = scmp.eq.s32.totalorder %s14, 1
    %p53 = por %p51, %p52
    %p54 = scmp.ne.s32.totalorder %s45, %s46
    %p55 = scmp.eq.s32.totalorder %s14, 0
    %p56 = por %p54, %p55
    %p57 = scmp.ne.s32.totalorder %s45, %s46
    %p58 = scmp.eq.s32.totalorder %s15, 1
    %p59 = por %p57, %p58
    %p61 = scmp.ne.s32.totalorder %s46, %s60
    %p62 = scmp.eq.s32.totalorder %s15, 0
    %p63 = por %p61, %p62
    %s65 = sadd.s32 %s64, 1
    %p68 = scmp.eq.s32.totalorder %s9, 1
    %p69 = scmp.ne.s32.totalorder %s64, %s66
    %p70 = scmp.eq.s32.totalorder %s9, 0
    %p71 = por %p69, %p70
    %p72 = scmp.ne.s32.totalorder %s64, %s66
    %p73 = scmp.eq.s32.totalorder %s14, 1
    %p74 = por %p72, %p73
    %p75 = scmp.ne.s32.totalorder %s66, %s67
    %p76 = scmp.eq.s32.totalorder %s14, 0
    %p77 = por %p75, %p76
    %p78 = scmp.ne.s32.totalorder %s66, %s67
    %p79 = scmp.eq.s32.totalorder %s15, 1
    %p80 = por %p78, %p79
    %p82 = scmp.ne.s32.totalorder %s67, %s81
    %p83 = scmp.eq.s32.totalorder %s15, 0
    %p84 = por %p82, %p83
    %s85 = ssub.s32 %s9, %s16
    %p86 = scmp.eq.s32.totalorder %s85, 0
    %s88 = sadd.s32 %s87, 1
    %s89 = scalar_select %p86, %s87, %s88
    %p92 = pneg %p86
    %p93 = scmp.eq.s32.totalorder %s9, 1
    %p94 = por %p92, %p93
    %p95 = scmp.ne.s32.totalorder %s87, %s90
    %p96 = scmp.eq.s32.totalorder %s9, 0
    %p97 = por %p95, %p96
    %p98 = scmp.ne.s32.totalorder %s87, %s90
    %p99 = scmp.eq.s32.totalorder %s14, 1
    %p100 = por %p98, %p99
    %p101 = scmp.ne.s32.totalorder %s90, %s91
    %p102 = scmp.eq.s32.totalorder %s14, 0
    %p103 = por %p101, %p102
    %p104 = scmp.ne.s32.totalorder %s90, %s91
    %p105 = scmp.eq.s32.totalorder %s15, 1
    %p106 = por %p104, %p105
    %p108 = scmp.ne.s32.totalorder %s91, %s107
    %p109 = scmp.eq.s32.totalorder %s15, 0
    %p110 = por %p108, %p109
    %p111 = scmp.le.s32.totalorder 1, %s9
    %p112 = scmp.lt.s32.totalorder %s9, 3
    %p113 = pnand %p111, %p112
    %p114 = pneg %p113
    // Predicated region
    $region9: #{model_forward.5} parent=5 // pred_check
      _
    $region10: #{model_forward.5} parent=5 // pred_check_branch
      %116 = sbr.rel (%p113) target = $region12
    $region11: #{model_forward.5} parent=5 // pred_region
      %s117 = ssub.s32 %s9, 1
      // Predicated region
      $region13: #{model_forward.5} parent=11 // pred_check
        %p118 = pneg %p56
      $region14: #{model_forward.5} parent=11 // pred_check_branch
        %120 = sbr.rel (%p118) target = $region16
      $region15: #{model_forward.5} parent=11 // pred_region
        _
      $region16: #{model_forward.5} parent=11 // pred_fallthru
        _
      // Predicated region
      $region17: #{model_forward.5} parent=11 // pred_check
        %p121 = pneg %p77
      $region18: #{model_forward.5} parent=11 // pred_check_branch
        %123 = sbr.rel (%p121) target = $region20
      $region19: #{model_forward.5} parent=11 // pred_region
        _
      $region20: #{model_forward.5} parent=11 // pred_fallthru
        _
    $region12: #{model_forward.5} parent=5 // pred_fallthru
      _
    %p124 = scmp.lt.s32.totalorder %s9, 2
    // Predicated region
    $region21: #{model_forward.5} parent=5 // pred_check
      %p125 = pneg %p124
    $region22: #{model_forward.5} parent=5 // pred_check_branch
      %127 = sbr.rel (%p125) target = $region24
    $region23: #{model_forward.5} parent=5 // pred_region
      // Predicated region
      $region25: #{model_forward.5} parent=23 // pred_check
        %p128 = pneg %p29
      $region26: #{model_forward.5} parent=23 // pred_check_branch
        %130 = sbr.rel (%p128) target = $region28
      $region27: #{model_forward.5} parent=23 // pred_region
        %s131 = smul.u32 192, %s9
        %p132 = scmp.lt.s32.totalorder %s131, 383
        %s133 = scalar_select %p132, %s131, 383
        %s134 = smul.addr %s133, 2
        %s135 = smul.addr %s134, 4
        %s136 = scalar_lea.vmem %s0, %s135
        %s137 = smul.u32 192, %s9
      $region28: #{model_forward.5} parent=23 // pred_fallthru
        _
    $region24: #{model_forward.5} parent=5 // pred_fallthru
      _
    %p138 = scmp.le.s32.totalorder 1, %s9
    %p139 = scmp.lt.s32.totalorder %s9, 3
    %p140 = pnand %p138, %p139
    %p141 = pneg %p140
    // Predicated region
    $region29: #{model_forward.5} parent=5 // pred_check
      _
    $region30: #{model_forward.5} parent=5 // pred_check_branch
      %143 = sbr.rel (%p140) target = $region32
    $region31: #{model_forward.5} parent=5 // pred_region
      %s144 = ssub.s32 %s9, 1
      %s145 = smul.u32 192, %s14
      %p146 = scmp.lt.s32.totalorder %s145, 383
      %s147 = scalar_select %p146, %s145, 383
      %s148 = smul.addr %s147, 2
      %s149 = smul.addr %s148, 4
      %s150 = scalar_lea.vmem %s0, %s149
      %p151 = pneg %p35
      %p152 = pneg %p32
      %p153 = pneg %p56
      %p154 = pneg %p53
      %p155 = pneg %p77
      %p156 = pneg %p74
      %p157 = pneg %p103
      %p158 = pneg %p100
      %s159 = smul.u32 192, %s14
      %p160 = scmp.lt.s32.totalorder %s159, 383
      %s161 = scalar_select %p160, %s159, 383
      %s162 = smul.addr %s161, 4
      %s163 = scalar_lea.vmem %s3, %s162
      %s164 = smul.u32 192, %s14
      %p165 = scmp.lt.s32.totalorder %s164, 383
      %s166 = scalar_select %p165, %s164, 383
      %s167 = smul.addr %s166, 2
      %s168 = smul.addr %s167, 4
      %s169 = scalar_lea.vmem %s0, %s168
      %s170 = smul.u32 192, %s14
      %s171 = smul.u32 192, %s14
      %p172 = scmp.lt.s32.totalorder %s171, 383
      %s173 = scalar_select %p172, %s171, 383
      %s174 = smul.addr %s173, 4
      %s175 = scalar_lea.vmem %s3, %s174
      %s176 = smul.u32 192, %s14
      %v178 = vld [vmem:[%s169] sm:$0xff]
      %v179 = vld [vmem:[%s169 + $0x8] sm:$0xff]
      %v180 = vld [vmem:[%s169 + $0x10] sm:$0xff]
      %v181 = vld [vmem:[%s169 + $0x18] sm:$0xff]
      %v182 = vld [vmem:[%s169 + $0x20] sm:$0xff]
      %v183 = vld [vmem:[%s169 + $0x28] sm:$0xff]
      %v184 = vld [vmem:[%s169 + $0x30] sm:$0xff]
      %v185 = vld [vmem:[%s169 + $0x38] sm:$0xff]
      %v186 = vld [vmem:[%s169 + $0x40] sm:$0xff]
      %v187 = vld [vmem:[%s169 + $0x48] sm:$0xff]
      %v188 = vld [vmem:[%s169 + $0x50] sm:$0xff]
      %v189 = vld [vmem:[%s169 + $0x58] sm:$0xff]
      %v190 = vld [vmem:[%s169 + $0x60] sm:$0xff]
      %v191 = vld [vmem:[%s169 + $0x68] sm:$0xff]
      %v192 = vld [vmem:[%s169 + $0x70] sm:$0xff]
      %v193 = vld [vmem:[%s169 + $0x78] sm:$0xff]
      %v194 = vld [vmem:[%s169 + $0x80] sm:$0xff]
      %v195 = vld [vmem:[%s169 + $0x88] sm:$0xff]
      %v196 = vld [vmem:[%s169 + $0x90] sm:$0xff]
      %v197 = vld [vmem:[%s169 + $0x98] sm:$0xff]
      %v198 = vld [vmem:[%s169 + $0xa0] sm:$0xff]
      %v199 = vld [vmem:[%s169 + $0xa8] sm:$0xff]
      %v200 = vld [vmem:[%s169 + $0xb0] sm:$0xff]
      %v201 = vld [vmem:[%s169 + $0xb8] sm:$0xff]
      %v202 = vld [vmem:[%s169 + $0xc0] sm:$0xff]
      %v203 = vld [vmem:[%s169 + $0xc8] sm:$0xff]
      %v204 = vld [vmem:[%s169 + $0xd0] sm:$0xff]
      %v205 = vld [vmem:[%s169 + $0xd8] sm:$0xff]
      %v206 = vld [vmem:[%s169 + $0xe0] sm:$0xff]
      %v207 = vld [vmem:[%s169 + $0xe8] sm:$0xff]
      %v208 = vld [vmem:[%s169 + $0xf0] sm:$0xff]
      %v209 = vld [vmem:[%s169 + $0xf8] sm:$0xff]
      %v210 = vld [vmem:[%s169 + $0x100] sm:$0xff]
      %v211 = vld [vmem:[%s169 + $0x108] sm:$0xff]
      %v212 = vld [vmem:[%s169 + $0x110] sm:$0xff]
      %v213 = vld [vmem:[%s169 + $0x118] sm:$0xff]
      %v214 = vld [vmem:[%s169 + $0x120] sm:$0xff]
      %v215 = vld [vmem:[%s169 + $0x128] sm:$0xff]
      %v216 = vld [vmem:[%s169 + $0x130] sm:$0xff]
      %v217 = vld [vmem:[%s169 + $0x138] sm:$0xff]
      %v218 = vld [vmem:[%s169 + $0x140] sm:$0xff]
      %v219 = vld [vmem:[%s169 + $0x148] sm:$0xff]
      %v220 = vld [vmem:[%s169 + $0x150] sm:$0xff]
      %v221 = vld [vmem:[%s169 + $0x158] sm:$0xff]
      %v222 = vld [vmem:[%s169 + $0x160] sm:$0xff]
      %v223 = vld [vmem:[%s169 + $0x168] sm:$0xff]
      %v224 = vld [vmem:[%s169 + $0x170] sm:$0xff]
      %v225 = vld [vmem:[%s169 + $0x178] sm:$0xff]
      %v226 = vld [vmem:[%s169 + $0x180] sm:$0xff]
      %v227 = vld [vmem:[%s169 + $0x188] sm:$0xff]
      %v228 = vld [vmem:[%s169 + $0x190] sm:$0xff]
      %v229 = vld [vmem:[%s169 + $0x198] sm:$0xff]
      %v230 = vld [vmem:[%s169 + $0x1a0] sm:$0xff]
      %v231 = vld [vmem:[%s169 + $0x1a8] sm:$0xff]
      %v232 = vld [vmem:[%s169 + $0x1b0] sm:$0xff]
      %v233 = vld [vmem:[%s169 + $0x1b8] sm:$0xff]
      %v234 = vld [vmem:[%s169 + $0x1c0] sm:$0xff]
      %v235 = vld [vmem:[%s169 + $0x1c8] sm:$0xff]
      %v236 = vld [vmem:[%s169 + $0x1d0] sm:$0xff]
      %v237 = vld [vmem:[%s169 + $0x1d8] sm:$0xff]
      %v238 = vld [vmem:[%s169 + $0x1e0] sm:$0xff]
      %v239 = vld [vmem:[%s169 + $0x1e8] sm:$0xff]
      %v240 = vld [vmem:[%s169 + $0x1f0] sm:$0xff]
      %v241 = vld [vmem:[%s169 + $0x1f8] sm:$0xff]
      %v242 = vld [vmem:[%s169 + $0x200] sm:$0xff]
      %v243 = vld [vmem:[%s169 + $0x208] sm:$0xff]
      %v244 = vld [vmem:[%s169 + $0x210] sm:$0xff]
      %v245 = vld [vmem:[%s169 + $0x218] sm:$0xff]
      %v246 = vld [vmem:[%s169 + $0x220] sm:$0xff]
      %v247 = vld [vmem:[%s169 + $0x228] sm:$0xff]
      %v248 = vld [vmem:[%s169 + $0x230] sm:$0xff]
      %v249 = vld [vmem:[%s169 + $0x238] sm:$0xff]
      %v250 = vld [vmem:[%s169 + $0x240] sm:$0xff]
      %v251 = vld [vmem:[%s169 + $0x248] sm:$0xff]
      %v252 = vld [vmem:[%s169 + $0x250] sm:$0xff]
      %v253 = vld [vmem:[%s169 + $0x258] sm:$0xff]
      %v254 = vld [vmem:[%s169 + $0x260] sm:$0xff]
      %v255 = vld [vmem:[%s169 + $0x268] sm:$0xff]
      %v256 = vld [vmem:[%s169 + $0x270] sm:$0xff]
      %v257 = vld [vmem:[%s169 + $0x278] sm:$0xff]
      %v258 = vld [vmem:[%s169 + $0x280] sm:$0xff]
      %v259 = vld [vmem:[%s169 + $0x288] sm:$0xff]
      %v260 = vld [vmem:[%s169 + $0x290] sm:$0xff]
      %v261 = vld [vmem:[%s169 + $0x298] sm:$0xff]
      %v262 = vld [vmem:[%s169 + $0x2a0] sm:$0xff]
      %v263 = vld [vmem:[%s169 + $0x2a8] sm:$0xff]
      %v264 = vld [vmem:[%s169 + $0x2b0] sm:$0xff]
      %v265 = vld [vmem:[%s169 + $0x2b8] sm:$0xff]
      %v266 = vld [vmem:[%s169 + $0x2c0] sm:$0xff]
      %v267 = vld [vmem:[%s169 + $0x2c8] sm:$0xff]
      %v268 = vld [vmem:[%s169 + $0x2d0] sm:$0xff]
      %v269 = vld [vmem:[%s169 + $0x2d8] sm:$0xff]
      %v270 = vld [vmem:[%s169 + $0x2e0] sm:$0xff]
      %v271 = vld [vmem:[%s169 + $0x2e8] sm:$0xff]
      %v272 = vld [vmem:[%s169 + $0x2f0] sm:$0xff]
      %v273 = vld [vmem:[%s169 + $0x2f8] sm:$0xff]
      %v274 = vld [vmem:[%s169 + $0x300] sm:$0xff]
      %v275 = vld [vmem:[%s169 + $0x308] sm:$0xff]
      %v276 = vld [vmem:[%s169 + $0x310] sm:$0xff]
      %v277 = vld [vmem:[%s169 + $0x318] sm:$0xff]
      %v278 = vld [vmem:[%s169 + $0x320] sm:$0xff]
      %v279 = vld [vmem:[%s169 + $0x328] sm:$0xff]
      %v280 = vld [vmem:[%s169 + $0x330] sm:$0xff]
      %v281 = vld [vmem:[%s169 + $0x338] sm:$0xff]
      %v282 = vld [vmem:[%s169 + $0x340] sm:$0xff]
      %v283 = vld [vmem:[%s169 + $0x348] sm:$0xff]
      %v284 = vld [vmem:[%s169 + $0x350] sm:$0xff]
      %v285 = vld [vmem:[%s169 + $0x358] sm:$0xff]
      %v286 = vld [vmem:[%s169 + $0x360] sm:$0xff]
      %v287 = vld [vmem:[%s169 + $0x368] sm:$0xff]
      %v288 = vld [vmem:[%s169 + $0x370] sm:$0xff]
      %v289 = vld [vmem:[%s169 + $0x378] sm:$0xff]
      %v290 = vld [vmem:[%s169 + $0x380] sm:$0xff]
      %v291 = vld [vmem:[%s169 + $0x388] sm:$0xff]
      %v292 = vld [vmem:[%s169 + $0x390] sm:$0xff]
      %v293 = vld [vmem:[%s169 + $0x398] sm:$0xff]
      %v294 = vld [vmem:[%s169 + $0x3a0] sm:$0xff]
      %v295 = vld [vmem:[%s169 + $0x3a8] sm:$0xff]
      %v296 = vld [vmem:[%s169 + $0x3b0] sm:$0xff]
      %v297 = vld [vmem:[%s169 + $0x3b8] sm:$0xff]
      %v298 = vld [vmem:[%s169 + $0x3c0] sm:$0xff]
      %v299 = vld [vmem:[%s169 + $0x3c8] sm:$0xff]
      %v300 = vld [vmem:[%s169 + $0x3d0] sm:$0xff]
      %v301 = vld [vmem:[%s169 + $0x3d8] sm:$0xff]
      %v302 = vld [vmem:[%s169 + $0x3e0] sm:$0xff]
      %v303 = vld [vmem:[%s169 + $0x3e8] sm:$0xff]
      %v304 = vld [vmem:[%s169 + $0x3f0] sm:$0xff]
      %v305 = vld [vmem:[%s169 + $0x3f8] sm:$0xff]
      %v306 = vld [vmem:[%s169 + $0x400] sm:$0xff]
      %v307 = vld [vmem:[%s169 + $0x408] sm:$0xff]
      %v308 = vld [vmem:[%s169 + $0x410] sm:$0xff]
      %v309 = vld [vmem:[%s169 + $0x418] sm:$0xff]
      %v310 = vld [vmem:[%s169 + $0x420] sm:$0xff]
      %v311 = vld [vmem:[%s169 + $0x428] sm:$0xff]
      %v312 = vld [vmem:[%s169 + $0x430] sm:$0xff]
      %v313 = vld [vmem:[%s169 + $0x438] sm:$0xff]
      %v314 = vld [vmem:[%s169 + $0x440] sm:$0xff]
      %v315 = vld [vmem:[%s169 + $0x448] sm:$0xff]
      %v316 = vld [vmem:[%s169 + $0x450] sm:$0xff]
      %v317 = vld [vmem:[%s169 + $0x458] sm:$0xff]
      %v318 = vld [vmem:[%s169 + $0x460] sm:$0xff]
      %v319 = vld [vmem:[%s169 + $0x468] sm:$0xff]
      %v320 = vld [vmem:[%s169 + $0x470] sm:$0xff]
      %v321 = vld [vmem:[%s169 + $0x478] sm:$0xff]
      %v322 = vld [vmem:[%s169 + $0x480] sm:$0xff]
      %v323 = vld [vmem:[%s169 + $0x488] sm:$0xff]
      %v324 = vld [vmem:[%s169 + $0x490] sm:$0xff]
      %v325 = vld [vmem:[%s169 + $0x498] sm:$0xff]
      %v326 = vld [vmem:[%s169 + $0x4a0] sm:$0xff]
      %v327 = vld [vmem:[%s169 + $0x4a8] sm:$0xff]
      %v328 = vld [vmem:[%s169 + $0x4b0] sm:$0xff]
      %v329 = vld [vmem:[%s169 + $0x4b8] sm:$0xff]
      %v330 = vld [vmem:[%s169 + $0x4c0] sm:$0xff]
      %v331 = vld [vmem:[%s169 + $0x4c8] sm:$0xff]
      %v332 = vld [vmem:[%s169 + $0x4d0] sm:$0xff]
      %v333 = vld [vmem:[%s169 + $0x4d8] sm:$0xff]
      %v334 = vld [vmem:[%s169 + $0x4e0] sm:$0xff]
      %v335 = vld [vmem:[%s169 + $0x4e8] sm:$0xff]
      %v336 = vld [vmem:[%s169 + $0x4f0] sm:$0xff]
      %v337 = vld [vmem:[%s169 + $0x4f8] sm:$0xff]
      %v338 = vld [vmem:[%s169 + $0x500] sm:$0xff]
      %v339 = vld [vmem:[%s169 + $0x508] sm:$0xff]
      %v340 = vld [vmem:[%s169 + $0x510] sm:$0xff]
      %v341 = vld [vmem:[%s169 + $0x518] sm:$0xff]
      %v342 = vld [vmem:[%s169 + $0x520] sm:$0xff]
      %v343 = vld [vmem:[%s169 + $0x528] sm:$0xff]
      %v344 = vld [vmem:[%s169 + $0x530] sm:$0xff]
      %v345 = vld [vmem:[%s169 + $0x538] sm:$0xff]
      %v346 = vld [vmem:[%s169 + $0x540] sm:$0xff]
      %v347 = vld [vmem:[%s169 + $0x548] sm:$0xff]
      %v348 = vld [vmem:[%s169 + $0x550] sm:$0xff]
      %v349 = vld [vmem:[%s169 + $0x558] sm:$0xff]
      %v350 = vld [vmem:[%s169 + $0x560] sm:$0xff]
      %v351 = vld [vmem:[%s169 + $0x568] sm:$0xff]
      %v352 = vld [vmem:[%s169 + $0x570] sm:$0xff]
      %v353 = vld [vmem:[%s169 + $0x578] sm:$0xff]
      %v354 = vld [vmem:[%s169 + $0x580] sm:$0xff]
      %v355 = vld [vmem:[%s169 + $0x588] sm:$0xff]
      %v356 = vld [vmem:[%s169 + $0x590] sm:$0xff]
      %v357 = vld [vmem:[%s169 + $0x598] sm:$0xff]
      %v358 = vld [vmem:[%s169 + $0x5a0] sm:$0xff]
      %v359 = vld [vmem:[%s169 + $0x5a8] sm:$0xff]
      %v360 = vld [vmem:[%s169 + $0x5b0] sm:$0xff]
      %v361 = vld [vmem:[%s169 + $0x5b8] sm:$0xff]
      %v362 = vld [vmem:[%s169 + $0x5c0] sm:$0xff]
      %v363 = vld [vmem:[%s169 + $0x5c8] sm:$0xff]
      %v364 = vld [vmem:[%s169 + $0x5d0] sm:$0xff]
      %v365 = vld [vmem:[%s169 + $0x5d8] sm:$0xff]
      %v366 = vld [vmem:[%s169 + $0x5e0] sm:$0xff]
      %v367 = vld [vmem:[%s169 + $0x5e8] sm:$0xff]
      %v368 = vld [vmem:[%s169 + $0x5f0] sm:$0xff]
      %v369 = vld [vmem:[%s169 + $0x5f8] sm:$0xff]
      %v370 = vld [vmem:[%s1] sm:$0xf]
      %v371 = vld [vmem:[%s1 + $0x4] sm:$0xf]
      %v372 = vld [vmem:[%s1 + $0x8] sm:$0xf]
      %v373 = vld [vmem:[%s1 + $0xc] sm:$0xf]
      %v374 = vld [vmem:[%s1 + $0x10] sm:$0xf]
      %v375 = vld [vmem:[%s1 + $0x14] sm:$0xf]
      %v376 = vld [vmem:[%s1 + $0x18] sm:$0xf]
      %v377 = vld [vmem:[%s1 + $0x1c] sm:$0xf]
      %v378 = vld [vmem:[%s1 + $0x20] sm:$0xf]
      %v379 = vld [vmem:[%s1 + $0x24] sm:$0xf]
      %v380 = vld [vmem:[%s1 + $0x28] sm:$0xf]
      %v381 = vld [vmem:[%s1 + $0x2c] sm:$0xf]
      %v382 = vld [vmem:[%s1 + $0x30] sm:$0xf]
      %v383 = vld [vmem:[%s1 + $0x34] sm:$0xf]
      %v384 = vld [vmem:[%s1 + $0x38] sm:$0xf]
      %v385 = vld [vmem:[%s1 + $0x3c] sm:$0xf]
      %v386 = vld [vmem:[%s1 + $0x40] sm:$0xf]
      %v387 = vld [vmem:[%s1 + $0x44] sm:$0xf]
      %v388 = vld [vmem:[%s1 + $0x48] sm:$0xf]
      %v389 = vld [vmem:[%s1 + $0x4c] sm:$0xf]
      %v390 = vld [vmem:[%s2] sm:$0x1]
      %v392 = vperm.slane %v390, 0
      %v586 = vunpack.c.l.b16 %v178
      %v587 = vunpack.c.h.b16 %v178
      %v588 = vunpack.c.l.b16 %v179
      %v589 = vunpack.c.h.b16 %v179
      %v590 = vunpack.c.l.b16 %v180
      %v591 = vunpack.c.h.b16 %v180
      %v592 = vunpack.c.l.b16 %v181
      %v593 = vunpack.c.h.b16 %v181
      %v594 = vunpack.c.l.b16 %v182
      %v595 = vunpack.c.h.b16 %v182
      %v596 = vunpack.c.l.b16 %v183
      %v597 = vunpack.c.h.b16 %v183
      %v598 = vunpack.c.l.b16 %v184
      %v599 = vunpack.c.h.b16 %v184
      %v600 = vunpack.c.l.b16 %v185
      %v601 = vunpack.c.h.b16 %v185
      %v602 = vunpack.c.l.b16 %v186
      %v603 = vunpack.c.h.b16 %v186
      %v604 = vunpack.c.l.b16 %v187
      %v605 = vunpack.c.h.b16 %v187
      %v606 = vunpack.c.l.b16 %v188
      %v607 = vunpack.c.h.b16 %v188
      %v608 = vunpack.c.l.b16 %v189
      %v609 = vunpack.c.h.b16 %v189
      %v610 = vunpack.c.l.b16 %v190
      %v611 = vunpack.c.h.b16 %v190
      %v612 = vunpack.c.l.b16 %v191
      %v613 = vunpack.c.h.b16 %v191
      %v614 = vunpack.c.l.b16 %v192
      %v615 = vunpack.c.h.b16 %v192
      %v616 = vunpack.c.l.b16 %v193
      %v617 = vunpack.c.h.b16 %v193
      %v618 = vunpack.c.l.b16 %v194
      %v619 = vunpack.c.h.b16 %v194
      %v620 = vunpack.c.l.b16 %v195
      %v621 = vunpack.c.h.b16 %v195
      %v622 = vunpack.c.l.b16 %v196
      %v623 = vunpack.c.h.b16 %v196
      %v624 = vunpack.c.l.b16 %v197
      %v625 = vunpack.c.h.b16 %v197
      %v626 = vunpack.c.l.b16 %v198
      %v627 = vunpack.c.h.b16 %v198
      %v628 = vunpack.c.l.b16 %v199
      %v629 = vunpack.c.h.b16 %v199
      %v630 = vunpack.c.l.b16 %v200
      %v631 = vunpack.c.h.b16 %v200
      %v632 = vunpack.c.l.b16 %v201
      %v633 = vunpack.c.h.b16 %v201
      %v634 = vunpack.c.l.b16 %v202
      %v635 = vunpack.c.h.b16 %v202
      %v636 = vunpack.c.l.b16 %v203
      %v637 = vunpack.c.h.b16 %v203
      %v638 = vunpack.c.l.b16 %v204
      %v639 = vunpack.c.h.b16 %v204
      %v640 = vunpack.c.l.b16 %v205
      %v641 = vunpack.c.h.b16 %v205
      %v642 = vunpack.c.l.b16 %v206
      %v643 = vunpack.c.h.b16 %v206
      %v644 = vunpack.c.l.b16 %v207
      %v645 = vunpack.c.h.b16 %v207
      %v646 = vunpack.c.l.b16 %v208
      %v647 = vunpack.c.h.b16 %v208
      %v648 = vunpack.c.l.b16 %v209
      %v649 = vunpack.c.h.b16 %v209
      %v650 = vunpack.c.l.b16 %v210
      %v651 = vunpack.c.h.b16 %v210
      %v652 = vunpack.c.l.b16 %v211
      %v653 = vunpack.c.h.b16 %v211
      %v654 = vunpack.c.l.b16 %v212
      %v655 = vunpack.c.h.b16 %v212
      %v656 = vunpack.c.l.b16 %v213
      %v657 = vunpack.c.h.b16 %v213
      %v658 = vunpack.c.l.b16 %v214
      %v659 = vunpack.c.h.b16 %v214
      %v660 = vunpack.c.l.b16 %v215
      %v661 = vunpack.c.h.b16 %v215
      %v662 = vunpack.c.l.b16 %v216
      %v663 = vunpack.c.h.b16 %v216
      %v664 = vunpack.c.l.b16 %v217
      %v665 = vunpack.c.h.b16 %v217
      %v666 = vunpack.c.l.b16 %v218
      %v667 = vunpack.c.h.b16 %v218
      %v668 = vunpack.c.l.b16 %v219
      %v669 = vunpack.c.h.b16 %v219
      %v670 = vunpack.c.l.b16 %v220
      %v671 = vunpack.c.h.b16 %v220
      %v672 = vunpack.c.l.b16 %v221
      %v673 = vunpack.c.h.b16 %v221
      %v674 = vunpack.c.l.b16 %v222
      %v675 = vunpack.c.h.b16 %v222
      %v676 = vunpack.c.l.b16 %v223
      %v677 = vunpack.c.h.b16 %v223
      %v678 = vunpack.c.l.b16 %v224
      %v679 = vunpack.c.h.b16 %v224
      %v680 = vunpack.c.l.b16 %v225
      %v681 = vunpack.c.h.b16 %v225
      %v682 = vunpack.c.l.b16 %v226
      %v683 = vunpack.c.h.b16 %v226
      %v684 = vunpack.c.l.b16 %v227
      %v685 = vunpack.c.h.b16 %v227
      %v686 = vunpack.c.l.b16 %v228
      %v687 = vunpack.c.h.b16 %v228
      %v688 = vunpack.c.l.b16 %v229
      %v689 = vunpack.c.h.b16 %v229
      %v690 = vunpack.c.l.b16 %v230
      %v691 = vunpack.c.h.b16 %v230
      %v692 = vunpack.c.l.b16 %v231
      %v693 = vunpack.c.h.b16 %v231
      %v694 = vunpack.c.l.b16 %v232
      %v695 = vunpack.c.h.b16 %v232
      %v696 = vunpack.c.l.b16 %v233
      %v697 = vunpack.c.h.b16 %v233
      %v698 = vunpack.c.l.b16 %v234
      %v699 = vunpack.c.h.b16 %v234
      %v700 = vunpack.c.l.b16 %v235
      %v701 = vunpack.c.h.b16 %v235
      %v702 = vunpack.c.l.b16 %v236
      %v703 = vunpack.c.h.b16 %v236
      %v704 = vunpack.c.l.b16 %v237
      %v705 = vunpack.c.h.b16 %v237
      %v706 = vunpack.c.l.b16 %v238
      %v707 = vunpack.c.h.b16 %v238
      %v708 = vunpack.c.l.b16 %v239
      %v709 = vunpack.c.h.b16 %v239
      %v710 = vunpack.c.l.b16 %v240
      %v711 = vunpack.c.h.b16 %v240
      %v712 = vunpack.c.l.b16 %v241
      %v713 = vunpack.c.h.b16 %v241
      %v714 = vunpack.c.l.b16 %v242
      %v715 = vunpack.c.h.b16 %v242
      %v716 = vunpack.c.l.b16 %v243
      %v717 = vunpack.c.h.b16 %v243
      %v718 = vunpack.c.l.b16 %v244
      %v719 = vunpack.c.h.b16 %v244
      %v720 = vunpack.c.l.b16 %v245
      %v721 = vunpack.c.h.b16 %v245
      %v722 = vunpack.c.l.b16 %v246
      %v723 = vunpack.c.h.b16 %v246
      %v724 = vunpack.c.l.b16 %v247
      %v725 = vunpack.c.h.b16 %v247
      %v726 = vunpack.c.l.b16 %v248
      %v727 = vunpack.c.h.b16 %v248
      %v728 = vunpack.c.l.b16 %v249
      %v729 = vunpack.c.h.b16 %v249
      %v730 = vunpack.c.l.b16 %v250
      %v731 = vunpack.c.h.b16 %v250
      %v732 = vunpack.c.l.b16 %v251
      %v733 = vunpack.c.h.b16 %v251
      %v734 = vunpack.c.l.b16 %v252
      %v735 = vunpack.c.h.b16 %v252
      %v736 = vunpack.c.l.b16 %v253
      %v737 = vunpack.c.h.b16 %v253
      %v738 = vunpack.c.l.b16 %v254
      %v739 = vunpack.c.h.b16 %v254
      %v740 = vunpack.c.l.b16 %v255
      %v741 = vunpack.c.h.b16 %v255
      %v742 = vunpack.c.l.b16 %v256
      %v743 = vunpack.c.h.b16 %v256
      %v744 = vunpack.c.l.b16 %v257
      %v745 = vunpack.c.h.b16 %v257
      %v746 = vunpack.c.l.b16 %v258
      %v747 = vunpack.c.h.b16 %v258
      %v748 = vunpack.c.l.b16 %v259
      %v749 = vunpack.c.h.b16 %v259
      %v750 = vunpack.c.l.b16 %v260
      %v751 = vunpack.c.h.b16 %v260
      %v752 = vunpack.c.l.b16 %v261
      %v753 = vunpack.c.h.b16 %v261
      %v754 = vunpack.c.l.b16 %v262
      %v755 = vunpack.c.h.b16 %v262
      %v756 = vunpack.c.l.b16 %v263
      %v757 = vunpack.c.h.b16 %v263
      %v758 = vunpack.c.l.b16 %v264
      %v759 = vunpack.c.h.b16 %v264
      %v760 = vunpack.c.l.b16 %v265
      %v761 = vunpack.c.h.b16 %v265
      %v762 = vunpack.c.l.b16 %v266
      %v763 = vunpack.c.h.b16 %v266
      %v764 = vunpack.c.l.b16 %v267
      %v765 = vunpack.c.h.b16 %v267
      %v766 = vunpack.c.l.b16 %v268
      %v767 = vunpack.c.h.b16 %v268
      %v768 = vunpack.c.l.b16 %v269
      %v769 = vunpack.c.h.b16 %v269
      %v770 = vunpack.c.l.b16 %v270
      %v771 = vunpack.c.h.b16 %v270
      %v772 = vunpack.c.l.b16 %v271
      %v773 = vunpack.c.h.b16 %v271
      %v774 = vunpack.c.l.b16 %v272
      %v775 = vunpack.c.h.b16 %v272
      %v776 = vunpack.c.l.b16 %v273
      %v777 = vunpack.c.h.b16 %v273
      %v778 = vunpack.c.l.b16 %v274
      %v779 = vunpack.c.h.b16 %v274
      %v780 = vunpack.c.l.b16 %v275
      %v781 = vunpack.c.h.b16 %v275
      %v782 = vunpack.c.l.b16 %v276
      %v783 = vunpack.c.h.b16 %v276
      %v784 = vunpack.c.l.b16 %v277
      %v785 = vunpack.c.h.b16 %v277
      %v786 = vunpack.c.l.b16 %v278
      %v787 = vunpack.c.h.b16 %v278
      %v788 = vunpack.c.l.b16 %v279
      %v789 = vunpack.c.h.b16 %v279
      %v790 = vunpack.c.l.b16 %v280
      %v791 = vunpack.c.h.b16 %v280
      %v792 = vunpack.c.l.b16 %v281
      %v793 = vunpack.c.h.b16 %v281
      %v794 = vunpack.c.l.b16 %v282
      %v795 = vunpack.c.h.b16 %v282
      %v796 = vunpack.c.l.b16 %v283
      %v797 = vunpack.c.h.b16 %v283
      %v798 = vunpack.c.l.b16 %v284
      %v799 = vunpack.c.h.b16 %v284
      %v800 = vunpack.c.l.b16 %v285
      %v801 = vunpack.c.h.b16 %v285
      %v802 = vunpack.c.l.b16 %v286
      %v803 = vunpack.c.h.b16 %v286
      %v804 = vunpack.c.l.b16 %v287
      %v805 = vunpack.c.h.b16 %v287
      %v806 = vunpack.c.l.b16 %v288
      %v807 = vunpack.c.h.b16 %v288
      %v808 = vunpack.c.l.b16 %v289
      %v809 = vunpack.c.h.b16 %v289
      %v810 = vunpack.c.l.b16 %v290
      %v811 = vunpack.c.h.b16 %v290
      %v812 = vunpack.c.l.b16 %v291
      %v813 = vunpack.c.h.b16 %v291
      %v814 = vunpack.c.l.b16 %v292
      %v815 = vunpack.c.h.b16 %v292
      %v816 = vunpack.c.l.b16 %v293
      %v817 = vunpack.c.h.b16 %v293
      %v818 = vunpack.c.l.b16 %v294
      %v819 = vunpack.c.h.b16 %v294
      %v820 = vunpack.c.l.b16 %v295
      %v821 = vunpack.c.h.b16 %v295
      %v822 = vunpack.c.l.b16 %v296
      %v823 = vunpack.c.h.b16 %v296
      %v824 = vunpack.c.l.b16 %v297
      %v825 = vunpack.c.h.b16 %v297
      %v826 = vunpack.c.l.b16 %v298
      %v827 = vunpack.c.h.b16 %v298
      %v828 = vunpack.c.l.b16 %v299
      %v829 = vunpack.c.h.b16 %v299
      %v830 = vunpack.c.l.b16 %v300
      %v831 = vunpack.c.h.b16 %v300
      %v832 = vunpack.c.l.b16 %v301
      %v833 = vunpack.c.h.b16 %v301
      %v834 = vunpack.c.l.b16 %v302
      %v835 = vunpack.c.h.b16 %v302
      %v836 = vunpack.c.l.b16 %v303
      %v837 = vunpack.c.h.b16 %v303
      %v838 = vunpack.c.l.b16 %v304
      %v839 = vunpack.c.h.b16 %v304
      %v840 = vunpack.c.l.b16 %v305
      %v841 = vunpack.c.h.b16 %v305
      %v842 = vunpack.c.l.b16 %v306
      %v843 = vunpack.c.h.b16 %v306
      %v844 = vunpack.c.l.b16 %v307
      %v845 = vunpack.c.h.b16 %v307
      %v846 = vunpack.c.l.b16 %v308
      %v847 = vunpack.c.h.b16 %v308
      %v848 = vunpack.c.l.b16 %v309
      %v849 = vunpack.c.h.b16 %v309
      %v850 = vunpack.c.l.b16 %v310
      %v851 = vunpack.c.h.b16 %v310
      %v852 = vunpack.c.l.b16 %v311
      %v853 = vunpack.c.h.b16 %v311
      %v854 = vunpack.c.l.b16 %v312
      %v855 = vunpack.c.h.b16 %v312
      %v856 = vunpack.c.l.b16 %v313
      %v857 = vunpack.c.h.b16 %v313
      %v858 = vunpack.c.l.b16 %v314
      %v859 = vunpack.c.h.b16 %v314
      %v860 = vunpack.c.l.b16 %v315
      %v861 = vunpack.c.h.b16 %v315
      %v862 = vunpack.c.l.b16 %v316
      %v863 = vunpack.c.h.b16 %v316
      %v864 = vunpack.c.l.b16 %v317
      %v865 = vunpack.c.h.b16 %v317
      %v866 = vunpack.c.l.b16 %v318
      %v867 = vunpack.c.h.b16 %v318
      %v868 = vunpack.c.l.b16 %v319
      %v869 = vunpack.c.h.b16 %v319
      %v870 = vunpack.c.l.b16 %v320
      %v871 = vunpack.c.h.b16 %v320
      %v872 = vunpack.c.l.b16 %v321
      %v873 = vunpack.c.h.b16 %v321
      %v874 = vunpack.c.l.b16 %v322
      %v875 = vunpack.c.h.b16 %v322
      %v876 = vunpack.c.l.b16 %v323
      %v877 = vunpack.c.h.b16 %v323
      %v878 = vunpack.c.l.b16 %v324
      %v879 = vunpack.c.h.b16 %v324
      %v880 = vunpack.c.l.b16 %v325
      %v881 = vunpack.c.h.b16 %v325
      %v882 = vunpack.c.l.b16 %v326
      %v883 = vunpack.c.h.b16 %v326
      %v884 = vunpack.c.l.b16 %v327
      %v885 = vunpack.c.h.b16 %v327
      %v886 = vunpack.c.l.b16 %v328
      %v887 = vunpack.c.h.b16 %v328
      %v888 = vunpack.c.l.b16 %v329
      %v889 = vunpack.c.h.b16 %v329
      %v890 = vunpack.c.l.b16 %v330
      %v891 = vunpack.c.h.b16 %v330
      %v892 = vunpack.c.l.b16 %v331
      %v893 = vunpack.c.h.b16 %v331
      %v894 = vunpack.c.l.b16 %v332
      %v895 = vunpack.c.h.b16 %v332
      %v896 = vunpack.c.l.b16 %v333
      %v897 = vunpack.c.h.b16 %v333
      %v898 = vunpack.c.l.b16 %v334
      %v899 = vunpack.c.h.b16 %v334
      %v900 = vunpack.c.l.b16 %v335
      %v901 = vunpack.c.h.b16 %v335
      %v902 = vunpack.c.l.b16 %v336
      %v903 = vunpack.c.h.b16 %v336
      %v904 = vunpack.c.l.b16 %v337
      %v905 = vunpack.c.h.b16 %v337
      %v906 = vunpack.c.l.b16 %v338
      %v907 = vunpack.c.h.b16 %v338
      %v908 = vunpack.c.l.b16 %v339
      %v909 = vunpack.c.h.b16 %v339
      %v910 = vunpack.c.l.b16 %v340
      %v911 = vunpack.c.h.b16 %v340
      %v912 = vunpack.c.l.b16 %v341
      %v913 = vunpack.c.h.b16 %v341
      %v914 = vunpack.c.l.b16 %v342
      %v915 = vunpack.c.h.b16 %v342
      %v916 = vunpack.c.l.b16 %v343
      %v917 = vunpack.c.h.b16 %v343
      %v918 = vunpack.c.l.b16 %v344
      %v919 = vunpack.c.h.b16 %v344
      %v920 = vunpack.c.l.b16 %v345
      %v921 = vunpack.c.h.b16 %v345
      %v922 = vunpack.c.l.b16 %v346
      %v923 = vunpack.c.h.b16 %v346
      %v924 = vunpack.c.l.b16 %v347
      %v925 = vunpack.c.h.b16 %v347
      %v926 = vunpack.c.l.b16 %v348
      %v927 = vunpack.c.h.b16 %v348
      %v928 = vunpack.c.l.b16 %v349
      %v929 = vunpack.c.h.b16 %v349
      %v930 = vunpack.c.l.b16 %v350
      %v931 = vunpack.c.h.b16 %v350
      %v932 = vunpack.c.l.b16 %v351
      %v933 = vunpack.c.h.b16 %v351
      %v934 = vunpack.c.l.b16 %v352
      %v935 = vunpack.c.h.b16 %v352
      %v936 = vunpack.c.l.b16 %v353
      %v937 = vunpack.c.h.b16 %v353
      %v938 = vunpack.c.l.b16 %v354
      %v939 = vunpack.c.h.b16 %v354
      %v940 = vunpack.c.l.b16 %v355
      %v941 = vunpack.c.h.b16 %v355
      %v942 = vunpack.c.l.b16 %v356
      %v943 = vunpack.c.h.b16 %v356
      %v944 = vunpack.c.l.b16 %v357
      %v945 = vunpack.c.h.b16 %v357
      %v946 = vunpack.c.l.b16 %v358
      %v947 = vunpack.c.h.b16 %v358
      %v948 = vunpack.c.l.b16 %v359
      %v949 = vunpack.c.h.b16 %v359
      %v950 = vunpack.c.l.b16 %v360
      %v951 = vunpack.c.h.b16 %v360
      %v952 = vunpack.c.l.b16 %v361
      %v953 = vunpack.c.h.b16 %v361
      %v954 = vunpack.c.l.b16 %v362
      %v955 = vunpack.c.h.b16 %v362
      %v956 = vunpack.c.l.b16 %v363
      %v957 = vunpack.c.h.b16 %v363
      %v958 = vunpack.c.l.b16 %v364
      %v959 = vunpack.c.h.b16 %v364
      %v960 = vunpack.c.l.b16 %v365
      %v961 = vunpack.c.h.b16 %v365
      %v962 = vunpack.c.l.b16 %v366
      %v963 = vunpack.c.h.b16 %v366
      %v964 = vunpack.c.l.b16 %v367
      %v965 = vunpack.c.h.b16 %v367
      %v966 = vunpack.c.l.b16 %v368
      %v967 = vunpack.c.h.b16 %v368
      %v968 = vunpack.c.l.b16 %v369
      %v969 = vunpack.c.h.b16 %v369
      %v970 = vpack.c.b16 %v588, %v586
      %v971 = vpack.c.b16 %v589, %v587
      %v972 = vpack.c.b16 %v592, %v590
      %v973 = vpack.c.b16 %v593, %v591
      %v974 = vpack.c.b16 %v596, %v594
      %v975 = vpack.c.b16 %v597, %v595
      %v976 = vpack.c.b16 %v600, %v598
      %v977 = vpack.c.b16 %v601, %v599
      %v978 = vpack.c.b16 %v604, %v602
      %v979 = vpack.c.b16 %v605, %v603
      %v980 = vpack.c.b16 %v608, %v606
      %v981 = vpack.c.b16 %v609, %v607
      %v982 = vpack.c.b16 %v612, %v610
      %v983 = vpack.c.b16 %v613, %v611
      %v984 = vpack.c.b16 %v616, %v614
      %v985 = vpack.c.b16 %v617, %v615
      %v986 = vpack.c.b16 %v620, %v618
      %v987 = vpack.c.b16 %v621, %v619
      %v988 = vpack.c.b16 %v624, %v622
      %v989 = vpack.c.b16 %v625, %v623
      %v990 = vpack.c.b16 %v628, %v626
      %v991 = vpack.c.b16 %v629, %v627
      %v992 = vpack.c.b16 %v632, %v630
      %v993 = vpack.c.b16 %v633, %v631
      %v994 = vpack.c.b16 %v636, %v634
      %v995 = vpack.c.b16 %v637, %v635
      %v996 = vpack.c.b16 %v640, %v638
      %v997 = vpack.c.b16 %v641, %v639
      %v998 = vpack.c.b16 %v644, %v642
      %v999 = vpack.c.b16 %v645, %v643
      %v1000 = vpack.c.b16 %v648, %v646
      %v1001 = vpack.c.b16 %v649, %v647
      %v1002 = vpack.c.b16 %v652, %v650
      %v1003 = vpack.c.b16 %v653, %v651
      %v1004 = vpack.c.b16 %v656, %v654
      %v1005 = vpack.c.b16 %v657, %v655
      %v1006 = vpack.c.b16 %v660, %v658
      %v1007 = vpack.c.b16 %v661, %v659
      %v1008 = vpack.c.b16 %v664, %v662
      %v1009 = vpack.c.b16 %v665, %v663
      %v1010 = vpack.c.b16 %v668, %v666
      %v1011 = vpack.c.b16 %v669, %v667
      %v1012 = vpack.c.b16 %v672, %v670
      %v1013 = vpack.c.b16 %v673, %v671
      %v1014 = vpack.c.b16 %v676, %v674
      %v1015 = vpack.c.b16 %v677, %v675
      %v1016 = vpack.c.b16 %v680, %v678
      %v1017 = vpack.c.b16 %v681, %v679
      %v1018 = vpack.c.b16 %v684, %v682
      %v1019 = vpack.c.b16 %v685, %v683
      %v1020 = vpack.c.b16 %v688, %v686
      %v1021 = vpack.c.b16 %v689, %v687
      %v1022 = vpack.c.b16 %v692, %v690
      %v1023 = vpack.c.b16 %v693, %v691
      %v1024 = vpack.c.b16 %v696, %v694
      %v1025 = vpack.c.b16 %v697, %v695
      %v1026 = vpack.c.b16 %v700, %v698
      %v1027 = vpack.c.b16 %v701, %v699
      %v1028 = vpack.c.b16 %v704, %v702
      %v1029 = vpack.c.b16 %v705, %v703
      %v1030 = vpack.c.b16 %v708, %v706
      %v1031 = vpack.c.b16 %v709, %v707
      %v1032 = vpack.c.b16 %v712, %v710
      %v1033 = vpack.c.b16 %v713, %v711
      %v1034 = vpack.c.b16 %v716, %v714
      %v1035 = vpack.c.b16 %v717, %v715
      %v1036 = vpack.c.b16 %v720, %v718
      %v1037 = vpack.c.b16 %v721, %v719
      %v1038 = vpack.c.b16 %v724, %v722
      %v1039 = vpack.c.b16 %v725, %v723
      %v1040 = vpack.c.b16 %v728, %v726
      %v1041 = vpack.c.b16 %v729, %v727
      %v1042 = vpack.c.b16 %v732, %v730
      %v1043 = vpack.c.b16 %v733, %v731
      %v1044 = vpack.c.b16 %v736, %v734
      %v1045 = vpack.c.b16 %v737, %v735
      %v1046 = vpack.c.b16 %v740, %v738
      %v1047 = vpack.c.b16 %v741, %v739
      %v1048 = vpack.c.b16 %v744, %v742
      %v1049 = vpack.c.b16 %v745, %v743
      %v1050 = vpack.c.b16 %v748, %v746
      %v1051 = vpack.c.b16 %v749, %v747
      %v1052 = vpack.c.b16 %v752, %v750
      %v1053 = vpack.c.b16 %v753, %v751
      %v1054 = vpack.c.b16 %v756, %v754
      %v1055 = vpack.c.b16 %v757, %v755
      %v1056 = vpack.c.b16 %v760, %v758
      %v1057 = vpack.c.b16 %v761, %v759
      %v1058 = vpack.c.b16 %v764, %v762
      %v1059 = vpack.c.b16 %v765, %v763
      %v1060 = vpack.c.b16 %v768, %v766
      %v1061 = vpack.c.b16 %v769, %v767
      %v1062 = vpack.c.b16 %v772, %v770
      %v1063 = vpack.c.b16 %v773, %v771
      %v1064 = vpack.c.b16 %v776, %v774
      %v1065 = vpack.c.b16 %v777, %v775
      %v1066 = vpack.c.b16 %v780, %v778
      %v1067 = vpack.c.b16 %v781, %v779
      %v1068 = vpack.c.b16 %v784, %v782
      %v1069 = vpack.c.b16 %v785, %v783
      %v1070 = vpack.c.b16 %v788, %v786
      %v1071 = vpack.c.b16 %v789, %v787
      %v1072 = vpack.c.b16 %v792, %v790
      %v1073 = vpack.c.b16 %v793, %v791
      %v1074 = vpack.c.b16 %v796, %v794
      %v1075 = vpack.c.b16 %v797, %v795
      %v1076 = vpack.c.b16 %v800, %v798
      %v1077 = vpack.c.b16 %v801, %v799
      %v1078 = vpack.c.b16 %v804, %v802
      %v1079 = vpack.c.b16 %v805, %v803
      %v1080 = vpack.c.b16 %v808, %v806
      %v1081 = vpack.c.b16 %v809, %v807
      %v1082 = vpack.c.b16 %v812, %v810
      %v1083 = vpack.c.b16 %v813, %v811
      %v1084 = vpack.c.b16 %v816, %v814
      %v1085 = vpack.c.b16 %v817, %v815
      %v1086 = vpack.c.b16 %v820, %v818
      %v1087 = vpack.c.b16 %v821, %v819
      %v1088 = vpack.c.b16 %v824, %v822
      %v1089 = vpack.c.b16 %v825, %v823
      %v1090 = vpack.c.b16 %v828, %v826
      %v1091 = vpack.c.b16 %v829, %v827
      %v1092 = vpack.c.b16 %v832, %v830
      %v1093 = vpack.c.b16 %v833, %v831
      %v1094 = vpack.c.b16 %v836, %v834
      %v1095 = vpack.c.b16 %v837, %v835
      %v1096 = vpack.c.b16 %v840, %v838
      %v1097 = vpack.c.b16 %v841, %v839
      %v1098 = vpack.c.b16 %v844, %v842
      %v1099 = vpack.c.b16 %v845, %v843
      %v1100 = vpack.c.b16 %v848, %v846
      %v1101 = vpack.c.b16 %v849, %v847
      %v1102 = vpack.c.b16 %v852, %v850
      %v1103 = vpack.c.b16 %v853, %v851
      %v1104 = vpack.c.b16 %v856, %v854
      %v1105 = vpack.c.b16 %v857, %v855
      %v1106 = vpack.c.b16 %v860, %v858
      %v1107 = vpack.c.b16 %v861, %v859
      %v1108 = vpack.c.b16 %v864, %v862
      %v1109 = vpack.c.b16 %v865, %v863
      %v1110 = vpack.c.b16 %v868, %v866
      %v1111 = vpack.c.b16 %v869, %v867
      %v1112 = vpack.c.b16 %v872, %v870
      %v1113 = vpack.c.b16 %v873, %v871
      %v1114 = vpack.c.b16 %v876, %v874
      %v1115 = vpack.c.b16 %v877, %v875
      %v1116 = vpack.c.b16 %v880, %v878
      %v1117 = vpack.c.b16 %v881, %v879
      %v1118 = vpack.c.b16 %v884, %v882
      %v1119 = vpack.c.b16 %v885, %v883
      %v1120 = vpack.c.b16 %v888, %v886
      %v1121 = vpack.c.b16 %v889, %v887
      %v1122 = vpack.c.b16 %v892, %v890
      %v1123 = vpack.c.b16 %v893, %v891
      %v1124 = vpack.c.b16 %v896, %v894
      %v1125 = vpack.c.b16 %v897, %v895
      %v1126 = vpack.c.b16 %v900, %v898
      %v1127 = vpack.c.b16 %v901, %v899
      %v1128 = vpack.c.b16 %v904, %v902
      %v1129 = vpack.c.b16 %v905, %v903
      %v1130 = vpack.c.b16 %v908, %v906
      %v1131 = vpack.c.b16 %v909, %v907
      %v1132 = vpack.c.b16 %v912, %v910
      %v1133 = vpack.c.b16 %v913, %v911
      %v1134 = vpack.c.b16 %v916, %v914
      %v1135 = vpack.c.b16 %v917, %v915
      %v1136 = vpack.c.b16 %v920, %v918
      %v1137 = vpack.c.b16 %v921, %v919
      %v1138 = vpack.c.b16 %v924, %v922
      %v1139 = vpack.c.b16 %v925, %v923
      %v1140 = vpack.c.b16 %v928, %v926
      %v1141 = vpack.c.b16 %v929, %v927
      %v1142 = vpack.c.b16 %v932, %v930
      %v1143 = vpack.c.b16 %v933, %v931
      %v1144 = vpack.c.b16 %v936, %v934
      %v1145 = vpack.c.b16 %v937, %v935
      %v1146 = vpack.c.b16 %v940, %v938
      %v1147 = vpack.c.b16 %v941, %v939
      %v1148 = vpack.c.b16 %v944, %v942
      %v1149 = vpack.c.b16 %v945, %v943
      %v1150 = vpack.c.b16 %v948, %v946
      %v1151 = vpack.c.b16 %v949, %v947
      %v1152 = vpack.c.b16 %v952, %v950
      %v1153 = vpack.c.b16 %v953, %v951
      %v1154 = vpack.c.b16 %v956, %v954
      %v1155 = vpack.c.b16 %v957, %v955
      %v1156 = vpack.c.b16 %v960, %v958
      %v1157 = vpack.c.b16 %v961, %v959
      %v1158 = vpack.c.b16 %v964, %v962
      %v1159 = vpack.c.b16 %v965, %v963
      %v1160 = vpack.c.b16 %v968, %v966
      %v1161 = vpack.c.b16 %v969, %v967
      %v1278 = vunpack.c.l.b16 %v370
      %v1279 = vunpack.c.l.b16 %v371
      %v1280 = vunpack.c.l.b16 %v372
      %v1281 = vunpack.c.l.b16 %v373
      %v1282 = vunpack.c.l.b16 %v374
      %v1283 = vunpack.c.l.b16 %v375
      %v1284 = vunpack.c.l.b16 %v376
      %v1285 = vunpack.c.l.b16 %v377
      %v1286 = vunpack.c.l.b16 %v378
      %v1287 = vunpack.c.l.b16 %v379
      %v1288 = vunpack.c.l.b16 %v380
      %v1289 = vunpack.c.l.b16 %v381
      %v1290 = vunpack.c.l.b16 %v382
      %v1291 = vunpack.c.l.b16 %v383
      %v1292 = vunpack.c.l.b16 %v384
      %v1293 = vunpack.c.l.b16 %v385
      %v1294 = vunpack.c.l.b16 %v386
      %v1295 = vunpack.c.l.b16 %v387
      %v1296 = vunpack.c.l.b16 %v388
      %v1297 = vunpack.c.l.b16 %v389
      %v1298 = vpack.c.b16 %v1279, %v1278
      %v1299 = vpack.c.b16 %v1281, %v1280
      %v1300 = vpack.c.b16 %v1283, %v1282
      %v1301 = vpack.c.b16 %v1285, %v1284
      %v1302 = vpack.c.b16 %v1287, %v1286
      %v1303 = vpack.c.b16 %v1289, %v1288
      %v1304 = vpack.c.b16 %v1291, %v1290
      %v1305 = vpack.c.b16 %v1293, %v1292
      %v1306 = vpack.c.b16 %v1295, %v1294
      %v1307 = vpack.c.b16 %v1297, %v1296
      %vm1318 = vcmask 261120
      %v1320 = vsel %vm1318, %v971, 0
      %v1323 = vsel %vm1318, %v973, 0
      %v1326 = vsel %vm1318, %v975, 0
      %v1329 = vsel %vm1318, %v977, 0
      %v1332 = vsel %vm1318, %v979, 0
      %v1335 = vsel %vm1318, %v981, 0
      %v1338 = vsel %vm1318, %v983, 0
      %v1341 = vsel %vm1318, %v985, 0
      %v1344 = vsel %vm1318, %v987, 0
      %v1347 = vsel %vm1318, %v989, 0
      %v1350 = vsel %vm1318, %v991, 0
      %v1353 = vsel %vm1318, %v993, 0
      %v1356 = vsel %vm1318, %v995, 0
      %v1359 = vsel %vm1318, %v997, 0
      %v1362 = vsel %vm1318, %v999, 0
      %v1365 = vsel %vm1318, %v1001, 0
      %v1368 = vsel %vm1318, %v1003, 0
      %v1371 = vsel %vm1318, %v1005, 0
      %v1374 = vsel %vm1318, %v1007, 0
      %v1377 = vsel %vm1318, %v1009, 0
      %v1380 = vsel %vm1318, %v1011, 0
      %v1383 = vsel %vm1318, %v1013, 0
      %v1386 = vsel %vm1318, %v1015, 0
      %v1389 = vsel %vm1318, %v1017, 0
      %v1392 = vsel %vm1318, %v1019, 0
      %v1395 = vsel %vm1318, %v1021, 0
      %v1398 = vsel %vm1318, %v1023, 0
      %v1401 = vsel %vm1318, %v1025, 0
      %v1404 = vsel %vm1318, %v1027, 0
      %v1407 = vsel %vm1318, %v1029, 0
      %v1410 = vsel %vm1318, %v1031, 0
      %v1413 = vsel %vm1318, %v1033, 0
      %v1416 = vsel %vm1318, %v1035, 0
      %v1419 = vsel %vm1318, %v1037, 0
      %v1422 = vsel %vm1318, %v1039, 0
      %v1425 = vsel %vm1318, %v1041, 0
      %v1428 = vsel %vm1318, %v1043, 0
      %v1431 = vsel %vm1318, %v1045, 0
      %v1434 = vsel %vm1318, %v1047, 0
      %v1437 = vsel %vm1318, %v1049, 0
      %v1440 = vsel %vm1318, %v1051, 0
      %v1443 = vsel %vm1318, %v1053, 0
      %v1446 = vsel %vm1318, %v1055, 0
      %v1449 = vsel %vm1318, %v1057, 0
      %v1452 = vsel %vm1318, %v1059, 0
      %v1455 = vsel %vm1318, %v1061, 0
      %v1458 = vsel %vm1318, %v1063, 0
      %v1461 = vsel %vm1318, %v1065, 0
      %v1464 = vsel %vm1318, %v1067, 0
      %v1467 = vsel %vm1318, %v1069, 0
      %v1470 = vsel %vm1318, %v1071, 0
      %v1473 = vsel %vm1318, %v1073, 0
      %v1476 = vsel %vm1318, %v1075, 0
      %v1479 = vsel %vm1318, %v1077, 0
      %v1482 = vsel %vm1318, %v1079, 0
      %v1485 = vsel %vm1318, %v1081, 0
      %v1488 = vsel %vm1318, %v1083, 0
      %v1491 = vsel %vm1318, %v1085, 0
      %v1494 = vsel %vm1318, %v1087, 0
      %v1497 = vsel %vm1318, %v1089, 0
      %v1500 = vsel %vm1318, %v1091, 0
      %v1503 = vsel %vm1318, %v1093, 0
      %v1506 = vsel %vm1318, %v1095, 0
      %v1509 = vsel %vm1318, %v1097, 0
      %v1512 = vsel %vm1318, %v1099, 0
      %v1515 = vsel %vm1318, %v1101, 0
      %v1518 = vsel %vm1318, %v1103, 0
      %v1521 = vsel %vm1318, %v1105, 0
      %v1524 = vsel %vm1318, %v1107, 0
      %v1527 = vsel %vm1318, %v1109, 0
      %v1530 = vsel %vm1318, %v1111, 0
      %v1533 = vsel %vm1318, %v1113, 0
      %v1536 = vsel %vm1318, %v1115, 0
      %v1539 = vsel %vm1318, %v1117, 0
      %v1542 = vsel %vm1318, %v1119, 0
      %v1545 = vsel %vm1318, %v1121, 0
      %v1548 = vsel %vm1318, %v1123, 0
      %v1551 = vsel %vm1318, %v1125, 0
      %v1554 = vsel %vm1318, %v1127, 0
      %v1557 = vsel %vm1318, %v1129, 0
      %v1560 = vsel %vm1318, %v1131, 0
      %v1563 = vsel %vm1318, %v1133, 0
      %v1566 = vsel %vm1318, %v1135, 0
      %v1569 = vsel %vm1318, %v1137, 0
      %v1572 = vsel %vm1318, %v1139, 0
      %v1575 = vsel %vm1318, %v1141, 0
      %v1578 = vsel %vm1318, %v1143, 0
      %v1581 = vsel %vm1318, %v1145, 0
      %v1584 = vsel %vm1318, %v1147, 0
      %v1587 = vsel %vm1318, %v1149, 0
      %v1590 = vsel %vm1318, %v1151, 0
      %v1593 = vsel %vm1318, %v1153, 0
      %v1596 = vsel %vm1318, %v1155, 0
      %v1599 = vsel %vm1318, %v1157, 0
      %v1602 = vsel %vm1318, %v1159, 0
      %v1605 = vsel %vm1318, %v1161, 0
      %1607 = vmatpush.bf16.msra.mxu0 %v1305
      %1608 = vmatpush.bf16.msra.mxu0 %v1304
      %1609 = vmatpush.bf16.msra.mxu0 %v1303
      %1610 = vmatpush.bf16.msra.mxu0 %v1302
      %1611 = vmatpush.bf16.msra.mxu0 %v1301
      %1612 = vmatpush.bf16.msra.mxu0 %v1300
      %1613 = vmatpush.bf16.msra.mxu0 %v1299
      %1614 = vmatpush.bf16.msra.mxu0 %v1298
      %1615 = vmatmul.bf16.gmra.mxu0 %v970
      %v1616 = vpop.f32.mrf.mxu0
      %v1617 = vadd.f32 %v392, %v1616
      %v1618 = vpop.f32.mrf.mxu0
      %v1619 = vadd.f32 %v392, %v1618
      %1620 = vmatmul.bf16.gmra.mxu0 %v972
      %v1621 = vpop.f32.mrf.mxu0
      %v1622 = vadd.f32 %v392, %v1621
      %v1623 = vpop.f32.mrf.mxu0
      %v1624 = vadd.f32 %v392, %v1623
      %1625 = vmatmul.bf16.gmra.mxu0 %v974
      %v1626 = vpop.f32.mrf.mxu0
      %v1627 = vadd.f32 %v392, %v1626
      %v1628 = vpop.f32.mrf.mxu0
      %v1629 = vadd.f32 %v392, %v1628
      %1630 = vmatmul.bf16.gmra.mxu0 %v976
      %v1631 = vpop.f32.mrf.mxu0
      %v1632 = vadd.f32 %v392, %v1631
      %v1633 = vpop.f32.mrf.mxu0
      %v1634 = vadd.f32 %v392, %v1633
      %1635 = vmatmul.bf16.gmra.mxu0 %v978
      %v1636 = vpop.f32.mrf.mxu0
      %v1637 = vadd.f32 %v392, %v1636
      %v1638 = vpop.f32.mrf.mxu0
      %v1639 = vadd.f32 %v392, %v1638
      %1640 = vmatmul.bf16.gmra.mxu0 %v980
      %v1641 = vpop.f32.mrf.mxu0
      %v1642 = vadd.f32 %v392, %v1641
      %v1643 = vpop.f32.mrf.mxu0
      %v1644 = vadd.f32 %v392, %v1643
      %1645 = vmatmul.bf16.gmra.mxu0 %v982
      %v1646 = vpop.f32.mrf.mxu0
      %v1647 = vadd.f32 %v392, %v1646
      %v1648 = vpop.f32.mrf.mxu0
      %v1649 = vadd.f32 %v392, %v1648
      %1650 = vmatmul.bf16.gmra.mxu0 %v984
      %v1651 = vpop.f32.mrf.mxu0
      %v1652 = vadd.f32 %v392, %v1651
      %v1653 = vpop.f32.mrf.mxu0
      %v1654 = vadd.f32 %v392, %v1653
      %1655 = vmatmul.bf16.gmra.mxu0 %v986
      %v1656 = vpop.f32.mrf.mxu0
      %v1657 = vadd.f32 %v392, %v1656
      %v1658 = vpop.f32.mrf.mxu0
      %v1659 = vadd.f32 %v392, %v1658
      %1660 = vmatmul.bf16.gmra.mxu0 %v988
      %v1661 = vpop.f32.mrf.mxu0
      %v1662 = vadd.f32 %v392, %v1661
      %v1663 = vpop.f32.mrf.mxu0
      %v1664 = vadd.f32 %v392, %v1663
      %1665 = vmatmul.bf16.gmra.mxu0 %v990
      %v1666 = vpop.f32.mrf.mxu0
      %v1667 = vadd.f32 %v392, %v1666
      %v1668 = vpop.f32.mrf.mxu0
      %v1669 = vadd.f32 %v392, %v1668
      %1670 = vmatmul.bf16.gmra.mxu0 %v992
      %v1671 = vpop.f32.mrf.mxu0
      %v1672 = vadd.f32 %v392, %v1671
      %v1673 = vpop.f32.mrf.mxu0
      %v1674 = vadd.f32 %v392, %v1673
      %1675 = vmatmul.bf16.gmra.mxu0 %v994
      %v1676 = vpop.f32.mrf.mxu0
      %v1677 = vadd.f32 %v392, %v1676
      %v1678 = vpop.f32.mrf.mxu0
      %v1679 = vadd.f32 %v392, %v1678
      %1680 = vmatmul.bf16.gmra.mxu0 %v996
      %v1681 = vpop.f32.mrf.mxu0
      %v1682 = vadd.f32 %v392, %v1681
      %v1683 = vpop.f32.mrf.mxu0
      %v1684 = vadd.f32 %v392, %v1683
      %1685 = vmatmul.bf16.gmra.mxu0 %v998
      %v1686 = vpop.f32.mrf.mxu0
      %v1687 = vadd.f32 %v392, %v1686
      %v1688 = vpop.f32.mrf.mxu0
      %v1689 = vadd.f32 %v392, %v1688
      %1690 = vmatmul.bf16.gmra.mxu0 %v1000
      %v1691 = vpop.f32.mrf.mxu0
      %v1692 = vadd.f32 %v392, %v1691
      %v1693 = vpop.f32.mrf.mxu0
      %v1694 = vadd.f32 %v392, %v1693
      %1695 = vmatmul.bf16.gmra.mxu0 %v1002
      %v1696 = vpop.f32.mrf.mxu0
      %v1697 = vadd.f32 %v392, %v1696
      %v1698 = vpop.f32.mrf.mxu0
      %v1699 = vadd.f32 %v392, %v1698
      %1700 = vmatmul.bf16.gmra.mxu0 %v1004
      %v1701 = vpop.f32.mrf.mxu0
      %v1702 = vadd.f32 %v392, %v1701
      %v1703 = vpop.f32.mrf.mxu0
      %v1704 = vadd.f32 %v392, %v1703
      %1705 = vmatmul.bf16.gmra.mxu0 %v1006
      %v1706 = vpop.f32.mrf.mxu0
      %v1707 = vadd.f32 %v392, %v1706
      %v1708 = vpop.f32.mrf.mxu0
      %v1709 = vadd.f32 %v392, %v1708
      %1710 = vmatmul.bf16.gmra.mxu0 %v1008
      %v1711 = vpop.f32.mrf.mxu0
      %v1712 = vadd.f32 %v392, %v1711
      %v1713 = vpop.f32.mrf.mxu0
      %v1714 = vadd.f32 %v392, %v1713
      %1715 = vmatmul.bf16.gmra.mxu0 %v1010
      %v1716 = vpop.f32.mrf.mxu0
      %v1717 = vadd.f32 %v392, %v1716
      %v1718 = vpop.f32.mrf.mxu0
      %v1719 = vadd.f32 %v392, %v1718
      %1720 = vmatmul.bf16.gmra.mxu0 %v1012
      %v1721 = vpop.f32.mrf.mxu0
      %v1722 = vadd.f32 %v392, %v1721
      %v1723 = vpop.f32.mrf.mxu0
      %v1724 = vadd.f32 %v392, %v1723
      %1725 = vmatmul.bf16.gmra.mxu0 %v1014
      %v1726 = vpop.f32.mrf.mxu0
      %v1727 = vadd.f32 %v392, %v1726
      %v1728 = vpop.f32.mrf.mxu0
      %v1729 = vadd.f32 %v392, %v1728
      %1730 = vmatmul.bf16.gmra.mxu0 %v1016
      %v1731 = vpop.f32.mrf.mxu0
      %v1732 = vadd.f32 %v392, %v1731
      %v1733 = vpop.f32.mrf.mxu0
      %v1734 = vadd.f32 %v392, %v1733
      %1735 = vmatmul.bf16.gmra.mxu0 %v1018
      %v1736 = vpop.f32.mrf.mxu0
      %v1737 = vadd.f32 %v392, %v1736
      %v1738 = vpop.f32.mrf.mxu0
      %v1739 = vadd.f32 %v392, %v1738
      %1740 = vmatmul.bf16.gmra.mxu0 %v1020
      %v1741 = vpop.f32.mrf.mxu0
      %v1742 = vadd.f32 %v392, %v1741
      %v1743 = vpop.f32.mrf.mxu0
      %v1744 = vadd.f32 %v392, %v1743
      %1745 = vmatmul.bf16.gmra.mxu0 %v1022
      %v1746 = vpop.f32.mrf.mxu0
      %v1747 = vadd.f32 %v392, %v1746
      %v1748 = vpop.f32.mrf.mxu0
      %v1749 = vadd.f32 %v392, %v1748
      %1750 = vmatmul.bf16.gmra.mxu0 %v1024
      %v1751 = vpop.f32.mrf.mxu0
      %v1752 = vadd.f32 %v392, %v1751
      %v1753 = vpop.f32.mrf.mxu0
      %v1754 = vadd.f32 %v392, %v1753
      %1755 = vmatmul.bf16.gmra.mxu0 %v1026
      %v1756 = vpop.f32.mrf.mxu0
      %v1757 = vadd.f32 %v392, %v1756
      %v1758 = vpop.f32.mrf.mxu0
      %v1759 = vadd.f32 %v392, %v1758
      %1760 = vmatmul.bf16.gmra.mxu0 %v1028
      %v1761 = vpop.f32.mrf.mxu0
      %v1762 = vadd.f32 %v392, %v1761
      %v1763 = vpop.f32.mrf.mxu0
      %v1764 = vadd.f32 %v392, %v1763
      %1765 = vmatmul.bf16.gmra.mxu0 %v1030
      %v1766 = vpop.f32.mrf.mxu0
      %v1767 = vadd.f32 %v392, %v1766
      %v1768 = vpop.f32.mrf.mxu0
      %v1769 = vadd.f32 %v392, %v1768
      %1770 = vmatmul.bf16.gmra.mxu0 %v1032
      %v1771 = vpop.f32.mrf.mxu0
      %v1772 = vadd.f32 %v392, %v1771
      %v1773 = vpop.f32.mrf.mxu0
      %v1774 = vadd.f32 %v392, %v1773
      %1775 = vmatmul.bf16.gmra.mxu0 %v1034
      %v1776 = vpop.f32.mrf.mxu0
      %v1777 = vadd.f32 %v392, %v1776
      %v1778 = vpop.f32.mrf.mxu0
      %v1779 = vadd.f32 %v392, %v1778
      %1780 = vmatmul.bf16.gmra.mxu0 %v1036
      %v1781 = vpop.f32.mrf.mxu0
      %v1782 = vadd.f32 %v392, %v1781
      %v1783 = vpop.f32.mrf.mxu0
      %v1784 = vadd.f32 %v392, %v1783
      %1785 = vmatmul.bf16.gmra.mxu0 %v1038
      %v1786 = vpop.f32.mrf.mxu0
      %v1787 = vadd.f32 %v392, %v1786
      %v1788 = vpop.f32.mrf.mxu0
      %v1789 = vadd.f32 %v392, %v1788
      %1790 = vmatmul.bf16.gmra.mxu0 %v1040
      %v1791 = vpop.f32.mrf.mxu0
      %v1792 = vadd.f32 %v392, %v1791
      %v1793 = vpop.f32.mrf.mxu0
      %v1794 = vadd.f32 %v392, %v1793
      %1795 = vmatmul.bf16.gmra.mxu0 %v1042
      %v1796 = vpop.f32.mrf.mxu0
      %v1797 = vadd.f32 %v392, %v1796
      %v1798 = vpop.f32.mrf.mxu0
      %v1799 = vadd.f32 %v392, %v1798
      %1800 = vmatmul.bf16.gmra.mxu0 %v1044
      %v1801 = vpop.f32.mrf.mxu0
      %v1802 = vadd.f32 %v392, %v1801
      %v1803 = vpop.f32.mrf.mxu0
      %v1804 = vadd.f32 %v392, %v1803
      %1805 = vmatmul.bf16.gmra.mxu0 %v1046
      %v1806 = vpop.f32.mrf.mxu0
      %v1807 = vadd.f32 %v392, %v1806
      %v1808 = vpop.f32.mrf.mxu0
      %v1809 = vadd.f32 %v392, %v1808
      %1810 = vmatmul.bf16.gmra.mxu0 %v1048
      %v1811 = vpop.f32.mrf.mxu0
      %v1812 = vadd.f32 %v392, %v1811
      %v1813 = vpop.f32.mrf.mxu0
      %v1814 = vadd.f32 %v392, %v1813
      %1815 = vmatmul.bf16.gmra.mxu0 %v1050
      %v1816 = vpop.f32.mrf.mxu0
      %v1817 = vadd.f32 %v392, %v1816
      %v1818 = vpop.f32.mrf.mxu0
      %v1819 = vadd.f32 %v392, %v1818
      %1820 = vmatmul.bf16.gmra.mxu0 %v1052
      %v1821 = vpop.f32.mrf.mxu0
      %v1822 = vadd.f32 %v392, %v1821
      %v1823 = vpop.f32.mrf.mxu0
      %v1824 = vadd.f32 %v392, %v1823
      %1825 = vmatmul.bf16.gmra.mxu0 %v1054
      %v1826 = vpop.f32.mrf.mxu0
      %v1827 = vadd.f32 %v392, %v1826
      %v1828 = vpop.f32.mrf.mxu0
      %v1829 = vadd.f32 %v392, %v1828
      %1830 = vmatmul.bf16.gmra.mxu0 %v1056
      %v1831 = vpop.f32.mrf.mxu0
      %v1832 = vadd.f32 %v392, %v1831
      %v1833 = vpop.f32.mrf.mxu0
      %v1834 = vadd.f32 %v392, %v1833
      %1835 = vmatmul.bf16.gmra.mxu0 %v1058
      %v1836 = vpop.f32.mrf.mxu0
      %v1837 = vadd.f32 %v392, %v1836
      %v1838 = vpop.f32.mrf.mxu0
      %v1839 = vadd.f32 %v392, %v1838
      %1840 = vmatmul.bf16.gmra.mxu0 %v1060
      %v1841 = vpop.f32.mrf.mxu0
      %v1842 = vadd.f32 %v392, %v1841
      %v1843 = vpop.f32.mrf.mxu0
      %v1844 = vadd.f32 %v392, %v1843
      %1845 = vmatmul.bf16.gmra.mxu0 %v1062
      %v1846 = vpop.f32.mrf.mxu0
      %v1847 = vadd.f32 %v392, %v1846
      %v1848 = vpop.f32.mrf.mxu0
      %v1849 = vadd.f32 %v392, %v1848
      %1850 = vmatmul.bf16.gmra.mxu0 %v1064
      %v1851 = vpop.f32.mrf.mxu0
      %v1852 = vadd.f32 %v392, %v1851
      %v1853 = vpop.f32.mrf.mxu0
      %v1854 = vadd.f32 %v392, %v1853
      %1855 = vmatmul.bf16.gmra.mxu0 %v1066
      %v1856 = vpop.f32.mrf.mxu0
      %v1857 = vadd.f32 %v392, %v1856
      %v1858 = vpop.f32.mrf.mxu0
      %v1859 = vadd.f32 %v392, %v1858
      %1860 = vmatmul.bf16.gmra.mxu0 %v1068
      %v1861 = vpop.f32.mrf.mxu0
      %v1862 = vadd.f32 %v392, %v1861
      %v1863 = vpop.f32.mrf.mxu0
      %v1864 = vadd.f32 %v392, %v1863
      %1865 = vmatmul.bf16.gmra.mxu0 %v1070
      %v1866 = vpop.f32.mrf.mxu0
      %v1867 = vadd.f32 %v392, %v1866
      %v1868 = vpop.f32.mrf.mxu0
      %v1869 = vadd.f32 %v392, %v1868
      %1870 = vmatmul.bf16.gmra.mxu0 %v1072
      %v1871 = vpop.f32.mrf.mxu0
      %v1872 = vadd.f32 %v392, %v1871
      %v1873 = vpop.f32.mrf.mxu0
      %v1874 = vadd.f32 %v392, %v1873
      %1875 = vmatmul.bf16.gmra.mxu0 %v1074
      %v1876 = vpop.f32.mrf.mxu0
      %v1877 = vadd.f32 %v392, %v1876
      %v1878 = vpop.f32.mrf.mxu0
      %v1879 = vadd.f32 %v392, %v1878
      %1880 = vmatmul.bf16.gmra.mxu0 %v1076
      %v1881 = vpop.f32.mrf.mxu0
      %v1882 = vadd.f32 %v392, %v1881
      %v1883 = vpop.f32.mrf.mxu0
      %v1884 = vadd.f32 %v392, %v1883
      %1885 = vmatmul.bf16.gmra.mxu0 %v1078
      %v1886 = vpop.f32.mrf.mxu0
      %v1887 = vadd.f32 %v392, %v1886
      %v1888 = vpop.f32.mrf.mxu0
      %v1889 = vadd.f32 %v392, %v1888
      %1890 = vmatmul.bf16.gmra.mxu0 %v1080
      %v1891 = vpop.f32.mrf.mxu0
      %v1892 = vadd.f32 %v392, %v1891
      %v1893 = vpop.f32.mrf.mxu0
      %v1894 = vadd.f32 %v392, %v1893
      %1895 = vmatmul.bf16.gmra.mxu0 %v1082
      %v1896 = vpop.f32.mrf.mxu0
      %v1897 = vadd.f32 %v392, %v1896
      %v1898 = vpop.f32.mrf.mxu0
      %v1899 = vadd.f32 %v392, %v1898
      %1900 = vmatmul.bf16.gmra.mxu0 %v1084
      %v1901 = vpop.f32.mrf.mxu0
      %v1902 = vadd.f32 %v392, %v1901
      %v1903 = vpop.f32.mrf.mxu0
      %v1904 = vadd.f32 %v392, %v1903
      %1905 = vmatmul.bf16.gmra.mxu0 %v1086
      %v1906 = vpop.f32.mrf.mxu0
      %v1907 = vadd.f32 %v392, %v1906
      %v1908 = vpop.f32.mrf.mxu0
      %v1909 = vadd.f32 %v392, %v1908
      %1910 = vmatmul.bf16.gmra.mxu0 %v1088
      %v1911 = vpop.f32.mrf.mxu0
      %v1912 = vadd.f32 %v392, %v1911
      %v1913 = vpop.f32.mrf.mxu0
      %v1914 = vadd.f32 %v392, %v1913
      %1915 = vmatmul.bf16.gmra.mxu0 %v1090
      %v1916 = vpop.f32.mrf.mxu0
      %v1917 = vadd.f32 %v392, %v1916
      %v1918 = vpop.f32.mrf.mxu0
      %v1919 = vadd.f32 %v392, %v1918
      %1920 = vmatmul.bf16.gmra.mxu0 %v1092
      %v1921 = vpop.f32.mrf.mxu0
      %v1922 = vadd.f32 %v392, %v1921
      %v1923 = vpop.f32.mrf.mxu0
      %v1924 = vadd.f32 %v392, %v1923
      %1925 = vmatmul.bf16.gmra.mxu0 %v1094
      %v1926 = vpop.f32.mrf.mxu0
      %v1927 = vadd.f32 %v392, %v1926
      %v1928 = vpop.f32.mrf.mxu0
      %v1929 = vadd.f32 %v392, %v1928
      %1930 = vmatmul.bf16.gmra.mxu0 %v1096
      %v1931 = vpop.f32.mrf.mxu0
      %v1932 = vadd.f32 %v392, %v1931
      %v1933 = vpop.f32.mrf.mxu0
      %v1934 = vadd.f32 %v392, %v1933
      %1935 = vmatmul.bf16.gmra.mxu0 %v1098
      %v1936 = vpop.f32.mrf.mxu0
      %v1937 = vadd.f32 %v392, %v1936
      %v1938 = vpop.f32.mrf.mxu0
      %v1939 = vadd.f32 %v392, %v1938
      %1940 = vmatmul.bf16.gmra.mxu0 %v1100
      %v1941 = vpop.f32.mrf.mxu0
      %v1942 = vadd.f32 %v392, %v1941
      %v1943 = vpop.f32.mrf.mxu0
      %v1944 = vadd.f32 %v392, %v1943
      %1945 = vmatmul.bf16.gmra.mxu0 %v1102
      %v1946 = vpop.f32.mrf.mxu0
      %v1947 = vadd.f32 %v392, %v1946
      %v1948 = vpop.f32.mrf.mxu0
      %v1949 = vadd.f32 %v392, %v1948
      %1950 = vmatmul.bf16.gmra.mxu0 %v1104
      %v1951 = vpop.f32.mrf.mxu0
      %v1952 = vadd.f32 %v392, %v1951
      %v1953 = vpop.f32.mrf.mxu0
      %v1954 = vadd.f32 %v392, %v1953
      %1955 = vmatmul.bf16.gmra.mxu0 %v1106
      %v1956 = vpop.f32.mrf.mxu0
      %v1957 = vadd.f32 %v392, %v1956
      %v1958 = vpop.f32.mrf.mxu0
      %v1959 = vadd.f32 %v392, %v1958
      %1960 = vmatmul.bf16.gmra.mxu0 %v1108
      %v1961 = vpop.f32.mrf.mxu0
      %v1962 = vadd.f32 %v392, %v1961
      %v1963 = vpop.f32.mrf.mxu0
      %v1964 = vadd.f32 %v392, %v1963
      %1965 = vmatmul.bf16.gmra.mxu0 %v1110
      %v1966 = vpop.f32.mrf.mxu0
      %v1967 = vadd.f32 %v392, %v1966
      %v1968 = vpop.f32.mrf.mxu0
      %v1969 = vadd.f32 %v392, %v1968
      %1970 = vmatmul.bf16.gmra.mxu0 %v1112
      %v1971 = vpop.f32.mrf.mxu0
      %v1972 = vadd.f32 %v392, %v1971
      %v1973 = vpop.f32.mrf.mxu0
      %v1974 = vadd.f32 %v392, %v1973
      %1975 = vmatmul.bf16.gmra.mxu0 %v1114
      %v1976 = vpop.f32.mrf.mxu0
      %v1977 = vadd.f32 %v392, %v1976
      %v1978 = vpop.f32.mrf.mxu0
      %v1979 = vadd.f32 %v392, %v1978
      %1980 = vmatmul.bf16.gmra.mxu0 %v1116
      %v1981 = vpop.f32.mrf.mxu0
      %v1982 = vadd.f32 %v392, %v1981
      %v1983 = vpop.f32.mrf.mxu0
      %v1984 = vadd.f32 %v392, %v1983
      %1985 = vmatmul.bf16.gmra.mxu0 %v1118
      %v1986 = vpop.f32.mrf.mxu0
      %v1987 = vadd.f32 %v392, %v1986
      %v1988 = vpop.f32.mrf.mxu0
      %v1989 = vadd.f32 %v392, %v1988
      %1990 = vmatmul.bf16.gmra.mxu0 %v1120
      %v1991 = vpop.f32.mrf.mxu0
      %v1992 = vadd.f32 %v392, %v1991
      %v1993 = vpop.f32.mrf.mxu0
      %v1994 = vadd.f32 %v392, %v1993
      %1995 = vmatmul.bf16.gmra.mxu0 %v1122
      %v1996 = vpop.f32.mrf.mxu0
      %v1997 = vadd.f32 %v392, %v1996
      %v1998 = vpop.f32.mrf.mxu0
      %v1999 = vadd.f32 %v392, %v1998
      %2000 = vmatmul.bf16.gmra.mxu0 %v1124
      %v2001 = vpop.f32.mrf.mxu0
      %v2002 = vadd.f32 %v392, %v2001
      %v2003 = vpop.f32.mrf.mxu0
      %v2004 = vadd.f32 %v392, %v2003
      %2005 = vmatmul.bf16.gmra.mxu0 %v1126
      %v2006 = vpop.f32.mrf.mxu0
      %v2007 = vadd.f32 %v392, %v2006
      %v2008 = vpop.f32.mrf.mxu0
      %v2009 = vadd.f32 %v392, %v2008
      %2010 = vmatmul.bf16.gmra.mxu0 %v1128
      %v2011 = vpop.f32.mrf.mxu0
      %v2012 = vadd.f32 %v392, %v2011
      %v2013 = vpop.f32.mrf.mxu0
      %v2014 = vadd.f32 %v392, %v2013
      %2015 = vmatmul.bf16.gmra.mxu0 %v1130
      %v2016 = vpop.f32.mrf.mxu0
      %v2017 = vadd.f32 %v392, %v2016
      %v2018 = vpop.f32.mrf.mxu0
      %v2019 = vadd.f32 %v392, %v2018
      %2020 = vmatmul.bf16.gmra.mxu0 %v1132
      %v2021 = vpop.f32.mrf.mxu0
      %v2022 = vadd.f32 %v392, %v2021
      %v2023 = vpop.f32.mrf.mxu0
      %v2024 = vadd.f32 %v392, %v2023
      %2025 = vmatmul.bf16.gmra.mxu0 %v1134
      %v2026 = vpop.f32.mrf.mxu0
      %v2027 = vadd.f32 %v392, %v2026
      %v2028 = vpop.f32.mrf.mxu0
      %v2029 = vadd.f32 %v392, %v2028
      %2030 = vmatmul.bf16.gmra.mxu0 %v1136
      %v2031 = vpop.f32.mrf.mxu0
      %v2032 = vadd.f32 %v392, %v2031
      %v2033 = vpop.f32.mrf.mxu0
      %v2034 = vadd.f32 %v392, %v2033
      %2035 = vmatmul.bf16.gmra.mxu0 %v1138
      %v2036 = vpop.f32.mrf.mxu0
      %v2037 = vadd.f32 %v392, %v2036
      %v2038 = vpop.f32.mrf.mxu0
      %v2039 = vadd.f32 %v392, %v2038
      %2040 = vmatmul.bf16.gmra.mxu0 %v1140
      %v2041 = vpop.f32.mrf.mxu0
      %v2042 = vadd.f32 %v392, %v2041
      %v2043 = vpop.f32.mrf.mxu0
      %v2044 = vadd.f32 %v392, %v2043
      %2045 = vmatmul.bf16.gmra.mxu0 %v1142
      %v2046 = vpop.f32.mrf.mxu0
      %v2047 = vadd.f32 %v392, %v2046
      %v2048 = vpop.f32.mrf.mxu0
      %v2049 = vadd.f32 %v392, %v2048
      %2050 = vmatmul.bf16.gmra.mxu0 %v1144
      %v2051 = vpop.f32.mrf.mxu0
      %v2052 = vadd.f32 %v392, %v2051
      %v2053 = vpop.f32.mrf.mxu0
      %v2054 = vadd.f32 %v392, %v2053
      %2055 = vmatmul.bf16.gmra.mxu0 %v1146
      %v2056 = vpop.f32.mrf.mxu0
      %v2057 = vadd.f32 %v392, %v2056
      %v2058 = vpop.f32.mrf.mxu0
      %v2059 = vadd.f32 %v392, %v2058
      %2060 = vmatmul.bf16.gmra.mxu0 %v1148
      %v2061 = vpop.f32.mrf.mxu0
      %v2062 = vadd.f32 %v392, %v2061
      %v2063 = vpop.f32.mrf.mxu0
      %v2064 = vadd.f32 %v392, %v2063
      %2065 = vmatmul.bf16.gmra.mxu0 %v1150
      %v2066 = vpop.f32.mrf.mxu0
      %v2067 = vadd.f32 %v392, %v2066
      %v2068 = vpop.f32.mrf.mxu0
      %v2069 = vadd.f32 %v392, %v2068
      %2070 = vmatmul.bf16.gmra.mxu0 %v1152
      %v2071 = vpop.f32.mrf.mxu0
      %v2072 = vadd.f32 %v392, %v2071
      %v2073 = vpop.f32.mrf.mxu0
      %v2074 = vadd.f32 %v392, %v2073
      %2075 = vmatmul.bf16.gmra.mxu0 %v1154
      %v2076 = vpop.f32.mrf.mxu0
      %v2077 = vadd.f32 %v392, %v2076
      %v2078 = vpop.f32.mrf.mxu0
      %v2079 = vadd.f32 %v392, %v2078
      %2080 = vmatmul.bf16.gmra.mxu0 %v1156
      %v2081 = vpop.f32.mrf.mxu0
      %v2082 = vadd.f32 %v392, %v2081
      %v2083 = vpop.f32.mrf.mxu0
      %v2084 = vadd.f32 %v392, %v2083
      %2085 = vmatmul.bf16.gmra.mxu0 %v1158
      %v2086 = vpop.f32.mrf.mxu0
      %v2087 = vadd.f32 %v392, %v2086
      %v2088 = vpop.f32.mrf.mxu0
      %v2089 = vadd.f32 %v392, %v2088
      %2090 = vmatmul.bf16.gmra.mxu0 %v1160
      %v2091 = vpop.f32.mrf.mxu0
      %v2092 = vadd.f32 %v392, %v2091
      %v2093 = vpop.f32.mrf.mxu0
      %v2094 = vadd.f32 %v392, %v2093
      %2095 = vdwg.mxu0
      %2096 = vmatpush.bf16.msra.mxu0 0
      %2097 = vmatpush.bf16.msra.mxu0 0
      %2098 = vmatpush.bf16.msra.mxu0 0
      %2099 = vmatpush.bf16.msra.mxu0 0
      %2100 = vmatpush.bf16.msra.mxu0 0
      %2101 = vmatpush.bf16.msra.mxu0 0
      %2102 = vmatpush.bf16.msra.mxu0 %v1307
      %2103 = vmatpush.bf16.msra.mxu0 %v1306
      %2104 = vmatmul.bf16.gmra.mxu0 %v1320
      %v2105 = vpop.f32.mrf.mxu0
      %v2106 = vadd.f32 %v1617, %v2105
      %v2107 = vpop.f32.mrf.mxu0
      %v2108 = vadd.f32 %v1619, %v2107
      %2109 = vmatmul.bf16.gmra.mxu0 %v1323
      %v2110 = vpop.f32.mrf.mxu0
      %v2111 = vadd.f32 %v1622, %v2110
      %v2112 = vpop.f32.mrf.mxu0
      %v2113 = vadd.f32 %v1624, %v2112
      %2114 = vmatmul.bf16.gmra.mxu0 %v1326
      %v2115 = vpop.f32.mrf.mxu0
      %v2116 = vadd.f32 %v1627, %v2115
      %v2117 = vpop.f32.mrf.mxu0
      %v2118 = vadd.f32 %v1629, %v2117
      %2119 = vmatmul.bf16.gmra.mxu0 %v1329
      %v2120 = vpop.f32.mrf.mxu0
      %v2121 = vadd.f32 %v1632, %v2120
      %v2122 = vpop.f32.mrf.mxu0
      %v2123 = vadd.f32 %v1634, %v2122
      %2124 = vmatmul.bf16.gmra.mxu0 %v1332
      %v2125 = vpop.f32.mrf.mxu0
      %v2126 = vadd.f32 %v1637, %v2125
      %v2127 = vpop.f32.mrf.mxu0
      %v2128 = vadd.f32 %v1639, %v2127
      %2129 = vmatmul.bf16.gmra.mxu0 %v1335
      %v2130 = vpop.f32.mrf.mxu0
      %v2131 = vadd.f32 %v1642, %v2130
      %v2132 = vpop.f32.mrf.mxu0
      %v2133 = vadd.f32 %v1644, %v2132
      %2134 = vmatmul.bf16.gmra.mxu0 %v1338
      %v2135 = vpop.f32.mrf.mxu0
      %v2136 = vadd.f32 %v1647, %v2135
      %v2137 = vpop.f32.mrf.mxu0
      %v2138 = vadd.f32 %v1649, %v2137
      %2139 = vmatmul.bf16.gmra.mxu0 %v1341
      %v2140 = vpop.f32.mrf.mxu0
      %v2141 = vadd.f32 %v1652, %v2140
      %v2142 = vpop.f32.mrf.mxu0
      %v2143 = vadd.f32 %v1654, %v2142
      %2144 = vmatmul.bf16.gmra.mxu0 %v1344
      %v2145 = vpop.f32.mrf.mxu0
      %v2146 = vadd.f32 %v1657, %v2145
      %v2147 = vpop.f32.mrf.mxu0
      %v2148 = vadd.f32 %v1659, %v2147
      %2149 = vmatmul.bf16.gmra.mxu0 %v1347
      %v2150 = vpop.f32.mrf.mxu0
      %v2151 = vadd.f32 %v1662, %v2150
      %v2152 = vpop.f32.mrf.mxu0
      %v2153 = vadd.f32 %v1664, %v2152
      %2154 = vmatmul.bf16.gmra.mxu0 %v1350
      %v2155 = vpop.f32.mrf.mxu0
      %v2156 = vadd.f32 %v1667, %v2155
      %v2157 = vpop.f32.mrf.mxu0
      %v2158 = vadd.f32 %v1669, %v2157
      %2159 = vmatmul.bf16.gmra.mxu0 %v1353
      %v2160 = vpop.f32.mrf.mxu0
      %v2161 = vadd.f32 %v1672, %v2160
      %v2162 = vpop.f32.mrf.mxu0
      %v2163 = vadd.f32 %v1674, %v2162
      %2164 = vmatmul.bf16.gmra.mxu0 %v1356
      %v2165 = vpop.f32.mrf.mxu0
      %v2166 = vadd.f32 %v1677, %v2165
      %v2167 = vpop.f32.mrf.mxu0
      %v2168 = vadd.f32 %v1679, %v2167
      %2169 = vmatmul.bf16.gmra.mxu0 %v1359
      %v2170 = vpop.f32.mrf.mxu0
      %v2171 = vadd.f32 %v1682, %v2170
      %v2172 = vpop.f32.mrf.mxu0
      %v2173 = vadd.f32 %v1684, %v2172
      %2174 = vmatmul.bf16.gmra.mxu0 %v1362
      %v2175 = vpop.f32.mrf.mxu0
      %v2176 = vadd.f32 %v1687, %v2175
      %v2177 = vpop.f32.mrf.mxu0
      %v2178 = vadd.f32 %v1689, %v2177
      %2179 = vmatmul.bf16.gmra.mxu0 %v1365
      %v2180 = vpop.f32.mrf.mxu0
      %v2181 = vadd.f32 %v1692, %v2180
      %v2182 = vpop.f32.mrf.mxu0
      %v2183 = vadd.f32 %v1694, %v2182
      %2184 = vmatmul.bf16.gmra.mxu0 %v1368
      %v2185 = vpop.f32.mrf.mxu0
      %v2186 = vadd.f32 %v1697, %v2185
      %v2187 = vpop.f32.mrf.mxu0
      %v2188 = vadd.f32 %v1699, %v2187
      %2189 = vmatmul.bf16.gmra.mxu0 %v1371
      %v2190 = vpop.f32.mrf.mxu0
      %v2191 = vadd.f32 %v1702, %v2190
      %v2192 = vpop.f32.mrf.mxu0
      %v2193 = vadd.f32 %v1704, %v2192
      %2194 = vmatmul.bf16.gmra.mxu0 %v1374
      %v2195 = vpop.f32.mrf.mxu0
      %v2196 = vadd.f32 %v1707, %v2195
      %v2197 = vpop.f32.mrf.mxu0
      %v2198 = vadd.f32 %v1709, %v2197
      %2199 = vmatmul.bf16.gmra.mxu0 %v1377
      %v2200 = vpop.f32.mrf.mxu0
      %v2201 = vadd.f32 %v1712, %v2200
      %v2202 = vpop.f32.mrf.mxu0
      %v2203 = vadd.f32 %v1714, %v2202
      %2204 = vmatmul.bf16.gmra.mxu0 %v1380
      %v2205 = vpop.f32.mrf.mxu0
      %v2206 = vadd.f32 %v1717, %v2205
      %v2207 = vpop.f32.mrf.mxu0
      %v2208 = vadd.f32 %v1719, %v2207
      %2209 = vmatmul.bf16.gmra.mxu0 %v1383
      %v2210 = vpop.f32.mrf.mxu0
      %v2211 = vadd.f32 %v1722, %v2210
      %v2212 = vpop.f32.mrf.mxu0
      %v2213 = vadd.f32 %v1724, %v2212
      %2214 = vmatmul.bf16.gmra.mxu0 %v1386
      %v2215 = vpop.f32.mrf.mxu0
      %v2216 = vadd.f32 %v1727, %v2215
      %v2217 = vpop.f32.mrf.mxu0
      %v2218 = vadd.f32 %v1729, %v2217
      %2219 = vmatmul.bf16.gmra.mxu0 %v1389
      %v2220 = vpop.f32.mrf.mxu0
      %v2221 = vadd.f32 %v1732, %v2220
      %v2222 = vpop.f32.mrf.mxu0
      %v2223 = vadd.f32 %v1734, %v2222
      %2224 = vmatmul.bf16.gmra.mxu0 %v1392
      %v2225 = vpop.f32.mrf.mxu0
      %v2226 = vadd.f32 %v1737, %v2225
      %v2227 = vpop.f32.mrf.mxu0
      %v2228 = vadd.f32 %v1739, %v2227
      %2229 = vmatmul.bf16.gmra.mxu0 %v1395
      %v2230 = vpop.f32.mrf.mxu0
      %v2231 = vadd.f32 %v1742, %v2230
      %v2232 = vpop.f32.mrf.mxu0
      %v2233 = vadd.f32 %v1744, %v2232
      %2234 = vmatmul.bf16.gmra.mxu0 %v1398
      %v2235 = vpop.f32.mrf.mxu0
      %v2236 = vadd.f32 %v1747, %v2235
      %v2237 = vpop.f32.mrf.mxu0
      %v2238 = vadd.f32 %v1749, %v2237
      %2239 = vmatmul.bf16.gmra.mxu0 %v1401
      %v2240 = vpop.f32.mrf.mxu0
      %v2241 = vadd.f32 %v1752, %v2240
      %v2242 = vpop.f32.mrf.mxu0
      %v2243 = vadd.f32 %v1754, %v2242
      %2244 = vmatmul.bf16.gmra.mxu0 %v1404
      %v2245 = vpop.f32.mrf.mxu0
      %v2246 = vadd.f32 %v1757, %v2245
      %v2247 = vpop.f32.mrf.mxu0
      %v2248 = vadd.f32 %v1759, %v2247
      %2249 = vmatmul.bf16.gmra.mxu0 %v1407
      %v2250 = vpop.f32.mrf.mxu0
      %v2251 = vadd.f32 %v1762, %v2250
      %v2252 = vpop.f32.mrf.mxu0
      %v2253 = vadd.f32 %v1764, %v2252
      %2254 = vmatmul.bf16.gmra.mxu0 %v1410
      %v2255 = vpop.f32.mrf.mxu0
      %v2256 = vadd.f32 %v1767, %v2255
      %v2257 = vpop.f32.mrf.mxu0
      %v2258 = vadd.f32 %v1769, %v2257
      %2259 = vmatmul.bf16.gmra.mxu0 %v1413
      %v2260 = vpop.f32.mrf.mxu0
      %v2261 = vadd.f32 %v1772, %v2260
      %v2262 = vpop.f32.mrf.mxu0
      %v2263 = vadd.f32 %v1774, %v2262
      %2264 = vmatmul.bf16.gmra.mxu0 %v1416
      %v2265 = vpop.f32.mrf.mxu0
      %v2266 = vadd.f32 %v1777, %v2265
      %v2267 = vpop.f32.mrf.mxu0
      %v2268 = vadd.f32 %v1779, %v2267
      %2269 = vmatmul.bf16.gmra.mxu0 %v1419
      %v2270 = vpop.f32.mrf.mxu0
      %v2271 = vadd.f32 %v1782, %v2270
      %v2272 = vpop.f32.mrf.mxu0
      %v2273 = vadd.f32 %v1784, %v2272
      %2274 = vmatmul.bf16.gmra.mxu0 %v1422
      %v2275 = vpop.f32.mrf.mxu0
      %v2276 = vadd.f32 %v1787, %v2275
      %v2277 = vpop.f32.mrf.mxu0
      %v2278 = vadd.f32 %v1789, %v2277
      %2279 = vmatmul.bf16.gmra.mxu0 %v1425
      %v2280 = vpop.f32.mrf.mxu0
      %v2281 = vadd.f32 %v1792, %v2280
      %v2282 = vpop.f32.mrf.mxu0
      %v2283 = vadd.f32 %v1794, %v2282
      %2284 = vmatmul.bf16.gmra.mxu0 %v1428
      %v2285 = vpop.f32.mrf.mxu0
      %v2286 = vadd.f32 %v1797, %v2285
      %v2287 = vpop.f32.mrf.mxu0
      %v2288 = vadd.f32 %v1799, %v2287
      %2289 = vmatmul.bf16.gmra.mxu0 %v1431
      %v2290 = vpop.f32.mrf.mxu0
      %v2291 = vadd.f32 %v1802, %v2290
      %v2292 = vpop.f32.mrf.mxu0
      %v2293 = vadd.f32 %v1804, %v2292
      %2294 = vmatmul.bf16.gmra.mxu0 %v1434
      %v2295 = vpop.f32.mrf.mxu0
      %v2296 = vadd.f32 %v1807, %v2295
      %v2297 = vpop.f32.mrf.mxu0
      %v2298 = vadd.f32 %v1809, %v2297
      %2299 = vmatmul.bf16.gmra.mxu0 %v1437
      %v2300 = vpop.f32.mrf.mxu0
      %v2301 = vadd.f32 %v1812, %v2300
      %v2302 = vpop.f32.mrf.mxu0
      %v2303 = vadd.f32 %v1814, %v2302
      %2304 = vmatmul.bf16.gmra.mxu0 %v1440
      %v2305 = vpop.f32.mrf.mxu0
      %v2306 = vadd.f32 %v1817, %v2305
      %v2307 = vpop.f32.mrf.mxu0
      %v2308 = vadd.f32 %v1819, %v2307
      %2309 = vmatmul.bf16.gmra.mxu0 %v1443
      %v2310 = vpop.f32.mrf.mxu0
      %v2311 = vadd.f32 %v1822, %v2310
      %v2312 = vpop.f32.mrf.mxu0
      %v2313 = vadd.f32 %v1824, %v2312
      %2314 = vmatmul.bf16.gmra.mxu0 %v1446
      %v2315 = vpop.f32.mrf.mxu0
      %v2316 = vadd.f32 %v1827, %v2315
      %v2317 = vpop.f32.mrf.mxu0
      %v2318 = vadd.f32 %v1829, %v2317
      %2319 = vmatmul.bf16.gmra.mxu0 %v1449
      %v2320 = vpop.f32.mrf.mxu0
      %v2321 = vadd.f32 %v1832, %v2320
      %v2322 = vpop.f32.mrf.mxu0
      %v2323 = vadd.f32 %v1834, %v2322
      %2324 = vmatmul.bf16.gmra.mxu0 %v1452
      %v2325 = vpop.f32.mrf.mxu0
      %v2326 = vadd.f32 %v1837, %v2325
      %v2327 = vpop.f32.mrf.mxu0
      %v2328 = vadd.f32 %v1839, %v2327
      %2329 = vmatmul.bf16.gmra.mxu0 %v1455
      %v2330 = vpop.f32.mrf.mxu0
      %v2331 = vadd.f32 %v1842, %v2330
      %v2332 = vpop.f32.mrf.mxu0
      %v2333 = vadd.f32 %v1844, %v2332
      %2334 = vmatmul.bf16.gmra.mxu0 %v1458
      %v2335 = vpop.f32.mrf.mxu0
      %v2336 = vadd.f32 %v1847, %v2335
      %v2337 = vpop.f32.mrf.mxu0
      %v2338 = vadd.f32 %v1849, %v2337
      %2339 = vmatmul.bf16.gmra.mxu0 %v1461
      %v2340 = vpop.f32.mrf.mxu0
      %v2341 = vadd.f32 %v1852, %v2340
      %v2342 = vpop.f32.mrf.mxu0
      %v2343 = vadd.f32 %v1854, %v2342
      %2344 = vmatmul.bf16.gmra.mxu0 %v1464
      %v2345 = vpop.f32.mrf.mxu0
      %v2346 = vadd.f32 %v1857, %v2345
      %v2347 = vpop.f32.mrf.mxu0
      %v2348 = vadd.f32 %v1859, %v2347
      %2349 = vmatmul.bf16.gmra.mxu0 %v1467
      %v2350 = vpop.f32.mrf.mxu0
      %v2351 = vadd.f32 %v1862, %v2350
      %v2352 = vpop.f32.mrf.mxu0
      %v2353 = vadd.f32 %v1864, %v2352
      %2354 = vmatmul.bf16.gmra.mxu0 %v1470
      %v2355 = vpop.f32.mrf.mxu0
      %v2356 = vadd.f32 %v1867, %v2355
      %v2357 = vpop.f32.mrf.mxu0
      %v2358 = vadd.f32 %v1869, %v2357
      %2359 = vmatmul.bf16.gmra.mxu0 %v1473
      %v2360 = vpop.f32.mrf.mxu0
      %v2361 = vadd.f32 %v1872, %v2360
      %v2362 = vpop.f32.mrf.mxu0
      %v2363 = vadd.f32 %v1874, %v2362
      %2364 = vmatmul.bf16.gmra.mxu0 %v1476
      %v2365 = vpop.f32.mrf.mxu0
      %v2366 = vadd.f32 %v1877, %v2365
      %v2367 = vpop.f32.mrf.mxu0
      %v2368 = vadd.f32 %v1879, %v2367
      %2369 = vmatmul.bf16.gmra.mxu0 %v1479
      %v2370 = vpop.f32.mrf.mxu0
      %v2371 = vadd.f32 %v1882, %v2370
      %v2372 = vpop.f32.mrf.mxu0
      %v2373 = vadd.f32 %v1884, %v2372
      %2374 = vmatmul.bf16.gmra.mxu0 %v1482
      %v2375 = vpop.f32.mrf.mxu0
      %v2376 = vadd.f32 %v1887, %v2375
      %v2377 = vpop.f32.mrf.mxu0
      %v2378 = vadd.f32 %v1889, %v2377
      %2379 = vmatmul.bf16.gmra.mxu0 %v1485
      %v2380 = vpop.f32.mrf.mxu0
      %v2381 = vadd.f32 %v1892, %v2380
      %v2382 = vpop.f32.mrf.mxu0
      %v2383 = vadd.f32 %v1894, %v2382
      %2384 = vmatmul.bf16.gmra.mxu0 %v1488
      %v2385 = vpop.f32.mrf.mxu0
      %v2386 = vadd.f32 %v1897, %v2385
      %v2387 = vpop.f32.mrf.mxu0
      %v2388 = vadd.f32 %v1899, %v2387
      %2389 = vmatmul.bf16.gmra.mxu0 %v1491
      %v2390 = vpop.f32.mrf.mxu0
      %v2391 = vadd.f32 %v1902, %v2390
      %v2392 = vpop.f32.mrf.mxu0
      %v2393 = vadd.f32 %v1904, %v2392
      %2394 = vmatmul.bf16.gmra.mxu0 %v1494
      %v2395 = vpop.f32.mrf.mxu0
      %v2396 = vadd.f32 %v1907, %v2395
      %v2397 = vpop.f32.mrf.mxu0
      %v2398 = vadd.f32 %v1909, %v2397
      %2399 = vmatmul.bf16.gmra.mxu0 %v1497
      %v2400 = vpop.f32.mrf.mxu0
      %v2401 = vadd.f32 %v1912, %v2400
      %v2402 = vpop.f32.mrf.mxu0
      %v2403 = vadd.f32 %v1914, %v2402
      %2404 = vmatmul.bf16.gmra.mxu0 %v1500
      %v2405 = vpop.f32.mrf.mxu0
      %v2406 = vadd.f32 %v1917, %v2405
      %v2407 = vpop.f32.mrf.mxu0
      %v2408 = vadd.f32 %v1919, %v2407
      %2409 = vmatmul.bf16.gmra.mxu0 %v1503
      %v2410 = vpop.f32.mrf.mxu0
      %v2411 = vadd.f32 %v1922, %v2410
      %v2412 = vpop.f32.mrf.mxu0
      %v2413 = vadd.f32 %v1924, %v2412
      %2414 = vmatmul.bf16.gmra.mxu0 %v1506
      %v2415 = vpop.f32.mrf.mxu0
      %v2416 = vadd.f32 %v1927, %v2415
      %v2417 = vpop.f32.mrf.mxu0
      %v2418 = vadd.f32 %v1929, %v2417
      %2419 = vmatmul.bf16.gmra.mxu0 %v1509
      %v2420 = vpop.f32.mrf.mxu0
      %v2421 = vadd.f32 %v1932, %v2420
      %v2422 = vpop.f32.mrf.mxu0
      %v2423 = vadd.f32 %v1934, %v2422
      %2424 = vmatmul.bf16.gmra.mxu0 %v1512
      %v2425 = vpop.f32.mrf.mxu0
      %v2426 = vadd.f32 %v1937, %v2425
      %v2427 = vpop.f32.mrf.mxu0
      %v2428 = vadd.f32 %v1939, %v2427
      %2429 = vmatmul.bf16.gmra.mxu0 %v1515
      %v2430 = vpop.f32.mrf.mxu0
      %v2431 = vadd.f32 %v1942, %v2430
      %v2432 = vpop.f32.mrf.mxu0
      %v2433 = vadd.f32 %v1944, %v2432
      %2434 = vmatmul.bf16.gmra.mxu0 %v1518
      %v2435 = vpop.f32.mrf.mxu0
      %v2436 = vadd.f32 %v1947, %v2435
      %v2437 = vpop.f32.mrf.mxu0
      %v2438 = vadd.f32 %v1949, %v2437
      %2439 = vmatmul.bf16.gmra.mxu0 %v1521
      %v2440 = vpop.f32.mrf.mxu0
      %v2441 = vadd.f32 %v1952, %v2440
      %v2442 = vpop.f32.mrf.mxu0
      %v2443 = vadd.f32 %v1954, %v2442
      %2444 = vmatmul.bf16.gmra.mxu0 %v1524
      %v2445 = vpop.f32.mrf.mxu0
      %v2446 = vadd.f32 %v1957, %v2445
      %v2447 = vpop.f32.mrf.mxu0
      %v2448 = vadd.f32 %v1959, %v2447
      %2449 = vmatmul.bf16.gmra.mxu0 %v1527
      %v2450 = vpop.f32.mrf.mxu0
      %v2451 = vadd.f32 %v1962, %v2450
      %v2452 = vpop.f32.mrf.mxu0
      %v2453 = vadd.f32 %v1964, %v2452
      %2454 = vmatmul.bf16.gmra.mxu0 %v1530
      %v2455 = vpop.f32.mrf.mxu0
      %v2456 = vadd.f32 %v1967, %v2455
      %v2457 = vpop.f32.mrf.mxu0
      %v2458 = vadd.f32 %v1969, %v2457
      %2459 = vmatmul.bf16.gmra.mxu0 %v1533
      %v2460 = vpop.f32.mrf.mxu0
      %v2461 = vadd.f32 %v1972, %v2460
      %v2462 = vpop.f32.mrf.mxu0
      %v2463 = vadd.f32 %v1974, %v2462
      %2464 = vmatmul.bf16.gmra.mxu0 %v1536
      %v2465 = vpop.f32.mrf.mxu0
      %v2466 = vadd.f32 %v1977, %v2465
      %v2467 = vpop.f32.mrf.mxu0
      %v2468 = vadd.f32 %v1979, %v2467
      %2469 = vmatmul.bf16.gmra.mxu0 %v1539
      %v2470 = vpop.f32.mrf.mxu0
      %v2471 = vadd.f32 %v1982, %v2470
      %v2472 = vpop.f32.mrf.mxu0
      %v2473 = vadd.f32 %v1984, %v2472
      %2474 = vmatmul.bf16.gmra.mxu0 %v1542
      %v2475 = vpop.f32.mrf.mxu0
      %v2476 = vadd.f32 %v1987, %v2475
      %v2477 = vpop.f32.mrf.mxu0
      %v2478 = vadd.f32 %v1989, %v2477
      %2479 = vmatmul.bf16.gmra.mxu0 %v1545
      %v2480 = vpop.f32.mrf.mxu0
      %v2481 = vadd.f32 %v1992, %v2480
      %v2482 = vpop.f32.mrf.mxu0
      %v2483 = vadd.f32 %v1994, %v2482
      %2484 = vmatmul.bf16.gmra.mxu0 %v1548
      %v2485 = vpop.f32.mrf.mxu0
      %v2486 = vadd.f32 %v1997, %v2485
      %v2487 = vpop.f32.mrf.mxu0
      %v2488 = vadd.f32 %v1999, %v2487
      %2489 = vmatmul.bf16.gmra.mxu0 %v1551
      %v2490 = vpop.f32.mrf.mxu0
      %v2491 = vadd.f32 %v2002, %v2490
      %v2492 = vpop.f32.mrf.mxu0
      %v2493 = vadd.f32 %v2004, %v2492
      %2494 = vmatmul.bf16.gmra.mxu0 %v1554
      %v2495 = vpop.f32.mrf.mxu0
      %v2496 = vadd.f32 %v2007, %v2495
      %v2497 = vpop.f32.mrf.mxu0
      %v2498 = vadd.f32 %v2009, %v2497
      %2499 = vmatmul.bf16.gmra.mxu0 %v1557
      %v2500 = vpop.f32.mrf.mxu0
      %v2501 = vadd.f32 %v2012, %v2500
      %v2502 = vpop.f32.mrf.mxu0
      %v2503 = vadd.f32 %v2014, %v2502
      %2504 = vmatmul.bf16.gmra.mxu0 %v1560
      %v2505 = vpop.f32.mrf.mxu0
      %v2506 = vadd.f32 %v2017, %v2505
      %v2507 = vpop.f32.mrf.mxu0
      %v2508 = vadd.f32 %v2019, %v2507
      %2509 = vmatmul.bf16.gmra.mxu0 %v1563
      %v2510 = vpop.f32.mrf.mxu0
      %v2511 = vadd.f32 %v2022, %v2510
      %v2512 = vpop.f32.mrf.mxu0
      %v2513 = vadd.f32 %v2024, %v2512
      %2514 = vmatmul.bf16.gmra.mxu0 %v1566
      %v2515 = vpop.f32.mrf.mxu0
      %v2516 = vadd.f32 %v2027, %v2515
      %v2517 = vpop.f32.mrf.mxu0
      %v2518 = vadd.f32 %v2029, %v2517
      %2519 = vmatmul.bf16.gmra.mxu0 %v1569
      %v2520 = vpop.f32.mrf.mxu0
      %v2521 = vadd.f32 %v2032, %v2520
      %v2522 = vpop.f32.mrf.mxu0
      %v2523 = vadd.f32 %v2034, %v2522
      %2524 = vmatmul.bf16.gmra.mxu0 %v1572
      %v2525 = vpop.f32.mrf.mxu0
      %v2526 = vadd.f32 %v2037, %v2525
      %v2527 = vpop.f32.mrf.mxu0
      %v2528 = vadd.f32 %v2039, %v2527
      %2529 = vmatmul.bf16.gmra.mxu0 %v1575
      %v2530 = vpop.f32.mrf.mxu0
      %v2531 = vadd.f32 %v2042, %v2530
      %v2532 = vpop.f32.mrf.mxu0
      %v2533 = vadd.f32 %v2044, %v2532
      %2534 = vmatmul.bf16.gmra.mxu0 %v1578
      %v2535 = vpop.f32.mrf.mxu0
      %v2536 = vadd.f32 %v2047, %v2535
      %v2537 = vpop.f32.mrf.mxu0
      %v2538 = vadd.f32 %v2049, %v2537
      %2539 = vmatmul.bf16.gmra.mxu0 %v1581
      %v2540 = vpop.f32.mrf.mxu0
      %v2541 = vadd.f32 %v2052, %v2540
      %v2542 = vpop.f32.mrf.mxu0
      %v2543 = vadd.f32 %v2054, %v2542
      %2544 = vmatmul.bf16.gmra.mxu0 %v1584
      %v2545 = vpop.f32.mrf.mxu0
      %v2546 = vadd.f32 %v2057, %v2545
      %v2547 = vpop.f32.mrf.mxu0
      %v2548 = vadd.f32 %v2059, %v2547
      %2549 = vmatmul.bf16.gmra.mxu0 %v1587
      %v2550 = vpop.f32.mrf.mxu0
      %v2551 = vadd.f32 %v2062, %v2550
      %v2552 = vpop.f32.mrf.mxu0
      %v2553 = vadd.f32 %v2064, %v2552
      %2554 = vmatmul.bf16.gmra.mxu0 %v1590
      %v2555 = vpop.f32.mrf.mxu0
      %v2556 = vadd.f32 %v2067, %v2555
      %v2557 = vpop.f32.mrf.mxu0
      %v2558 = vadd.f32 %v2069, %v2557
      %2559 = vmatmul.bf16.gmra.mxu0 %v1593
      %v2560 = vpop.f32.mrf.mxu0
      %v2561 = vadd.f32 %v2072, %v2560
      %v2562 = vpop.f32.mrf.mxu0
      %v2563 = vadd.f32 %v2074, %v2562
      %2564 = vmatmul.bf16.gmra.mxu0 %v1596
      %v2565 = vpop.f32.mrf.mxu0
      %v2566 = vadd.f32 %v2077, %v2565
      %v2567 = vpop.f32.mrf.mxu0
      %v2568 = vadd.f32 %v2079, %v2567
      %2569 = vmatmul.bf16.gmra.mxu0 %v1599
      %v2570 = vpop.f32.mrf.mxu0
      %v2571 = vadd.f32 %v2082, %v2570
      %v2572 = vpop.f32.mrf.mxu0
      %v2573 = vadd.f32 %v2084, %v2572
      %2574 = vmatmul.bf16.gmra.mxu0 %v1602
      %v2575 = vpop.f32.mrf.mxu0
      %v2576 = vadd.f32 %v2087, %v2575
      %v2577 = vpop.f32.mrf.mxu0
      %v2578 = vadd.f32 %v2089, %v2577
      %2579 = vmatmul.bf16.gmra.mxu0 %v1605
      %v2580 = vpop.f32.mrf.mxu0
      %v2581 = vadd.f32 %v2092, %v2580
      %v2582 = vpop.f32.mrf.mxu0
      %v2583 = vadd.f32 %v2094, %v2582
      %2584 = vdwg.mxu0
      %v2585 = vmax.f32 %v2106, 0.0
      %v2586 = vmax.f32 %v2108, 0.0
      %v2587 = vmax.f32 %v2111, 0.0
      %v2588 = vmax.f32 %v2113, 0.0
      %v2589 = vmax.f32 %v2116, 0.0
      %v2590 = vmax.f32 %v2118, 0.0
      %v2591 = vmax.f32 %v2121, 0.0
      %v2592 = vmax.f32 %v2123, 0.0
      %v2593 = vmax.f32 %v2126, 0.0
      %v2594 = vmax.f32 %v2128, 0.0
      %v2595 = vmax.f32 %v2131, 0.0
      %v2596 = vmax.f32 %v2133, 0.0
      %v2597 = vmax.f32 %v2136, 0.0
      %v2598 = vmax.f32 %v2138, 0.0
      %v2599 = vmax.f32 %v2141, 0.0
      %v2600 = vmax.f32 %v2143, 0.0
      %v2601 = vmax.f32 %v2146, 0.0
      %v2602 = vmax.f32 %v2148, 0.0
      %v2603 = vmax.f32 %v2151, 0.0
      %v2604 = vmax.f32 %v2153, 0.0
      %v2605 = vmax.f32 %v2156, 0.0
      %v2606 = vmax.f32 %v2158, 0.0
      %v2607 = vmax.f32 %v2161, 0.0
      %v2608 = vmax.f32 %v2163, 0.0
      %v2609 = vmax.f32 %v2166, 0.0
      %v2610 = vmax.f32 %v2168, 0.0
      %v2611 = vmax.f32 %v2171, 0.0
      %v2612 = vmax.f32 %v2173, 0.0
      %v2613 = vmax.f32 %v2176, 0.0
      %v2614 = vmax.f32 %v2178, 0.0
      %v2615 = vmax.f32 %v2181, 0.0
      %v2616 = vmax.f32 %v2183, 0.0
      %v2617 = vmax.f32 %v2186, 0.0
      %v2618 = vmax.f32 %v2188, 0.0
      %v2619 = vmax.f32 %v2191, 0.0
      %v2620 = vmax.f32 %v2193, 0.0
      %v2621 = vmax.f32 %v2196, 0.0
      %v2622 = vmax.f32 %v2198, 0.0
      %v2623 = vmax.f32 %v2201, 0.0
      %v2624 = vmax.f32 %v2203, 0.0
      %v2625 = vmax.f32 %v2206, 0.0
      %v2626 = vmax.f32 %v2208, 0.0
      %v2627 = vmax.f32 %v2211, 0.0
      %v2628 = vmax.f32 %v2213, 0.0
      %v2629 = vmax.f32 %v2216, 0.0
      %v2630 = vmax.f32 %v2218, 0.0
      %v2631 = vmax.f32 %v2221, 0.0
      %v2632 = vmax.f32 %v2223, 0.0
      %v2633 = vmax.f32 %v2226, 0.0
      %v2634 = vmax.f32 %v2228, 0.0
      %v2635 = vmax.f32 %v2231, 0.0
      %v2636 = vmax.f32 %v2233, 0.0
      %v2637 = vmax.f32 %v2236, 0.0
      %v2638 = vmax.f32 %v2238, 0.0
      %v2639 = vmax.f32 %v2241, 0.0
      %v2640 = vmax.f32 %v2243, 0.0
      %v2641 = vmax.f32 %v2246, 0.0
      %v2642 = vmax.f32 %v2248, 0.0
      %v2643 = vmax.f32 %v2251, 0.0
      %v2644 = vmax.f32 %v2253, 0.0
      %v2645 = vmax.f32 %v2256, 0.0
      %v2646 = vmax.f32 %v2258, 0.0
      %v2647 = vmax.f32 %v2261, 0.0
      %v2648 = vmax.f32 %v2263, 0.0
      %v2649 = vmax.f32 %v2266, 0.0
      %v2650 = vmax.f32 %v2268, 0.0
      %v2651 = vmax.f32 %v2271, 0.0
      %v2652 = vmax.f32 %v2273, 0.0
      %v2653 = vmax.f32 %v2276, 0.0
      %v2654 = vmax.f32 %v2278, 0.0
      %v2655 = vmax.f32 %v2281, 0.0
      %v2656 = vmax.f32 %v2283, 0.0
      %v2657 = vmax.f32 %v2286, 0.0
      %v2658 = vmax.f32 %v2288, 0.0
      %v2659 = vmax.f32 %v2291, 0.0
      %v2660 = vmax.f32 %v2293, 0.0
      %v2661 = vmax.f32 %v2296, 0.0
      %v2662 = vmax.f32 %v2298, 0.0
      %v2663 = vmax.f32 %v2301, 0.0
      %v2664 = vmax.f32 %v2303, 0.0
      %v2665 = vmax.f32 %v2306, 0.0
      %v2666 = vmax.f32 %v2308, 0.0
      %v2667 = vmax.f32 %v2311, 0.0
      %v2668 = vmax.f32 %v2313, 0.0
      %v2669 = vmax.f32 %v2316, 0.0
      %v2670 = vmax.f32 %v2318, 0.0
      %v2671 = vmax.f32 %v2321, 0.0
      %v2672 = vmax.f32 %v2323, 0.0
      %v2673 = vmax.f32 %v2326, 0.0
      %v2674 = vmax.f32 %v2328, 0.0
      %v2675 = vmax.f32 %v2331, 0.0
      %v2676 = vmax.f32 %v2333, 0.0
      %v2677 = vmax.f32 %v2336, 0.0
      %v2678 = vmax.f32 %v2338, 0.0
      %v2679 = vmax.f32 %v2341, 0.0
      %v2680 = vmax.f32 %v2343, 0.0
      %v2681 = vmax.f32 %v2346, 0.0
      %v2682 = vmax.f32 %v2348, 0.0
      %v2683 = vmax.f32 %v2351, 0.0
      %v2684 = vmax.f32 %v2353, 0.0
      %v2685 = vmax.f32 %v2356, 0.0
      %v2686 = vmax.f32 %v2358, 0.0
      %v2687 = vmax.f32 %v2361, 0.0
      %v2688 = vmax.f32 %v2363, 0.0
      %v2689 = vmax.f32 %v2366, 0.0
      %v2690 = vmax.f32 %v2368, 0.0
      %v2691 = vmax.f32 %v2371, 0.0
      %v2692 = vmax.f32 %v2373, 0.0
      %v2693 = vmax.f32 %v2376, 0.0
      %v2694 = vmax.f32 %v2378, 0.0
      %v2695 = vmax.f32 %v2381, 0.0
      %v2696 = vmax.f32 %v2383, 0.0
      %v2697 = vmax.f32 %v2386, 0.0
      %v2698 = vmax.f32 %v2388, 0.0
      %v2699 = vmax.f32 %v2391, 0.0
      %v2700 = vmax.f32 %v2393, 0.0
      %v2701 = vmax.f32 %v2396, 0.0
      %v2702 = vmax.f32 %v2398, 0.0
      %v2703 = vmax.f32 %v2401, 0.0
      %v2704 = vmax.f32 %v2403, 0.0
      %v2705 = vmax.f32 %v2406, 0.0
      %v2706 = vmax.f32 %v2408, 0.0
      %v2707 = vmax.f32 %v2411, 0.0
      %v2708 = vmax.f32 %v2413, 0.0
      %v2709 = vmax.f32 %v2416, 0.0
      %v2710 = vmax.f32 %v2418, 0.0
      %v2711 = vmax.f32 %v2421, 0.0
      %v2712 = vmax.f32 %v2423, 0.0
      %v2713 = vmax.f32 %v2426, 0.0
      %v2714 = vmax.f32 %v2428, 0.0
      %v2715 = vmax.f32 %v2431, 0.0
      %v2716 = vmax.f32 %v2433, 0.0
      %v2717 = vmax.f32 %v2436, 0.0
      %v2718 = vmax.f32 %v2438, 0.0
      %v2719 = vmax.f32 %v2441, 0.0
      %v2720 = vmax.f32 %v2443, 0.0
      %v2721 = vmax.f32 %v2446, 0.0
      %v2722 = vmax.f32 %v2448, 0.0
      %v2723 = vmax.f32 %v2451, 0.0
      %v2724 = vmax.f32 %v2453, 0.0
      %v2725 = vmax.f32 %v2456, 0.0
      %v2726 = vmax.f32 %v2458, 0.0
      %v2727 = vmax.f32 %v2461, 0.0
      %v2728 = vmax.f32 %v2463, 0.0
      %v2729 = vmax.f32 %v2466, 0.0
      %v2730 = vmax.f32 %v2468, 0.0
      %v2731 = vmax.f32 %v2471, 0.0
      %v2732 = vmax.f32 %v2473, 0.0
      %v2733 = vmax.f32 %v2476, 0.0
      %v2734 = vmax.f32 %v2478, 0.0
      %v2735 = vmax.f32 %v2481, 0.0
      %v2736 = vmax.f32 %v2483, 0.0
      %v2737 = vmax.f32 %v2486, 0.0
      %v2738 = vmax.f32 %v2488, 0.0
      %v2739 = vmax.f32 %v2491, 0.0
      %v2740 = vmax.f32 %v2493, 0.0
      %v2741 = vmax.f32 %v2496, 0.0
      %v2742 = vmax.f32 %v2498, 0.0
      %v2743 = vmax.f32 %v2501, 0.0
      %v2744 = vmax.f32 %v2503, 0.0
      %v2745 = vmax.f32 %v2506, 0.0
      %v2746 = vmax.f32 %v2508, 0.0
      %v2747 = vmax.f32 %v2511, 0.0
      %v2748 = vmax.f32 %v2513, 0.0
      %v2749 = vmax.f32 %v2516, 0.0
      %v2750 = vmax.f32 %v2518, 0.0
      %v2751 = vmax.f32 %v2521, 0.0
      %v2752 = vmax.f32 %v2523, 0.0
      %v2753 = vmax.f32 %v2526, 0.0
      %v2754 = vmax.f32 %v2528, 0.0
      %v2755 = vmax.f32 %v2531, 0.0
      %v2756 = vmax.f32 %v2533, 0.0
      %v2757 = vmax.f32 %v2536, 0.0
      %v2758 = vmax.f32 %v2538, 0.0
      %v2759 = vmax.f32 %v2541, 0.0
      %v2760 = vmax.f32 %v2543, 0.0
      %v2761 = vmax.f32 %v2546, 0.0
      %v2762 = vmax.f32 %v2548, 0.0
      %v2763 = vmax.f32 %v2551, 0.0
      %v2764 = vmax.f32 %v2553, 0.0
      %v2765 = vmax.f32 %v2556, 0.0
      %v2766 = vmax.f32 %v2558, 0.0
      %v2767 = vmax.f32 %v2561, 0.0
      %v2768 = vmax.f32 %v2563, 0.0
      %v2769 = vmax.f32 %v2566, 0.0
      %v2770 = vmax.f32 %v2568, 0.0
      %v2771 = vmax.f32 %v2571, 0.0
      %v2772 = vmax.f32 %v2573, 0.0
      %v2773 = vmax.f32 %v2576, 0.0
      %v2774 = vmax.f32 %v2578, 0.0
      %v2775 = vmax.f32 %v2581, 0.0
      %v2776 = vmax.f32 %v2583, 0.0
      %v2777 = vpack.c.bf16 %v2585, %v2585
      %v2778 = vpack.c.bf16 %v2586, %v2586
      %v2779 = vpack.c.bf16 %v2587, %v2587
      %v2780 = vpack.c.bf16 %v2588, %v2588
      %v2781 = vpack.c.bf16 %v2589, %v2589
      %v2782 = vpack.c.bf16 %v2590, %v2590
      %v2783 = vpack.c.bf16 %v2591, %v2591
      %v2784 = vpack.c.bf16 %v2592, %v2592
      %v2785 = vpack.c.bf16 %v2593, %v2593
      %v2786 = vpack.c.bf16 %v2594, %v2594
      %v2787 = vpack.c.bf16 %v2595, %v2595
      %v2788 = vpack.c.bf16 %v2596, %v2596
      %v2789 = vpack.c.bf16 %v2597, %v2597
      %v2790 = vpack.c.bf16 %v2598, %v2598
      %v2791 = vpack.c.bf16 %v2599, %v2599
      %v2792 = vpack.c.bf16 %v2600, %v2600
      %v2793 = vpack.c.bf16 %v2601, %v2601
      %v2794 = vpack.c.bf16 %v2602, %v2602
      %v2795 = vpack.c.bf16 %v2603, %v2603
      %v2796 = vpack.c.bf16 %v2604, %v2604
      %v2797 = vpack.c.bf16 %v2605, %v2605
      %v2798 = vpack.c.bf16 %v2606, %v2606
      %v2799 = vpack.c.bf16 %v2607, %v2607
      %v2800 = vpack.c.bf16 %v2608, %v2608
      %v2801 = vpack.c.bf16 %v2609, %v2609
      %v2802 = vpack.c.bf16 %v2610, %v2610
      %v2803 = vpack.c.bf16 %v2611, %v2611
      %v2804 = vpack.c.bf16 %v2612, %v2612
      %v2805 = vpack.c.bf16 %v2613, %v2613
      %v2806 = vpack.c.bf16 %v2614, %v2614
      %v2807 = vpack.c.bf16 %v2615, %v2615
      %v2808 = vpack.c.bf16 %v2616, %v2616
      %v2809 = vpack.c.bf16 %v2617, %v2617
      %v2810 = vpack.c.bf16 %v2618, %v2618
      %v2811 = vpack.c.bf16 %v2619, %v2619
      %v2812 = vpack.c.bf16 %v2620, %v2620
      %v2813 = vpack.c.bf16 %v2621, %v2621
      %v2814 = vpack.c.bf16 %v2622, %v2622
      %v2815 = vpack.c.bf16 %v2623, %v2623
      %v2816 = vpack.c.bf16 %v2624, %v2624
      %v2817 = vpack.c.bf16 %v2625, %v2625
      %v2818 = vpack.c.bf16 %v2626, %v2626
      %v2819 = vpack.c.bf16 %v2627, %v2627
      %v2820 = vpack.c.bf16 %v2628, %v2628
      %v2821 = vpack.c.bf16 %v2629, %v2629
      %v2822 = vpack.c.bf16 %v2630, %v2630
      %v2823 = vpack.c.bf16 %v2631, %v2631
      %v2824 = vpack.c.bf16 %v2632, %v2632
      %v2825 = vpack.c.bf16 %v2633, %v2633
      %v2826 = vpack.c.bf16 %v2634, %v2634
      %v2827 = vpack.c.bf16 %v2635, %v2635
      %v2828 = vpack.c.bf16 %v2636, %v2636
      %v2829 = vpack.c.bf16 %v2637, %v2637
      %v2830 = vpack.c.bf16 %v2638, %v2638
      %v2831 = vpack.c.bf16 %v2639, %v2639
      %v2832 = vpack.c.bf16 %v2640, %v2640
      %v2833 = vpack.c.bf16 %v2641, %v2641
      %v2834 = vpack.c.bf16 %v2642, %v2642
      %v2835 = vpack.c.bf16 %v2643, %v2643
      %v2836 = vpack.c.bf16 %v2644, %v2644
      %v2837 = vpack.c.bf16 %v2645, %v2645
      %v2838 = vpack.c.bf16 %v2646, %v2646
      %v2839 = vpack.c.bf16 %v2647, %v2647
      %v2840 = vpack.c.bf16 %v2648, %v2648
      %v2841 = vpack.c.bf16 %v2649, %v2649
      %v2842 = vpack.c.bf16 %v2650, %v2650
      %v2843 = vpack.c.bf16 %v2651, %v2651
      %v2844 = vpack.c.bf16 %v2652, %v2652
      %v2845 = vpack.c.bf16 %v2653, %v2653
      %v2846 = vpack.c.bf16 %v2654, %v2654
      %v2847 = vpack.c.bf16 %v2655, %v2655
      %v2848 = vpack.c.bf16 %v2656, %v2656
      %v2849 = vpack.c.bf16 %v2657, %v2657
      %v2850 = vpack.c.bf16 %v2658, %v2658
      %v2851 = vpack.c.bf16 %v2659, %v2659
      %v2852 = vpack.c.bf16 %v2660, %v2660
      %v2853 = vpack.c.bf16 %v2661, %v2661
      %v2854 = vpack.c.bf16 %v2662, %v2662
      %v2855 = vpack.c.bf16 %v2663, %v2663
      %v2856 = vpack.c.bf16 %v2664, %v2664
      %v2857 = vpack.c.bf16 %v2665, %v2665
      %v2858 = vpack.c.bf16 %v2666, %v2666
      %v2859 = vpack.c.bf16 %v2667, %v2667
      %v2860 = vpack.c.bf16 %v2668, %v2668
      %v2861 = vpack.c.bf16 %v2669, %v2669
      %v2862 = vpack.c.bf16 %v2670, %v2670
      %v2863 = vpack.c.bf16 %v2671, %v2671
      %v2864 = vpack.c.bf16 %v2672, %v2672
      %v2865 = vpack.c.bf16 %v2673, %v2673
      %v2866 = vpack.c.bf16 %v2674, %v2674
      %v2867 = vpack.c.bf16 %v2675, %v2675
      %v2868 = vpack.c.bf16 %v2676, %v2676
      %v2869 = vpack.c.bf16 %v2677, %v2677
      %v2870 = vpack.c.bf16 %v2678, %v2678
      %v2871 = vpack.c.bf16 %v2679, %v2679
      %v2872 = vpack.c.bf16 %v2680, %v2680
      %v2873 = vpack.c.bf16 %v2681, %v2681
      %v2874 = vpack.c.bf16 %v2682, %v2682
      %v2875 = vpack.c.bf16 %v2683, %v2683
      %v2876 = vpack.c.bf16 %v2684, %v2684
      %v2877 = vpack.c.bf16 %v2685, %v2685
      %v2878 = vpack.c.bf16 %v2686, %v2686
      %v2879 = vpack.c.bf16 %v2687, %v2687
      %v2880 = vpack.c.bf16 %v2688, %v2688
      %v2881 = vpack.c.bf16 %v2689, %v2689
      %v2882 = vpack.c.bf16 %v2690, %v2690
      %v2883 = vpack.c.bf16 %v2691, %v2691
      %v2884 = vpack.c.bf16 %v2692, %v2692
      %v2885 = vpack.c.bf16 %v2693, %v2693
      %v2886 = vpack.c.bf16 %v2694, %v2694
      %v2887 = vpack.c.bf16 %v2695, %v2695
      %v2888 = vpack.c.bf16 %v2696, %v2696
      %v2889 = vpack.c.bf16 %v2697, %v2697
      %v2890 = vpack.c.bf16 %v2698, %v2698
      %v2891 = vpack.c.bf16 %v2699, %v2699
      %v2892 = vpack.c.bf16 %v2700, %v2700
      %v2893 = vpack.c.bf16 %v2701, %v2701
      %v2894 = vpack.c.bf16 %v2702, %v2702
      %v2895 = vpack.c.bf16 %v2703, %v2703
      %v2896 = vpack.c.bf16 %v2704, %v2704
      %v2897 = vpack.c.bf16 %v2705, %v2705
      %v2898 = vpack.c.bf16 %v2706, %v2706
      %v2899 = vpack.c.bf16 %v2707, %v2707
      %v2900 = vpack.c.bf16 %v2708, %v2708
      %v2901 = vpack.c.bf16 %v2709, %v2709
      %v2902 = vpack.c.bf16 %v2710, %v2710
      %v2903 = vpack.c.bf16 %v2711, %v2711
      %v2904 = vpack.c.bf16 %v2712, %v2712
      %v2905 = vpack.c.bf16 %v2713, %v2713
      %v2906 = vpack.c.bf16 %v2714, %v2714
      %v2907 = vpack.c.bf16 %v2715, %v2715
      %v2908 = vpack.c.bf16 %v2716, %v2716
      %v2909 = vpack.c.bf16 %v2717, %v2717
      %v2910 = vpack.c.bf16 %v2718, %v2718
      %v2911 = vpack.c.bf16 %v2719, %v2719
      %v2912 = vpack.c.bf16 %v2720, %v2720
      %v2913 = vpack.c.bf16 %v2721, %v2721
      %v2914 = vpack.c.bf16 %v2722, %v2722
      %v2915 = vpack.c.bf16 %v2723, %v2723
      %v2916 = vpack.c.bf16 %v2724, %v2724
      %v2917 = vpack.c.bf16 %v2725, %v2725
      %v2918 = vpack.c.bf16 %v2726, %v2726
      %v2919 = vpack.c.bf16 %v2727, %v2727
      %v2920 = vpack.c.bf16 %v2728, %v2728
      %v2921 = vpack.c.bf16 %v2729, %v2729
      %v2922 = vpack.c.bf16 %v2730, %v2730
      %v2923 = vpack.c.bf16 %v2731, %v2731
      %v2924 = vpack.c.bf16 %v2732, %v2732
      %v2925 = vpack.c.bf16 %v2733, %v2733
      %v2926 = vpack.c.bf16 %v2734, %v2734
      %v2927 = vpack.c.bf16 %v2735, %v2735
      %v2928 = vpack.c.bf16 %v2736, %v2736
      %v2929 = vpack.c.bf16 %v2737, %v2737
      %v2930 = vpack.c.bf16 %v2738, %v2738
      %v2931 = vpack.c.bf16 %v2739, %v2739
      %v2932 = vpack.c.bf16 %v2740, %v2740
      %v2933 = vpack.c.bf16 %v2741, %v2741
      %v2934 = vpack.c.bf16 %v2742, %v2742
      %v2935 = vpack.c.bf16 %v2743, %v2743
      %v2936 = vpack.c.bf16 %v2744, %v2744
      %v2937 = vpack.c.bf16 %v2745, %v2745
      %v2938 = vpack.c.bf16 %v2746, %v2746
      %v2939 = vpack.c.bf16 %v2747, %v2747
      %v2940 = vpack.c.bf16 %v2748, %v2748
      %v2941 = vpack.c.bf16 %v2749, %v2749
      %v2942 = vpack.c.bf16 %v2750, %v2750
      %v2943 = vpack.c.bf16 %v2751, %v2751
      %v2944 = vpack.c.bf16 %v2752, %v2752
      %v2945 = vpack.c.bf16 %v2753, %v2753
      %v2946 = vpack.c.bf16 %v2754, %v2754
      %v2947 = vpack.c.bf16 %v2755, %v2755
      %v2948 = vpack.c.bf16 %v2756, %v2756
      %v2949 = vpack.c.bf16 %v2757, %v2757
      %v2950 = vpack.c.bf16 %v2758, %v2758
      %v2951 = vpack.c.bf16 %v2759, %v2759
      %v2952 = vpack.c.bf16 %v2760, %v2760
      %v2953 = vpack.c.bf16 %v2761, %v2761
      %v2954 = vpack.c.bf16 %v2762, %v2762
      %v2955 = vpack.c.bf16 %v2763, %v2763
      %v2956 = vpack.c.bf16 %v2764, %v2764
      %v2957 = vpack.c.bf16 %v2765, %v2765
      %v2958 = vpack.c.bf16 %v2766, %v2766
      %v2959 = vpack.c.bf16 %v2767, %v2767
      %v2960 = vpack.c.bf16 %v2768, %v2768
      %v2961 = vpack.c.bf16 %v2769, %v2769
      %v2962 = vpack.c.bf16 %v2770, %v2770
      %v2963 = vpack.c.bf16 %v2771, %v2771
      %v2964 = vpack.c.bf16 %v2772, %v2772
      %v2965 = vpack.c.bf16 %v2773, %v2773
      %v2966 = vpack.c.bf16 %v2774, %v2774
      %v2967 = vpack.c.bf16 %v2775, %v2775
      %v2968 = vpack.c.bf16 %v2776, %v2776
      %vm2969 = vcmask 125952
      %2970 = vst.msk [vmem:[%s175] sm:$0xf] %vm2969, %v2777
      %2971 = vst.msk [vmem:[%s175 + $0x4] sm:$0xf] %vm2969, %v2778
      %2972 = vst.msk [vmem:[%s175 + $0x8] sm:$0xf] %vm2969, %v2779
      %2973 = vst.msk [vmem:[%s175 + $0xc] sm:$0xf] %vm2969, %v2780
      %2974 = vst.msk [vmem:[%s175 + $0x10] sm:$0xf] %vm2969, %v2781
      %2975 = vst.msk [vmem:[%s175 + $0x14] sm:$0xf] %vm2969, %v2782
      %2976 = vst.msk [vmem:[%s175 + $0x18] sm:$0xf] %vm2969, %v2783
      %2977 = vst.msk [vmem:[%s175 + $0x1c] sm:$0xf] %vm2969, %v2784
      %2978 = vst.msk [vmem:[%s175 + $0x20] sm:$0xf] %vm2969, %v2785
      %2979 = vst.msk [vmem:[%s175 + $0x24] sm:$0xf] %vm2969, %v2786
      %2980 = vst.msk [vmem:[%s175 + $0x28] sm:$0xf] %vm2969, %v2787
      %2981 = vst.msk [vmem:[%s175 + $0x2c] sm:$0xf] %vm2969, %v2788
      %2982 = vst.msk [vmem:[%s175 + $0x30] sm:$0xf] %vm2969, %v2789
      %2983 = vst.msk [vmem:[%s175 + $0x34] sm:$0xf] %vm2969, %v2790
      %2984 = vst.msk [vmem:[%s175 + $0x38] sm:$0xf] %vm2969, %v2791
      %2985 = vst.msk [vmem:[%s175 + $0x3c] sm:$0xf] %vm2969, %v2792
      %2986 = vst.msk [vmem:[%s175 + $0x40] sm:$0xf] %vm2969, %v2793
      %2987 = vst.msk [vmem:[%s175 + $0x44] sm:$0xf] %vm2969, %v2794
      %2988 = vst.msk [vmem:[%s175 + $0x48] sm:$0xf] %vm2969, %v2795
      %2989 = vst.msk [vmem:[%s175 + $0x4c] sm:$0xf] %vm2969, %v2796
      %2990 = vst.msk [vmem:[%s175 + $0x50] sm:$0xf] %vm2969, %v2797
      %2991 = vst.msk [vmem:[%s175 + $0x54] sm:$0xf] %vm2969, %v2798
      %2992 = vst.msk [vmem:[%s175 + $0x58] sm:$0xf] %vm2969, %v2799
      %2993 = vst.msk [vmem:[%s175 + $0x5c] sm:$0xf] %vm2969, %v2800
      %2994 = vst.msk [vmem:[%s175 + $0x60] sm:$0xf] %vm2969, %v2801
      %2995 = vst.msk [vmem:[%s175 + $0x64] sm:$0xf] %vm2969, %v2802
      %2996 = vst.msk [vmem:[%s175 + $0x68] sm:$0xf] %vm2969, %v2803
      %2997 = vst.msk [vmem:[%s175 + $0x6c] sm:$0xf] %vm2969, %v2804
      %2998 = vst.msk [vmem:[%s175 + $0x70] sm:$0xf] %vm2969, %v2805
      %2999 = vst.msk [vmem:[%s175 + $0x74] sm:$0xf] %vm2969, %v2806
      %3000 = vst.msk [vmem:[%s175 + $0x78] sm:$0xf] %vm2969, %v2807
      %3001 = vst.msk [vmem:[%s175 + $0x7c] sm:$0xf] %vm2969, %v2808
      %3002 = vst.msk [vmem:[%s175 + $0x80] sm:$0xf] %vm2969, %v2809
      %3003 = vst.msk [vmem:[%s175 + $0x84] sm:$0xf] %vm2969, %v2810
      %3004 = vst.msk [vmem:[%s175 + $0x88] sm:$0xf] %vm2969, %v2811
      %3005 = vst.msk [vmem:[%s175 + $0x8c] sm:$0xf] %vm2969, %v2812
      %3006 = vst.msk [vmem:[%s175 + $0x90] sm:$0xf] %vm2969, %v2813
      %3007 = vst.msk [vmem:[%s175 + $0x94] sm:$0xf] %vm2969, %v2814
      %3008 = vst.msk [vmem:[%s175 + $0x98] sm:$0xf] %vm2969, %v2815
      %3009 = vst.msk [vmem:[%s175 + $0x9c] sm:$0xf] %vm2969, %v2816
      %3010 = vst.msk [vmem:[%s175 + $0xa0] sm:$0xf] %vm2969, %v2817
      %3011 = vst.msk [vmem:[%s175 + $0xa4] sm:$0xf] %vm2969, %v2818
      %3012 = vst.msk [vmem:[%s175 + $0xa8] sm:$0xf] %vm2969, %v2819
      %3013 = vst.msk [vmem:[%s175 + $0xac] sm:$0xf] %vm2969, %v2820
      %3014 = vst.msk [vmem:[%s175 + $0xb0] sm:$0xf] %vm2969, %v2821
      %3015 = vst.msk [vmem:[%s175 + $0xb4] sm:$0xf] %vm2969, %v2822
      %3016 = vst.msk [vmem:[%s175 + $0xb8] sm:$0xf] %vm2969, %v2823
      %3017 = vst.msk [vmem:[%s175 + $0xbc] sm:$0xf] %vm2969, %v2824
      %3018 = vst.msk [vmem:[%s175 + $0xc0] sm:$0xf] %vm2969, %v2825
      %3019 = vst.msk [vmem:[%s175 + $0xc4] sm:$0xf] %vm2969, %v2826
      %3020 = vst.msk [vmem:[%s175 + $0xc8] sm:$0xf] %vm2969, %v2827
      %3021 = vst.msk [vmem:[%s175 + $0xcc] sm:$0xf] %vm2969, %v2828
      %3022 = vst.msk [vmem:[%s175 + $0xd0] sm:$0xf] %vm2969, %v2829
      %3023 = vst.msk [vmem:[%s175 + $0xd4] sm:$0xf] %vm2969, %v2830
      %3024 = vst.msk [vmem:[%s175 + $0xd8] sm:$0xf] %vm2969, %v2831
      %3025 = vst.msk [vmem:[%s175 + $0xdc] sm:$0xf] %vm2969, %v2832
      %3026 = vst.msk [vmem:[%s175 + $0xe0] sm:$0xf] %vm2969, %v2833
      %3027 = vst.msk [vmem:[%s175 + $0xe4] sm:$0xf] %vm2969, %v2834
      %3028 = vst.msk [vmem:[%s175 + $0xe8] sm:$0xf] %vm2969, %v2835
      %3029 = vst.msk [vmem:[%s175 + $0xec] sm:$0xf] %vm2969, %v2836
      %3030 = vst.msk [vmem:[%s175 + $0xf0] sm:$0xf] %vm2969, %v2837
      %3031 = vst.msk [vmem:[%s175 + $0xf4] sm:$0xf] %vm2969, %v2838
      %3032 = vst.msk [vmem:[%s175 + $0xf8] sm:$0xf] %vm2969, %v2839
      %3033 = vst.msk [vmem:[%s175 + $0xfc] sm:$0xf] %vm2969, %v2840
      %3034 = vst.msk [vmem:[%s175 + $0x100] sm:$0xf] %vm2969, %v2841
      %3035 = vst.msk [vmem:[%s175 + $0x104] sm:$0xf] %vm2969, %v2842
      %3036 = vst.msk [vmem:[%s175 + $0x108] sm:$0xf] %vm2969, %v2843
      %3037 = vst.msk [vmem:[%s175 + $0x10c] sm:$0xf] %vm2969, %v2844
      %3038 = vst.msk [vmem:[%s175 + $0x110] sm:$0xf] %vm2969, %v2845
      %3039 = vst.msk [vmem:[%s175 + $0x114] sm:$0xf] %vm2969, %v2846
      %3040 = vst.msk [vmem:[%s175 + $0x118] sm:$0xf] %vm2969, %v2847
      %3041 = vst.msk [vmem:[%s175 + $0x11c] sm:$0xf] %vm2969, %v2848
      %3042 = vst.msk [vmem:[%s175 + $0x120] sm:$0xf] %vm2969, %v2849
      %3043 = vst.msk [vmem:[%s175 + $0x124] sm:$0xf] %vm2969, %v2850
      %3044 = vst.msk [vmem:[%s175 + $0x128] sm:$0xf] %vm2969, %v2851
      %3045 = vst.msk [vmem:[%s175 + $0x12c] sm:$0xf] %vm2969, %v2852
      %3046 = vst.msk [vmem:[%s175 + $0x130] sm:$0xf] %vm2969, %v2853
      %3047 = vst.msk [vmem:[%s175 + $0x134] sm:$0xf] %vm2969, %v2854
      %3048 = vst.msk [vmem:[%s175 + $0x138] sm:$0xf] %vm2969, %v2855
      %3049 = vst.msk [vmem:[%s175 + $0x13c] sm:$0xf] %vm2969, %v2856
      %3050 = vst.msk [vmem:[%s175 + $0x140] sm:$0xf] %vm2969, %v2857
      %3051 = vst.msk [vmem:[%s175 + $0x144] sm:$0xf] %vm2969, %v2858
      %3052 = vst.msk [vmem:[%s175 + $0x148] sm:$0xf] %vm2969, %v2859
      %3053 = vst.msk [vmem:[%s175 + $0x14c] sm:$0xf] %vm2969, %v2860
      %3054 = vst.msk [vmem:[%s175 + $0x150] sm:$0xf] %vm2969, %v2861
      %3055 = vst.msk [vmem:[%s175 + $0x154] sm:$0xf] %vm2969, %v2862
      %3056 = vst.msk [vmem:[%s175 + $0x158] sm:$0xf] %vm2969, %v2863
      %3057 = vst.msk [vmem:[%s175 + $0x15c] sm:$0xf] %vm2969, %v2864
      %3058 = vst.msk [vmem:[%s175 + $0x160] sm:$0xf] %vm2969, %v2865
      %3059 = vst.msk [vmem:[%s175 + $0x164] sm:$0xf] %vm2969, %v2866
      %3060 = vst.msk [vmem:[%s175 + $0x168] sm:$0xf] %vm2969, %v2867
      %3061 = vst.msk [vmem:[%s175 + $0x16c] sm:$0xf] %vm2969, %v2868
      %3062 = vst.msk [vmem:[%s175 + $0x170] sm:$0xf] %vm2969, %v2869
      %3063 = vst.msk [vmem:[%s175 + $0x174] sm:$0xf] %vm2969, %v2870
      %3064 = vst.msk [vmem:[%s175 + $0x178] sm:$0xf] %vm2969, %v2871
      %3065 = vst.msk [vmem:[%s175 + $0x17c] sm:$0xf] %vm2969, %v2872
      %3066 = vst.msk [vmem:[%s175 + $0x180] sm:$0xf] %vm2969, %v2873
      %3067 = vst.msk [vmem:[%s175 + $0x184] sm:$0xf] %vm2969, %v2874
      %3068 = vst.msk [vmem:[%s175 + $0x188] sm:$0xf] %vm2969, %v2875
      %3069 = vst.msk [vmem:[%s175 + $0x18c] sm:$0xf] %vm2969, %v2876
      %3070 = vst.msk [vmem:[%s175 + $0x190] sm:$0xf] %vm2969, %v2877
      %3071 = vst.msk [vmem:[%s175 + $0x194] sm:$0xf] %vm2969, %v2878
      %3072 = vst.msk [vmem:[%s175 + $0x198] sm:$0xf] %vm2969, %v2879
      %3073 = vst.msk [vmem:[%s175 + $0x19c] sm:$0xf] %vm2969, %v2880
      %3074 = vst.msk [vmem:[%s175 + $0x1a0] sm:$0xf] %vm2969, %v2881
      %3075 = vst.msk [vmem:[%s175 + $0x1a4] sm:$0xf] %vm2969, %v2882
      %3076 = vst.msk [vmem:[%s175 + $0x1a8] sm:$0xf] %vm2969, %v2883
      %3077 = vst.msk [vmem:[%s175 + $0x1ac] sm:$0xf] %vm2969, %v2884
      %3078 = vst.msk [vmem:[%s175 + $0x1b0] sm:$0xf] %vm2969, %v2885
      %3079 = vst.msk [vmem:[%s175 + $0x1b4] sm:$0xf] %vm2969, %v2886
      %3080 = vst.msk [vmem:[%s175 + $0x1b8] sm:$0xf] %vm2969, %v2887
      %3081 = vst.msk [vmem:[%s175 + $0x1bc] sm:$0xf] %vm2969, %v2888
      %3082 = vst.msk [vmem:[%s175 + $0x1c0] sm:$0xf] %vm2969, %v2889
      %3083 = vst.msk [vmem:[%s175 + $0x1c4] sm:$0xf] %vm2969, %v2890
      %3084 = vst.msk [vmem:[%s175 + $0x1c8] sm:$0xf] %vm2969, %v2891
      %3085 = vst.msk [vmem:[%s175 + $0x1cc] sm:$0xf] %vm2969, %v2892
      %3086 = vst.msk [vmem:[%s175 + $0x1d0] sm:$0xf] %vm2969, %v2893
      %3087 = vst.msk [vmem:[%s175 + $0x1d4] sm:$0xf] %vm2969, %v2894
      %3088 = vst.msk [vmem:[%s175 + $0x1d8] sm:$0xf] %vm2969, %v2895
      %3089 = vst.msk [vmem:[%s175 + $0x1dc] sm:$0xf] %vm2969, %v2896
      %3090 = vst.msk [vmem:[%s175 + $0x1e0] sm:$0xf] %vm2969, %v2897
      %3091 = vst.msk [vmem:[%s175 + $0x1e4] sm:$0xf] %vm2969, %v2898
      %3092 = vst.msk [vmem:[%s175 + $0x1e8] sm:$0xf] %vm2969, %v2899
      %3093 = vst.msk [vmem:[%s175 + $0x1ec] sm:$0xf] %vm2969, %v2900
      %3094 = vst.msk [vmem:[%s175 + $0x1f0] sm:$0xf] %vm2969, %v2901
      %3095 = vst.msk [vmem:[%s175 + $0x1f4] sm:$0xf] %vm2969, %v2902
      %3096 = vst.msk [vmem:[%s175 + $0x1f8] sm:$0xf] %vm2969, %v2903
      %3097 = vst.msk [vmem:[%s175 + $0x1fc] sm:$0xf] %vm2969, %v2904
      %3098 = vst.msk [vmem:[%s175 + $0x200] sm:$0xf] %vm2969, %v2905
      %3099 = vst.msk [vmem:[%s175 + $0x204] sm:$0xf] %vm2969, %v2906
      %3100 = vst.msk [vmem:[%s175 + $0x208] sm:$0xf] %vm2969, %v2907
      %3101 = vst.msk [vmem:[%s175 + $0x20c] sm:$0xf] %vm2969, %v2908
      %3102 = vst.msk [vmem:[%s175 + $0x210] sm:$0xf] %vm2969, %v2909
      %3103 = vst.msk [vmem:[%s175 + $0x214] sm:$0xf] %vm2969, %v2910
      %3104 = vst.msk [vmem:[%s175 + $0x218] sm:$0xf] %vm2969, %v2911
      %3105 = vst.msk [vmem:[%s175 + $0x21c] sm:$0xf] %vm2969, %v2912
      %3106 = vst.msk [vmem:[%s175 + $0x220] sm:$0xf] %vm2969, %v2913
      %3107 = vst.msk [vmem:[%s175 + $0x224] sm:$0xf] %vm2969, %v2914
      %3108 = vst.msk [vmem:[%s175 + $0x228] sm:$0xf] %vm2969, %v2915
      %3109 = vst.msk [vmem:[%s175 + $0x22c] sm:$0xf] %vm2969, %v2916
      %3110 = vst.msk [vmem:[%s175 + $0x230] sm:$0xf] %vm2969, %v2917
      %3111 = vst.msk [vmem:[%s175 + $0x234] sm:$0xf] %vm2969, %v2918
      %3112 = vst.msk [vmem:[%s175 + $0x238] sm:$0xf] %vm2969, %v2919
      %3113 = vst.msk [vmem:[%s175 + $0x23c] sm:$0xf] %vm2969, %v2920
      %3114 = vst.msk [vmem:[%s175 + $0x240] sm:$0xf] %vm2969, %v2921
      %3115 = vst.msk [vmem:[%s175 + $0x244] sm:$0xf] %vm2969, %v2922
      %3116 = vst.msk [vmem:[%s175 + $0x248] sm:$0xf] %vm2969, %v2923
      %3117 = vst.msk [vmem:[%s175 + $0x24c] sm:$0xf] %vm2969, %v2924
      %3118 = vst.msk [vmem:[%s175 + $0x250] sm:$0xf] %vm2969, %v2925
      %3119 = vst.msk [vmem:[%s175 + $0x254] sm:$0xf] %vm2969, %v2926
      %3120 = vst.msk [vmem:[%s175 + $0x258] sm:$0xf] %vm2969, %v2927
      %3121 = vst.msk [vmem:[%s175 + $0x25c] sm:$0xf] %vm2969, %v2928
      %3122 = vst.msk [vmem:[%s175 + $0x260] sm:$0xf] %vm2969, %v2929
      %3123 = vst.msk [vmem:[%s175 + $0x264] sm:$0xf] %vm2969, %v2930
      %3124 = vst.msk [vmem:[%s175 + $0x268] sm:$0xf] %vm2969, %v2931
      %3125 = vst.msk [vmem:[%s175 + $0x26c] sm:$0xf] %vm2969, %v2932
      %3126 = vst.msk [vmem:[%s175 + $0x270] sm:$0xf] %vm2969, %v2933
      %3127 = vst.msk [vmem:[%s175 + $0x274] sm:$0xf] %vm2969, %v2934
      %3128 = vst.msk [vmem:[%s175 + $0x278] sm:$0xf] %vm2969, %v2935
      %3129 = vst.msk [vmem:[%s175 + $0x27c] sm:$0xf] %vm2969, %v2936
      %3130 = vst.msk [vmem:[%s175 + $0x280] sm:$0xf] %vm2969, %v2937
      %3131 = vst.msk [vmem:[%s175 + $0x284] sm:$0xf] %vm2969, %v2938
      %3132 = vst.msk [vmem:[%s175 + $0x288] sm:$0xf] %vm2969, %v2939
      %3133 = vst.msk [vmem:[%s175 + $0x28c] sm:$0xf] %vm2969, %v2940
      %3134 = vst.msk [vmem:[%s175 + $0x290] sm:$0xf] %vm2969, %v2941
      %3135 = vst.msk [vmem:[%s175 + $0x294] sm:$0xf] %vm2969, %v2942
      %3136 = vst.msk [vmem:[%s175 + $0x298] sm:$0xf] %vm2969, %v2943
      %3137 = vst.msk [vmem:[%s175 + $0x29c] sm:$0xf] %vm2969, %v2944
      %3138 = vst.msk [vmem:[%s175 + $0x2a0] sm:$0xf] %vm2969, %v2945
      %3139 = vst.msk [vmem:[%s175 + $0x2a4] sm:$0xf] %vm2969, %v2946
      %3140 = vst.msk [vmem:[%s175 + $0x2a8] sm:$0xf] %vm2969, %v2947
      %3141 = vst.msk [vmem:[%s175 + $0x2ac] sm:$0xf] %vm2969, %v2948
      %3142 = vst.msk [vmem:[%s175 + $0x2b0] sm:$0xf] %vm2969, %v2949
      %3143 = vst.msk [vmem:[%s175 + $0x2b4] sm:$0xf] %vm2969, %v2950
      %3144 = vst.msk [vmem:[%s175 + $0x2b8] sm:$0xf] %vm2969, %v2951
      %3145 = vst.msk [vmem:[%s175 + $0x2bc] sm:$0xf] %vm2969, %v2952
      %3146 = vst.msk [vmem:[%s175 + $0x2c0] sm:$0xf] %vm2969, %v2953
      %3147 = vst.msk [vmem:[%s175 + $0x2c4] sm:$0xf] %vm2969, %v2954
      %3148 = vst.msk [vmem:[%s175 + $0x2c8] sm:$0xf] %vm2969, %v2955
      %3149 = vst.msk [vmem:[%s175 + $0x2cc] sm:$0xf] %vm2969, %v2956
      %3150 = vst.msk [vmem:[%s175 + $0x2d0] sm:$0xf] %vm2969, %v2957
      %3151 = vst.msk [vmem:[%s175 + $0x2d4] sm:$0xf] %vm2969, %v2958
      %3152 = vst.msk [vmem:[%s175 + $0x2d8] sm:$0xf] %vm2969, %v2959
      %3153 = vst.msk [vmem:[%s175 + $0x2dc] sm:$0xf] %vm2969, %v2960
      %3154 = vst.msk [vmem:[%s175 + $0x2e0] sm:$0xf] %vm2969, %v2961
      %3155 = vst.msk [vmem:[%s175 + $0x2e4] sm:$0xf] %vm2969, %v2962
      %3156 = vst.msk [vmem:[%s175 + $0x2e8] sm:$0xf] %vm2969, %v2963
      %3157 = vst.msk [vmem:[%s175 + $0x2ec] sm:$0xf] %vm2969, %v2964
      %3158 = vst.msk [vmem:[%s175 + $0x2f0] sm:$0xf] %vm2969, %v2965
      %3159 = vst.msk [vmem:[%s175 + $0x2f4] sm:$0xf] %vm2969, %v2966
      %3160 = vst.msk [vmem:[%s175 + $0x2f8] sm:$0xf] %vm2969, %v2967
      %3161 = vst.msk [vmem:[%s175 + $0x2fc] sm:$0xf] %vm2969, %v2968
      %s3162 = smul.u32 192, %s14
      %p3163 = scmp.lt.s32.totalorder %s3162, 383
      %s3164 = scalar_select %p3163, %s3162, 383
      %s3165 = smul.addr %s3164, 4
      %s3166 = scalar_lea.vmem %s3, %s3165
      // Predicated region
      $region33: #{model_forward.5} parent=31 // pred_check
        %p3167 = pneg %p100
      $region34: #{model_forward.5} parent=31 // pred_check_branch
        %3169 = sbr.rel (%p3167) target = $region36
      $region35: #{model_forward.5} parent=31 // pred_region
        %s3170 = smul.u32 192, %s14
      $region36: #{model_forward.5} parent=31 // pred_fallthru
        _
    $region32: #{model_forward.5} parent=5 // pred_fallthru
      _
    %p3171 = scmp.le.s32.totalorder 2, %s9
    // Predicated region
    $region37: #{model_forward.5} parent=5 // pred_check
      %p3172 = pneg %p3171
    $region38: #{model_forward.5} parent=5 // pred_check_branch
      %3174 = sbr.rel (%p3172) target = $region40
    $region39: #{model_forward.5} parent=5 // pred_region
      %s3175 = ssub.s32 %s9, 2
      // Predicated region
      $region41: #{model_forward.5} parent=39 // pred_check
        %p3176 = pneg %p106
      $region42: #{model_forward.5} parent=39 // pred_check_branch
        %3178 = sbr.rel (%p3176) target = $region44
      $region43: #{model_forward.5} parent=39 // pred_region
        %s3179 = smul.u32 192, %s15
        %p3180 = scmp.lt.s32.totalorder %s3179, 383
        %s3181 = scalar_select %p3180, %s3179, 383
        %s3182 = smul.addr %s3181, 4
        %s3183 = scalar_lea.vmem %s3, %s3182
      $region44: #{model_forward.5} parent=39 // pred_fallthru
        _
    $region40: #{model_forward.5} parent=5 // pred_fallthru
      _
  $region6: #{model_forward.5} parent=0 // loop_footer
    %s13 = sadd.s32 1, %s9
  $region7: #{model_forward.5} parent=0 // loop_footer_branch
    %8 = sbr.rel target = $region3
  $region8: #{model_forward.5} parent=0 // loop_exit
    _

// kernel: model_forward.7
$region0: #{model_forward.7}
  #allocation0 [shape = 'u32[]', space=smem, size = 0x4, offset = 0x4, fixed_abs, tag = 'smem constant byte address 0x4 - core index']
  #allocation1 [shape = 'u32[72,128]{1,0:T(1,128)}', space=vmem, size = 0x9000, scoped, tag = 'internal scratch']
  %s0 = inlined_call_operand.vmem [shape: bf16[768,288], index: 0, kind: input, shape index: {}]
  %s1 = inlined_call_operand.vmem [shape: bf16[288,32], index: 1, kind: input, shape index: {}]
  %s2 = inlined_call_operand.vmem [shape: f32[1,32], index: 2, kind: input, shape index: {}]
  %s3 = inlined_call_operand.vmem [shape: bf16[768,32], index: 3, kind: output, shape index: {}]
  %s4 = sld [smem:[#allocation0]]
  $region45: #{model_forward.7} parent=0
    _
  %s6 = ssub.s32 1, %s4
  %s7 = scalar_select 0, %s6, %s4
  loop: start=0, step=1, limit=4
  $region2: #{model_forward.7} parent=0 // loop_pre_header
    _
  $region3: #{model_forward.7} parent=0 // loop_header
    %s9 = sphi 0, %s13
    %p10 = scmp.ge.s32.totalorder %s9, 4
    %s19 = sphi 0, %s21
    %s22 = sphi 0, %s19
    %s23 = sphi 0, %s22
    %s39 = sphi 0, %s23
    %s43 = sphi 0, %s43
    %s45 = sphi 0, %s43
    %s46 = sphi 0, %s45
    %s60 = sphi 0, %s46
    %s64 = sphi 0, %s64
    %s66 = sphi 0, %s64
    %s67 = sphi 0, %s66
    %s81 = sphi 0, %s67
    %s87 = sphi 0, %s89
    %s90 = sphi 0, %s87
    %s91 = sphi 0, %s90
    %s107 = sphi 0, %s91
  $region4: #{model_forward.7} parent=0 // loop_header_branch
    %12 = sbr.rel (%p10) target = $region8
  $region5: #{model_forward.7} parent=0 // loop_body
    %s14 = ssub.s32 %s9, 1
    %s15 = ssub.s32 %s9, 2
    %s16 = sadd.s32 %s9, 1
    %s17 = ssub.s32 %s9, %s16
    %p18 = scmp.eq.s32.totalorder %s17, 0
    %s20 = sadd.s32 %s19, 1
    %s21 = scalar_select %p18, %s19, %s20
    %p24 = pneg %p18
    %p25 = scmp.eq.s32.totalorder %s9, 1
    %p26 = por %p24, %p25
    %p27 = scmp.ne.s32.totalorder %s19, %s22
    %p28 = scmp.eq.s32.totalorder %s9, 0
    %p29 = por %p27, %p28
    %p30 = scmp.ne.s32.totalorder %s19, %s22
    %p31 = scmp.eq.s32.totalorder %s14, 1
    %p32 = por %p30, %p31
    %p33 = scmp.ne.s32.totalorder %s22, %s23
    %p34 = scmp.eq.s32.totalorder %s14, 0
    %p35 = por %p33, %p34
    %p36 = scmp.ne.s32.totalorder %s22, %s23
    %p37 = scmp.eq.s32.totalorder %s15, 1
    %p38 = por %p36, %p37
    %p40 = scmp.ne.s32.totalorder %s23, %s39
    %p41 = scmp.eq.s32.totalorder %s15, 0
    %p42 = por %p40, %p41
    %s44 = sadd.s32 %s43, 1
    %p47 = scmp.eq.s32.totalorder %s9, 1
    %p48 = scmp.ne.s32.totalorder %s43, %s45
    %p49 = scmp.eq.s32.totalorder %s9, 0
    %p50 = por %p48, %p49
    %p51 = scmp.ne.s32.totalorder %s43, %s45
    %p52 = scmp.eq.s32.totalorder %s14, 1
    %p53 = por %p51, %p52
    %p54 = scmp.ne.s32.totalorder %s45, %s46
    %p55 = scmp.eq.s32.totalorder %s14, 0
    %p56 = por %p54, %p55
    %p57 = scmp.ne.s32.totalorder %s45, %s46
    %p58 = scmp.eq.s32.totalorder %s15, 1
    %p59 = por %p57, %p58
    %p61 = scmp.ne.s32.totalorder %s46, %s60
    %p62 = scmp.eq.s32.totalorder %s15, 0
    %p63 = por %p61, %p62
    %s65 = sadd.s32 %s64, 1
    %p68 = scmp.eq.s32.totalorder %s9, 1
    %p69 = scmp.ne.s32.totalorder %s64, %s66
    %p70 = scmp.eq.s32.totalorder %s9, 0
    %p71 = por %p69, %p70
    %p72 = scmp.ne.s32.totalorder %s64, %s66
    %p73 = scmp.eq.s32.totalorder %s14, 1
    %p74 = por %p72, %p73
    %p75 = scmp.ne.s32.totalorder %s66, %s67
    %p76 = scmp.eq.s32.totalorder %s14, 0
    %p77 = por %p75, %p76
    %p78 = scmp.ne.s32.totalorder %s66, %s67
    %p79 = scmp.eq.s32.totalorder %s15, 1
    %p80 = por %p78, %p79
    %p82 = scmp.ne.s32.totalorder %s67, %s81
    %p83 = scmp.eq.s32.totalorder %s15, 0
    %p84 = por %p82, %p83
    %s85 = ssub.s32 %s9, %s16
    %p86 = scmp.eq.s32.totalorder %s85, 0
    %s88 = sadd.s32 %s87, 1
    %s89 = scalar_select %p86, %s87, %s88
    %p92 = pneg %p86
    %p93 = scmp.eq.s32.totalorder %s9, 1
    %p94 = por %p92, %p93
    %p95 = scmp.ne.s32.totalorder %s87, %s90
    %p96 = scmp.eq.s32.totalorder %s9, 0
    %p97 = por %p95, %p96
    %p98 = scmp.ne.s32.totalorder %s87, %s90
    %p99 = scmp.eq.s32.totalorder %s14, 1
    %p100 = por %p98, %p99
    %p101 = scmp.ne.s32.totalorder %s90, %s91
    %p102 = scmp.eq.s32.totalorder %s14, 0
    %p103 = por %p101, %p102
    %p104 = scmp.ne.s32.totalorder %s90, %s91
    %p105 = scmp.eq.s32.totalorder %s15, 1
    %p106 = por %p104, %p105
    %p108 = scmp.ne.s32.totalorder %s91, %s107
    %p109 = scmp.eq.s32.totalorder %s15, 0
    %p110 = por %p108, %p109
    %p111 = scmp.le.s32.totalorder 1, %s9
    %p112 = scmp.lt.s32.totalorder %s9, 3
    %p113 = pnand %p111, %p112
    %p114 = pneg %p113
    // Predicated region
    $region9: #{model_forward.7} parent=5 // pred_check
      _
    $region10: #{model_forward.7} parent=5 // pred_check_branch
      %116 = sbr.rel (%p113) target = $region12
    $region11: #{model_forward.7} parent=5 // pred_region
      %s117 = ssub.s32 %s9, 1
      // Predicated region
      $region13: #{model_forward.7} parent=11 // pred_check
        %p118 = pneg %p56
      $region14: #{model_forward.7} parent=11 // pred_check_branch
        %120 = sbr.rel (%p118) target = $region16
      $region15: #{model_forward.7} parent=11 // pred_region
        _
      $region16: #{model_forward.7} parent=11 // pred_fallthru
        _
      // Predicated region
      $region17: #{model_forward.7} parent=11 // pred_check
        %p121 = pneg %p77
      $region18: #{model_forward.7} parent=11 // pred_check_branch
        %123 = sbr.rel (%p121) target = $region20
      $region19: #{model_forward.7} parent=11 // pred_region
        _
      $region20: #{model_forward.7} parent=11 // pred_fallthru
        _
    $region12: #{model_forward.7} parent=5 // pred_fallthru
      _
    %p124 = scmp.lt.s32.totalorder %s9, 2
    // Predicated region
    $region21: #{model_forward.7} parent=5 // pred_check
      %p125 = pneg %p124
    $region22: #{model_forward.7} parent=5 // pred_check_branch
      %127 = sbr.rel (%p125) target = $region24
    $region23: #{model_forward.7} parent=5 // pred_region
      // Predicated region
      $region25: #{model_forward.7} parent=23 // pred_check
        %p128 = pneg %p29
      $region26: #{model_forward.7} parent=23 // pred_check_branch
        %130 = sbr.rel (%p128) target = $region28
      $region27: #{model_forward.7} parent=23 // pred_region
        %s131 = smul.u32 48, %s9
        %p132 = scmp.lt.s32.totalorder %s131, 95
        %s133 = scalar_select %p132, %s131, 95
        %s134 = smul.addr %s133, 3
        %s135 = smul.addr %s134, 4
        %s136 = scalar_lea.vmem %s0, %s135
        %s137 = smul.u32 48, %s9
      $region28: #{model_forward.7} parent=23 // pred_fallthru
        _
    $region24: #{model_forward.7} parent=5 // pred_fallthru
      _
    %p138 = scmp.le.s32.totalorder 1, %s9
    %p139 = scmp.lt.s32.totalorder %s9, 3
    %p140 = pnand %p138, %p139
    %p141 = pneg %p140
    // Predicated region
    $region29: #{model_forward.7} parent=5 // pred_check
      _
    $region30: #{model_forward.7} parent=5 // pred_check_branch
      %143 = sbr.rel (%p140) target = $region32
    $region31: #{model_forward.7} parent=5 // pred_region
      %s144 = ssub.s32 %s9, 1
      %s145 = smul.u32 48, %s14
      %p146 = scmp.lt.s32.totalorder %s145, 95
      %s147 = scalar_select %p146, %s145, 95
      %s148 = smul.addr %s147, 3
      %s149 = smul.addr %s148, 4
      %s150 = scalar_lea.vmem %s0, %s149
      %p151 = pneg %p35
      %p152 = pneg %p32
      %p153 = pneg %p56
      %p154 = pneg %p53
      %p155 = pneg %p77
      %p156 = pneg %p74
      %p157 = pneg %p103
      %p158 = pneg %p100
      %s159 = smul.u32 48, %s14
      %p160 = scmp.lt.s32.totalorder %s159, 95
      %s161 = scalar_select %p160, %s159, 95
      %s162 = smul.addr %s161, 4
      %s163 = scalar_lea.vmem %s3, %s162
      %s164 = smul.u32 48, %s14
      %p165 = scmp.lt.s32.totalorder %s164, 95
      %s166 = scalar_select %p165, %s164, 95
      %s167 = smul.addr %s166, 3
      %s168 = smul.addr %s167, 4
      %s169 = scalar_lea.vmem %s0, %s168
      %s170 = smul.u32 48, %s14
      %s171 = smul.u32 48, %s14
      %p172 = scmp.lt.s32.totalorder %s171, 95
      %s173 = scalar_select %p172, %s171, 95
      %s174 = smul.addr %s173, 4
      %s175 = scalar_lea.vmem %s3, %s174
      %s176 = smul.u32 48, %s14
      %v178 = vld [vmem:[%s169] sm:$0xff]
      %v179 = vld [vmem:[%s169 + $0x8] sm:$0xf]
      %v180 = vld [vmem:[%s169 + $0xc] sm:$0xff]
      %v181 = vld [vmem:[%s169 + $0x14] sm:$0xf]
      %v182 = vld [vmem:[%s169 + $0x18] sm:$0xff]
      %v183 = vld [vmem:[%s169 + $0x20] sm:$0xf]
      %v184 = vld [vmem:[%s169 + $0x24] sm:$0xff]
      %v185 = vld [vmem:[%s169 + $0x2c] sm:$0xf]
      %v186 = vld [vmem:[%s169 + $0x30] sm:$0xff]
      %v187 = vld [vmem:[%s169 + $0x38] sm:$0xf]
      %v188 = vld [vmem:[%s169 + $0x3c] sm:$0xff]
      %v189 = vld [vmem:[%s169 + $0x44] sm:$0xf]
      %v190 = vld [vmem:[%s169 + $0x48] sm:$0xff]
      %v191 = vld [vmem:[%s169 + $0x50] sm:$0xf]
      %v192 = vld [vmem:[%s169 + $0x54] sm:$0xff]
      %v193 = vld [vmem:[%s169 + $0x5c] sm:$0xf]
      %v194 = vld [vmem:[%s169 + $0x60] sm:$0xff]
      %v195 = vld [vmem:[%s169 + $0x68] sm:$0xf]
      %v196 = vld [vmem:[%s169 + $0x6c] sm:$0xff]
      %v197 = vld [vmem:[%s169 + $0x74] sm:$0xf]
      %v198 = vld [vmem:[%s169 + $0x78] sm:$0xff]
      %v199 = vld [vmem:[%s169 + $0x80] sm:$0xf]
      %v200 = vld [vmem:[%s169 + $0x84] sm:$0xff]
      %v201 = vld [vmem:[%s169 + $0x8c] sm:$0xf]
      %v202 = vld [vmem:[%s169 + $0x90] sm:$0xff]
      %v203 = vld [vmem:[%s169 + $0x98] sm:$0xf]
      %v204 = vld [vmem:[%s169 + $0x9c] sm:$0xff]
      %v205 = vld [vmem:[%s169 + $0xa4] sm:$0xf]
      %v206 = vld [vmem:[%s169 + $0xa8] sm:$0xff]
      %v207 = vld [vmem:[%s169 + $0xb0] sm:$0xf]
      %v208 = vld [vmem:[%s169 + $0xb4] sm:$0xff]
      %v209 = vld [vmem:[%s169 + $0xbc] sm:$0xf]
      %v210 = vld [vmem:[%s169 + $0xc0] sm:$0xff]
      %v211 = vld [vmem:[%s169 + $0xc8] sm:$0xf]
      %v212 = vld [vmem:[%s169 + $0xcc] sm:$0xff]
      %v213 = vld [vmem:[%s169 + $0xd4] sm:$0xf]
      %v214 = vld [vmem:[%s169 + $0xd8] sm:$0xff]
      %v215 = vld [vmem:[%s169 + $0xe0] sm:$0xf]
      %v216 = vld [vmem:[%s169 + $0xe4] sm:$0xff]
      %v217 = vld [vmem:[%s169 + $0xec] sm:$0xf]
      %v218 = vld [vmem:[%s169 + $0xf0] sm:$0xff]
      %v219 = vld [vmem:[%s169 + $0xf8] sm:$0xf]
      %v220 = vld [vmem:[%s169 + $0xfc] sm:$0xff]
      %v221 = vld [vmem:[%s169 + $0x104] sm:$0xf]
      %v222 = vld [vmem:[%s169 + $0x108] sm:$0xff]
      %v223 = vld [vmem:[%s169 + $0x110] sm:$0xf]
      %v224 = vld [vmem:[%s169 + $0x114] sm:$0xff]
      %v225 = vld [vmem:[%s169 + $0x11c] sm:$0xf]
      %v226 = vld [vmem:[%s169 + $0x120] sm:$0xff]
      %v227 = vld [vmem:[%s169 + $0x128] sm:$0xf]
      %v228 = vld [vmem:[%s169 + $0x12c] sm:$0xff]
      %v229 = vld [vmem:[%s169 + $0x134] sm:$0xf]
      %v230 = vld [vmem:[%s169 + $0x138] sm:$0xff]
      %v231 = vld [vmem:[%s169 + $0x140] sm:$0xf]
      %v232 = vld [vmem:[%s169 + $0x144] sm:$0xff]
      %v233 = vld [vmem:[%s169 + $0x14c] sm:$0xf]
      %v234 = vld [vmem:[%s169 + $0x150] sm:$0xff]
      %v235 = vld [vmem:[%s169 + $0x158] sm:$0xf]
      %v236 = vld [vmem:[%s169 + $0x15c] sm:$0xff]
      %v237 = vld [vmem:[%s169 + $0x164] sm:$0xf]
      %v238 = vld [vmem:[%s169 + $0x168] sm:$0xff]
      %v239 = vld [vmem:[%s169 + $0x170] sm:$0xf]
      %v240 = vld [vmem:[%s169 + $0x174] sm:$0xff]
      %v241 = vld [vmem:[%s169 + $0x17c] sm:$0xf]
      %v242 = vld [vmem:[%s169 + $0x180] sm:$0xff]
      %v243 = vld [vmem:[%s169 + $0x188] sm:$0xf]
      %v244 = vld [vmem:[%s169 + $0x18c] sm:$0xff]
      %v245 = vld [vmem:[%s169 + $0x194] sm:$0xf]
      %v246 = vld [vmem:[%s169 + $0x198] sm:$0xff]
      %v247 = vld [vmem:[%s169 + $0x1a0] sm:$0xf]
      %v248 = vld [vmem:[%s169 + $0x1a4] sm:$0xff]
      %v249 = vld [vmem:[%s169 + $0x1ac] sm:$0xf]
      %v250 = vld [vmem:[%s169 + $0x1b0] sm:$0xff]
      %v251 = vld [vmem:[%s169 + $0x1b8] sm:$0xf]
      %v252 = vld [vmem:[%s169 + $0x1bc] sm:$0xff]
      %v253 = vld [vmem:[%s169 + $0x1c4] sm:$0xf]
      %v254 = vld [vmem:[%s169 + $0x1c8] sm:$0xff]
      %v255 = vld [vmem:[%s169 + $0x1d0] sm:$0xf]
      %v256 = vld [vmem:[%s169 + $0x1d4] sm:$0xff]
      %v257 = vld [vmem:[%s169 + $0x1dc] sm:$0xf]
      %v258 = vld [vmem:[%s169 + $0x1e0] sm:$0xff]
      %v259 = vld [vmem:[%s169 + $0x1e8] sm:$0xf]
      %v260 = vld [vmem:[%s169 + $0x1ec] sm:$0xff]
      %v261 = vld [vmem:[%s169 + $0x1f4] sm:$0xf]
      %v262 = vld [vmem:[%s169 + $0x1f8] sm:$0xff]
      %v263 = vld [vmem:[%s169 + $0x200] sm:$0xf]
      %v264 = vld [vmem:[%s169 + $0x204] sm:$0xff]
      %v265 = vld [vmem:[%s169 + $0x20c] sm:$0xf]
      %v266 = vld [vmem:[%s169 + $0x210] sm:$0xff]
      %v267 = vld [vmem:[%s169 + $0x218] sm:$0xf]
      %v268 = vld [vmem:[%s169 + $0x21c] sm:$0xff]
      %v269 = vld [vmem:[%s169 + $0x224] sm:$0xf]
      %v270 = vld [vmem:[%s169 + $0x228] sm:$0xff]
      %v271 = vld [vmem:[%s169 + $0x230] sm:$0xf]
      %v272 = vld [vmem:[%s169 + $0x234] sm:$0xff]
      %v273 = vld [vmem:[%s169 + $0x23c] sm:$0xf]
      %v274 = vld [vmem:[%s1] sm:$0xf]
      %v275 = vld [vmem:[%s1 + $0x4] sm:$0xf]
      %v276 = vld [vmem:[%s1 + $0x8] sm:$0xf]
      %v277 = vld [vmem:[%s1 + $0xc] sm:$0xf]
      %v278 = vld [vmem:[%s1 + $0x10] sm:$0xf]
      %v279 = vld [vmem:[%s1 + $0x14] sm:$0xf]
      %v280 = vld [vmem:[%s1 + $0x18] sm:$0xf]
      %v281 = vld [vmem:[%s1 + $0x1c] sm:$0xf]
      %v282 = vld [vmem:[%s1 + $0x20] sm:$0xf]
      %v283 = vld [vmem:[%s1 + $0x24] sm:$0xf]
      %v284 = vld [vmem:[%s1 + $0x28] sm:$0xf]
      %v285 = vld [vmem:[%s1 + $0x2c] sm:$0xf]
      %v286 = vld [vmem:[%s1 + $0x30] sm:$0xf]
      %v287 = vld [vmem:[%s1 + $0x34] sm:$0xf]
      %v288 = vld [vmem:[%s1 + $0x38] sm:$0xf]
      %v289 = vld [vmem:[%s1 + $0x3c] sm:$0xf]
      %v290 = vld [vmem:[%s1 + $0x40] sm:$0xf]
      %v291 = vld [vmem:[%s1 + $0x44] sm:$0xf]
      %v292 = vld [vmem:[%s1 + $0x48] sm:$0xf]
      %v293 = vld [vmem:[%s1 + $0x4c] sm:$0xf]
      %v294 = vld [vmem:[%s1 + $0x50] sm:$0xf]
      %v295 = vld [vmem:[%s1 + $0x54] sm:$0xf]
      %v296 = vld [vmem:[%s1 + $0x58] sm:$0xf]
      %v297 = vld [vmem:[%s1 + $0x5c] sm:$0xf]
      %v298 = vld [vmem:[%s1 + $0x60] sm:$0xf]
      %v299 = vld [vmem:[%s1 + $0x64] sm:$0xf]
      %v300 = vld [vmem:[%s1 + $0x68] sm:$0xf]
      %v301 = vld [vmem:[%s1 + $0x6c] sm:$0xf]
      %v302 = vld [vmem:[%s1 + $0x70] sm:$0xf]
      %v303 = vld [vmem:[%s1 + $0x74] sm:$0xf]
      %v304 = vld [vmem:[%s1 + $0x78] sm:$0xf]
      %v305 = vld [vmem:[%s1 + $0x7c] sm:$0xf]
      %v306 = vld [vmem:[%s1 + $0x80] sm:$0xf]
      %v307 = vld [vmem:[%s1 + $0x84] sm:$0xf]
      %v308 = vld [vmem:[%s1 + $0x88] sm:$0xf]
      %v309 = vld [vmem:[%s1 + $0x8c] sm:$0xf]
      %v310 = vld [vmem:[%s2] sm:$0x1]
      %v312 = vperm.slane %v310, 0
      %v410 = vunpack.c.l.b16 %v178
      %v411 = vunpack.c.h.b16 %v178
      %v412 = vunpack.c.l.b16 %v179
      %v413 = vunpack.c.l.b16 %v180
      %v414 = vunpack.c.h.b16 %v180
      %v415 = vunpack.c.l.b16 %v181
      %v416 = vunpack.c.l.b16 %v182
      %v417 = vunpack.c.h.b16 %v182
      %v418 = vunpack.c.l.b16 %v183
      %v419 = vunpack.c.l.b16 %v184
      %v420 = vunpack.c.h.b16 %v184
      %v421 = vunpack.c.l.b16 %v185
      %v422 = vunpack.c.l.b16 %v186
      %v423 = vunpack.c.h.b16 %v186
      %v424 = vunpack.c.l.b16 %v187
      %v425 = vunpack.c.l.b16 %v188
      %v426 = vunpack.c.h.b16 %v188
      %v427 = vunpack.c.l.b16 %v189
      %v428 = vunpack.c.l.b16 %v190
      %v429 = vunpack.c.h.b16 %v190
      %v430 = vunpack.c.l.b16 %v191
      %v431 = vunpack.c.l.b16 %v192
      %v432 = vunpack.c.h.b16 %v192
      %v433 = vunpack.c.l.b16 %v193
      %v434 = vunpack.c.l.b16 %v194
      %v435 = vunpack.c.h.b16 %v194
      %v436 = vunpack.c.l.b16 %v195
      %v437 = vunpack.c.l.b16 %v196
      %v438 = vunpack.c.h.b16 %v196
      %v439 = vunpack.c.l.b16 %v197
      %v440 = vunpack.c.l.b16 %v198
      %v441 = vunpack.c.h.b16 %v198
      %v442 = vunpack.c.l.b16 %v199
      %v443 = vunpack.c.l.b16 %v200
      %v444 = vunpack.c.h.b16 %v200
      %v445 = vunpack.c.l.b16 %v201
      %v446 = vunpack.c.l.b16 %v202
      %v447 = vunpack.c.h.b16 %v202
      %v448 = vunpack.c.l.b16 %v203
      %v449 = vunpack.c.l.b16 %v204
      %v450 = vunpack.c.h.b16 %v204
      %v451 = vunpack.c.l.b16 %v205
      %v452 = vunpack.c.l.b16 %v206
      %v453 = vunpack.c.h.b16 %v206
      %v454 = vunpack.c.l.b16 %v207
      %v455 = vunpack.c.l.b16 %v208
      %v456 = vunpack.c.h.b16 %v208
      %v457 = vunpack.c.l.b16 %v209
      %v458 = vunpack.c.l.b16 %v210
      %v459 = vunpack.c.h.b16 %v210
      %v460 = vunpack.c.l.b16 %v211
      %v461 = vunpack.c.l.b16 %v212
      %v462 = vunpack.c.h.b16 %v212
      %v463 = vunpack.c.l.b16 %v213
      %v464 = vunpack.c.l.b16 %v214
      %v465 = vunpack.c.h.b16 %v214
      %v466 = vunpack.c.l.b16 %v215
      %v467 = vunpack.c.l.b16 %v216
      %v468 = vunpack.c.h.b16 %v216
      %v469 = vunpack.c.l.b16 %v217
      %v470 = vunpack.c.l.b16 %v218
      %v471 = vunpack.c.h.b16 %v218
      %v472 = vunpack.c.l.b16 %v219
      %v473 = vunpack.c.l.b16 %v220
      %v474 = vunpack.c.h.b16 %v220
      %v475 = vunpack.c.l.b16 %v221
      %v476 = vunpack.c.l.b16 %v222
      %v477 = vunpack.c.h.b16 %v222
      %v478 = vunpack.c.l.b16 %v223
      %v479 = vunpack.c.l.b16 %v224
      %v480 = vunpack.c.h.b16 %v224
      %v481 = vunpack.c.l.b16 %v225
      %v482 = vunpack.c.l.b16 %v226
      %v483 = vunpack.c.h.b16 %v226
      %v484 = vunpack.c.l.b16 %v227
      %v485 = vunpack.c.l.b16 %v228
      %v486 = vunpack.c.h.b16 %v228
      %v487 = vunpack.c.l.b16 %v229
      %v488 = vunpack.c.l.b16 %v230
      %v489 = vunpack.c.h.b16 %v230
      %v490 = vunpack.c.l.b16 %v231
      %v491 = vunpack.c.l.b16 %v232
      %v492 = vunpack.c.h.b16 %v232
      %v493 = vunpack.c.l.b16 %v233
      %v494 = vunpack.c.l.b16 %v234
      %v495 = vunpack.c.h.b16 %v234
      %v496 = vunpack.c.l.b16 %v235
      %v497 = vunpack.c.l.b16 %v236
      %v498 = vunpack.c.h.b16 %v236
      %v499 = vunpack.c.l.b16 %v237
      %v500 = vunpack.c.l.b16 %v238
      %v501 = vunpack.c.h.b16 %v238
      %v502 = vunpack.c.l.b16 %v239
      %v503 = vunpack.c.l.b16 %v240
      %v504 = vunpack.c.h.b16 %v240
      %v505 = vunpack.c.l.b16 %v241
      %v506 = vunpack.c.l.b16 %v242
      %v507 = vunpack.c.h.b16 %v242
      %v508 = vunpack.c.l.b16 %v243
      %v509 = vunpack.c.l.b16 %v244
      %v510 = vunpack.c.h.b16 %v244
      %v511 = vunpack.c.l.b16 %v245
      %v512 = vunpack.c.l.b16 %v246
      %v513 = vunpack.c.h.b16 %v246
      %v514 = vunpack.c.l.b16 %v247
      %v515 = vunpack.c.l.b16 %v248
      %v516 = vunpack.c.h.b16 %v248
      %v517 = vunpack.c.l.b16 %v249
      %v518 = vunpack.c.l.b16 %v250
      %v519 = vunpack.c.h.b16 %v250
      %v520 = vunpack.c.l.b16 %v251
      %v521 = vunpack.c.l.b16 %v252
      %v522 = vunpack.c.h.b16 %v252
      %v523 = vunpack.c.l.b16 %v253
      %v524 = vunpack.c.l.b16 %v254
      %v525 = vunpack.c.h.b16 %v254
      %v526 = vunpack.c.l.b16 %v255
      %v527 = vunpack.c.l.b16 %v256
      %v528 = vunpack.c.h.b16 %v256
      %v529 = vunpack.c.l.b16 %v257
      %v530 = vunpack.c.l.b16 %v258
      %v531 = vunpack.c.h.b16 %v258
      %v532 = vunpack.c.l.b16 %v259
      %v533 = vunpack.c.l.b16 %v260
      %v534 = vunpack.c.h.b16 %v260
      %v535 = vunpack.c.l.b16 %v261
      %v536 = vunpack.c.l.b16 %v262
      %v537 = vunpack.c.h.b16 %v262
      %v538 = vunpack.c.l.b16 %v263
      %v539 = vunpack.c.l.b16 %v264
      %v540 = vunpack.c.h.b16 %v264
      %v541 = vunpack.c.l.b16 %v265
      %v542 = vunpack.c.l.b16 %v266
      %v543 = vunpack.c.h.b16 %v266
      %v544 = vunpack.c.l.b16 %v267
      %v545 = vunpack.c.l.b16 %v268
      %v546 = vunpack.c.h.b16 %v268
      %v547 = vunpack.c.l.b16 %v269
      %v548 = vunpack.c.l.b16 %v270
      %v549 = vunpack.c.h.b16 %v270
      %v550 = vunpack.c.l.b16 %v271
      %v551 = vunpack.c.l.b16 %v272
      %v552 = vunpack.c.h.b16 %v272
      %v553 = vunpack.c.l.b16 %v273
      %v554 = vpack.c.b16 %v413, %v410
      %v555 = vpack.c.b16 %v414, %v411
      %v556 = vpack.c.b16 %v415, %v412
      %v557 = vpack.c.b16 %v419, %v416
      %v558 = vpack.c.b16 %v420, %v417
      %v559 = vpack.c.b16 %v421, %v418
      %v560 = vpack.c.b16 %v425, %v422
      %v561 = vpack.c.b16 %v426, %v423
      %v562 = vpack.c.b16 %v427, %v424
      %v563 = vpack.c.b16 %v431, %v428
      %v564 = vpack.c.b16 %v432, %v429
      %v565 = vpack.c.b16 %v433, %v430
      %v566 = vpack.c.b16 %v437, %v434
      %v567 = vpack.c.b16 %v438, %v435
      %v568 = vpack.c.b16 %v439, %v436
      %v569 = vpack.c.b16 %v443, %v440
      %v570 = vpack.c.b16 %v444, %v441
      %v571 = vpack.c.b16 %v445, %v442
      %v572 = vpack.c.b16 %v449, %v446
      %v573 = vpack.c.b16 %v450, %v447
      %v574 = vpack.c.b16 %v451, %v448
      %v575 = vpack.c.b16 %v455, %v452
      %v576 = vpack.c.b16 %v456, %v453
      %v577 = vpack.c.b16 %v457, %v454
      %v578 = vpack.c.b16 %v461, %v458
      %v579 = vpack.c.b16 %v462, %v459
      %v580 = vpack.c.b16 %v463, %v460
      %v581 = vpack.c.b16 %v467, %v464
      %v582 = vpack.c.b16 %v468, %v465
      %v583 = vpack.c.b16 %v469, %v466
      %v584 = vpack.c.b16 %v473, %v470
      %v585 = vpack.c.b16 %v474, %v471
      %v586 = vpack.c.b16 %v475, %v472
      %v587 = vpack.c.b16 %v479, %v476
      %v588 = vpack.c.b16 %v480, %v477
      %v589 = vpack.c.b16 %v481, %v478
      %v590 = vpack.c.b16 %v485, %v482
      %v591 = vpack.c.b16 %v486, %v483
      %v592 = vpack.c.b16 %v487, %v484
      %v593 = vpack.c.b16 %v491, %v488
      %v594 = vpack.c.b16 %v492, %v489
      %v595 = vpack.c.b16 %v493, %v490
      %v596 = vpack.c.b16 %v497, %v494
      %v597 = vpack.c.b16 %v498, %v495
      %v598 = vpack.c.b16 %v499, %v496
      %v599 = vpack.c.b16 %v503, %v500
      %v600 = vpack.c.b16 %v504, %v501
      %v601 = vpack.c.b16 %v505, %v502
      %v602 = vpack.c.b16 %v509, %v506
      %v603 = vpack.c.b16 %v510, %v507
      %v604 = vpack.c.b16 %v511, %v508
      %v605 = vpack.c.b16 %v515, %v512
      %v606 = vpack.c.b16 %v516, %v513
      %v607 = vpack.c.b16 %v517, %v514
      %v608 = vpack.c.b16 %v521, %v518
      %v609 = vpack.c.b16 %v522, %v519
      %v610 = vpack.c.b16 %v523, %v520
      %v611 = vpack.c.b16 %v527, %v524
      %v612 = vpack.c.b16 %v528, %v525
      %v613 = vpack.c.b16 %v529, %v526
      %v614 = vpack.c.b16 %v533, %v530
      %v615 = vpack.c.b16 %v534, %v531
      %v616 = vpack.c.b16 %v535, %v532
      %v617 = vpack.c.b16 %v539, %v536
      %v618 = vpack.c.b16 %v540, %v537
      %v619 = vpack.c.b16 %v541, %v538
      %v620 = vpack.c.b16 %v545, %v542
      %v621 = vpack.c.b16 %v546, %v543
      %v622 = vpack.c.b16 %v547, %v544
      %v623 = vpack.c.b16 %v551, %v548
      %v624 = vpack.c.b16 %v552, %v549
      %v625 = vpack.c.b16 %v553, %v550
      %v710 = vunpack.c.l.b16 %v274
      %v711 = vunpack.c.l.b16 %v275
      %v712 = vunpack.c.l.b16 %v276
      %v713 = vunpack.c.l.b16 %v277
      %v714 = vunpack.c.l.b16 %v278
      %v715 = vunpack.c.l.b16 %v279
      %v716 = vunpack.c.l.b16 %v280
      %v717 = vunpack.c.l.b16 %v281
      %v718 = vunpack.c.l.b16 %v282
      %v719 = vunpack.c.l.b16 %v283
      %v720 = vunpack.c.l.b16 %v284
      %v721 = vunpack.c.l.b16 %v285
      %v722 = vunpack.c.l.b16 %v286
      %v723 = vunpack.c.l.b16 %v287
      %v724 = vunpack.c.l.b16 %v288
      %v725 = vunpack.c.l.b16 %v289
      %v726 = vunpack.c.l.b16 %v290
      %v727 = vunpack.c.l.b16 %v291
      %v728 = vunpack.c.l.b16 %v292
      %v729 = vunpack.c.l.b16 %v293
      %v730 = vunpack.c.l.b16 %v294
      %v731 = vunpack.c.l.b16 %v295
      %v732 = vunpack.c.l.b16 %v296
      %v733 = vunpack.c.l.b16 %v297
      %v734 = vunpack.c.l.b16 %v298
      %v735 = vunpack.c.l.b16 %v299
      %v736 = vunpack.c.l.b16 %v300
      %v737 = vunpack.c.l.b16 %v301
      %v738 = vunpack.c.l.b16 %v302
      %v739 = vunpack.c.l.b16 %v303
      %v740 = vunpack.c.l.b16 %v304
      %v741 = vunpack.c.l.b16 %v305
      %v742 = vunpack.c.l.b16 %v306
      %v743 = vunpack.c.l.b16 %v307
      %v744 = vunpack.c.l.b16 %v308
      %v745 = vunpack.c.l.b16 %v309
      %v746 = vpack.c.b16 %v711, %v710
      %v747 = vpack.c.b16 %v713, %v712
      %v748 = vpack.c.b16 %v715, %v714
      %v749 = vpack.c.b16 %v717, %v716
      %v750 = vpack.c.b16 %v719, %v718
      %v751 = vpack.c.b16 %v721, %v720
      %v752 = vpack.c.b16 %v723, %v722
      %v753 = vpack.c.b16 %v725, %v724
      %v754 = vpack.c.b16 %v727, %v726
      %v755 = vpack.c.b16 %v729, %v728
      %v756 = vpack.c.b16 %v731, %v730
      %v757 = vpack.c.b16 %v733, %v732
      %v758 = vpack.c.b16 %v735, %v734
      %v759 = vpack.c.b16 %v737, %v736
      %v760 = vpack.c.b16 %v739, %v738
      %v761 = vpack.c.b16 %v741, %v740
      %v762 = vpack.c.b16 %v743, %v742
      %v763 = vpack.c.b16 %v745, %v744
      %vm782 = vcmask 261120
      %v784 = vsel %vm782, %v556, 0
      %v787 = vsel %vm782, %v559, 0
      %v790 = vsel %vm782, %v562, 0
      %v793 = vsel %vm782, %v565, 0
      %v796 = vsel %vm782, %v568, 0
      %v799 = vsel %vm782, %v571, 0
      %v802 = vsel %vm782, %v574, 0
      %v805 = vsel %vm782, %v577, 0
      %v808 = vsel %vm782, %v580, 0
      %v811 = vsel %vm782, %v583, 0
      %v814 = vsel %vm782, %v586, 0
      %v817 = vsel %vm782, %v589, 0
      %v820 = vsel %vm782, %v592, 0
      %v823 = vsel %vm782, %v595, 0
      %v826 = vsel %vm782, %v598, 0
      %v829 = vsel %vm782, %v601, 0
      %v832 = vsel %vm782, %v604, 0
      %v835 = vsel %vm782, %v607, 0
      %v838 = vsel %vm782, %v610, 0
      %v841 = vsel %vm782, %v613, 0
      %v844 = vsel %vm782, %v616, 0
      %v847 = vsel %vm782, %v619, 0
      %v850 = vsel %vm782, %v622, 0
      %v853 = vsel %vm782, %v625, 0
      %855 = vmatpush.bf16.msra.mxu0 %v753
      %856 = vmatpush.bf16.msra.mxu0 %v752
      %857 = vmatpush.bf16.msra.mxu0 %v751
      %858 = vmatpush.bf16.msra.mxu0 %v750
      %859 = vmatpush.bf16.msra.mxu0 %v749
      %860 = vmatpush.bf16.msra.mxu0 %v748
      %861 = vmatpush.bf16.msra.mxu0 %v747
      %862 = vmatpush.bf16.msra.mxu0 %v746
      %863 = vmatmul.bf16.gmra.mxu0 %v554
      %v864 = vpop.f32.mrf.mxu0
      %v865 = vadd.f32 %v312, %v864
      %v866 = vpop.f32.mrf.mxu0
      %v867 = vadd.f32 %v312, %v866
      %868 = vmatmul.bf16.gmra.mxu0 %v557
      %v869 = vpop.f32.mrf.mxu0
      %v870 = vadd.f32 %v312, %v869
      %v871 = vpop.f32.mrf.mxu0
      %v872 = vadd.f32 %v312, %v871
      %873 = vmatmul.bf16.gmra.mxu0 %v560
      %v874 = vpop.f32.mrf.mxu0
      %v875 = vadd.f32 %v312, %v874
      %v876 = vpop.f32.mrf.mxu0
      %v877 = vadd.f32 %v312, %v876
      %878 = vmatmul.bf16.gmra.mxu0 %v563
      %v879 = vpop.f32.mrf.mxu0
      %v880 = vadd.f32 %v312, %v879
      %v881 = vpop.f32.mrf.mxu0
      %v882 = vadd.f32 %v312, %v881
      %883 = vmatmul.bf16.gmra.mxu0 %v566
      %v884 = vpop.f32.mrf.mxu0
      %v885 = vadd.f32 %v312, %v884
      %v886 = vpop.f32.mrf.mxu0
      %v887 = vadd.f32 %v312, %v886
      %888 = vmatmul.bf16.gmra.mxu0 %v569
      %v889 = vpop.f32.mrf.mxu0
      %v890 = vadd.f32 %v312, %v889
      %v891 = vpop.f32.mrf.mxu0
      %v892 = vadd.f32 %v312, %v891
      %893 = vmatmul.bf16.gmra.mxu0 %v572
      %v894 = vpop.f32.mrf.mxu0
      %v895 = vadd.f32 %v312, %v894
      %v896 = vpop.f32.mrf.mxu0
      %v897 = vadd.f32 %v312, %v896
      %898 = vmatmul.bf16.gmra.mxu0 %v575
      %v899 = vpop.f32.mrf.mxu0
      %v900 = vadd.f32 %v312, %v899
      %v901 = vpop.f32.mrf.mxu0
      %v902 = vadd.f32 %v312, %v901
      %903 = vmatmul.bf16.gmra.mxu0 %v578
      %v904 = vpop.f32.mrf.mxu0
      %v905 = vadd.f32 %v312, %v904
      %v906 = vpop.f32.mrf.mxu0
      %v907 = vadd.f32 %v312, %v906
      %908 = vmatmul.bf16.gmra.mxu0 %v581
      %v909 = vpop.f32.mrf.mxu0
      %v910 = vadd.f32 %v312, %v909
      %v911 = vpop.f32.mrf.mxu0
      %v912 = vadd.f32 %v312, %v911
      %913 = vmatmul.bf16.gmra.mxu0 %v584
      %v914 = vpop.f32.mrf.mxu0
      %v915 = vadd.f32 %v312, %v914
      %v916 = vpop.f32.mrf.mxu0
      %v917 = vadd.f32 %v312, %v916
      %918 = vmatmul.bf16.gmra.mxu0 %v587
      %v919 = vpop.f32.mrf.mxu0
      %v920 = vadd.f32 %v312, %v919
      %v921 = vpop.f32.mrf.mxu0
      %v922 = vadd.f32 %v312, %v921
      %923 = vmatmul.bf16.gmra.mxu0 %v590
      %v924 = vpop.f32.mrf.mxu0
      %v925 = vadd.f32 %v312, %v924
      %v926 = vpop.f32.mrf.mxu0
      %v927 = vadd.f32 %v312, %v926
      %928 = vmatmul.bf16.gmra.mxu0 %v593
      %v929 = vpop.f32.mrf.mxu0
      %v930 = vadd.f32 %v312, %v929
      %v931 = vpop.f32.mrf.mxu0
      %v932 = vadd.f32 %v312, %v931
      %933 = vmatmul.bf16.gmra.mxu0 %v596
      %v934 = vpop.f32.mrf.mxu0
      %v935 = vadd.f32 %v312, %v934
      %v936 = vpop.f32.mrf.mxu0
      %v937 = vadd.f32 %v312, %v936
      %938 = vmatmul.bf16.gmra.mxu0 %v599
      %v939 = vpop.f32.mrf.mxu0
      %v940 = vadd.f32 %v312, %v939
      %v941 = vpop.f32.mrf.mxu0
      %v942 = vadd.f32 %v312, %v941
      %943 = vmatmul.bf16.gmra.mxu0 %v602
      %v944 = vpop.f32.mrf.mxu0
      %v945 = vadd.f32 %v312, %v944
      %v946 = vpop.f32.mrf.mxu0
      %v947 = vadd.f32 %v312, %v946
      %948 = vmatmul.bf16.gmra.mxu0 %v605
      %v949 = vpop.f32.mrf.mxu0
      %v950 = vadd.f32 %v312, %v949
      %v951 = vpop.f32.mrf.mxu0
      %v952 = vadd.f32 %v312, %v951
      %953 = vmatmul.bf16.gmra.mxu0 %v608
      %v954 = vpop.f32.mrf.mxu0
      %v955 = vadd.f32 %v312, %v954
      %v956 = vpop.f32.mrf.mxu0
      %v957 = vadd.f32 %v312, %v956
      %958 = vmatmul.bf16.gmra.mxu0 %v611
      %v959 = vpop.f32.mrf.mxu0
      %v960 = vadd.f32 %v312, %v959
      %v961 = vpop.f32.mrf.mxu0
      %v962 = vadd.f32 %v312, %v961
      %963 = vmatmul.bf16.gmra.mxu0 %v614
      %v964 = vpop.f32.mrf.mxu0
      %v965 = vadd.f32 %v312, %v964
      %v966 = vpop.f32.mrf.mxu0
      %v967 = vadd.f32 %v312, %v966
      %968 = vmatmul.bf16.gmra.mxu0 %v617
      %v969 = vpop.f32.mrf.mxu0
      %v970 = vadd.f32 %v312, %v969
      %v971 = vpop.f32.mrf.mxu0
      %v972 = vadd.f32 %v312, %v971
      %973 = vmatmul.bf16.gmra.mxu0 %v620
      %v974 = vpop.f32.mrf.mxu0
      %v975 = vadd.f32 %v312, %v974
      %v976 = vpop.f32.mrf.mxu0
      %v977 = vadd.f32 %v312, %v976
      %978 = vmatmul.bf16.gmra.mxu0 %v623
      %v979 = vpop.f32.mrf.mxu0
      %v980 = vadd.f32 %v312, %v979
      %v981 = vpop.f32.mrf.mxu0
      %v982 = vadd.f32 %v312, %v981
      %983 = vdwg.mxu0
      %984 = vmatpush.bf16.msra.mxu0 %v761
      %985 = vmatpush.bf16.msra.mxu0 %v760
      %986 = vmatpush.bf16.msra.mxu0 %v759
      %987 = vmatpush.bf16.msra.mxu0 %v758
      %988 = vmatpush.bf16.msra.mxu0 %v757
      %989 = vmatpush.bf16.msra.mxu0 %v756
      %990 = vmatpush.bf16.msra.mxu0 %v755
      %991 = vmatpush.bf16.msra.mxu0 %v754
      %992 = vmatmul.bf16.gmra.mxu0 %v555
      %v993 = vpop.f32.mrf.mxu0
      %v994 = vadd.f32 %v865, %v993
      %v995 = vpop.f32.mrf.mxu0
      %v996 = vadd.f32 %v867, %v995
      %997 = vmatmul.bf16.gmra.mxu0 %v558
      %v998 = vpop.f32.mrf.mxu0
      %v999 = vadd.f32 %v870, %v998
      %v1000 = vpop.f32.mrf.mxu0
      %v1001 = vadd.f32 %v872, %v1000
      %1002 = vmatmul.bf16.gmra.mxu0 %v561
      %v1003 = vpop.f32.mrf.mxu0
      %v1004 = vadd.f32 %v875, %v1003
      %v1005 = vpop.f32.mrf.mxu0
      %v1006 = vadd.f32 %v877, %v1005
      %1007 = vmatmul.bf16.gmra.mxu0 %v564
      %v1008 = vpop.f32.mrf.mxu0
      %v1009 = vadd.f32 %v880, %v1008
      %v1010 = vpop.f32.mrf.mxu0
      %v1011 = vadd.f32 %v882, %v1010
      %1012 = vmatmul.bf16.gmra.mxu0 %v567
      %v1013 = vpop.f32.mrf.mxu0
      %v1014 = vadd.f32 %v885, %v1013
      %v1015 = vpop.f32.mrf.mxu0
      %v1016 = vadd.f32 %v887, %v1015
      %1017 = vmatmul.bf16.gmra.mxu0 %v570
      %v1018 = vpop.f32.mrf.mxu0
      %v1019 = vadd.f32 %v890, %v1018
      %v1020 = vpop.f32.mrf.mxu0
      %v1021 = vadd.f32 %v892, %v1020
      %1022 = vmatmul.bf16.gmra.mxu0 %v573
      %v1023 = vpop.f32.mrf.mxu0
      %v1024 = vadd.f32 %v895, %v1023
      %v1025 = vpop.f32.mrf.mxu0
      %v1026 = vadd.f32 %v897, %v1025
      %1027 = vmatmul.bf16.gmra.mxu0 %v576
      %v1028 = vpop.f32.mrf.mxu0
      %v1029 = vadd.f32 %v900, %v1028
      %v1030 = vpop.f32.mrf.mxu0
      %v1031 = vadd.f32 %v902, %v1030
      %1032 = vmatmul.bf16.gmra.mxu0 %v579
      %v1033 = vpop.f32.mrf.mxu0
      %v1034 = vadd.f32 %v905, %v1033
      %v1035 = vpop.f32.mrf.mxu0
      %v1036 = vadd.f32 %v907, %v1035
      %1037 = vmatmul.bf16.gmra.mxu0 %v582
      %v1038 = vpop.f32.mrf.mxu0
      %v1039 = vadd.f32 %v910, %v1038
      %v1040 = vpop.f32.mrf.mxu0
      %v1041 = vadd.f32 %v912, %v1040
      %1042 = vmatmul.bf16.gmra.mxu0 %v585
      %v1043 = vpop.f32.mrf.mxu0
      %v1044 = vadd.f32 %v915, %v1043
      %v1045 = vpop.f32.mrf.mxu0
      %v1046 = vadd.f32 %v917, %v1045
      %1047 = vmatmul.bf16.gmra.mxu0 %v588
      %v1048 = vpop.f32.mrf.mxu0
      %v1049 = vadd.f32 %v920, %v1048
      %v1050 = vpop.f32.mrf.mxu0
      %v1051 = vadd.f32 %v922, %v1050
      %1052 = vmatmul.bf16.gmra.mxu0 %v591
      %v1053 = vpop.f32.mrf.mxu0
      %v1054 = vadd.f32 %v925, %v1053
      %v1055 = vpop.f32.mrf.mxu0
      %v1056 = vadd.f32 %v927, %v1055
      %1057 = vmatmul.bf16.gmra.mxu0 %v594
      %v1058 = vpop.f32.mrf.mxu0
      %v1059 = vadd.f32 %v930, %v1058
      %v1060 = vpop.f32.mrf.mxu0
      %v1061 = vadd.f32 %v932, %v1060
      %1062 = vmatmul.bf16.gmra.mxu0 %v597
      %v1063 = vpop.f32.mrf.mxu0
      %v1064 = vadd.f32 %v935, %v1063
      %v1065 = vpop.f32.mrf.mxu0
      %v1066 = vadd.f32 %v937, %v1065
      %1067 = vmatmul.bf16.gmra.mxu0 %v600
      %v1068 = vpop.f32.mrf.mxu0
      %v1069 = vadd.f32 %v940, %v1068
      %v1070 = vpop.f32.mrf.mxu0
      %v1071 = vadd.f32 %v942, %v1070
      %1072 = vmatmul.bf16.gmra.mxu0 %v603
      %v1073 = vpop.f32.mrf.mxu0
      %v1074 = vadd.f32 %v945, %v1073
      %v1075 = vpop.f32.mrf.mxu0
      %v1076 = vadd.f32 %v947, %v1075
      %1077 = vmatmul.bf16.gmra.mxu0 %v606
      %v1078 = vpop.f32.mrf.mxu0
      %v1079 = vadd.f32 %v950, %v1078
      %v1080 = vpop.f32.mrf.mxu0
      %v1081 = vadd.f32 %v952, %v1080
      %1082 = vmatmul.bf16.gmra.mxu0 %v609
      %v1083 = vpop.f32.mrf.mxu0
      %v1084 = vadd.f32 %v955, %v1083
      %v1085 = vpop.f32.mrf.mxu0
      %v1086 = vadd.f32 %v957, %v1085
      %1087 = vmatmul.bf16.gmra.mxu0 %v612
      %v1088 = vpop.f32.mrf.mxu0
      %v1089 = vadd.f32 %v960, %v1088
      %v1090 = vpop.f32.mrf.mxu0
      %v1091 = vadd.f32 %v962, %v1090
      %1092 = vmatmul.bf16.gmra.mxu0 %v615
      %v1093 = vpop.f32.mrf.mxu0
      %v1094 = vadd.f32 %v965, %v1093
      %v1095 = vpop.f32.mrf.mxu0
      %v1096 = vadd.f32 %v967, %v1095
      %1097 = vmatmul.bf16.gmra.mxu0 %v618
      %v1098 = vpop.f32.mrf.mxu0
      %v1099 = vadd.f32 %v970, %v1098
      %v1100 = vpop.f32.mrf.mxu0
      %v1101 = vadd.f32 %v972, %v1100
      %1102 = vmatmul.bf16.gmra.mxu0 %v621
      %v1103 = vpop.f32.mrf.mxu0
      %v1104 = vadd.f32 %v975, %v1103
      %v1105 = vpop.f32.mrf.mxu0
      %v1106 = vadd.f32 %v977, %v1105
      %1107 = vmatmul.bf16.gmra.mxu0 %v624
      %v1108 = vpop.f32.mrf.mxu0
      %v1109 = vadd.f32 %v980, %v1108
      %v1110 = vpop.f32.mrf.mxu0
      %v1111 = vadd.f32 %v982, %v1110
      %1112 = vdwg.mxu0
      %1113 = vmatpush.bf16.msra.mxu0 0
      %1114 = vmatpush.bf16.msra.mxu0 0
      %1115 = vmatpush.bf16.msra.mxu0 0
      %1116 = vmatpush.bf16.msra.mxu0 0
      %1117 = vmatpush.bf16.msra.mxu0 0
      %1118 = vmatpush.bf16.msra.mxu0 0
      %1119 = vmatpush.bf16.msra.mxu0 %v763
      %1120 = vmatpush.bf16.msra.mxu0 %v762
      %1121 = vmatmul.bf16.gmra.mxu0 %v784
      %v1122 = vpop.f32.mrf.mxu0
      %v1123 = vadd.f32 %v994, %v1122
      %v1124 = vpop.f32.mrf.mxu0
      %v1125 = vadd.f32 %v996, %v1124
      %1126 = vmatmul.bf16.gmra.mxu0 %v787
      %v1127 = vpop.f32.mrf.mxu0
      %v1128 = vadd.f32 %v999, %v1127
      %v1129 = vpop.f32.mrf.mxu0
      %v1130 = vadd.f32 %v1001, %v1129
      %1131 = vmatmul.bf16.gmra.mxu0 %v790
      %v1132 = vpop.f32.mrf.mxu0
      %v1133 = vadd.f32 %v1004, %v1132
      %v1134 = vpop.f32.mrf.mxu0
      %v1135 = vadd.f32 %v1006, %v1134
      %1136 = vmatmul.bf16.gmra.mxu0 %v793
      %v1137 = vpop.f32.mrf.mxu0
      %v1138 = vadd.f32 %v1009, %v1137
      %v1139 = vpop.f32.mrf.mxu0
      %v1140 = vadd.f32 %v1011, %v1139
      %1141 = vmatmul.bf16.gmra.mxu0 %v796
      %v1142 = vpop.f32.mrf.mxu0
      %v1143 = vadd.f32 %v1014, %v1142
      %v1144 = vpop.f32.mrf.mxu0
      %v1145 = vadd.f32 %v1016, %v1144
      %1146 = vmatmul.bf16.gmra.mxu0 %v799
      %v1147 = vpop.f32.mrf.mxu0
      %v1148 = vadd.f32 %v1019, %v1147
      %v1149 = vpop.f32.mrf.mxu0
      %v1150 = vadd.f32 %v1021, %v1149
      %1151 = vmatmul.bf16.gmra.mxu0 %v802
      %v1152 = vpop.f32.mrf.mxu0
      %v1153 = vadd.f32 %v1024, %v1152
      %v1154 = vpop.f32.mrf.mxu0
      %v1155 = vadd.f32 %v1026, %v1154
      %1156 = vmatmul.bf16.gmra.mxu0 %v805
      %v1157 = vpop.f32.mrf.mxu0
      %v1158 = vadd.f32 %v1029, %v1157
      %v1159 = vpop.f32.mrf.mxu0
      %v1160 = vadd.f32 %v1031, %v1159
      %1161 = vmatmul.bf16.gmra.mxu0 %v808
      %v1162 = vpop.f32.mrf.mxu0
      %v1163 = vadd.f32 %v1034, %v1162
      %v1164 = vpop.f32.mrf.mxu0
      %v1165 = vadd.f32 %v1036, %v1164
      %1166 = vmatmul.bf16.gmra.mxu0 %v811
      %v1167 = vpop.f32.mrf.mxu0
      %v1168 = vadd.f32 %v1039, %v1167
      %v1169 = vpop.f32.mrf.mxu0
      %v1170 = vadd.f32 %v1041, %v1169
      %1171 = vmatmul.bf16.gmra.mxu0 %v814
      %v1172 = vpop.f32.mrf.mxu0
      %v1173 = vadd.f32 %v1044, %v1172
      %v1174 = vpop.f32.mrf.mxu0
      %v1175 = vadd.f32 %v1046, %v1174
      %1176 = vmatmul.bf16.gmra.mxu0 %v817
      %v1177 = vpop.f32.mrf.mxu0
      %v1178 = vadd.f32 %v1049, %v1177
      %v1179 = vpop.f32.mrf.mxu0
      %v1180 = vadd.f32 %v1051, %v1179
      %1181 = vmatmul.bf16.gmra.mxu0 %v820
      %v1182 = vpop.f32.mrf.mxu0
      %v1183 = vadd.f32 %v1054, %v1182
      %v1184 = vpop.f32.mrf.mxu0
      %v1185 = vadd.f32 %v1056, %v1184
      %1186 = vmatmul.bf16.gmra.mxu0 %v823
      %v1187 = vpop.f32.mrf.mxu0
      %v1188 = vadd.f32 %v1059, %v1187
      %v1189 = vpop.f32.mrf.mxu0
      %v1190 = vadd.f32 %v1061, %v1189
      %1191 = vmatmul.bf16.gmra.mxu0 %v826
      %v1192 = vpop.f32.mrf.mxu0
      %v1193 = vadd.f32 %v1064, %v1192
      %v1194 = vpop.f32.mrf.mxu0
      %v1195 = vadd.f32 %v1066, %v1194
      %1196 = vmatmul.bf16.gmra.mxu0 %v829
      %v1197 = vpop.f32.mrf.mxu0
      %v1198 = vadd.f32 %v1069, %v1197
      %v1199 = vpop.f32.mrf.mxu0
      %v1200 = vadd.f32 %v1071, %v1199
      %1201 = vmatmul.bf16.gmra.mxu0 %v832
      %v1202 = vpop.f32.mrf.mxu0
      %v1203 = vadd.f32 %v1074, %v1202
      %v1204 = vpop.f32.mrf.mxu0
      %v1205 = vadd.f32 %v1076, %v1204
      %1206 = vmatmul.bf16.gmra.mxu0 %v835
      %v1207 = vpop.f32.mrf.mxu0
      %v1208 = vadd.f32 %v1079, %v1207
      %v1209 = vpop.f32.mrf.mxu0
      %v1210 = vadd.f32 %v1081, %v1209
      %1211 = vmatmul.bf16.gmra.mxu0 %v838
      %v1212 = vpop.f32.mrf.mxu0
      %v1213 = vadd.f32 %v1084, %v1212
      %v1214 = vpop.f32.mrf.mxu0
      %v1215 = vadd.f32 %v1086, %v1214
      %1216 = vmatmul.bf16.gmra.mxu0 %v841
      %v1217 = vpop.f32.mrf.mxu0
      %v1218 = vadd.f32 %v1089, %v1217
      %v1219 = vpop.f32.mrf.mxu0
      %v1220 = vadd.f32 %v1091, %v1219
      %1221 = vmatmul.bf16.gmra.mxu0 %v844
      %v1222 = vpop.f32.mrf.mxu0
      %v1223 = vadd.f32 %v1094, %v1222
      %v1224 = vpop.f32.mrf.mxu0
      %v1225 = vadd.f32 %v1096, %v1224
      %1226 = vmatmul.bf16.gmra.mxu0 %v847
      %v1227 = vpop.f32.mrf.mxu0
      %v1228 = vadd.f32 %v1099, %v1227
      %v1229 = vpop.f32.mrf.mxu0
      %v1230 = vadd.f32 %v1101, %v1229
      %1231 = vmatmul.bf16.gmra.mxu0 %v850
      %v1232 = vpop.f32.mrf.mxu0
      %v1233 = vadd.f32 %v1104, %v1232
      %v1234 = vpop.f32.mrf.mxu0
      %v1235 = vadd.f32 %v1106, %v1234
      %1236 = vmatmul.bf16.gmra.mxu0 %v853
      %v1237 = vpop.f32.mrf.mxu0
      %v1238 = vadd.f32 %v1109, %v1237
      %v1239 = vpop.f32.mrf.mxu0
      %v1240 = vadd.f32 %v1111, %v1239
      %1241 = vdwg.mxu0
      %v1242 = vmax.f32 %v1123, 0.0
      %v1243 = vmax.f32 %v1125, 0.0
      %v1244 = vmax.f32 %v1128, 0.0
      %v1245 = vmax.f32 %v1130, 0.0
      %v1246 = vmax.f32 %v1133, 0.0
      %v1247 = vmax.f32 %v1135, 0.0
      %v1248 = vmax.f32 %v1138, 0.0
      %v1249 = vmax.f32 %v1140, 0.0
      %v1250 = vmax.f32 %v1143, 0.0
      %v1251 = vmax.f32 %v1145, 0.0
      %v1252 = vmax.f32 %v1148, 0.0
      %v1253 = vmax.f32 %v1150, 0.0
      %v1254 = vmax.f32 %v1153, 0.0
      %v1255 = vmax.f32 %v1155, 0.0
      %v1256 = vmax.f32 %v1158, 0.0
      %v1257 = vmax.f32 %v1160, 0.0
      %v1258 = vmax.f32 %v1163, 0.0
      %v1259 = vmax.f32 %v1165, 0.0
      %v1260 = vmax.f32 %v1168, 0.0
      %v1261 = vmax.f32 %v1170, 0.0
      %v1262 = vmax.f32 %v1173, 0.0
      %v1263 = vmax.f32 %v1175, 0.0
      %v1264 = vmax.f32 %v1178, 0.0
      %v1265 = vmax.f32 %v1180, 0.0
      %v1266 = vmax.f32 %v1183, 0.0
      %v1267 = vmax.f32 %v1185, 0.0
      %v1268 = vmax.f32 %v1188, 0.0
      %v1269 = vmax.f32 %v1190, 0.0
      %v1270 = vmax.f32 %v1193, 0.0
      %v1271 = vmax.f32 %v1195, 0.0
      %v1272 = vmax.f32 %v1198, 0.0
      %v1273 = vmax.f32 %v1200, 0.0
      %v1274 = vmax.f32 %v1203, 0.0
      %v1275 = vmax.f32 %v1205, 0.0
      %v1276 = vmax.f32 %v1208, 0.0
      %v1277 = vmax.f32 %v1210, 0.0
      %v1278 = vmax.f32 %v1213, 0.0
      %v1279 = vmax.f32 %v1215, 0.0
      %v1280 = vmax.f32 %v1218, 0.0
      %v1281 = vmax.f32 %v1220, 0.0
      %v1282 = vmax.f32 %v1223, 0.0
      %v1283 = vmax.f32 %v1225, 0.0
      %v1284 = vmax.f32 %v1228, 0.0
      %v1285 = vmax.f32 %v1230, 0.0
      %v1286 = vmax.f32 %v1233, 0.0
      %v1287 = vmax.f32 %v1235, 0.0
      %v1288 = vmax.f32 %v1238, 0.0
      %v1289 = vmax.f32 %v1240, 0.0
      %v1290 = vpack.c.bf16 %v1242, %v1242
      %v1291 = vpack.c.bf16 %v1243, %v1243
      %v1292 = vpack.c.bf16 %v1244, %v1244
      %v1293 = vpack.c.bf16 %v1245, %v1245
      %v1294 = vpack.c.bf16 %v1246, %v1246
      %v1295 = vpack.c.bf16 %v1247, %v1247
      %v1296 = vpack.c.bf16 %v1248, %v1248
      %v1297 = vpack.c.bf16 %v1249, %v1249
      %v1298 = vpack.c.bf16 %v1250, %v1250
      %v1299 = vpack.c.bf16 %v1251, %v1251
      %v1300 = vpack.c.bf16 %v1252, %v1252
      %v1301 = vpack.c.bf16 %v1253, %v1253
      %v1302 = vpack.c.bf16 %v1254, %v1254
      %v1303 = vpack.c.bf16 %v1255, %v1255
      %v1304 = vpack.c.bf16 %v1256, %v1256
      %v1305 = vpack.c.bf16 %v1257, %v1257
      %v1306 = vpack.c.bf16 %v1258, %v1258
      %v1307 = vpack.c.bf16 %v1259, %v1259
      %v1308 = vpack.c.bf16 %v1260, %v1260
      %v1309 = vpack.c.bf16 %v1261, %v1261
      %v1310 = vpack.c.bf16 %v1262, %v1262
      %v1311 = vpack.c.bf16 %v1263, %v1263
      %v1312 = vpack.c.bf16 %v1264, %v1264
      %v1313 = vpack.c.bf16 %v1265, %v1265
      %v1314 = vpack.c.bf16 %v1266, %v1266
      %v1315 = vpack.c.bf16 %v1267, %v1267
      %v1316 = vpack.c.bf16 %v1268, %v1268
      %v1317 = vpack.c.bf16 %v1269, %v1269
      %v1318 = vpack.c.bf16 %v1270, %v1270
      %v1319 = vpack.c.bf16 %v1271, %v1271
      %v1320 = vpack.c.bf16 %v1272, %v1272
      %v1321 = vpack.c.bf16 %v1273, %v1273
      %v1322 = vpack.c.bf16 %v1274, %v1274
      %v1323 = vpack.c.bf16 %v1275, %v1275
      %v1324 = vpack.c.bf16 %v1276, %v1276
      %v1325 = vpack.c.bf16 %v1277, %v1277
      %v1326 = vpack.c.bf16 %v1278, %v1278
      %v1327 = vpack.c.bf16 %v1279, %v1279
      %v1328 = vpack.c.bf16 %v1280, %v1280
      %v1329 = vpack.c.bf16 %v1281, %v1281
      %v1330 = vpack.c.bf16 %v1282, %v1282
      %v1331 = vpack.c.bf16 %v1283, %v1283
      %v1332 = vpack.c.bf16 %v1284, %v1284
      %v1333 = vpack.c.bf16 %v1285, %v1285
      %v1334 = vpack.c.bf16 %v1286, %v1286
      %v1335 = vpack.c.bf16 %v1287, %v1287
      %v1336 = vpack.c.bf16 %v1288, %v1288
      %v1337 = vpack.c.bf16 %v1289, %v1289
      %vm1338 = vcmask 257024
      %1339 = vst.msk [vmem:[%s175] sm:$0xf] %vm1338, %v1290
      %1340 = vst.msk [vmem:[%s175 + $0x4] sm:$0xf] %vm1338, %v1291
      %1341 = vst.msk [vmem:[%s175 + $0x8] sm:$0xf] %vm1338, %v1292
      %1342 = vst.msk [vmem:[%s175 + $0xc] sm:$0xf] %vm1338, %v1293
      %1343 = vst.msk [vmem:[%s175 + $0x10] sm:$0xf] %vm1338, %v1294
      %1344 = vst.msk [vmem:[%s175 + $0x14] sm:$0xf] %vm1338, %v1295
      %1345 = vst.msk [vmem:[%s175 + $0x18] sm:$0xf] %vm1338, %v1296
      %1346 = vst.msk [vmem:[%s175 + $0x1c] sm:$0xf] %vm1338, %v1297
      %1347 = vst.msk [vmem:[%s175 + $0x20] sm:$0xf] %vm1338, %v1298
      %1348 = vst.msk [vmem:[%s175 + $0x24] sm:$0xf] %vm1338, %v1299
      %1349 = vst.msk [vmem:[%s175 + $0x28] sm:$0xf] %vm1338, %v1300
      %1350 = vst.msk [vmem:[%s175 + $0x2c] sm:$0xf] %vm1338, %v1301
      %1351 = vst.msk [vmem:[%s175 + $0x30] sm:$0xf] %vm1338, %v1302
      %1352 = vst.msk [vmem:[%s175 + $0x34] sm:$0xf] %vm1338, %v1303
      %1353 = vst.msk [vmem:[%s175 + $0x38] sm:$0xf] %vm1338, %v1304
      %1354 = vst.msk [vmem:[%s175 + $0x3c] sm:$0xf] %vm1338, %v1305
      %1355 = vst.msk [vmem:[%s175 + $0x40] sm:$0xf] %vm1338, %v1306
      %1356 = vst.msk [vmem:[%s175 + $0x44] sm:$0xf] %vm1338, %v1307
      %1357 = vst.msk [vmem:[%s175 + $0x48] sm:$0xf] %vm1338, %v1308
      %1358 = vst.msk [vmem:[%s175 + $0x4c] sm:$0xf] %vm1338, %v1309
      %1359 = vst.msk [vmem:[%s175 + $0x50] sm:$0xf] %vm1338, %v1310
      %1360 = vst.msk [vmem:[%s175 + $0x54] sm:$0xf] %vm1338, %v1311
      %1361 = vst.msk [vmem:[%s175 + $0x58] sm:$0xf] %vm1338, %v1312
      %1362 = vst.msk [vmem:[%s175 + $0x5c] sm:$0xf] %vm1338, %v1313
      %1363 = vst.msk [vmem:[%s175 + $0x60] sm:$0xf] %vm1338, %v1314
      %1364 = vst.msk [vmem:[%s175 + $0x64] sm:$0xf] %vm1338, %v1315
      %1365 = vst.msk [vmem:[%s175 + $0x68] sm:$0xf] %vm1338, %v1316
      %1366 = vst.msk [vmem:[%s175 + $0x6c] sm:$0xf] %vm1338, %v1317
      %1367 = vst.msk [vmem:[%s175 + $0x70] sm:$0xf] %vm1338, %v1318
      %1368 = vst.msk [vmem:[%s175 + $0x74] sm:$0xf] %vm1338, %v1319
      %1369 = vst.msk [vmem:[%s175 + $0x78] sm:$0xf] %vm1338, %v1320
      %1370 = vst.msk [vmem:[%s175 + $0x7c] sm:$0xf] %vm1338, %v1321
      %1371 = vst.msk [vmem:[%s175 + $0x80] sm:$0xf] %vm1338, %v1322
      %1372 = vst.msk [vmem:[%s175 + $0x84] sm:$0xf] %vm1338, %v1323
      %1373 = vst.msk [vmem:[%s175 + $0x88] sm:$0xf] %vm1338, %v1324
      %1374 = vst.msk [vmem:[%s175 + $0x8c] sm:$0xf] %vm1338, %v1325
      %1375 = vst.msk [vmem:[%s175 + $0x90] sm:$0xf] %vm1338, %v1326
      %1376 = vst.msk [vmem:[%s175 + $0x94] sm:$0xf] %vm1338, %v1327
      %1377 = vst.msk [vmem:[%s175 + $0x98] sm:$0xf] %vm1338, %v1328
      %1378 = vst.msk [vmem:[%s175 + $0x9c] sm:$0xf] %vm1338, %v1329
      %1379 = vst.msk [vmem:[%s175 + $0xa0] sm:$0xf] %vm1338, %v1330
      %1380 = vst.msk [vmem:[%s175 + $0xa4] sm:$0xf] %vm1338, %v1331
      %1381 = vst.msk [vmem:[%s175 + $0xa8] sm:$0xf] %vm1338, %v1332
      %1382 = vst.msk [vmem:[%s175 + $0xac] sm:$0xf] %vm1338, %v1333
      %1383 = vst.msk [vmem:[%s175 + $0xb0] sm:$0xf] %vm1338, %v1334
      %1384 = vst.msk [vmem:[%s175 + $0xb4] sm:$0xf] %vm1338, %v1335
      %1385 = vst.msk [vmem:[%s175 + $0xb8] sm:$0xf] %vm1338, %v1336
      %1386 = vst.msk [vmem:[%s175 + $0xbc] sm:$0xf] %vm1338, %v1337
      %s1387 = smul.u32 48, %s14
      %p1388 = scmp.lt.s32.totalorder %s1387, 95
      %s1389 = scalar_select %p1388, %s1387, 95
      %s1390 = smul.addr %s1389, 4
      %s1391 = scalar_lea.vmem %s3, %s1390
      // Predicated region
      $region33: #{model_forward.7} parent=31 // pred_check
        %p1392 = pneg %p100
      $region34: #{model_forward.7} parent=31 // pred_check_branch
        %1394 = sbr.rel (%p1392) target = $region36
      $region35: #{model_forward.7} parent=31 // pred_region
        %s1395 = smul.u32 48, %s14
      $region36: #{model_forward.7} parent=31 // pred_fallthru
        _
    $region32: #{model_forward.7} parent=5 // pred_fallthru
      _
    %p1396 = scmp.le.s32.totalorder 2, %s9
    // Predicated region
    $region37: #{model_forward.7} parent=5 // pred_check
      %p1397 = pneg %p1396
    $region38: #{model_forward.7} parent=5 // pred_check_branch
      %1399 = sbr.rel (%p1397) target = $region40
    $region39: #{model_forward.7} parent=5 // pred_region
      %s1400 = ssub.s32 %s9, 2
      // Predicated region
      $region41: #{model_forward.7} parent=39 // pred_check
        %p1401 = pneg %p106
      $region42: #{model_forward.7} parent=39 // pred_check_branch
        %1403 = sbr.rel (%p1401) target = $region44
      $region43: #{model_forward.7} parent=39 // pred_region
        %s1404 = smul.u32 48, %s15
        %p1405 = scmp.lt.s32.totalorder %s1404, 95
        %s1406 = scalar_select %p1405, %s1404, 95
        %s1407 = smul.addr %s1406, 4
        %s1408 = scalar_lea.vmem %s3, %s1407
      $region44: #{model_forward.7} parent=39 // pred_fallthru
        _
    $region40: #{model_forward.7} parent=5 // pred_fallthru
      _
  $region6: #{model_forward.7} parent=0 // loop_footer
    %s13 = sadd.s32 1, %s9
  $region7: #{model_forward.7} parent=0 // loop_footer_branch
    %8 = sbr.rel target = $region3
  $region8: #{model_forward.7} parent=0 // loop_exit
    _

// kernel: model_forward.8
$region0: #{model_forward.8}
  #allocation0 [shape = 'u32[]', space=smem, size = 0x4, offset = 0x4, fixed_abs, tag = 'smem constant byte address 0x4 - core index']
  #allocation1 [shape = 'u32[72,128]{1,0:T(1,128)}', space=vmem, size = 0x9000, scoped, tag = 'internal scratch']
  %s0 = inlined_call_operand.vmem [shape: bf16[768,32], index: 0, kind: input, shape index: {}]
  %s1 = inlined_call_operand.vmem [shape: bf16[768,16], index: 1, kind: input, shape index: {}]
  %s2 = inlined_call_operand.vmem [shape: bf16[32,32], index: 2, kind: input, shape index: {}]
  %s3 = inlined_call_operand.vmem [shape: bf16[16,32], index: 3, kind: input, shape index: {}]
  %s4 = inlined_call_operand.vmem [shape: f32[1,32], index: 4, kind: input, shape index: {}]
  %s5 = inlined_call_operand.vmem [shape: bf16[768,32], index: 5, kind: output, shape index: {}]
  %s6 = sld [smem:[#allocation0]]
  $region53: #{model_forward.8} parent=0
    _
  %s8 = ssub.s32 1, %s6
  %s9 = scalar_select 0, %s8, %s6
  loop: start=0, step=1, limit=4
  $region2: #{model_forward.8} parent=0 // loop_pre_header
    _
  $region3: #{model_forward.8} parent=0 // loop_header
    %s11 = sphi 0, %s15
    %p12 = scmp.ge.s32.totalorder %s11, 4
    %s21 = sphi 0, %s23
    %s24 = sphi 0, %s21
    %s25 = sphi 0, %s24
    %s41 = sphi 0, %s25
    %s47 = sphi 0, %s49
    %s50 = sphi 0, %s47
    %s51 = sphi 0, %s50
    %s67 = sphi 0, %s51
    %s71 = sphi 0, %s71
    %s73 = sphi 0, %s71
    %s74 = sphi 0, %s73
    %s88 = sphi 0, %s74
    %s92 = sphi 0, %s92
    %s94 = sphi 0, %s92
    %s95 = sphi 0, %s94
    %s109 = sphi 0, %s95
    %s113 = sphi 0, %s113
    %s115 = sphi 0, %s113
    %s116 = sphi 0, %s115
    %s130 = sphi 0, %s116
    %s136 = sphi 0, %s138
    %s139 = sphi 0, %s136
    %s140 = sphi 0, %s139
    %s156 = sphi 0, %s140
  $region4: #{model_forward.8} parent=0 // loop_header_branch
    %14 = sbr.rel (%p12) target = $region8
  $region5: #{model_forward.8} parent=0 // loop_body
    %s16 = ssub.s32 %s11, 1
    %s17 = ssub.s32 %s11, 2
    %s18 = sadd.s32 %s11, 1
    %s19 = ssub.s32 %s11, %s18
    %p20 = scmp.eq.s32.totalorder %s19, 0
    %s22 = sadd.s32 %s21, 1
    %s23 = scalar_select %p20, %s21, %s22
    %p26 = pneg %p20
    %p27 = scmp.eq.s32.totalorder %s11, 1
    %p28 = por %p26, %p27
    %p29 = scmp.ne.s32.totalorder %s21, %s24
    %p30 = scmp.eq.s32.totalorder %s11, 0
    %p31 = por %p29, %p30
    %p32 = scmp.ne.s32.totalorder %s21, %s24
    %p33 = scmp.eq.s32.totalorder %s16, 1
    %p34 = por %p32, %p33
    %p35 = scmp.ne.s32.totalorder %s24, %s25
    %p36 = scmp.eq.s32.totalorder %s16, 0
    %p37 = por %p35, %p36
    %p38 = scmp.ne.s32.totalorder %s24, %s25
    %p39 = scmp.eq.s32.totalorder %s17, 1
    %p40 = por %p38, %p39
    %p42 = scmp.ne.s32.totalorder %s25, %s41
    %p43 = scmp.eq.s32.totalorder %s17, 0
    %p44 = por %p42, %p43
    %s45 = ssub.s32 %s11, %s18
    %p46 = scmp.eq.s32.totalorder %s45, 0
    %s48 = sadd.s32 %s47, 1
    %s49 = scalar_select %p46, %s47, %s48
    %p52 = pneg %p46
    %p53 = scmp.eq.s32.totalorder %s11, 1
    %p54 = por %p52, %p53
    %p55 = scmp.ne.s32.totalorder %s47, %s50
    %p56 = scmp.eq.s32.totalorder %s11, 0
    %p57 = por %p55, %p56
    %p58 = scmp.ne.s32.totalorder %s47, %s50
    %p59 = scmp.eq.s32.totalorder %s16, 1
    %p60 = por %p58, %p59
    %p61 = scmp.ne.s32.totalorder %s50, %s51
    %p62 = scmp.eq.s32.totalorder %s16, 0
    %p63 = por %p61, %p62
    %p64 = scmp.ne.s32.totalorder %s50, %s51
    %p65 = scmp.eq.s32.totalorder %s17, 1
    %p66 = por %p64, %p65
    %p68 = scmp.ne.s32.totalorder %s51, %s67
    %p69 = scmp.eq.s32.totalorder %s17, 0
    %p70 = por %p68, %p69
    %s72 = sadd.s32 %s71, 1
    %p75 = scmp.eq.s32.totalorder %s11, 1
    %p76 = scmp.ne.s32.totalorder %s71, %s73
    %p77 = scmp.eq.s32.totalorder %s11, 0
    %p78 = por %p76, %p77
    %p79 = scmp.ne.s32.totalorder %s71, %s73
    %p80 = scmp.eq.s32.totalorder %s16, 1
    %p81 = por %p79, %p80
    %p82 = scmp.ne.s32.totalorder %s73, %s74
    %p83 = scmp.eq.s32.totalorder %s16, 0
    %p84 = por %p82, %p83
    %p85 = scmp.ne.s32.totalorder %s73, %s74
    %p86 = scmp.eq.s32.totalorder %s17, 1
    %p87 = por %p85, %p86
    %p89 = scmp.ne.s32.totalorder %s74, %s88
    %p90 = scmp.eq.s32.totalorder %s17, 0
    %p91 = por %p89, %p90
    %s93 = sadd.s32 %s92, 1
    %p96 = scmp.eq.s32.totalorder %s11, 1
    %p97 = scmp.ne.s32.totalorder %s92, %s94
    %p98 = scmp.eq.s32.totalorder %s11, 0
    %p99 = por %p97, %p98
    %p100 = scmp.ne.s32.totalorder %s92, %s94
    %p101 = scmp.eq.s32.totalorder %s16, 1
    %p102 = por %p100, %p101
    %p103 = scmp.ne.s32.totalorder %s94, %s95
    %p104 = scmp.eq.s32.totalorder %s16, 0
    %p105 = por %p103, %p104
    %p106 = scmp.ne.s32.totalorder %s94, %s95
    %p107 = scmp.eq.s32.totalorder %s17, 1
    %p108 = por %p106, %p107
    %p110 = scmp.ne.s32.totalorder %s95, %s109
    %p111 = scmp.eq.s32.totalorder %s17, 0
    %p112 = por %p110, %p111
    %s114 = sadd.s32 %s113, 1
    %p117 = scmp.eq.s32.totalorder %s11, 1
    %p118 = scmp.ne.s32.totalorder %s113, %s115
    %p119 = scmp.eq.s32.totalorder %s11, 0
    %p120 = por %p118, %p119
    %p121 = scmp.ne.s32.totalorder %s113, %s115
    %p122 = scmp.eq.s32.totalorder %s16, 1
    %p123 = por %p121, %p122
    %p124 = scmp.ne.s32.totalorder %s115, %s116
    %p125 = scmp.eq.s32.totalorder %s16, 0
    %p126 = por %p124, %p125
    %p127 = scmp.ne.s32.totalorder %s115, %s116
    %p128 = scmp.eq.s32.totalorder %s17, 1
    %p129 = por %p127, %p128
    %p131 = scmp.ne.s32.totalorder %s116, %s130
    %p132 = scmp.eq.s32.totalorder %s17, 0
    %p133 = por %p131, %p132
    %s134 = ssub.s32 %s11, %s18
    %p135 = scmp.eq.s32.totalorder %s134, 0
    %s137 = sadd.s32 %s136, 1
    %s138 = scalar_select %p135, %s136, %s137
    %p141 = pneg %p135
    %p142 = scmp.eq.s32.totalorder %s11, 1
    %p143 = por %p141, %p142
    %p144 = scmp.ne.s32.totalorder %s136, %s139
    %p145 = scmp.eq.s32.totalorder %s11, 0
    %p146 = por %p144, %p145
    %p147 = scmp.ne.s32.totalorder %s136, %s139
    %p148 = scmp.eq.s32.totalorder %s16, 1
    %p149 = por %p147, %p148
    %p150 = scmp.ne.s32.totalorder %s139, %s140
    %p151 = scmp.eq.s32.totalorder %s16, 0
    %p152 = por %p150, %p151
    %p153 = scmp.ne.s32.totalorder %s139, %s140
    %p154 = scmp.eq.s32.totalorder %s17, 1
    %p155 = por %p153, %p154
    %p157 = scmp.ne.s32.totalorder %s140, %s156
    %p158 = scmp.eq.s32.totalorder %s17, 0
    %p159 = por %p157, %p158
    %p160 = scmp.le.s32.totalorder 1, %s11
    %p161 = scmp.lt.s32.totalorder %s11, 3
    %p162 = pnand %p160, %p161
    %p163 = pneg %p162
    // Predicated region
    $region9: #{model_forward.8} parent=5 // pred_check
      _
    $region10: #{model_forward.8} parent=5 // pred_check_branch
      %165 = sbr.rel (%p162) target = $region12
    $region11: #{model_forward.8} parent=5 // pred_region
      %s166 = ssub.s32 %s11, 1
      // Predicated region
      $region13: #{model_forward.8} parent=11 // pred_check
        %p167 = pneg %p84
      $region14: #{model_forward.8} parent=11 // pred_check_branch
        %169 = sbr.rel (%p167) target = $region16
      $region15: #{model_forward.8} parent=11 // pred_region
        _
      $region16: #{model_forward.8} parent=11 // pred_fallthru
        _
      // Predicated region
      $region17: #{model_forward.8} parent=11 // pred_check
        %p170 = pneg %p105
      $region18: #{model_forward.8} parent=11 // pred_check_branch
        %172 = sbr.rel (%p170) target = $region20
      $region19: #{model_forward.8} parent=11 // pred_region
        _
      $region20: #{model_forward.8} parent=11 // pred_fallthru
        _
      // Predicated region
      $region21: #{model_forward.8} parent=11 // pred_check
        %p173 = pneg %p126
      $region22: #{model_forward.8} parent=11 // pred_check_branch
        %175 = sbr.rel (%p173) target = $region24
      $region23: #{model_forward.8} parent=11 // pred_region
        _
      $region24: #{model_forward.8} parent=11 // pred_fallthru
        _
    $region12: #{model_forward.8} parent=5 // pred_fallthru
      _
    %p176 = scmp.lt.s32.totalorder %s11, 2
    // Predicated region
    $region25: #{model_forward.8} parent=5 // pred_check
      %p177 = pneg %p176
    $region26: #{model_forward.8} parent=5 // pred_check_branch
      %179 = sbr.rel (%p177) target = $region28
    $region27: #{model_forward.8} parent=5 // pred_region
      // Predicated region
      $region29: #{model_forward.8} parent=27 // pred_check
        %p180 = pneg %p31
      $region30: #{model_forward.8} parent=27 // pred_check_branch
        %182 = sbr.rel (%p180) target = $region32
      $region31: #{model_forward.8} parent=27 // pred_region
        %s183 = smul.u32 48, %s11
        %p184 = scmp.lt.s32.totalorder %s183, 95
        %s185 = scalar_select %p184, %s183, 95
        %s186 = smul.addr %s185, 4
        %s187 = scalar_lea.vmem %s0, %s186
        %s188 = smul.u32 48, %s11
      $region32: #{model_forward.8} parent=27 // pred_fallthru
        _
      // Predicated region
      $region33: #{model_forward.8} parent=27 // pred_check
        %p189 = pneg %p57
      $region34: #{model_forward.8} parent=27 // pred_check_branch
        %191 = sbr.rel (%p189) target = $region36
      $region35: #{model_forward.8} parent=27 // pred_region
        %s192 = smul.u32 48, %s11
        %p193 = scmp.lt.s32.totalorder %s192, 95
        %s194 = scalar_select %p193, %s192, 95
        %s195 = smul.addr %s194, 4
        %s196 = scalar_lea.vmem %s1, %s195
        %s197 = smul.u32 48, %s11
      $region36: #{model_forward.8} parent=27 // pred_fallthru
        _
    $region28: #{model_forward.8} parent=5 // pred_fallthru
      _
    %p198 = scmp.le.s32.totalorder 1, %s11
    %p199 = scmp.lt.s32.totalorder %s11, 3
    %p200 = pnand %p198, %p199
    %p201 = pneg %p200
    // Predicated region
    $region37: #{model_forward.8} parent=5 // pred_check
      _
    $region38: #{model_forward.8} parent=5 // pred_check_branch
      %203 = sbr.rel (%p200) target = $region40
    $region39: #{model_forward.8} parent=5 // pred_region
      %s204 = ssub.s32 %s11, 1
      %s205 = smul.u32 48, %s16
      %p206 = scmp.lt.s32.totalorder %s205, 95
      %s207 = scalar_select %p206, %s205, 95
      %s208 = smul.addr %s207, 4
      %s209 = scalar_lea.vmem %s0, %s208
      %p210 = pneg %p37
      %p211 = pneg %p34
      %s212 = smul.u32 48, %s16
      %p213 = scmp.lt.s32.totalorder %s212, 95
      %s214 = scalar_select %p213, %s212, 95
      %s215 = smul.addr %s214, 4
      %s216 = scalar_lea.vmem %s1, %s215
      %p217 = pneg %p63
      %p218 = pneg %p60
      %p219 = pneg %p84
      %p220 = pneg %p81
      %p221 = pneg %p105
      %p222 = pneg %p102
      %p223 = pneg %p126
      %p224 = pneg %p123
      %p225 = pneg %p152
      %p226 = pneg %p149
      %s227 = smul.u32 48, %s16
      %p228 = scmp.lt.s32.totalorder %s227, 95
      %s229 = scalar_select %p228, %s227, 95
      %s230 = smul.addr %s229, 4
      %s231 = scalar_lea.vmem %s5, %s230
      %s232 = smul.u32 48, %s16
      %p233 = scmp.lt.s32.totalorder %s232, 95
      %s234 = scalar_select %p233, %s232, 95
      %s235 = smul.addr %s234, 4
      %s236 = scalar_lea.vmem %s0, %s235
      %s237 = smul.u32 48, %s16
      %s238 = smul.u32 48, %s16
      %p239 = scmp.lt.s32.totalorder %s238, 95
      %s240 = scalar_select %p239, %s238, 95
      %s241 = smul.addr %s240, 4
      %s242 = scalar_lea.vmem %s1, %s241
      %s243 = smul.u32 48, %s16
      %s244 = smul.u32 48, %s16
      %p245 = scmp.lt.s32.totalorder %s244, 95
      %s246 = scalar_select %p245, %s244, 95
      %s247 = smul.addr %s246, 4
      %s248 = scalar_lea.vmem %s5, %s247
      %s249 = smul.u32 48, %s16
      %v251 = vld [vmem:[%s236] sm:$0xf]
      %v252 = vld [vmem:[%s236 + $0x4] sm:$0xf]
      %v253 = vld [vmem:[%s236 + $0x8] sm:$0xf]
      %v254 = vld [vmem:[%s236 + $0xc] sm:$0xf]
      %v255 = vld [vmem:[%s236 + $0x10] sm:$0xf]
      %v256 = vld [vmem:[%s236 + $0x14] sm:$0xf]
      %v257 = vld [vmem:[%s236 + $0x18] sm:$0xf]
      %v258 = vld [vmem:[%s236 + $0x1c] sm:$0xf]
      %v259 = vld [vmem:[%s236 + $0x20] sm:$0xf]
      %v260 = vld [vmem:[%s236 + $0x24] sm:$0xf]
      %v261 = vld [vmem:[%s236 + $0x28] sm:$0xf]
      %v262 = vld [vmem:[%s236 + $0x2c] sm:$0xf]
      %v263 = vld [vmem:[%s236 + $0x30] sm:$0xf]
      %v264 = vld [vmem:[%s236 + $0x34] sm:$0xf]
      %v265 = vld [vmem:[%s236 + $0x38] sm:$0xf]
      %v266 = vld [vmem:[%s236 + $0x3c] sm:$0xf]
      %v267 = vld [vmem:[%s236 + $0x40] sm:$0xf]
      %v268 = vld [vmem:[%s236 + $0x44] sm:$0xf]
      %v269 = vld [vmem:[%s236 + $0x48] sm:$0xf]
      %v270 = vld [vmem:[%s236 + $0x4c] sm:$0xf]
      %v271 = vld [vmem:[%s236 + $0x50] sm:$0xf]
      %v272 = vld [vmem:[%s236 + $0x54] sm:$0xf]
      %v273 = vld [vmem:[%s236 + $0x58] sm:$0xf]
      %v274 = vld [vmem:[%s236 + $0x5c] sm:$0xf]
      %v275 = vld [vmem:[%s236 + $0x60] sm:$0xf]
      %v276 = vld [vmem:[%s236 + $0x64] sm:$0xf]
      %v277 = vld [vmem:[%s236 + $0x68] sm:$0xf]
      %v278 = vld [vmem:[%s236 + $0x6c] sm:$0xf]
      %v279 = vld [vmem:[%s236 + $0x70] sm:$0xf]
      %v280 = vld [vmem:[%s236 + $0x74] sm:$0xf]
      %v281 = vld [vmem:[%s236 + $0x78] sm:$0xf]
      %v282 = vld [vmem:[%s236 + $0x7c] sm:$0xf]
      %v283 = vld [vmem:[%s236 + $0x80] sm:$0xf]
      %v284 = vld [vmem:[%s236 + $0x84] sm:$0xf]
      %v285 = vld [vmem:[%s236 + $0x88] sm:$0xf]
      %v286 = vld [vmem:[%s236 + $0x8c] sm:$0xf]
      %v287 = vld [vmem:[%s236 + $0x90] sm:$0xf]
      %v288 = vld [vmem:[%s236 + $0x94] sm:$0xf]
      %v289 = vld [vmem:[%s236 + $0x98] sm:$0xf]
      %v290 = vld [vmem:[%s236 + $0x9c] sm:$0xf]
      %v291 = vld [vmem:[%s236 + $0xa0] sm:$0xf]
      %v292 = vld [vmem:[%s236 + $0xa4] sm:$0xf]
      %v293 = vld [vmem:[%s236 + $0xa8] sm:$0xf]
      %v294 = vld [vmem:[%s236 + $0xac] sm:$0xf]
      %v295 = vld [vmem:[%s236 + $0xb0] sm:$0xf]
      %v296 = vld [vmem:[%s236 + $0xb4] sm:$0xf]
      %v297 = vld [vmem:[%s236 + $0xb8] sm:$0xf]
      %v298 = vld [vmem:[%s236 + $0xbc] sm:$0xf]
      %v299 = vld [vmem:[%s2] sm:$0xf]
      %v300 = vld [vmem:[%s2 + $0x4] sm:$0xf]
      %v301 = vld [vmem:[%s2 + $0x8] sm:$0xf]
      %v302 = vld [vmem:[%s2 + $0xc] sm:$0xf]
      %v303 = vld [vmem:[%s242] sm:$0xf]
      %v304 = vld [vmem:[%s242 + $0x4] sm:$0xf]
      %v305 = vld [vmem:[%s242 + $0x8] sm:$0xf]
      %v306 = vld [vmem:[%s242 + $0xc] sm:$0xf]
      %v307 = vld [vmem:[%s242 + $0x10] sm:$0xf]
      %v308 = vld [vmem:[%s242 + $0x14] sm:$0xf]
      %v309 = vld [vmem:[%s242 + $0x18] sm:$0xf]
      %v310 = vld [vmem:[%s242 + $0x1c] sm:$0xf]
      %v311 = vld [vmem:[%s242 + $0x20] sm:$0xf]
      %v312 = vld [vmem:[%s242 + $0x24] sm:$0xf]
      %v313 = vld [vmem:[%s242 + $0x28] sm:$0xf]
      %v314 = vld [vmem:[%s242 + $0x2c] sm:$0xf]
      %v315 = vld [vmem:[%s242 + $0x30] sm:$0xf]
      %v316 = vld [vmem:[%s242 + $0x34] sm:$0xf]
      %v317 = vld [vmem:[%s242 + $0x38] sm:$0xf]
      %v318 = vld [vmem:[%s242 + $0x3c] sm:$0xf]
      %v319 = vld [vmem:[%s242 + $0x40] sm:$0xf]
      %v320 = vld [vmem:[%s242 + $0x44] sm:$0xf]
      %v321 = vld [vmem:[%s242 + $0x48] sm:$0xf]
      %v322 = vld [vmem:[%s242 + $0x4c] sm:$0xf]
      %v323 = vld [vmem:[%s242 + $0x50] sm:$0xf]
      %v324 = vld [vmem:[%s242 + $0x54] sm:$0xf]
      %v325 = vld [vmem:[%s242 + $0x58] sm:$0xf]
      %v326 = vld [vmem:[%s242 + $0x5c] sm:$0xf]
      %v327 = vld [vmem:[%s242 + $0x60] sm:$0xf]
      %v328 = vld [vmem:[%s242 + $0x64] sm:$0xf]
      %v329 = vld [vmem:[%s242 + $0x68] sm:$0xf]
      %v330 = vld [vmem:[%s242 + $0x6c] sm:$0xf]
      %v331 = vld [vmem:[%s242 + $0x70] sm:$0xf]
      %v332 = vld [vmem:[%s242 + $0x74] sm:$0xf]
      %v333 = vld [vmem:[%s242 + $0x78] sm:$0xf]
      %v334 = vld [vmem:[%s242 + $0x7c] sm:$0xf]
      %v335 = vld [vmem:[%s242 + $0x80] sm:$0xf]
      %v336 = vld [vmem:[%s242 + $0x84] sm:$0xf]
      %v337 = vld [vmem:[%s242 + $0x88] sm:$0xf]
      %v338 = vld [vmem:[%s242 + $0x8c] sm:$0xf]
      %v339 = vld [vmem:[%s242 + $0x90] sm:$0xf]
      %v340 = vld [vmem:[%s242 + $0x94] sm:$0xf]
      %v341 = vld [vmem:[%s242 + $0x98] sm:$0xf]
      %v342 = vld [vmem:[%s242 + $0x9c] sm:$0xf]
      %v343 = vld [vmem:[%s242 + $0xa0] sm:$0xf]
      %v344 = vld [vmem:[%s242 + $0xa4] sm:$0xf]
      %v345 = vld [vmem:[%s242 + $0xa8] sm:$0xf]
      %v346 = vld [vmem:[%s242 + $0xac] sm:$0xf]
      %v347 = vld [vmem:[%s242 + $0xb0] sm:$0xf]
      %v348 = vld [vmem:[%s242 + $0xb4] sm:$0xf]
      %v349 = vld [vmem:[%s242 + $0xb8] sm:$0xf]
      %v350 = vld [vmem:[%s242 + $0xbc] sm:$0xf]
      %v351 = vld [vmem:[%s3] sm:$0xf]
      %v352 = vld [vmem:[%s3 + $0x4] sm:$0xf]
      %v401 = vunpack.c.l.b16 %v303
      %v402 = vunpack.c.l.b16 %v304
      %v403 = vunpack.c.l.b16 %v305
      %v404 = vunpack.c.l.b16 %v306
      %v405 = vunpack.c.l.b16 %v307
      %v406 = vunpack.c.l.b16 %v308
      %v407 = vunpack.c.l.b16 %v309
      %v408 = vunpack.c.l.b16 %v310
      %v409 = vunpack.c.l.b16 %v311
      %v410 = vunpack.c.l.b16 %v312
      %v411 = vunpack.c.l.b16 %v313
      %v412 = vunpack.c.l.b16 %v314
      %v413 = vunpack.c.l.b16 %v315
      %v414 = vunpack.c.l.b16 %v316
      %v415 = vunpack.c.l.b16 %v317
      %v416 = vunpack.c.l.b16 %v318
      %v417 = vunpack.c.l.b16 %v319
      %v418 = vunpack.c.l.b16 %v320
      %v419 = vunpack.c.l.b16 %v321
      %v420 = vunpack.c.l.b16 %v322
      %v421 = vunpack.c.l.b16 %v323
      %v422 = vunpack.c.l.b16 %v324
      %v423 = vunpack.c.l.b16 %v325
      %v424 = vunpack.c.l.b16 %v326
      %v425 = vunpack.c.l.b16 %v327
      %v426 = vunpack.c.l.b16 %v328
      %v427 = vunpack.c.l.b16 %v329
      %v428 = vunpack.c.l.b16 %v330
      %v429 = vunpack.c.l.b16 %v331
      %v430 = vunpack.c.l.b16 %v332
      %v431 = vunpack.c.l.b16 %v333
      %v432 = vunpack.c.l.b16 %v334
      %v433 = vunpack.c.l.b16 %v335
      %v434 = vunpack.c.l.b16 %v336
      %v435 = vunpack.c.l.b16 %v337
      %v436 = vunpack.c.l.b16 %v338
      %v437 = vunpack.c.l.b16 %v339
      %v438 = vunpack.c.l.b16 %v340
      %v439 = vunpack.c.l.b16 %v341
      %v440 = vunpack.c.l.b16 %v342
      %v441 = vunpack.c.l.b16 %v343
      %v442 = vunpack.c.l.b16 %v344
      %v443 = vunpack.c.l.b16 %v345
      %v444 = vunpack.c.l.b16 %v346
      %v445 = vunpack.c.l.b16 %v347
      %v446 = vunpack.c.l.b16 %v348
      %v447 = vunpack.c.l.b16 %v349
      %v448 = vunpack.c.l.b16 %v350
      %v449 = vpack.c.b16 %v402, %v401
      %v450 = vpack.c.b16 %v404, %v403
      %v451 = vpack.c.b16 %v406, %v405
      %v452 = vpack.c.b16 %v408, %v407
      %v453 = vpack.c.b16 %v410, %v409
      %v454 = vpack.c.b16 %v412, %v411
      %v455 = vpack.c.b16 %v414, %v413
      %v456 = vpack.c.b16 %v416, %v415
      %v457 = vpack.c.b16 %v418, %v417
      %v458 = vpack.c.b16 %v420, %v419
      %v459 = vpack.c.b16 %v422, %v421
      %v460 = vpack.c.b16 %v424, %v423
      %v461 = vpack.c.b16 %v426, %v425
      %v462 = vpack.c.b16 %v428, %v427
      %v463 = vpack.c.b16 %v430, %v429
      %v464 = vpack.c.b16 %v432, %v431
      %v465 = vpack.c.b16 %v434, %v433
      %v466 = vpack.c.b16 %v436, %v435
      %v467 = vpack.c.b16 %v438, %v437
      %v468 = vpack.c.b16 %v440, %v439
      %v469 = vpack.c.b16 %v442, %v441
      %v470 = vpack.c.b16 %v444, %v443
      %v471 = vpack.c.b16 %v446, %v445
      %v472 = vpack.c.b16 %v448, %v447
      %v475 = vunpack.c.l.b16 %v351
      %v476 = vunpack.c.l.b16 %v352
      %v477 = vpack.c.b16 %v476, %v475
      %vm479 = vcmask 130048
      %v481 = vsel %vm479, %v449, 0
      %v484 = vsel %vm479, %v450, 0
      %v487 = vsel %vm479, %v451, 0
      %v490 = vsel %vm479, %v452, 0
      %v493 = vsel %vm479, %v453, 0
      %v496 = vsel %vm479, %v454, 0
      %v499 = vsel %vm479, %v455, 0
      %v502 = vsel %vm479, %v456, 0
      %v505 = vsel %vm479, %v457, 0
      %v508 = vsel %vm479, %v458, 0
      %v511 = vsel %vm479, %v459, 0
      %v514 = vsel %vm479, %v460, 0
      %v517 = vsel %vm479, %v461, 0
      %v520 = vsel %vm479, %v462, 0
      %v523 = vsel %vm479, %v463, 0
      %v526 = vsel %vm479, %v464, 0
      %v529 = vsel %vm479, %v465, 0
      %v532 = vsel %vm479, %v466, 0
      %v535 = vsel %vm479, %v467, 0
      %v538 = vsel %vm479, %v468, 0
      %v541 = vsel %vm479, %v469, 0
      %v544 = vsel %vm479, %v470, 0
      %v547 = vsel %vm479, %v471, 0
      %v550 = vsel %vm479, %v472, 0
      %552 = vmatpush.bf16.msra.mxu0 0
      %553 = vmatpush.bf16.msra.mxu0 0
      %554 = vmatpush.bf16.msra.mxu0 0
      %555 = vmatpush.bf16.msra.mxu0 0
      %556 = vmatpush.bf16.msra.mxu0 0
      %557 = vmatpush.bf16.msra.mxu0 0
      %558 = vmatpush.bf16.msra.mxu0 0
      %559 = vmatpush.bf16.msra.mxu0 %v477
      %560 = vmatmul.bf16.gmra.mxu0 %v481
      %v561 = vpop.f32.mrf.mxu0
      %v562 = vadd.f32 0.0, %v561
      %v563 = vpop.f32.mrf.mxu0
      %v564 = vadd.f32 0.0, %v563
      %565 = vmatmul.bf16.gmra.mxu0 %v484
      %v566 = vpop.f32.mrf.mxu0
      %v567 = vadd.f32 0.0, %v566
      %v568 = vpop.f32.mrf.mxu0
      %v569 = vadd.f32 0.0, %v568
      %570 = vmatmul.bf16.gmra.mxu0 %v487
      %v571 = vpop.f32.mrf.mxu0
      %v572 = vadd.f32 0.0, %v571
      %v573 = vpop.f32.mrf.mxu0
      %v574 = vadd.f32 0.0, %v573
      %575 = vmatmul.bf16.gmra.mxu0 %v490
      %v576 = vpop.f32.mrf.mxu0
      %v577 = vadd.f32 0.0, %v576
      %v578 = vpop.f32.mrf.mxu0
      %v579 = vadd.f32 0.0, %v578
      %580 = vmatmul.bf16.gmra.mxu0 %v493
      %v581 = vpop.f32.mrf.mxu0
      %v582 = vadd.f32 0.0, %v581
      %v583 = vpop.f32.mrf.mxu0
      %v584 = vadd.f32 0.0, %v583
      %585 = vmatmul.bf16.gmra.mxu0 %v496
      %v586 = vpop.f32.mrf.mxu0
      %v587 = vadd.f32 0.0, %v586
      %v588 = vpop.f32.mrf.mxu0
      %v589 = vadd.f32 0.0, %v588
      %590 = vmatmul.bf16.gmra.mxu0 %v499
      %v591 = vpop.f32.mrf.mxu0
      %v592 = vadd.f32 0.0, %v591
      %v593 = vpop.f32.mrf.mxu0
      %v594 = vadd.f32 0.0, %v593
      %595 = vmatmul.bf16.gmra.mxu0 %v502
      %v596 = vpop.f32.mrf.mxu0
      %v597 = vadd.f32 0.0, %v596
      %v598 = vpop.f32.mrf.mxu0
      %v599 = vadd.f32 0.0, %v598
      %600 = vmatmul.bf16.gmra.mxu0 %v505
      %v601 = vpop.f32.mrf.mxu0
      %v602 = vadd.f32 0.0, %v601
      %v603 = vpop.f32.mrf.mxu0
      %v604 = vadd.f32 0.0, %v603
      %605 = vmatmul.bf16.gmra.mxu0 %v508
      %v606 = vpop.f32.mrf.mxu0
      %v607 = vadd.f32 0.0, %v606
      %v608 = vpop.f32.mrf.mxu0
      %v609 = vadd.f32 0.0, %v608
      %610 = vmatmul.bf16.gmra.mxu0 %v511
      %v611 = vpop.f32.mrf.mxu0
      %v612 = vadd.f32 0.0, %v611
      %v613 = vpop.f32.mrf.mxu0
      %v614 = vadd.f32 0.0, %v613
      %615 = vmatmul.bf16.gmra.mxu0 %v514
      %v616 = vpop.f32.mrf.mxu0
      %v617 = vadd.f32 0.0, %v616
      %v618 = vpop.f32.mrf.mxu0
      %v619 = vadd.f32 0.0, %v618
      %620 = vmatmul.bf16.gmra.mxu0 %v517
      %v621 = vpop.f32.mrf.mxu0
      %v622 = vadd.f32 0.0, %v621
      %v623 = vpop.f32.mrf.mxu0
      %v624 = vadd.f32 0.0, %v623
      %625 = vmatmul.bf16.gmra.mxu0 %v520
      %v626 = vpop.f32.mrf.mxu0
      %v627 = vadd.f32 0.0, %v626
      %v628 = vpop.f32.mrf.mxu0
      %v629 = vadd.f32 0.0, %v628
      %630 = vmatmul.bf16.gmra.mxu0 %v523
      %v631 = vpop.f32.mrf.mxu0
      %v632 = vadd.f32 0.0, %v631
      %v633 = vpop.f32.mrf.mxu0
      %v634 = vadd.f32 0.0, %v633
      %635 = vmatmul.bf16.gmra.mxu0 %v526
      %v636 = vpop.f32.mrf.mxu0
      %v637 = vadd.f32 0.0, %v636
      %v638 = vpop.f32.mrf.mxu0
      %v639 = vadd.f32 0.0, %v638
      %640 = vmatmul.bf16.gmra.mxu0 %v529
      %v641 = vpop.f32.mrf.mxu0
      %v642 = vadd.f32 0.0, %v641
      %v643 = vpop.f32.mrf.mxu0
      %v644 = vadd.f32 0.0, %v643
      %645 = vmatmul.bf16.gmra.mxu0 %v532
      %v646 = vpop.f32.mrf.mxu0
      %v647 = vadd.f32 0.0, %v646
      %v648 = vpop.f32.mrf.mxu0
      %v649 = vadd.f32 0.0, %v648
      %650 = vmatmul.bf16.gmra.mxu0 %v535
      %v651 = vpop.f32.mrf.mxu0
      %v652 = vadd.f32 0.0, %v651
      %v653 = vpop.f32.mrf.mxu0
      %v654 = vadd.f32 0.0, %v653
      %655 = vmatmul.bf16.gmra.mxu0 %v538
      %v656 = vpop.f32.mrf.mxu0
      %v657 = vadd.f32 0.0, %v656
      %v658 = vpop.f32.mrf.mxu0
      %v659 = vadd.f32 0.0, %v658
      %660 = vmatmul.bf16.gmra.mxu0 %v541
      %v661 = vpop.f32.mrf.mxu0
      %v662 = vadd.f32 0.0, %v661
      %v663 = vpop.f32.mrf.mxu0
      %v664 = vadd.f32 0.0, %v663
      %665 = vmatmul.bf16.gmra.mxu0 %v544
      %v666 = vpop.f32.mrf.mxu0
      %v667 = vadd.f32 0.0, %v666
      %v668 = vpop.f32.mrf.mxu0
      %v669 = vadd.f32 0.0, %v668
      %670 = vmatmul.bf16.gmra.mxu0 %v547
      %v671 = vpop.f32.mrf.mxu0
      %v672 = vadd.f32 0.0, %v671
      %v673 = vpop.f32.mrf.mxu0
      %v674 = vadd.f32 0.0, %v673
      %675 = vmatmul.bf16.gmra.mxu0 %v550
      %v676 = vpop.f32.mrf.mxu0
      %v677 = vadd.f32 0.0, %v676
      %v678 = vpop.f32.mrf.mxu0
      %v679 = vadd.f32 0.0, %v678
      %680 = vdwg.mxu0
      %v729 = vunpack.c.l.b16 %v251
      %v730 = vunpack.c.l.b16 %v252
      %v731 = vunpack.c.l.b16 %v253
      %v732 = vunpack.c.l.b16 %v254
      %v733 = vunpack.c.l.b16 %v255
      %v734 = vunpack.c.l.b16 %v256
      %v735 = vunpack.c.l.b16 %v257
      %v736 = vunpack.c.l.b16 %v258
      %v737 = vunpack.c.l.b16 %v259
      %v738 = vunpack.c.l.b16 %v260
      %v739 = vunpack.c.l.b16 %v261
      %v740 = vunpack.c.l.b16 %v262
      %v741 = vunpack.c.l.b16 %v263
      %v742 = vunpack.c.l.b16 %v264
      %v743 = vunpack.c.l.b16 %v265
      %v744 = vunpack.c.l.b16 %v266
      %v745 = vunpack.c.l.b16 %v267
      %v746 = vunpack.c.l.b16 %v268
      %v747 = vunpack.c.l.b16 %v269
      %v748 = vunpack.c.l.b16 %v270
      %v749 = vunpack.c.l.b16 %v271
      %v750 = vunpack.c.l.b16 %v272
      %v751 = vunpack.c.l.b16 %v273
      %v752 = vunpack.c.l.b16 %v274
      %v753 = vunpack.c.l.b16 %v275
      %v754 = vunpack.c.l.b16 %v276
      %v755 = vunpack.c.l.b16 %v277
      %v756 = vunpack.c.l.b16 %v278
      %v757 = vunpack.c.l.b16 %v279
      %v758 = vunpack.c.l.b16 %v280
      %v759 = vunpack.c.l.b16 %v281
      %v760 = vunpack.c.l.b16 %v282
      %v761 = vunpack.c.l.b16 %v283
      %v762 = vunpack.c.l.b16 %v284
      %v763 = vunpack.c.l.b16 %v285
      %v764 = vunpack.c.l.b16 %v286
      %v765 = vunpack.c.l.b16 %v287
      %v766 = vunpack.c.l.b16 %v288
      %v767 = vunpack.c.l.b16 %v289
      %v768 = vunpack.c.l.b16 %v290
      %v769 = vunpack.c.l.b16 %v291
      %v770 = vunpack.c.l.b16 %v292
      %v771 = vunpack.c.l.b16 %v293
      %v772 = vunpack.c.l.b16 %v294
      %v773 = vunpack.c.l.b16 %v295
      %v774 = vunpack.c.l.b16 %v296
      %v775 = vunpack.c.l.b16 %v297
      %v776 = vunpack.c.l.b16 %v298
      %v777 = vpack.c.b16 %v730, %v729
      %v778 = vpack.c.b16 %v732, %v731
      %v779 = vpack.c.b16 %v734, %v733
      %v780 = vpack.c.b16 %v736, %v735
      %v781 = vpack.c.b16 %v738, %v737
      %v782 = vpack.c.b16 %v740, %v739
      %v783 = vpack.c.b16 %v742, %v741
      %v784 = vpack.c.b16 %v744, %v743
      %v785 = vpack.c.b16 %v746, %v745
      %v786 = vpack.c.b16 %v748, %v747
      %v787 = vpack.c.b16 %v750, %v749
      %v788 = vpack.c.b16 %v752, %v751
      %v789 = vpack.c.b16 %v754, %v753
      %v790 = vpack.c.b16 %v756, %v755
      %v791 = vpack.c.b16 %v758, %v757
      %v792 = vpack.c.b16 %v760, %v759
      %v793 = vpack.c.b16 %v762, %v761
      %v794 = vpack.c.b16 %v764, %v763
      %v795 = vpack.c.b16 %v766, %v765
      %v796 = vpack.c.b16 %v768, %v767
      %v797 = vpack.c.b16 %v770, %v769
      %v798 = vpack.c.b16 %v772, %v771
      %v799 = vpack.c.b16 %v774, %v773
      %v800 = vpack.c.b16 %v776, %v775
      %v805 = vunpack.c.l.b16 %v299
      %v806 = vunpack.c.l.b16 %v300
      %v807 = vunpack.c.l.b16 %v301
      %v808 = vunpack.c.l.b16 %v302
      %v809 = vpack.c.b16 %v806, %v805
      %v810 = vpack.c.b16 %v808, %v807
      %vm813 = vcmask 261120
      %v815 = vsel %vm813, %v777, 0
      %v818 = vsel %vm813, %v778, 0
      %v821 = vsel %vm813, %v779, 0
      %v824 = vsel %vm813, %v780, 0
      %v827 = vsel %vm813, %v781, 0
      %v830 = vsel %vm813, %v782, 0
      %v833 = vsel %vm813, %v783, 0
      %v836 = vsel %vm813, %v784, 0
      %v839 = vsel %vm813, %v785, 0
      %v842 = vsel %vm813, %v786, 0
      %v845 = vsel %vm813, %v787, 0
      %v848 = vsel %vm813, %v788, 0
      %v851 = vsel %vm813, %v789, 0
      %v854 = vsel %vm813, %v790, 0
      %v857 = vsel %vm813, %v791, 0
      %v860 = vsel %vm813, %v792, 0
      %v863 = vsel %vm813, %v793, 0
      %v866 = vsel %vm813, %v794, 0
      %v869 = vsel %vm813, %v795, 0
      %v872 = vsel %vm813, %v796, 0
      %v875 = vsel %vm813, %v797, 0
      %v878 = vsel %vm813, %v798, 0
      %v881 = vsel %vm813, %v799, 0
      %v884 = vsel %vm813, %v800, 0
      %886 = vmatpush.bf16.msra.mxu0 0
      %887 = vmatpush.bf16.msra.mxu0 0
      %888 = vmatpush.bf16.msra.mxu0 0
      %889 = vmatpush.bf16.msra.mxu0 0
      %890 = vmatpush.bf16.msra.mxu0 0
      %891 = vmatpush.bf16.msra.mxu0 0
      %892 = vmatpush.bf16.msra.mxu0 %v810
      %893 = vmatpush.bf16.msra.mxu0 %v809
      %894 = vmatmul.bf16.gmra.mxu0 %v815
      %v895 = vpop.f32.mrf.mxu0
      %v896 = vadd.f32 %v562, %v895
      %v897 = vpop.f32.mrf.mxu0
      %v898 = vadd.f32 %v564, %v897
      %899 = vmatmul.bf16.gmra.mxu0 %v818
      %v900 = vpop.f32.mrf.mxu0
      %v901 = vadd.f32 %v567, %v900
      %v902 = vpop.f32.mrf.mxu0
      %v903 = vadd.f32 %v569, %v902
      %904 = vmatmul.bf16.gmra.mxu0 %v821
      %v905 = vpop.f32.mrf.mxu0
      %v906 = vadd.f32 %v572, %v905
      %v907 = vpop.f32.mrf.mxu0
      %v908 = vadd.f32 %v574, %v907
      %909 = vmatmul.bf16.gmra.mxu0 %v824
      %v910 = vpop.f32.mrf.mxu0
      %v911 = vadd.f32 %v577, %v910
      %v912 = vpop.f32.mrf.mxu0
      %v913 = vadd.f32 %v579, %v912
      %914 = vmatmul.bf16.gmra.mxu0 %v827
      %v915 = vpop.f32.mrf.mxu0
      %v916 = vadd.f32 %v582, %v915
      %v917 = vpop.f32.mrf.mxu0
      %v918 = vadd.f32 %v584, %v917
      %919 = vmatmul.bf16.gmra.mxu0 %v830
      %v920 = vpop.f32.mrf.mxu0
      %v921 = vadd.f32 %v587, %v920
      %v922 = vpop.f32.mrf.mxu0
      %v923 = vadd.f32 %v589, %v922
      %924 = vmatmul.bf16.gmra.mxu0 %v833
      %v925 = vpop.f32.mrf.mxu0
      %v926 = vadd.f32 %v592, %v925
      %v927 = vpop.f32.mrf.mxu0
      %v928 = vadd.f32 %v594, %v927
      %929 = vmatmul.bf16.gmra.mxu0 %v836
      %v930 = vpop.f32.mrf.mxu0
      %v931 = vadd.f32 %v597, %v930
      %v932 = vpop.f32.mrf.mxu0
      %v933 = vadd.f32 %v599, %v932
      %934 = vmatmul.bf16.gmra.mxu0 %v839
      %v935 = vpop.f32.mrf.mxu0
      %v936 = vadd.f32 %v602, %v935
      %v937 = vpop.f32.mrf.mxu0
      %v938 = vadd.f32 %v604, %v937
      %939 = vmatmul.bf16.gmra.mxu0 %v842
      %v940 = vpop.f32.mrf.mxu0
      %v941 = vadd.f32 %v607, %v940
      %v942 = vpop.f32.mrf.mxu0
      %v943 = vadd.f32 %v609, %v942
      %944 = vmatmul.bf16.gmra.mxu0 %v845
      %v945 = vpop.f32.mrf.mxu0
      %v946 = vadd.f32 %v612, %v945
      %v947 = vpop.f32.mrf.mxu0
      %v948 = vadd.f32 %v614, %v947
      %949 = vmatmul.bf16.gmra.mxu0 %v848
      %v950 = vpop.f32.mrf.mxu0
      %v951 = vadd.f32 %v617, %v950
      %v952 = vpop.f32.mrf.mxu0
      %v953 = vadd.f32 %v619, %v952
      %954 = vmatmul.bf16.gmra.mxu0 %v851
      %v955 = vpop.f32.mrf.mxu0
      %v956 = vadd.f32 %v622, %v955
      %v957 = vpop.f32.mrf.mxu0
      %v958 = vadd.f32 %v624, %v957
      %959 = vmatmul.bf16.gmra.mxu0 %v854
      %v960 = vpop.f32.mrf.mxu0
      %v961 = vadd.f32 %v627, %v960
      %v962 = vpop.f32.mrf.mxu0
      %v963 = vadd.f32 %v629, %v962
      %964 = vmatmul.bf16.gmra.mxu0 %v857
      %v965 = vpop.f32.mrf.mxu0
      %v966 = vadd.f32 %v632, %v965
      %v967 = vpop.f32.mrf.mxu0
      %v968 = vadd.f32 %v634, %v967
      %969 = vmatmul.bf16.gmra.mxu0 %v860
      %v970 = vpop.f32.mrf.mxu0
      %v971 = vadd.f32 %v637, %v970
      %v972 = vpop.f32.mrf.mxu0
      %v973 = vadd.f32 %v639, %v972
      %974 = vmatmul.bf16.gmra.mxu0 %v863
      %v975 = vpop.f32.mrf.mxu0
      %v976 = vadd.f32 %v642, %v975
      %v977 = vpop.f32.mrf.mxu0
      %v978 = vadd.f32 %v644, %v977
      %979 = vmatmul.bf16.gmra.mxu0 %v866
      %v980 = vpop.f32.mrf.mxu0
      %v981 = vadd.f32 %v647, %v980
      %v982 = vpop.f32.mrf.mxu0
      %v983 = vadd.f32 %v649, %v982
      %984 = vmatmul.bf16.gmra.mxu0 %v869
      %v985 = vpop.f32.mrf.mxu0
      %v986 = vadd.f32 %v652, %v985
      %v987 = vpop.f32.mrf.mxu0
      %v988 = vadd.f32 %v654, %v987
      %989 = vmatmul.bf16.gmra.mxu0 %v872
      %v990 = vpop.f32.mrf.mxu0
      %v991 = vadd.f32 %v657, %v990
      %v992 = vpop.f32.mrf.mxu0
      %v993 = vadd.f32 %v659, %v992
      %994 = vmatmul.bf16.gmra.mxu0 %v875
      %v995 = vpop.f32.mrf.mxu0
      %v996 = vadd.f32 %v662, %v995
      %v997 = vpop.f32.mrf.mxu0
      %v998 = vadd.f32 %v664, %v997
      %999 = vmatmul.bf16.gmra.mxu0 %v878
      %v1000 = vpop.f32.mrf.mxu0
      %v1001 = vadd.f32 %v667, %v1000
      %v1002 = vpop.f32.mrf.mxu0
      %v1003 = vadd.f32 %v669, %v1002
      %1004 = vmatmul.bf16.gmra.mxu0 %v881
      %v1005 = vpop.f32.mrf.mxu0
      %v1006 = vadd.f32 %v672, %v1005
      %v1007 = vpop.f32.mrf.mxu0
      %v1008 = vadd.f32 %v674, %v1007
      %1009 = vmatmul.bf16.gmra.mxu0 %v884
      %v1010 = vpop.f32.mrf.mxu0
      %v1011 = vadd.f32 %v677, %v1010
      %v1012 = vpop.f32.mrf.mxu0
      %v1013 = vadd.f32 %v679, %v1012
      %1014 = vdwg.mxu0
      %v1015 = vld [vmem:[%s4] sm:$0x1]
      %v1017 = vperm.slane %v1015, 0
      %v1019 = vadd.f32 %v896, %v1017
      %v1020 = vadd.f32 %v898, %v1017
      %v1021 = vadd.f32 %v901, %v1017
      %v1022 = vadd.f32 %v903, %v1017
      %v1023 = vadd.f32 %v906, %v1017
      %v1024 = vadd.f32 %v908, %v1017
      %v1025 = vadd.f32 %v911, %v1017
      %v1026 = vadd.f32 %v913, %v1017
      %v1027 = vadd.f32 %v916, %v1017
      %v1028 = vadd.f32 %v918, %v1017
      %v1029 = vadd.f32 %v921, %v1017
      %v1030 = vadd.f32 %v923, %v1017
      %v1031 = vadd.f32 %v926, %v1017
      %v1032 = vadd.f32 %v928, %v1017
      %v1033 = vadd.f32 %v931, %v1017
      %v1034 = vadd.f32 %v933, %v1017
      %v1035 = vadd.f32 %v936, %v1017
      %v1036 = vadd.f32 %v938, %v1017
      %v1037 = vadd.f32 %v941, %v1017
      %v1038 = vadd.f32 %v943, %v1017
      %v1039 = vadd.f32 %v946, %v1017
      %v1040 = vadd.f32 %v948, %v1017
      %v1041 = vadd.f32 %v951, %v1017
      %v1042 = vadd.f32 %v953, %v1017
      %v1043 = vadd.f32 %v956, %v1017
      %v1044 = vadd.f32 %v958, %v1017
      %v1045 = vadd.f32 %v961, %v1017
      %v1046 = vadd.f32 %v963, %v1017
      %v1047 = vadd.f32 %v966, %v1017
      %v1048 = vadd.f32 %v968, %v1017
      %v1049 = vadd.f32 %v971, %v1017
      %v1050 = vadd.f32 %v973, %v1017
      %v1051 = vadd.f32 %v976, %v1017
      %v1052 = vadd.f32 %v978, %v1017
      %v1053 = vadd.f32 %v981, %v1017
      %v1054 = vadd.f32 %v983, %v1017
      %v1055 = vadd.f32 %v986, %v1017
      %v1056 = vadd.f32 %v988, %v1017
      %v1057 = vadd.f32 %v991, %v1017
      %v1058 = vadd.f32 %v993, %v1017
      %v1059 = vadd.f32 %v996, %v1017
      %v1060 = vadd.f32 %v998, %v1017
      %v1061 = vadd.f32 %v1001, %v1017
      %v1062 = vadd.f32 %v1003, %v1017
      %v1063 = vadd.f32 %v1006, %v1017
      %v1064 = vadd.f32 %v1008, %v1017
      %v1065 = vadd.f32 %v1011, %v1017
      %v1066 = vadd.f32 %v1013, %v1017
      %v1067 = vmax.f32 %v1019, 0.0
      %v1068 = vmax.f32 %v1020, 0.0
      %v1069 = vmax.f32 %v1021, 0.0
      %v1070 = vmax.f32 %v1022, 0.0
      %v1071 = vmax.f32 %v1023, 0.0
      %v1072 = vmax.f32 %v1024, 0.0
      %v1073 = vmax.f32 %v1025, 0.0
      %v1074 = vmax.f32 %v1026, 0.0
      %v1075 = vmax.f32 %v1027, 0.0
      %v1076 = vmax.f32 %v1028, 0.0
      %v1077 = vmax.f32 %v1029, 0.0
      %v1078 = vmax.f32 %v1030, 0.0
      %v1079 = vmax.f32 %v1031, 0.0
      %v1080 = vmax.f32 %v1032, 0.0
      %v1081 = vmax.f32 %v1033, 0.0
      %v1082 = vmax.f32 %v1034, 0.0
      %v1083 = vmax.f32 %v1035, 0.0
      %v1084 = vmax.f32 %v1036, 0.0
      %v1085 = vmax.f32 %v1037, 0.0
      %v1086 = vmax.f32 %v1038, 0.0
      %v1087 = vmax.f32 %v1039, 0.0
      %v1088 = vmax.f32 %v1040, 0.0
      %v1089 = vmax.f32 %v1041, 0.0
      %v1090 = vmax.f32 %v1042, 0.0
      %v1091 = vmax.f32 %v1043, 0.0
      %v1092 = vmax.f32 %v1044, 0.0
      %v1093 = vmax.f32 %v1045, 0.0
      %v1094 = vmax.f32 %v1046, 0.0
      %v1095 = vmax.f32 %v1047, 0.0
      %v1096 = vmax.f32 %v1048, 0.0
      %v1097 = vmax.f32 %v1049, 0.0
      %v1098 = vmax.f32 %v1050, 0.0
      %v1099 = vmax.f32 %v1051, 0.0
      %v1100 = vmax.f32 %v1052, 0.0
      %v1101 = vmax.f32 %v1053, 0.0
      %v1102 = vmax.f32 %v1054, 0.0
      %v1103 = vmax.f32 %v1055, 0.0
      %v1104 = vmax.f32 %v1056, 0.0
      %v1105 = vmax.f32 %v1057, 0.0
      %v1106 = vmax.f32 %v1058, 0.0
      %v1107 = vmax.f32 %v1059, 0.0
      %v1108 = vmax.f32 %v1060, 0.0
      %v1109 = vmax.f32 %v1061, 0.0
      %v1110 = vmax.f32 %v1062, 0.0
      %v1111 = vmax.f32 %v1063, 0.0
      %v1112 = vmax.f32 %v1064, 0.0
      %v1113 = vmax.f32 %v1065, 0.0
      %v1114 = vmax.f32 %v1066, 0.0
      %v1115 = vpack.c.bf16 %v1067, %v1067
      %v1116 = vpack.c.bf16 %v1068, %v1068
      %v1117 = vpack.c.bf16 %v1069, %v1069
      %v1118 = vpack.c.bf16 %v1070, %v1070
      %v1119 = vpack.c.bf16 %v1071, %v1071
      %v1120 = vpack.c.bf16 %v1072, %v1072
      %v1121 = vpack.c.bf16 %v1073, %v1073
      %v1122 = vpack.c.bf16 %v1074, %v1074
      %v1123 = vpack.c.bf16 %v1075, %v1075
      %v1124 = vpack.c.bf16 %v1076, %v1076
      %v1125 = vpack.c.bf16 %v1077, %v1077
      %v1126 = vpack.c.bf16 %v1078, %v1078
      %v1127 = vpack.c.bf16 %v1079, %v1079
      %v1128 = vpack.c.bf16 %v1080, %v1080
      %v1129 = vpack.c.bf16 %v1081, %v1081
      %v1130 = vpack.c.bf16 %v1082, %v1082
      %v1131 = vpack.c.bf16 %v1083, %v1083
      %v1132 = vpack.c.bf16 %v1084, %v1084
      %v1133 = vpack.c.bf16 %v1085, %v1085
      %v1134 = vpack.c.bf16 %v1086, %v1086
      %v1135 = vpack.c.bf16 %v1087, %v1087
      %v1136 = vpack.c.bf16 %v1088, %v1088
      %v1137 = vpack.c.bf16 %v1089, %v1089
      %v1138 = vpack.c.bf16 %v1090, %v1090
      %v1139 = vpack.c.bf16 %v1091, %v1091
      %v1140 = vpack.c.bf16 %v1092, %v1092
      %v1141 = vpack.c.bf16 %v1093, %v1093
      %v1142 = vpack.c.bf16 %v1094, %v1094
      %v1143 = vpack.c.bf16 %v1095, %v1095
      %v1144 = vpack.c.bf16 %v1096, %v1096
      %v1145 = vpack.c.bf16 %v1097, %v1097
      %v1146 = vpack.c.bf16 %v1098, %v1098
      %v1147 = vpack.c.bf16 %v1099, %v1099
      %v1148 = vpack.c.bf16 %v1100, %v1100
      %v1149 = vpack.c.bf16 %v1101, %v1101
      %v1150 = vpack.c.bf16 %v1102, %v1102
      %v1151 = vpack.c.bf16 %v1103, %v1103
      %v1152 = vpack.c.bf16 %v1104, %v1104
      %v1153 = vpack.c.bf16 %v1105, %v1105
      %v1154 = vpack.c.bf16 %v1106, %v1106
      %v1155 = vpack.c.bf16 %v1107, %v1107
      %v1156 = vpack.c.bf16 %v1108, %v1108
      %v1157 = vpack.c.bf16 %v1109, %v1109
      %v1158 = vpack.c.bf16 %v1110, %v1110
      %v1159 = vpack.c.bf16 %v1111, %v1111
      %v1160 = vpack.c.bf16 %v1112, %v1112
      %v1161 = vpack.c.bf16 %v1113, %v1113
      %v1162 = vpack.c.bf16 %v1114, %v1114
      %vm1163 = vcmask 257024
      %1164 = vst.msk [vmem:[%s248] sm:$0xf] %vm1163, %v1115
      %1165 = vst.msk [vmem:[%s248 + $0x4] sm:$0xf] %vm1163, %v1116
      %1166 = vst.msk [vmem:[%s248 + $0x8] sm:$0xf] %vm1163, %v1117
      %1167 = vst.msk [vmem:[%s248 + $0xc] sm:$0xf] %vm1163, %v1118
      %1168 = vst.msk [vmem:[%s248 + $0x10] sm:$0xf] %vm1163, %v1119
      %1169 = vst.msk [vmem:[%s248 + $0x14] sm:$0xf] %vm1163, %v1120
      %1170 = vst.msk [vmem:[%s248 + $0x18] sm:$0xf] %vm1163, %v1121
      %1171 = vst.msk [vmem:[%s248 + $0x1c] sm:$0xf] %vm1163, %v1122
      %1172 = vst.msk [vmem:[%s248 + $0x20] sm:$0xf] %vm1163, %v1123
      %1173 = vst.msk [vmem:[%s248 + $0x24] sm:$0xf] %vm1163, %v1124
      %1174 = vst.msk [vmem:[%s248 + $0x28] sm:$0xf] %vm1163, %v1125
      %1175 = vst.msk [vmem:[%s248 + $0x2c] sm:$0xf] %vm1163, %v1126
      %1176 = vst.msk [vmem:[%s248 + $0x30] sm:$0xf] %vm1163, %v1127
      %1177 = vst.msk [vmem:[%s248 + $0x34] sm:$0xf] %vm1163, %v1128
      %1178 = vst.msk [vmem:[%s248 + $0x38] sm:$0xf] %vm1163, %v1129
      %1179 = vst.msk [vmem:[%s248 + $0x3c] sm:$0xf] %vm1163, %v1130
      %1180 = vst.msk [vmem:[%s248 + $0x40] sm:$0xf] %vm1163, %v1131
      %1181 = vst.msk [vmem:[%s248 + $0x44] sm:$0xf] %vm1163, %v1132
      %1182 = vst.msk [vmem:[%s248 + $0x48] sm:$0xf] %vm1163, %v1133
      %1183 = vst.msk [vmem:[%s248 + $0x4c] sm:$0xf] %vm1163, %v1134
      %1184 = vst.msk [vmem:[%s248 + $0x50] sm:$0xf] %vm1163, %v1135
      %1185 = vst.msk [vmem:[%s248 + $0x54] sm:$0xf] %vm1163, %v1136
      %1186 = vst.msk [vmem:[%s248 + $0x58] sm:$0xf] %vm1163, %v1137
      %1187 = vst.msk [vmem:[%s248 + $0x5c] sm:$0xf] %vm1163, %v1138
      %1188 = vst.msk [vmem:[%s248 + $0x60] sm:$0xf] %vm1163, %v1139
      %1189 = vst.msk [vmem:[%s248 + $0x64] sm:$0xf] %vm1163, %v1140
      %1190 = vst.msk [vmem:[%s248 + $0x68] sm:$0xf] %vm1163, %v1141
      %1191 = vst.msk [vmem:[%s248 + $0x6c] sm:$0xf] %vm1163, %v1142
      %1192 = vst.msk [vmem:[%s248 + $0x70] sm:$0xf] %vm1163, %v1143
      %1193 = vst.msk [vmem:[%s248 + $0x74] sm:$0xf] %vm1163, %v1144
      %1194 = vst.msk [vmem:[%s248 + $0x78] sm:$0xf] %vm1163, %v1145
      %1195 = vst.msk [vmem:[%s248 + $0x7c] sm:$0xf] %vm1163, %v1146
      %1196 = vst.msk [vmem:[%s248 + $0x80] sm:$0xf] %vm1163, %v1147
      %1197 = vst.msk [vmem:[%s248 + $0x84] sm:$0xf] %vm1163, %v1148
      %1198 = vst.msk [vmem:[%s248 + $0x88] sm:$0xf] %vm1163, %v1149
      %1199 = vst.msk [vmem:[%s248 + $0x8c] sm:$0xf] %vm1163, %v1150
      %1200 = vst.msk [vmem:[%s248 + $0x90] sm:$0xf] %vm1163, %v1151
      %1201 = vst.msk [vmem:[%s248 + $0x94] sm:$0xf] %vm1163, %v1152
      %1202 = vst.msk [vmem:[%s248 + $0x98] sm:$0xf] %vm1163, %v1153
      %1203 = vst.msk [vmem:[%s248 + $0x9c] sm:$0xf] %vm1163, %v1154
      %1204 = vst.msk [vmem:[%s248 + $0xa0] sm:$0xf] %vm1163, %v1155
      %1205 = vst.msk [vmem:[%s248 + $0xa4] sm:$0xf] %vm1163, %v1156
      %1206 = vst.msk [vmem:[%s248 + $0xa8] sm:$0xf] %vm1163, %v1157
      %1207 = vst.msk [vmem:[%s248 + $0xac] sm:$0xf] %vm1163, %v1158
      %1208 = vst.msk [vmem:[%s248 + $0xb0] sm:$0xf] %vm1163, %v1159
      %1209 = vst.msk [vmem:[%s248 + $0xb4] sm:$0xf] %vm1163, %v1160
      %1210 = vst.msk [vmem:[%s248 + $0xb8] sm:$0xf] %vm1163, %v1161
      %1211 = vst.msk [vmem:[%s248 + $0xbc] sm:$0xf] %vm1163, %v1162
      %s1212 = smul.u32 48, %s16
      %p1213 = scmp.lt.s32.totalorder %s1212, 95
      %s1214 = scalar_select %p1213, %s1212, 95
      %s1215 = smul.addr %s1214, 4
      %s1216 = scalar_lea.vmem %s5, %s1215
      // Predicated region
      $region41: #{model_forward.8} parent=39 // pred_check
        %p1217 = pneg %p149
      $region42: #{model_forward.8} parent=39 // pred_check_branch
        %1219 = sbr.rel (%p1217) target = $region44
      $region43: #{model_forward.8} parent=39 // pred_region
        %s1220 = smul.u32 48, %s16
      $region44: #{model_forward.8} parent=39 // pred_fallthru
        _
    $region40: #{model_forward.8} parent=5 // pred_fallthru
      _
    %p1221 = scmp.le.s32.totalorder 2, %s11
    // Predicated region
    $region45: #{model_forward.8} parent=5 // pred_check
      %p1222 = pneg %p1221
    $region46: #{model_forward.8} parent=5 // pred_check_branch
      %1224 = sbr.rel (%p1222) target = $region48
    $region47: #{model_forward.8} parent=5 // pred_region
      %s1225 = ssub.s32 %s11, 2
      // Predicated region
      $region49: #{model_forward.8} parent=47 // pred_check
        %p1226 = pneg %p155
      $region50: #{model_forward.8} parent=47 // pred_check_branch
        %1228 = sbr.rel (%p1226) target = $region52
      $region51: #{model_forward.8} parent=47 // pred_region
        %s1229 = smul.u32 48, %s17
        %p1230 = scmp.lt.s32.totalorder %s1229, 95
        %s1231 = scalar_select %p1230, %s1229, 95
        %s1232 = smul.addr %s1231, 4
        %s1233 = scalar_lea.vmem %s5, %s1232
      $region52: #{model_forward.8} parent=47 // pred_fallthru
        _
    $region48: #{model_forward.8} parent=5 // pred_fallthru
      _
  $region6: #{model_forward.8} parent=0 // loop_footer
    %s15 = sadd.s32 1, %s11
  $region7: #{model_forward.8} parent=0 // loop_footer_branch
    %10 = sbr.rel target = $region3
  $region8: #{model_forward.8} parent=0 // loop_exit
    _

// kernel: model_forward.9
$region0: #{model_forward.9}
  #allocation0 [shape = 'u32[]', space=smem, size = 0x4, offset = 0x4, fixed_abs, tag = 'smem constant byte address 0x4 - core index']
  #allocation1 [shape = 'u32[72,128]{1,0:T(1,128)}', space=vmem, size = 0x9000, scoped, tag = 'internal scratch']
  %s0 = inlined_call_operand.vmem [shape: bf16[2,384,32], index: 0, kind: input, shape index: {}]
  %s1 = inlined_call_operand.vmem [shape: f32[32,512], index: 1, kind: input, shape index: {}]
  %s2 = inlined_call_operand.vmem [shape: f32[32,512], index: 2, kind: input, shape index: {}]
  %s3 = inlined_call_operand.vmem [shape: f32[1,512], index: 3, kind: input, shape index: {}]
  %s4 = inlined_call_operand.vmem [shape: f32[1,512], index: 4, kind: input, shape index: {}]
  %s5 = inlined_call_operand.vmem [shape: f32[1,512], index: 5, kind: input, shape index: {}]
  %s6 = inlined_call_operand.vmem [shape: f32[512,6], index: 6, kind: input, shape index: {}]
  %s7 = inlined_call_operand.vmem [shape: f32[1,6], index: 7, kind: input, shape index: {}]
  %s8 = inlined_call_operand.hbm [shape: f32[2,6], index: 8, kind: output, shape index: {}]
  %s9 = sld [smem:[#allocation0]]
  $region42: #{model_forward.9} parent=0
    _
  %s11 = ssub.s32 1, %s9
  %s12 = scalar_select 0, %s11, %s9
  $region1: #{model_forward.9} parent=0
    #allocation2 [shape = 'u8[1024]{0}', space=vmem, size = 0x400, scoped, tag = 'output window, operand 0, single buffered']
    #allocation3 [shape = 's32[1]{0}', space=sflag, size = 0x4, scoped, tag = 'scoped memory for model_forward.9']
    %13 = vsyncpa [#allocation3], 0
    // Predicated region
    $region2: #{model_forward.9} parent=1 // pred_check
      _
    $region3: #{model_forward.9} parent=1 // pred_check_branch
      %15 = sbr.rel (0) target = $region5
    $region4: #{model_forward.9} parent=1 // pred_region
      _
    $region5: #{model_forward.9} parent=1 // pred_fallthru
      _
    // Predicated region
    $region6: #{model_forward.9} parent=1 // pred_check
      _
    $region7: #{model_forward.9} parent=1 // pred_check_branch
      %17 = sbr.rel (0) target = $region9
    $region8: #{model_forward.9} parent=1 // pred_region
      _
    $region9: #{model_forward.9} parent=1 // pred_fallthru
      _
    // Predicated region
    $region10: #{model_forward.9} parent=1 // pred_check
      _
    $region11: #{model_forward.9} parent=1 // pred_check_branch
      %19 = sbr.rel (0) target = $region13
    $region12: #{model_forward.9} parent=1 // pred_region
      _
    $region13: #{model_forward.9} parent=1 // pred_fallthru
      _
    // Predicated region
    $region14: #{model_forward.9} parent=1 // pred_check
      _
    $region15: #{model_forward.9} parent=1 // pred_check_branch
      %21 = sbr.rel (0) target = $region17
    $region16: #{model_forward.9} parent=1 // pred_region
      _
    $region17: #{model_forward.9} parent=1 // pred_fallthru
      _
    // Predicated region
    $region18: #{model_forward.9} parent=1 // pred_check
      _
    $region19: #{model_forward.9} parent=1 // pred_check_branch
      %23 = sbr.rel (0) target = $region21
    $region20: #{model_forward.9} parent=1 // pred_region
      _
    $region21: #{model_forward.9} parent=1 // pred_fallthru
      _
    // Predicated region
    $region22: #{model_forward.9} parent=1 // pred_check
      _
    $region23: #{model_forward.9} parent=1 // pred_check_branch
      %25 = sbr.rel (0) target = $region25
    $region24: #{model_forward.9} parent=1 // pred_region
      _
    $region25: #{model_forward.9} parent=1 // pred_fallthru
      _
    // Predicated region
    $region26: #{model_forward.9} parent=1 // pred_check
      _
    $region27: #{model_forward.9} parent=1 // pred_check_branch
      %27 = sbr.rel (0) target = $region29
    $region28: #{model_forward.9} parent=1 // pred_region
      _
    $region29: #{model_forward.9} parent=1 // pred_fallthru
      _
    // Predicated region
    $region30: #{model_forward.9} parent=1 // pred_check
      _
    $region31: #{model_forward.9} parent=1 // pred_check_branch
      %29 = sbr.rel (0) target = $region33
    $region32: #{model_forward.9} parent=1 // pred_region
      _
    $region33: #{model_forward.9} parent=1 // pred_fallthru
      _
    %v30 = vld [vmem:[%s0] sm:$0xf]
    %v31 = vld [vmem:[%s0 + $0x4] sm:$0xf]
    %v32 = vld [vmem:[%s0 + $0x8] sm:$0xf]
    %v33 = vld [vmem:[%s0 + $0xc] sm:$0xf]
    %v34 = vld [vmem:[%s0 + $0x10] sm:$0xf]
    %v35 = vld [vmem:[%s0 + $0x14] sm:$0xf]
    %v36 = vld [vmem:[%s0 + $0x18] sm:$0xf]
    %v37 = vld [vmem:[%s0 + $0x1c] sm:$0xf]
    %v38 = vld [vmem:[%s0 + $0x20] sm:$0xf]
    %v39 = vld [vmem:[%s0 + $0x24] sm:$0xf]
    %v40 = vld [vmem:[%s0 + $0x28] sm:$0xf]
    %v41 = vld [vmem:[%s0 + $0x2c] sm:$0xf]
    %v42 = vld [vmem:[%s0 + $0x30] sm:$0xf]
    %v43 = vld [vmem:[%s0 + $0x34] sm:$0xf]
    %v44 = vld [vmem:[%s0 + $0x38] sm:$0xf]
    %v45 = vld [vmem:[%s0 + $0x3c] sm:$0xf]
    %v46 = vld [vmem:[%s0 + $0x40] sm:$0xf]
    %v47 = vld [vmem:[%s0 + $0x44] sm:$0xf]
    %v48 = vld [vmem:[%s0 + $0x48] sm:$0xf]
    %v49 = vld [vmem:[%s0 + $0x4c] sm:$0xf]
    %v50 = vld [vmem:[%s0 + $0x50] sm:$0xf]
    %v51 = vld [vmem:[%s0 + $0x54] sm:$0xf]
    %v52 = vld [vmem:[%s0 + $0x58] sm:$0xf]
    %v53 = vld [vmem:[%s0 + $0x5c] sm:$0xf]
    %v54 = vld [vmem:[%s0 + $0x60] sm:$0xf]
    %v55 = vld [vmem:[%s0 + $0x64] sm:$0xf]
    %v56 = vld [vmem:[%s0 + $0x68] sm:$0xf]
    %v57 = vld [vmem:[%s0 + $0x6c] sm:$0xf]
    %v58 = vld [vmem:[%s0 + $0x70] sm:$0xf]
    %v59 = vld [vmem:[%s0 + $0x74] sm:$0xf]
    %v60 = vld [vmem:[%s0 + $0x78] sm:$0xf]
    %v61 = vld [vmem:[%s0 + $0x7c] sm:$0xf]
    %v62 = vld [vmem:[%s0 + $0x80] sm:$0xf]
    %v63 = vld [vmem:[%s0 + $0x84] sm:$0xf]
    %v64 = vld [vmem:[%s0 + $0x88] sm:$0xf]
    %v65 = vld [vmem:[%s0 + $0x8c] sm:$0xf]
    %v66 = vld [vmem:[%s0 + $0x90] sm:$0xf]
    %v67 = vld [vmem:[%s0 + $0x94] sm:$0xf]
    %v68 = vld [vmem:[%s0 + $0x98] sm:$0xf]
    %v69 = vld [vmem:[%s0 + $0x9c] sm:$0xf]
    %v70 = vld [vmem:[%s0 + $0xa0] sm:$0xf]
    %v71 = vld [vmem:[%s0 + $0xa4] sm:$0xf]
    %v72 = vld [vmem:[%s0 + $0xa8] sm:$0xf]
    %v73 = vld [vmem:[%s0 + $0xac] sm:$0xf]
    %v74 = vld [vmem:[%s0 + $0xb0] sm:$0xf]
    %v75 = vld [vmem:[%s0 + $0xb4] sm:$0xf]
    %v76 = vld [vmem:[%s0 + $0xb8] sm:$0xf]
    %v77 = vld [vmem:[%s0 + $0xbc] sm:$0xf]
    %v78 = vld [vmem:[%s0 + $0xc0] sm:$0xf]
    %v79 = vld [vmem:[%s0 + $0xc4] sm:$0xf]
    %v80 = vld [vmem:[%s0 + $0xc8] sm:$0xf]
    %v81 = vld [vmem:[%s0 + $0xcc] sm:$0xf]
    %v82 = vld [vmem:[%s0 + $0xd0] sm:$0xf]
    %v83 = vld [vmem:[%s0 + $0xd4] sm:$0xf]
    %v84 = vld [vmem:[%s0 + $0xd8] sm:$0xf]
    %v85 = vld [vmem:[%s0 + $0xdc] sm:$0xf]
    %v86 = vld [vmem:[%s0 + $0xe0] sm:$0xf]
    %v87 = vld [vmem:[%s0 + $0xe4] sm:$0xf]
    %v88 = vld [vmem:[%s0 + $0xe8] sm:$0xf]
    %v89 = vld [vmem:[%s0 + $0xec] sm:$0xf]
    %v90 = vld [vmem:[%s0 + $0xf0] sm:$0xf]
    %v91 = vld [vmem:[%s0 + $0xf4] sm:$0xf]
    %v92 = vld [vmem:[%s0 + $0xf8] sm:$0xf]
    %v93 = vld [vmem:[%s0 + $0xfc] sm:$0xf]
    %v94 = vld [vmem:[%s0 + $0x100] sm:$0xf]
    %v95 = vld [vmem:[%s0 + $0x104] sm:$0xf]
    %v96 = vld [vmem:[%s0 + $0x108] sm:$0xf]
    %v97 = vld [vmem:[%s0 + $0x10c] sm:$0xf]
    %v98 = vld [vmem:[%s0 + $0x110] sm:$0xf]
    %v99 = vld [vmem:[%s0 + $0x114] sm:$0xf]
    %v100 = vld [vmem:[%s0 + $0x118] sm:$0xf]
    %v101 = vld [vmem:[%s0 + $0x11c] sm:$0xf]
    %v102 = vld [vmem:[%s0 + $0x120] sm:$0xf]
    %v103 = vld [vmem:[%s0 + $0x124] sm:$0xf]
    %v104 = vld [vmem:[%s0 + $0x128] sm:$0xf]
    %v105 = vld [vmem:[%s0 + $0x12c] sm:$0xf]
    %v106 = vld [vmem:[%s0 + $0x130] sm:$0xf]
    %v107 = vld [vmem:[%s0 + $0x134] sm:$0xf]
    %v108 = vld [vmem:[%s0 + $0x138] sm:$0xf]
    %v109 = vld [vmem:[%s0 + $0x13c] sm:$0xf]
    %v110 = vld [vmem:[%s0 + $0x140] sm:$0xf]
    %v111 = vld [vmem:[%s0 + $0x144] sm:$0xf]
    %v112 = vld [vmem:[%s0 + $0x148] sm:$0xf]
    %v113 = vld [vmem:[%s0 + $0x14c] sm:$0xf]
    %v114 = vld [vmem:[%s0 + $0x150] sm:$0xf]
    %v115 = vld [vmem:[%s0 + $0x154] sm:$0xf]
    %v116 = vld [vmem:[%s0 + $0x158] sm:$0xf]
    %v117 = vld [vmem:[%s0 + $0x15c] sm:$0xf]
    %v118 = vld [vmem:[%s0 + $0x160] sm:$0xf]
    %v119 = vld [vmem:[%s0 + $0x164] sm:$0xf]
    %v120 = vld [vmem:[%s0 + $0x168] sm:$0xf]
    %v121 = vld [vmem:[%s0 + $0x16c] sm:$0xf]
    %v122 = vld [vmem:[%s0 + $0x170] sm:$0xf]
    %v123 = vld [vmem:[%s0 + $0x174] sm:$0xf]
    %v124 = vld [vmem:[%s0 + $0x178] sm:$0xf]
    %v125 = vld [vmem:[%s0 + $0x17c] sm:$0xf]
    %v126 = vunpack.c.l.bf16 %v30
    %v127 = vunpack.c.l.bf16 %v31
    %v128 = vunpack.c.l.bf16 %v32
    %v129 = vunpack.c.l.bf16 %v33
    %v130 = vunpack.c.l.bf16 %v34
    %v131 = vunpack.c.l.bf16 %v35
    %v132 = vunpack.c.l.bf16 %v36
    %v133 = vunpack.c.l.bf16 %v37
    %v134 = vunpack.c.l.bf16 %v38
    %v135 = vunpack.c.l.bf16 %v39
    %v136 = vunpack.c.l.bf16 %v40
    %v137 = vunpack.c.l.bf16 %v41
    %v138 = vunpack.c.l.bf16 %v42
    %v139 = vunpack.c.l.bf16 %v43
    %v140 = vunpack.c.l.bf16 %v44
    %v141 = vunpack.c.l.bf16 %v45
    %v142 = vunpack.c.l.bf16 %v46
    %v143 = vunpack.c.l.bf16 %v47
    %v144 = vunpack.c.l.bf16 %v48
    %v145 = vunpack.c.l.bf16 %v49
    %v146 = vunpack.c.l.bf16 %v50
    %v147 = vunpack.c.l.bf16 %v51
    %v148 = vunpack.c.l.bf16 %v52
    %v149 = vunpack.c.l.bf16 %v53
    %v150 = vunpack.c.l.bf16 %v54
    %v151 = vunpack.c.l.bf16 %v55
    %v152 = vunpack.c.l.bf16 %v56
    %v153 = vunpack.c.l.bf16 %v57
    %v154 = vunpack.c.l.bf16 %v58
    %v155 = vunpack.c.l.bf16 %v59
    %v156 = vunpack.c.l.bf16 %v60
    %v157 = vunpack.c.l.bf16 %v61
    %v158 = vunpack.c.l.bf16 %v62
    %v159 = vunpack.c.l.bf16 %v63
    %v160 = vunpack.c.l.bf16 %v64
    %v161 = vunpack.c.l.bf16 %v65
    %v162 = vunpack.c.l.bf16 %v66
    %v163 = vunpack.c.l.bf16 %v67
    %v164 = vunpack.c.l.bf16 %v68
    %v165 = vunpack.c.l.bf16 %v69
    %v166 = vunpack.c.l.bf16 %v70
    %v167 = vunpack.c.l.bf16 %v71
    %v168 = vunpack.c.l.bf16 %v72
    %v169 = vunpack.c.l.bf16 %v73
    %v170 = vunpack.c.l.bf16 %v74
    %v171 = vunpack.c.l.bf16 %v75
    %v172 = vunpack.c.l.bf16 %v76
    %v173 = vunpack.c.l.bf16 %v77
    %v174 = vunpack.c.l.bf16 %v78
    %v175 = vunpack.c.l.bf16 %v79
    %v176 = vunpack.c.l.bf16 %v80
    %v177 = vunpack.c.l.bf16 %v81
    %v178 = vunpack.c.l.bf16 %v82
    %v179 = vunpack.c.l.bf16 %v83
    %v180 = vunpack.c.l.bf16 %v84
    %v181 = vunpack.c.l.bf16 %v85
    %v182 = vunpack.c.l.bf16 %v86
    %v183 = vunpack.c.l.bf16 %v87
    %v184 = vunpack.c.l.bf16 %v88
    %v185 = vunpack.c.l.bf16 %v89
    %v186 = vunpack.c.l.bf16 %v90
    %v187 = vunpack.c.l.bf16 %v91
    %v188 = vunpack.c.l.bf16 %v92
    %v189 = vunpack.c.l.bf16 %v93
    %v190 = vunpack.c.l.bf16 %v94
    %v191 = vunpack.c.l.bf16 %v95
    %v192 = vunpack.c.l.bf16 %v96
    %v193 = vunpack.c.l.bf16 %v97
    %v194 = vunpack.c.l.bf16 %v98
    %v195 = vunpack.c.l.bf16 %v99
    %v196 = vunpack.c.l.bf16 %v100
    %v197 = vunpack.c.l.bf16 %v101
    %v198 = vunpack.c.l.bf16 %v102
    %v199 = vunpack.c.l.bf16 %v103
    %v200 = vunpack.c.l.bf16 %v104
    %v201 = vunpack.c.l.bf16 %v105
    %v202 = vunpack.c.l.bf16 %v106
    %v203 = vunpack.c.l.bf16 %v107
    %v204 = vunpack.c.l.bf16 %v108
    %v205 = vunpack.c.l.bf16 %v109
    %v206 = vunpack.c.l.bf16 %v110
    %v207 = vunpack.c.l.bf16 %v111
    %v208 = vunpack.c.l.bf16 %v112
    %v209 = vunpack.c.l.bf16 %v113
    %v210 = vunpack.c.l.bf16 %v114
    %v211 = vunpack.c.l.bf16 %v115
    %v212 = vunpack.c.l.bf16 %v116
    %v213 = vunpack.c.l.bf16 %v117
    %v214 = vunpack.c.l.bf16 %v118
    %v215 = vunpack.c.l.bf16 %v119
    %v216 = vunpack.c.l.bf16 %v120
    %v217 = vunpack.c.l.bf16 %v121
    %v218 = vunpack.c.l.bf16 %v122
    %v219 = vunpack.c.l.bf16 %v123
    %v220 = vunpack.c.l.bf16 %v124
    %v221 = vunpack.c.l.bf16 %v125
    %vm222 = vcmask 261120
    %v223 = vsel %vm222, %v126, -inf
    %v224 = vsel %vm222, %v127, -inf
    %v225 = vsel %vm222, %v128, -inf
    %v226 = vmax.f32 %v223, %v225
    %v227 = vsel %vm222, %v129, -inf
    %v228 = vmax.f32 %v224, %v227
    %v229 = vsel %vm222, %v130, -inf
    %v230 = vmax.f32 %v226, %v229
    %v231 = vsel %vm222, %v131, -inf
    %v232 = vmax.f32 %v228, %v231
    %v233 = vsel %vm222, %v132, -inf
    %v234 = vmax.f32 %v230, %v233
    %v235 = vsel %vm222, %v133, -inf
    %v236 = vmax.f32 %v232, %v235
    %v237 = vsel %vm222, %v134, -inf
    %v238 = vmax.f32 %v234, %v237
    %v239 = vsel %vm222, %v135, -inf
    %v240 = vmax.f32 %v236, %v239
    %v241 = vsel %vm222, %v136, -inf
    %v242 = vmax.f32 %v238, %v241
    %v243 = vsel %vm222, %v137, -inf
    %v244 = vmax.f32 %v240, %v243
    %v245 = vsel %vm222, %v138, -inf
    %v246 = vmax.f32 %v242, %v245
    %v247 = vsel %vm222, %v139, -inf
    %v248 = vmax.f32 %v244, %v247
    %v249 = vsel %vm222, %v140, -inf
    %v250 = vmax.f32 %v246, %v249
    %v251 = vsel %vm222, %v141, -inf
    %v252 = vmax.f32 %v248, %v251
    %v253 = vsel %vm222, %v142, -inf
    %v254 = vmax.f32 %v250, %v253
    %v255 = vsel %vm222, %v143, -inf
    %v256 = vmax.f32 %v252, %v255
    %v257 = vsel %vm222, %v144, -inf
    %v258 = vmax.f32 %v254, %v257
    %v259 = vsel %vm222, %v145, -inf
    %v260 = vmax.f32 %v256, %v259
    %v261 = vsel %vm222, %v146, -inf
    %v262 = vmax.f32 %v258, %v261
    %v263 = vsel %vm222, %v147, -inf
    %v264 = vmax.f32 %v260, %v263
    %v265 = vsel %vm222, %v148, -inf
    %v266 = vmax.f32 %v262, %v265
    %v267 = vsel %vm222, %v149, -inf
    %v268 = vmax.f32 %v264, %v267
    %v269 = vsel %vm222, %v150, -inf
    %v270 = vmax.f32 %v266, %v269
    %v271 = vsel %vm222, %v151, -inf
    %v272 = vmax.f32 %v268, %v271
    %v273 = vsel %vm222, %v152, -inf
    %v274 = vmax.f32 %v270, %v273
    %v275 = vsel %vm222, %v153, -inf
    %v276 = vmax.f32 %v272, %v275
    %v277 = vsel %vm222, %v154, -inf
    %v278 = vmax.f32 %v274, %v277
    %v279 = vsel %vm222, %v155, -inf
    %v280 = vmax.f32 %v276, %v279
    %v281 = vsel %vm222, %v156, -inf
    %v282 = vmax.f32 %v278, %v281
    %v283 = vsel %vm222, %v157, -inf
    %v284 = vmax.f32 %v280, %v283
    %v285 = vsel %vm222, %v158, -inf
    %v286 = vmax.f32 %v282, %v285
    %v287 = vsel %vm222, %v159, -inf
    %v288 = vmax.f32 %v284, %v287
    %v289 = vsel %vm222, %v160, -inf
    %v290 = vmax.f32 %v286, %v289
    %v291 = vsel %vm222, %v161, -inf
    %v292 = vmax.f32 %v288, %v291
    %v293 = vsel %vm222, %v162, -inf
    %v294 = vmax.f32 %v290, %v293
    %v295 = vsel %vm222, %v163, -inf
    %v296 = vmax.f32 %v292, %v295
    %v297 = vsel %vm222, %v164, -inf
    %v298 = vmax.f32 %v294, %v297
    %v299 = vsel %vm222, %v165, -inf
    %v300 = vmax.f32 %v296, %v299
    %v301 = vsel %vm222, %v166, -inf
    %v302 = vmax.f32 %v298, %v301
    %v303 = vsel %vm222, %v167, -inf
    %v304 = vmax.f32 %v300, %v303
    %v305 = vsel %vm222, %v168, -inf
    %v306 = vmax.f32 %v302, %v305
    %v307 = vsel %vm222, %v169, -inf
    %v308 = vmax.f32 %v304, %v307
    %v309 = vsel %vm222, %v170, -inf
    %v310 = vmax.f32 %v306, %v309
    %v311 = vsel %vm222, %v171, -inf
    %v312 = vmax.f32 %v308, %v311
    %v313 = vsel %vm222, %v172, -inf
    %v314 = vmax.f32 %v310, %v313
    %v315 = vsel %vm222, %v173, -inf
    %v316 = vmax.f32 %v312, %v315
    %v317 = vmax.f32 %v314, %v316
    %v318 = vrot.slane %v317, 4
    %v319 = vmax.f32 %v317, %v318
    %v320 = vrot.slane %v319, 2
    %v321 = vmax.f32 %v319, %v320
    %v322 = vrot.slane %v321, 1
    %v323 = vmax.f32 %v321, %v322
    %v324 = vsel %vm222, %v174, -inf
    %v325 = vsel %vm222, %v175, -inf
    %v326 = vsel %vm222, %v176, -inf
    %v327 = vmax.f32 %v324, %v326
    %v328 = vsel %vm222, %v177, -inf
    %v329 = vmax.f32 %v325, %v328
    %v330 = vsel %vm222, %v178, -inf
    %v331 = vmax.f32 %v327, %v330
    %v332 = vsel %vm222, %v179, -inf
    %v333 = vmax.f32 %v329, %v332
    %v334 = vsel %vm222, %v180, -inf
    %v335 = vmax.f32 %v331, %v334
    %v336 = vsel %vm222, %v181, -inf
    %v337 = vmax.f32 %v333, %v336
    %v338 = vsel %vm222, %v182, -inf
    %v339 = vmax.f32 %v335, %v338
    %v340 = vsel %vm222, %v183, -inf
    %v341 = vmax.f32 %v337, %v340
    %v342 = vsel %vm222, %v184, -inf
    %v343 = vmax.f32 %v339, %v342
    %v344 = vsel %vm222, %v185, -inf
    %v345 = vmax.f32 %v341, %v344
    %v346 = vsel %vm222, %v186, -inf
    %v347 = vmax.f32 %v343, %v346
    %v348 = vsel %vm222, %v187, -inf
    %v349 = vmax.f32 %v345, %v348
    %v350 = vsel %vm222, %v188, -inf
    %v351 = vmax.f32 %v347, %v350
    %v352 = vsel %vm222, %v189, -inf
    %v353 = vmax.f32 %v349, %v352
    %v354 = vsel %vm222, %v190, -inf
    %v355 = vmax.f32 %v351, %v354
    %v356 = vsel %vm222, %v191, -inf
    %v357 = vmax.f32 %v353, %v356
    %v358 = vsel %vm222, %v192, -inf
    %v359 = vmax.f32 %v355, %v358
    %v360 = vsel %vm222, %v193, -inf
    %v361 = vmax.f32 %v357, %v360
    %v362 = vsel %vm222, %v194, -inf
    %v363 = vmax.f32 %v359, %v362
    %v364 = vsel %vm222, %v195, -inf
    %v365 = vmax.f32 %v361, %v364
    %v366 = vsel %vm222, %v196, -inf
    %v367 = vmax.f32 %v363, %v366
    %v368 = vsel %vm222, %v197, -inf
    %v369 = vmax.f32 %v365, %v368
    %v370 = vsel %vm222, %v198, -inf
    %v371 = vmax.f32 %v367, %v370
    %v372 = vsel %vm222, %v199, -inf
    %v373 = vmax.f32 %v369, %v372
    %v374 = vsel %vm222, %v200, -inf
    %v375 = vmax.f32 %v371, %v374
    %v376 = vsel %vm222, %v201, -inf
    %v377 = vmax.f32 %v373, %v376
    %v378 = vsel %vm222, %v202, -inf
    %v379 = vmax.f32 %v375, %v378
    %v380 = vsel %vm222, %v203, -inf
    %v381 = vmax.f32 %v377, %v380
    %v382 = vsel %vm222, %v204, -inf
    %v383 = vmax.f32 %v379, %v382
    %v384 = vsel %vm222, %v205, -inf
    %v385 = vmax.f32 %v381, %v384
    %v386 = vsel %vm222, %v206, -inf
    %v387 = vmax.f32 %v383, %v386
    %v388 = vsel %vm222, %v207, -inf
    %v389 = vmax.f32 %v385, %v388
    %v390 = vsel %vm222, %v208, -inf
    %v391 = vmax.f32 %v387, %v390
    %v392 = vsel %vm222, %v209, -inf
    %v393 = vmax.f32 %v389, %v392
    %v394 = vsel %vm222, %v210, -inf
    %v395 = vmax.f32 %v391, %v394
    %v396 = vsel %vm222, %v211, -inf
    %v397 = vmax.f32 %v393, %v396
    %v398 = vsel %vm222, %v212, -inf
    %v399 = vmax.f32 %v395, %v398
    %v400 = vsel %vm222, %v213, -inf
    %v401 = vmax.f32 %v397, %v400
    %v402 = vsel %vm222, %v214, -inf
    %v403 = vmax.f32 %v399, %v402
    %v404 = vsel %vm222, %v215, -inf
    %v405 = vmax.f32 %v401, %v404
    %v406 = vsel %vm222, %v216, -inf
    %v407 = vmax.f32 %v403, %v406
    %v408 = vsel %vm222, %v217, -inf
    %v409 = vmax.f32 %v405, %v408
    %v410 = vsel %vm222, %v218, -inf
    %v411 = vmax.f32 %v407, %v410
    %v412 = vsel %vm222, %v219, -inf
    %v413 = vmax.f32 %v409, %v412
    %v414 = vsel %vm222, %v220, -inf
    %v415 = vmax.f32 %v411, %v414
    %v416 = vsel %vm222, %v221, -inf
    %v417 = vmax.f32 %v413, %v416
    %v418 = vmax.f32 %v415, %v417
    %v419 = vrot.slane %v418, 4
    %v420 = vmax.f32 %v418, %v419
    %v421 = vrot.slane %v420, 2
    %v422 = vmax.f32 %v420, %v421
    %v423 = vrot.slane %v422, 1
    %v424 = vmax.f32 %v422, %v423
    %v425 = vsel %vm222, %v126, 0.0
    %v426 = vsel %vm222, %v127, 0.0
    %v427 = vadd.f32 %v425, %v426
    %v428 = vsel %vm222, %v128, 0.0
    %v429 = vadd.f32 %v427, %v428
    %v430 = vsel %vm222, %v129, 0.0
    %v431 = vadd.f32 %v429, %v430
    %v432 = vsel %vm222, %v130, 0.0
    %v433 = vadd.f32 %v431, %v432
    %v434 = vsel %vm222, %v131, 0.0
    %v435 = vadd.f32 %v433, %v434
    %v436 = vsel %vm222, %v132, 0.0
    %v437 = vadd.f32 %v435, %v436
    %v438 = vsel %vm222, %v133, 0.0
    %v439 = vadd.f32 %v437, %v438
    %v440 = vsel %vm222, %v134, 0.0
    %v441 = vadd.f32 %v439, %v440
    %v442 = vsel %vm222, %v135, 0.0
    %v443 = vadd.f32 %v441, %v442
    %v444 = vsel %vm222, %v136, 0.0
    %v445 = vadd.f32 %v443, %v444
    %v446 = vsel %vm222, %v137, 0.0
    %v447 = vadd.f32 %v445, %v446
    %v448 = vsel %vm222, %v138, 0.0
    %v449 = vadd.f32 %v447, %v448
    %v450 = vsel %vm222, %v139, 0.0
    %v451 = vadd.f32 %v449, %v450
    %v452 = vsel %vm222, %v140, 0.0
    %v453 = vadd.f32 %v451, %v452
    %v454 = vsel %vm222, %v141, 0.0
    %v455 = vadd.f32 %v453, %v454
    %v456 = vsel %vm222, %v142, 0.0
    %v457 = vadd.f32 %v455, %v456
    %v458 = vsel %vm222, %v143, 0.0
    %v459 = vadd.f32 %v457, %v458
    %v460 = vsel %vm222, %v144, 0.0
    %v461 = vadd.f32 %v459, %v460
    %v462 = vsel %vm222, %v145, 0.0
    %v463 = vadd.f32 %v461, %v462
    %v464 = vsel %vm222, %v146, 0.0
    %v465 = vadd.f32 %v463, %v464
    %v466 = vsel %vm222, %v147, 0.0
    %v467 = vadd.f32 %v465, %v466
    %v468 = vsel %vm222, %v148, 0.0
    %v469 = vadd.f32 %v467, %v468
    %v470 = vsel %vm222, %v149, 0.0
    %v471 = vadd.f32 %v469, %v470
    %v472 = vsel %vm222, %v150, 0.0
    %v473 = vadd.f32 %v471, %v472
    %v474 = vsel %vm222, %v151, 0.0
    %v475 = vadd.f32 %v473, %v474
    %v476 = vsel %vm222, %v152, 0.0
    %v477 = vadd.f32 %v475, %v476
    %v478 = vsel %vm222, %v153, 0.0
    %v479 = vadd.f32 %v477, %v478
    %v480 = vsel %vm222, %v154, 0.0
    %v481 = vadd.f32 %v479, %v480
    %v482 = vsel %vm222, %v155, 0.0
    %v483 = vadd.f32 %v481, %v482
    %v484 = vsel %vm222, %v156, 0.0
    %v485 = vadd.f32 %v483, %v484
    %v486 = vsel %vm222, %v157, 0.0
    %v487 = vadd.f32 %v485, %v486
    %v488 = vsel %vm222, %v158, 0.0
    %v489 = vadd.f32 %v487, %v488
    %v490 = vsel %vm222, %v159, 0.0
    %v491 = vadd.f32 %v489, %v490
    %v492 = vsel %vm222, %v160, 0.0
    %v493 = vadd.f32 %v491, %v492
    %v494 = vsel %vm222, %v161, 0.0
    %v495 = vadd.f32 %v493, %v494
    %v496 = vsel %vm222, %v162, 0.0
    %v497 = vadd.f32 %v495, %v496
    %v498 = vsel %vm222, %v163, 0.0
    %v499 = vadd.f32 %v497, %v498
    %v500 = vsel %vm222, %v164, 0.0
    %v501 = vadd.f32 %v499, %v500
    %v502 = vsel %vm222, %v165, 0.0
    %v503 = vadd.f32 %v501, %v502
    %v504 = vsel %vm222, %v166, 0.0
    %v505 = vadd.f32 %v503, %v504
    %v506 = vsel %vm222, %v167, 0.0
    %v507 = vadd.f32 %v505, %v506
    %v508 = vsel %vm222, %v168, 0.0
    %v509 = vadd.f32 %v507, %v508
    %v510 = vsel %vm222, %v169, 0.0
    %v511 = vadd.f32 %v509, %v510
    %v512 = vsel %vm222, %v170, 0.0
    %v513 = vadd.f32 %v511, %v512
    %v514 = vsel %vm222, %v171, 0.0
    %v515 = vadd.f32 %v513, %v514
    %v516 = vsel %vm222, %v172, 0.0
    %v517 = vadd.f32 %v515, %v516
    %v518 = vsel %vm222, %v173, 0.0
    %v519 = vadd.f32 %v517, %v518
    %v520 = vrot.slane %v519, 4
    %v521 = vadd.f32 %v519, %v520
    %v522 = vrot.slane %v521, 2
    %v523 = vadd.f32 %v521, %v522
    %v524 = vrot.slane %v523, 1
    %v525 = vadd.f32 %v523, %v524
    %v526 = vsel %vm222, %v174, 0.0
    %v527 = vsel %vm222, %v175, 0.0
    %v528 = vadd.f32 %v526, %v527
    %v529 = vsel %vm222, %v176, 0.0
    %v530 = vadd.f32 %v528, %v529
    %v531 = vsel %vm222, %v177, 0.0
    %v532 = vadd.f32 %v530, %v531
    %v533 = vsel %vm222, %v178, 0.0
    %v534 = vadd.f32 %v532, %v533
    %v535 = vsel %vm222, %v179, 0.0
    %v536 = vadd.f32 %v534, %v535
    %v537 = vsel %vm222, %v180, 0.0
    %v538 = vadd.f32 %v536, %v537
    %v539 = vsel %vm222, %v181, 0.0
    %v540 = vadd.f32 %v538, %v539
    %v541 = vsel %vm222, %v182, 0.0
    %v542 = vadd.f32 %v540, %v541
    %v543 = vsel %vm222, %v183, 0.0
    %v544 = vadd.f32 %v542, %v543
    %v545 = vsel %vm222, %v184, 0.0
    %v546 = vadd.f32 %v544, %v545
    %v547 = vsel %vm222, %v185, 0.0
    %v548 = vadd.f32 %v546, %v547
    %v549 = vsel %vm222, %v186, 0.0
    %v550 = vadd.f32 %v548, %v549
    %v551 = vsel %vm222, %v187, 0.0
    %v552 = vadd.f32 %v550, %v551
    %v553 = vsel %vm222, %v188, 0.0
    %v554 = vadd.f32 %v552, %v553
    %v555 = vsel %vm222, %v189, 0.0
    %v556 = vadd.f32 %v554, %v555
    %v557 = vsel %vm222, %v190, 0.0
    %v558 = vadd.f32 %v556, %v557
    %v559 = vsel %vm222, %v191, 0.0
    %v560 = vadd.f32 %v558, %v559
    %v561 = vsel %vm222, %v192, 0.0
    %v562 = vadd.f32 %v560, %v561
    %v563 = vsel %vm222, %v193, 0.0
    %v564 = vadd.f32 %v562, %v563
    %v565 = vsel %vm222, %v194, 0.0
    %v566 = vadd.f32 %v564, %v565
    %v567 = vsel %vm222, %v195, 0.0
    %v568 = vadd.f32 %v566, %v567
    %v569 = vsel %vm222, %v196, 0.0
    %v570 = vadd.f32 %v568, %v569
    %v571 = vsel %vm222, %v197, 0.0
    %v572 = vadd.f32 %v570, %v571
    %v573 = vsel %vm222, %v198, 0.0
    %v574 = vadd.f32 %v572, %v573
    %v575 = vsel %vm222, %v199, 0.0
    %v576 = vadd.f32 %v574, %v575
    %v577 = vsel %vm222, %v200, 0.0
    %v578 = vadd.f32 %v576, %v577
    %v579 = vsel %vm222, %v201, 0.0
    %v580 = vadd.f32 %v578, %v579
    %v581 = vsel %vm222, %v202, 0.0
    %v582 = vadd.f32 %v580, %v581
    %v583 = vsel %vm222, %v203, 0.0
    %v584 = vadd.f32 %v582, %v583
    %v585 = vsel %vm222, %v204, 0.0
    %v586 = vadd.f32 %v584, %v585
    %v587 = vsel %vm222, %v205, 0.0
    %v588 = vadd.f32 %v586, %v587
    %v589 = vsel %vm222, %v206, 0.0
    %v590 = vadd.f32 %v588, %v589
    %v591 = vsel %vm222, %v207, 0.0
    %v592 = vadd.f32 %v590, %v591
    %v593 = vsel %vm222, %v208, 0.0
    %v594 = vadd.f32 %v592, %v593
    %v595 = vsel %vm222, %v209, 0.0
    %v596 = vadd.f32 %v594, %v595
    %v597 = vsel %vm222, %v210, 0.0
    %v598 = vadd.f32 %v596, %v597
    %v599 = vsel %vm222, %v211, 0.0
    %v600 = vadd.f32 %v598, %v599
    %v601 = vsel %vm222, %v212, 0.0
    %v602 = vadd.f32 %v600, %v601
    %v603 = vsel %vm222, %v213, 0.0
    %v604 = vadd.f32 %v602, %v603
    %v605 = vsel %vm222, %v214, 0.0
    %v606 = vadd.f32 %v604, %v605
    %v607 = vsel %vm222, %v215, 0.0
    %v608 = vadd.f32 %v606, %v607
    %v609 = vsel %vm222, %v216, 0.0
    %v610 = vadd.f32 %v608, %v609
    %v611 = vsel %vm222, %v217, 0.0
    %v612 = vadd.f32 %v610, %v611
    %v613 = vsel %vm222, %v218, 0.0
    %v614 = vadd.f32 %v612, %v613
    %v615 = vsel %vm222, %v219, 0.0
    %v616 = vadd.f32 %v614, %v615
    %v617 = vsel %vm222, %v220, 0.0
    %v618 = vadd.f32 %v616, %v617
    %v619 = vsel %vm222, %v221, 0.0
    %v620 = vadd.f32 %v618, %v619
    %v621 = vrot.slane %v620, 4
    %v622 = vadd.f32 %v620, %v621
    %v623 = vrot.slane %v622, 2
    %v624 = vadd.f32 %v622, %v623
    %v625 = vrot.slane %v624, 1
    %v626 = vadd.f32 %v624, %v625
    %v627 = vrcp.pop 384.0
    %v628 = vmul.f32 384.0, %v627
    %v629 = vsub.f32 1.0, %v628
    %v630 = vmul.f32 %v627, %v629
    %v631 = vadd.f32 %v627, %v630
    %vm632 = vweird.f32 %v627
    %v633 = vsel %vm632, %v627, %v631
    %v634 = vmul.f32 %v525, %v633
    %v635 = vmul.f32 %v626, %v633
    %v636 = vld [vmem:[%s1] sm:$0xff]
    %v637 = vld [vmem:[%s1 + $0x8] sm:$0xff]
    %v638 = vld [vmem:[%s1 + $0x10] sm:$0xff]
    %v639 = vld [vmem:[%s1 + $0x18] sm:$0xff]
    %v640 = vld [vmem:[%s1 + $0x20] sm:$0xff]
    %v641 = vld [vmem:[%s1 + $0x28] sm:$0xff]
    %v642 = vld [vmem:[%s1 + $0x30] sm:$0xff]
    %v643 = vld [vmem:[%s1 + $0x38] sm:$0xff]
    %v644 = vld [vmem:[%s1 + $0x40] sm:$0xff]
    %v645 = vld [vmem:[%s1 + $0x48] sm:$0xff]
    %v646 = vld [vmem:[%s1 + $0x50] sm:$0xff]
    %v647 = vld [vmem:[%s1 + $0x58] sm:$0xff]
    %v648 = vld [vmem:[%s1 + $0x60] sm:$0xff]
    %v649 = vld [vmem:[%s1 + $0x68] sm:$0xff]
    %v650 = vld [vmem:[%s1 + $0x70] sm:$0xff]
    %v651 = vld [vmem:[%s1 + $0x78] sm:$0xff]
    %v652 = vld [vmem:[%s2] sm:$0xff]
    %v653 = vld [vmem:[%s2 + $0x8] sm:$0xff]
    %v654 = vld [vmem:[%s2 + $0x10] sm:$0xff]
    %v655 = vld [vmem:[%s2 + $0x18] sm:$0xff]
    %v656 = vld [vmem:[%s2 + $0x20] sm:$0xff]
    %v657 = vld [vmem:[%s2 + $0x28] sm:$0xff]
    %v658 = vld [vmem:[%s2 + $0x30] sm:$0xff]
    %v659 = vld [vmem:[%s2 + $0x38] sm:$0xff]
    %v660 = vld [vmem:[%s2 + $0x40] sm:$0xff]
    %v661 = vld [vmem:[%s2 + $0x48] sm:$0xff]
    %v662 = vld [vmem:[%s2 + $0x50] sm:$0xff]
    %v663 = vld [vmem:[%s2 + $0x58] sm:$0xff]
    %v664 = vld [vmem:[%s2 + $0x60] sm:$0xff]
    %v665 = vld [vmem:[%s2 + $0x68] sm:$0xff]
    %v666 = vld [vmem:[%s2 + $0x70] sm:$0xff]
    %v667 = vld [vmem:[%s2 + $0x78] sm:$0xff]
    %vm670 = vcmask 1041409
    %v671 = vsel %vm670, %v635, %v634
    %v672 = vsel %vm222, %v671, 0
    %674 = vmatpush.msra.mxu0 0.0
    %675 = vmatpush.msra.mxu0 0.0
    %676 = vmatpush.msra.mxu0 0.0
    %677 = vmatpush.msra.mxu0 0.0
    %678 = vmatpush.msra.mxu0 0.0
    %679 = vmatpush.msra.mxu0 0.0
    %680 = vmatpush.msra.mxu0 0.0
    %681 = vmatpush.msra.mxu0 0.0
    %682 = vmatpush.msra.mxu0 0.0
    %683 = vmatpush.msra.mxu0 0.0
    %684 = vmatpush.msra.mxu0 0.0
    %685 = vmatpush.msra.mxu0 0.0
    %686 = vmatpush.msra.mxu0 %v664
    %687 = vmatpush.msra.mxu0 %v660
    %688 = vmatpush.msra.mxu0 %v656
    %689 = vmatpush.msra.mxu0 %v652
    %690 = vmatmul.f32.gmra.mxu0 %v672
    %v691 = vpop.f32.mrf.mxu0
    %v692 = vadd.f32 0.0, %v691
    %693 = vdwg.mxu0
    %694 = vmatpush.msra.mxu0 0.0
    %695 = vmatpush.msra.mxu0 0.0
    %696 = vmatpush.msra.mxu0 0.0
    %697 = vmatpush.msra.mxu0 0.0
    %698 = vmatpush.msra.mxu0 0.0
    %699 = vmatpush.msra.mxu0 0.0
    %700 = vmatpush.msra.mxu0 0.0
    %701 = vmatpush.msra.mxu0 0.0
    %702 = vmatpush.msra.mxu0 0.0
    %703 = vmatpush.msra.mxu0 0.0
    %704 = vmatpush.msra.mxu0 0.0
    %705 = vmatpush.msra.mxu0 0.0
    %706 = vmatpush.msra.mxu0 %v665
    %707 = vmatpush.msra.mxu0 %v661
    %708 = vmatpush.msra.mxu0 %v657
    %709 = vmatpush.msra.mxu0 %v653
    %710 = vmatmul.f32.gmra.mxu0 %v672
    %v711 = vpop.f32.mrf.mxu0
    %v712 = vadd.f32 0.0, %v711
    %713 = vdwg.mxu0
    %714 = vmatpush.msra.mxu0 0.0
    %715 = vmatpush.msra.mxu0 0.0
    %716 = vmatpush.msra.mxu0 0.0
    %717 = vmatpush.msra.mxu0 0.0
    %718 = vmatpush.msra.mxu0 0.0
    %719 = vmatpush.msra.mxu0 0.0
    %720 = vmatpush.msra.mxu0 0.0
    %721 = vmatpush.msra.mxu0 0.0
    %722 = vmatpush.msra.mxu0 0.0
    %723 = vmatpush.msra.mxu0 0.0
    %724 = vmatpush.msra.mxu0 0.0
    %725 = vmatpush.msra.mxu0 0.0
    %726 = vmatpush.msra.mxu0 %v666
    %727 = vmatpush.msra.mxu0 %v662
    %728 = vmatpush.msra.mxu0 %v658
    %729 = vmatpush.msra.mxu0 %v654
    %730 = vmatmul.f32.gmra.mxu0 %v672
    %v731 = vpop.f32.mrf.mxu0
    %v732 = vadd.f32 0.0, %v731
    %733 = vdwg.mxu0
    %734 = vmatpush.msra.mxu0 0.0
    %735 = vmatpush.msra.mxu0 0.0
    %736 = vmatpush.msra.mxu0 0.0
    %737 = vmatpush.msra.mxu0 0.0
    %738 = vmatpush.msra.mxu0 0.0
    %739 = vmatpush.msra.mxu0 0.0
    %740 = vmatpush.msra.mxu0 0.0
    %741 = vmatpush.msra.mxu0 0.0
    %742 = vmatpush.msra.mxu0 0.0
    %743 = vmatpush.msra.mxu0 0.0
    %744 = vmatpush.msra.mxu0 0.0
    %745 = vmatpush.msra.mxu0 0.0
    %746 = vmatpush.msra.mxu0 %v667
    %747 = vmatpush.msra.mxu0 %v663
    %748 = vmatpush.msra.mxu0 %v659
    %749 = vmatpush.msra.mxu0 %v655
    %750 = vmatmul.f32.gmra.mxu0 %v672
    %v751 = vpop.f32.mrf.mxu0
    %v752 = vadd.f32 0.0, %v751
    %753 = vdwg.mxu0
    %v756 = vsel %vm670, %v424, %v323
    %v757 = vsel %vm222, %v756, 0
    %759 = vmatpush.msra.mxu0 0.0
    %760 = vmatpush.msra.mxu0 0.0
    %761 = vmatpush.msra.mxu0 0.0
    %762 = vmatpush.msra.mxu0 0.0
    %763 = vmatpush.msra.mxu0 0.0
    %764 = vmatpush.msra.mxu0 0.0
    %765 = vmatpush.msra.mxu0 0.0
    %766 = vmatpush.msra.mxu0 0.0
    %767 = vmatpush.msra.mxu0 0.0
    %768 = vmatpush.msra.mxu0 0.0
    %769 = vmatpush.msra.mxu0 0.0
    %770 = vmatpush.msra.mxu0 0.0
    %771 = vmatpush.msra.mxu0 %v648
    %772 = vmatpush.msra.mxu0 %v644
    %773 = vmatpush.msra.mxu0 %v640
    %774 = vmatpush.msra.mxu0 %v636
    %775 = vmatmul.f32.gmra.mxu0 %v757
    %v776 = vpop.f32.mrf.mxu0
    %v777 = vadd.f32 %v692, %v776
    %778 = vdwg.mxu0
    %779 = vmatpush.msra.mxu0 0.0
    %780 = vmatpush.msra.mxu0 0.0
    %781 = vmatpush.msra.mxu0 0.0
    %782 = vmatpush.msra.mxu0 0.0
    %783 = vmatpush.msra.mxu0 0.0
    %784 = vmatpush.msra.mxu0 0.0
    %785 = vmatpush.msra.mxu0 0.0
    %786 = vmatpush.msra.mxu0 0.0
    %787 = vmatpush.msra.mxu0 0.0
    %788 = vmatpush.msra.mxu0 0.0
    %789 = vmatpush.msra.mxu0 0.0
    %790 = vmatpush.msra.mxu0 0.0
    %791 = vmatpush.msra.mxu0 %v649
    %792 = vmatpush.msra.mxu0 %v645
    %793 = vmatpush.msra.mxu0 %v641
    %794 = vmatpush.msra.mxu0 %v637
    %795 = vmatmul.f32.gmra.mxu0 %v757
    %v796 = vpop.f32.mrf.mxu0
    %v797 = vadd.f32 %v712, %v796
    %798 = vdwg.mxu0
    %799 = vmatpush.msra.mxu0 0.0
    %800 = vmatpush.msra.mxu0 0.0
    %801 = vmatpush.msra.mxu0 0.0
    %802 = vmatpush.msra.mxu0 0.0
    %803 = vmatpush.msra.mxu0 0.0
    %804 = vmatpush.msra.mxu0 0.0
    %805 = vmatpush.msra.mxu0 0.0
    %806 = vmatpush.msra.mxu0 0.0
    %807 = vmatpush.msra.mxu0 0.0
    %808 = vmatpush.msra.mxu0 0.0
    %809 = vmatpush.msra.mxu0 0.0
    %810 = vmatpush.msra.mxu0 0.0
    %811 = vmatpush.msra.mxu0 %v650
    %812 = vmatpush.msra.mxu0 %v646
    %813 = vmatpush.msra.mxu0 %v642
    %814 = vmatpush.msra.mxu0 %v638
    %815 = vmatmul.f32.gmra.mxu0 %v757
    %v816 = vpop.f32.mrf.mxu0
    %v817 = vadd.f32 %v732, %v816
    %818 = vdwg.mxu0
    %819 = vmatpush.msra.mxu0 0.0
    %820 = vmatpush.msra.mxu0 0.0
    %821 = vmatpush.msra.mxu0 0.0
    %822 = vmatpush.msra.mxu0 0.0
    %823 = vmatpush.msra.mxu0 0.0
    %824 = vmatpush.msra.mxu0 0.0
    %825 = vmatpush.msra.mxu0 0.0
    %826 = vmatpush.msra.mxu0 0.0
    %827 = vmatpush.msra.mxu0 0.0
    %828 = vmatpush.msra.mxu0 0.0
    %829 = vmatpush.msra.mxu0 0.0
    %830 = vmatpush.msra.mxu0 0.0
    %831 = vmatpush.msra.mxu0 %v651
    %832 = vmatpush.msra.mxu0 %v647
    %833 = vmatpush.msra.mxu0 %v643
    %834 = vmatpush.msra.mxu0 %v639
    %835 = vmatmul.f32.gmra.mxu0 %v757
    %v836 = vpop.f32.mrf.mxu0
    %v837 = vadd.f32 %v752, %v836
    %838 = vdwg.mxu0
    %v839 = vld [vmem:[%s3] sm:$0xf]
    %v841 = vperm.slane %v839, 0
    %v842 = vperm.slane %v839, 1
    %v843 = vperm.slane %v839, 2
    %v844 = vperm.slane %v839, 3
    %v849 = vadd.f32 %v777, %v841
    %v850 = vadd.f32 %v797, %v842
    %v851 = vadd.f32 %v817, %v843
    %v852 = vadd.f32 %v837, %v844
    %v853 = vmax.f32 %v849, 0.0
    %v854 = vmax.f32 %v850, 0.0
    %v855 = vmax.f32 %v851, 0.0
    %v856 = vmax.f32 %v852, 0.0
    %vm857 = vcmp.ne.f32.partialorder %v849, %v849
    %vm858 = vcmp.ne.f32.partialorder %v850, %v850
    %vm859 = vcmp.ne.f32.partialorder %v851, %v851
    %vm860 = vcmp.ne.f32.partialorder %v852, %v852
    %v861 = vadd.f32 %v849, 0.0
    %v862 = vadd.f32 %v850, 0.0
    %v863 = vadd.f32 %v851, 0.0
    %v864 = vadd.f32 %v852, 0.0
    %v865 = vand.u32 2147483647, %v849
    %v866 = vand.u32 2147483647, %v850
    %v867 = vand.u32 2147483647, %v851
    %v868 = vand.u32 2147483647, %v852
    %v869 = vsub.f32 0.0, %v865
    %v870 = vsub.f32 0.0, %v866
    %v871 = vsub.f32 0.0, %v867
    %v872 = vsub.f32 0.0, %v868
    %v873 = vmul.f32 %v869, 1.442695
    %v874 = vpow.pop %v873
    %v875 = vmul.f32 %v870, 1.442695
    %v876 = vpow.pop %v875
    %v877 = vmul.f32 %v871, 1.442695
    %v878 = vpow.pop %v877
    %v879 = vmul.f32 %v872, 1.442695
    %v880 = vpow.pop %v879
    %v881 = vadd.f32 %v874, 1.0
    %v882 = vlog2.pop %v881
    %v883 = vmul.f32 %v882, 0.6931472
    %v884 = vmul.f32 -0.5, %v874
    %v885 = vadd.f32 %v884, 1.0
    %v886 = vmul.f32 %v885, %v874
    %v887 = vand.u32 2147483647, %v874
    %vm888 = vcmp.lt.f32.partialorder %v887, 0.0004427343
    %v889 = vsel %vm888, %v886, %v883
    %v890 = vadd.f32 %v876, 1.0
    %v891 = vlog2.pop %v890
    %v892 = vmul.f32 %v891, 0.6931472
    %v893 = vmul.f32 -0.5, %v876
    %v894 = vadd.f32 %v893, 1.0
    %v895 = vmul.f32 %v894, %v876
    %v896 = vand.u32 2147483647, %v876
    %vm897 = vcmp.lt.f32.partialorder %v896, 0.0004427343
    %v898 = vsel %vm897, %v895, %v892
    %v899 = vadd.f32 %v878, 1.0
    %v900 = vlog2.pop %v899
    %v901 = vmul.f32 %v900, 0.6931472
    %v902 = vmul.f32 -0.5, %v878
    %v903 = vadd.f32 %v902, 1.0
    %v904 = vmul.f32 %v903, %v878
    %v905 = vand.u32 2147483647, %v878
    %vm906 = vcmp.lt.f32.partialorder %v905, 0.0004427343
    %v907 = vsel %vm906, %v904, %v901
    %v908 = vadd.f32 %v880, 1.0
    %v909 = vlog2.pop %v908
    %v910 = vmul.f32 %v909, 0.6931472
    %v911 = vmul.f32 -0.5, %v880
    %v912 = vadd.f32 %v911, 1.0
    %v913 = vmul.f32 %v912, %v880
    %v914 = vand.u32 2147483647, %v880
    %vm915 = vcmp.lt.f32.partialorder %v914, 0.0004427343
    %v916 = vsel %vm915, %v913, %v910
    %v917 = vadd.f32 %v853, %v889
    %v918 = vadd.f32 %v854, %v898
    %v919 = vadd.f32 %v855, %v907
    %v920 = vadd.f32 %v856, %v916
    %v921 = vsel %vm857, %v861, %v917
    %v922 = vsel %vm858, %v862, %v918
    %v923 = vsel %vm859, %v863, %v919
    %v924 = vsel %vm860, %v864, %v920
    %v925 = vtanh.pop %v921
    %v926 = vtanh.pop %v922
    %v927 = vtanh.pop %v923
    %v928 = vtanh.pop %v924
    %v929 = vmul.f32 %v849, %v925
    %v930 = vmul.f32 %v850, %v926
    %v931 = vmul.f32 %v851, %v927
    %v932 = vmul.f32 %v852, %v928
    %v933 = vld [vmem:[%s4] sm:$0xf]
    %v935 = vperm.slane %v933, 0
    %v936 = vperm.slane %v933, 1
    %v937 = vperm.slane %v933, 2
    %v938 = vperm.slane %v933, 3
    %v943 = vmul.f32 %v929, %v935
    %v944 = vmul.f32 %v930, %v936
    %v945 = vmul.f32 %v931, %v937
    %v946 = vmul.f32 %v932, %v938
    %v947 = vld [vmem:[%s5] sm:$0xf]
    %v949 = vperm.slane %v947, 0
    %v950 = vperm.slane %v947, 1
    %v951 = vperm.slane %v947, 2
    %v952 = vperm.slane %v947, 3
    %v957 = vadd.f32 %v943, %v949
    %v958 = vadd.f32 %v944, %v950
    %v959 = vadd.f32 %v945, %v951
    %v960 = vadd.f32 %v946, %v952
    %v961 = vld [vmem:[%s6] sm:$0xff]
    %v962 = vld [vmem:[%s6 + $0x8] sm:$0xff]
    %v963 = vld [vmem:[%s6 + $0x10] sm:$0xff]
    %v964 = vld [vmem:[%s6 + $0x18] sm:$0xff]
    %v965 = vld [vmem:[%s6 + $0x20] sm:$0xff]
    %v966 = vld [vmem:[%s6 + $0x28] sm:$0xff]
    %v967 = vld [vmem:[%s6 + $0x30] sm:$0xff]
    %v968 = vld [vmem:[%s6 + $0x38] sm:$0xff]
    %v969 = vld [vmem:[%s6 + $0x40] sm:$0xff]
    %v970 = vld [vmem:[%s6 + $0x48] sm:$0xff]
    %v971 = vld [vmem:[%s6 + $0x50] sm:$0xff]
    %v972 = vld [vmem:[%s6 + $0x58] sm:$0xff]
    %v973 = vld [vmem:[%s6 + $0x60] sm:$0xff]
    %v974 = vld [vmem:[%s6 + $0x68] sm:$0xff]
    %v975 = vld [vmem:[%s6 + $0x70] sm:$0xff]
    %v976 = vld [vmem:[%s6 + $0x78] sm:$0xff]
    %v977 = vld [vmem:[%s6 + $0x80] sm:$0xff]
    %v978 = vld [vmem:[%s6 + $0x88] sm:$0xff]
    %v979 = vld [vmem:[%s6 + $0x90] sm:$0xff]
    %v980 = vld [vmem:[%s6 + $0x98] sm:$0xff]
    %v981 = vld [vmem:[%s6 + $0xa0] sm:$0xff]
    %v982 = vld [vmem:[%s6 + $0xa8] sm:$0xff]
    %v983 = vld [vmem:[%s6 + $0xb0] sm:$0xff]
    %v984 = vld [vmem:[%s6 + $0xb8] sm:$0xff]
    %v985 = vld [vmem:[%s6 + $0xc0] sm:$0xff]
    %v986 = vld [vmem:[%s6 + $0xc8] sm:$0xff]
    %v987 = vld [vmem:[%s6 + $0xd0] sm:$0xff]
    %v988 = vld [vmem:[%s6 + $0xd8] sm:$0xff]
    %v989 = vld [vmem:[%s6 + $0xe0] sm:$0xff]
    %v990 = vld [vmem:[%s6 + $0xe8] sm:$0xff]
    %v991 = vld [vmem:[%s6 + $0xf0] sm:$0xff]
    %v992 = vld [vmem:[%s6 + $0xf8] sm:$0xff]
    %v993 = vld [vmem:[%s6 + $0x100] sm:$0xff]
    %v994 = vld [vmem:[%s6 + $0x108] sm:$0xff]
    %v995 = vld [vmem:[%s6 + $0x110] sm:$0xff]
    %v996 = vld [vmem:[%s6 + $0x118] sm:$0xff]
    %v997 = vld [vmem:[%s6 + $0x120] sm:$0xff]
    %v998 = vld [vmem:[%s6 + $0x128] sm:$0xff]
    %v999 = vld [vmem:[%s6 + $0x130] sm:$0xff]
    %v1000 = vld [vmem:[%s6 + $0x138] sm:$0xff]
    %v1001 = vld [vmem:[%s6 + $0x140] sm:$0xff]
    %v1002 = vld [vmem:[%s6 + $0x148] sm:$0xff]
    %v1003 = vld [vmem:[%s6 + $0x150] sm:$0xff]
    %v1004 = vld [vmem:[%s6 + $0x158] sm:$0xff]
    %v1005 = vld [vmem:[%s6 + $0x160] sm:$0xff]
    %v1006 = vld [vmem:[%s6 + $0x168] sm:$0xff]
    %v1007 = vld [vmem:[%s6 + $0x170] sm:$0xff]
    %v1008 = vld [vmem:[%s6 + $0x178] sm:$0xff]
    %v1009 = vld [vmem:[%s6 + $0x180] sm:$0xff]
    %v1010 = vld [vmem:[%s6 + $0x188] sm:$0xff]
    %v1011 = vld [vmem:[%s6 + $0x190] sm:$0xff]
    %v1012 = vld [vmem:[%s6 + $0x198] sm:$0xff]
    %v1013 = vld [vmem:[%s6 + $0x1a0] sm:$0xff]
    %v1014 = vld [vmem:[%s6 + $0x1a8] sm:$0xff]
    %v1015 = vld [vmem:[%s6 + $0x1b0] sm:$0xff]
    %v1016 = vld [vmem:[%s6 + $0x1b8] sm:$0xff]
    %v1017 = vld [vmem:[%s6 + $0x1c0] sm:$0xff]
    %v1018 = vld [vmem:[%s6 + $0x1c8] sm:$0xff]
    %v1019 = vld [vmem:[%s6 + $0x1d0] sm:$0xff]
    %v1020 = vld [vmem:[%s6 + $0x1d8] sm:$0xff]
    %v1021 = vld [vmem:[%s6 + $0x1e0] sm:$0xff]
    %v1022 = vld [vmem:[%s6 + $0x1e8] sm:$0xff]
    %v1023 = vld [vmem:[%s6 + $0x1f0] sm:$0xff]
    %v1024 = vld [vmem:[%s6 + $0x1f8] sm:$0xff]
    %v1025 = vld [vmem:[%s7] sm:$0x1]
    %v1027 = vperm.slane %v1025, 0
    %1029 = vmatpush.msra.mxu0 %v976
    %1030 = vmatpush.msra.mxu0 %v975
    %1031 = vmatpush.msra.mxu0 %v974
    %1032 = vmatpush.msra.mxu0 %v973
    %1033 = vmatpush.msra.mxu0 %v972
    %1034 = vmatpush.msra.mxu0 %v971
    %1035 = vmatpush.msra.mxu0 %v970
    %1036 = vmatpush.msra.mxu0 %v969
    %1037 = vmatpush.msra.mxu0 %v968
    %1038 = vmatpush.msra.mxu0 %v967
    %1039 = vmatpush.msra.mxu0 %v966
    %1040 = vmatpush.msra.mxu0 %v965
    %1041 = vmatpush.msra.mxu0 %v964
    %1042 = vmatpush.msra.mxu0 %v963
    %1043 = vmatpush.msra.mxu0 %v962
    %1044 = vmatpush.msra.mxu0 %v961
    %1045 = vmatmul.f32.gmra.mxu0 %v957
    %v1046 = vpop.f32.mrf.mxu0
    %v1047 = vadd.f32 %v1027, %v1046
    %1048 = vdwg.mxu0
    %1049 = vmatpush.msra.mxu0 %v992
    %1050 = vmatpush.msra.mxu0 %v991
    %1051 = vmatpush.msra.mxu0 %v990
    %1052 = vmatpush.msra.mxu0 %v989
    %1053 = vmatpush.msra.mxu0 %v988
    %1054 = vmatpush.msra.mxu0 %v987
    %1055 = vmatpush.msra.mxu0 %v986
    %1056 = vmatpush.msra.mxu0 %v985
    %1057 = vmatpush.msra.mxu0 %v984
    %1058 = vmatpush.msra.mxu0 %v983
    %1059 = vmatpush.msra.mxu0 %v982
    %1060 = vmatpush.msra.mxu0 %v981
    %1061 = vmatpush.msra.mxu0 %v980
    %1062 = vmatpush.msra.mxu0 %v979
    %1063 = vmatpush.msra.mxu0 %v978
    %1064 = vmatpush.msra.mxu0 %v977
    %1065 = vmatmul.f32.gmra.mxu0 %v958
    %v1066 = vpop.f32.mrf.mxu0
    %v1067 = vadd.f32 %v1047, %v1066
    %1068 = vdwg.mxu0
    %1069 = vmatpush.msra.mxu0 %v1008
    %1070 = vmatpush.msra.mxu0 %v1007
    %1071 = vmatpush.msra.mxu0 %v1006
    %1072 = vmatpush.msra.mxu0 %v1005
    %1073 = vmatpush.msra.mxu0 %v1004
    %1074 = vmatpush.msra.mxu0 %v1003
    %1075 = vmatpush.msra.mxu0 %v1002
    %1076 = vmatpush.msra.mxu0 %v1001
    %1077 = vmatpush.msra.mxu0 %v1000
    %1078 = vmatpush.msra.mxu0 %v999
    %1079 = vmatpush.msra.mxu0 %v998
    %1080 = vmatpush.msra.mxu0 %v997
    %1081 = vmatpush.msra.mxu0 %v996
    %1082 = vmatpush.msra.mxu0 %v995
    %1083 = vmatpush.msra.mxu0 %v994
    %1084 = vmatpush.msra.mxu0 %v993
    %1085 = vmatmul.f32.gmra.mxu0 %v959
    %v1086 = vpop.f32.mrf.mxu0
    %v1087 = vadd.f32 %v1067, %v1086
    %1088 = vdwg.mxu0
    %1089 = vmatpush.msra.mxu0 %v1024
    %1090 = vmatpush.msra.mxu0 %v1023
    %1091 = vmatpush.msra.mxu0 %v1022
    %1092 = vmatpush.msra.mxu0 %v1021
    %1093 = vmatpush.msra.mxu0 %v1020
    %1094 = vmatpush.msra.mxu0 %v1019
    %1095 = vmatpush.msra.mxu0 %v1018
    %1096 = vmatpush.msra.mxu0 %v1017
    %1097 = vmatpush.msra.mxu0 %v1016
    %1098 = vmatpush.msra.mxu0 %v1015
    %1099 = vmatpush.msra.mxu0 %v1014
    %1100 = vmatpush.msra.mxu0 %v1013
    %1101 = vmatpush.msra.mxu0 %v1012
    %1102 = vmatpush.msra.mxu0 %v1011
    %1103 = vmatpush.msra.mxu0 %v1010
    %1104 = vmatpush.msra.mxu0 %v1009
    %1105 = vmatmul.f32.gmra.mxu0 %v960
    %v1106 = vpop.f32.mrf.mxu0
    %v1107 = vadd.f32 %v1087, %v1106
    %1108 = vdwg.mxu0
    %vm1109 = vcmask 41984
    %1110 = vst.msk [vmem:[#allocation2] sm:$0x3] %vm1109, %v1107
    // Predicated region
    $region34: #{model_forward.9} parent=1 // pred_check
      _
    $region35: #{model_forward.9} parent=1 // pred_check_branch
      %1112 = sbr.rel (0) target = $region37
    $region36: #{model_forward.9} parent=1 // pred_region
      %1114 = vsyncadd [#allocation3], 0
      %s1116 = sshll.u32 [#allocation2], 4
      %s1117 = int_to_ptr.vmem [resolvable:$true] %s1116
      %s1118 = sshll.u32 %s8, 4
      %s1119 = int_to_ptr.hbm [resolvable:$true] %s1118
      %1121 = dma.vmem_to_hbm [thread:$0]  %s1117, 32, %s1119, [#allocation3]
    $region37: #{model_forward.9} parent=1 // pred_fallthru
      _
    // Predicated region
    $region38: #{model_forward.9} parent=1 // pred_check
      _
    $region39: #{model_forward.9} parent=1 // pred_check_branch
      %1123 = sbr.rel (0) target = $region41
    $region40: #{model_forward.9} parent=1 // pred_region
      %1125 = dma.done [#allocation3], 32
    $region41: #{model_forward.9} parent=1 // pred_fallthru
      _
    %1126 = vsyncpa [#allocation3], 1

</llo_original>
